<compile_context>
chip_gen: v5e
topology: v5e:2x2
jax: 0.10.0
libtpu: 0.0.40
codegen_flags: <defaults>
</compile_context>

<pallas_src>
import jax
import jax.numpy as jnp
from jax import lax
from jax.experimental import pallas as pl
from jax.experimental.pallas import tpu as pltpu

BN_EPS = 1e-5


# --------------------------------------------------------------------------
# Fused Bottleneck kernel: one (BB, H, W, C) bf16 block per grid step
# --------------------------------------------------------------------------
def _bottleneck_kernel(x_ref, w1_ref, s1_ref, b1_ref,
                       w2_ref, s2_ref, b2_ref,
                       w3_ref, s3_ref, b3_ref,
                       o_ref, slab_ref):
    BB, H, W, Cin = x_ref.shape
    Wd = w1_ref.shape[1]             # bottleneck width
    Cout = w3_ref.shape[1]
    M = BB * H * W

    # ---- conv1 (1x1) + BN1 + ReLU  (bf16 MXU inputs, f32 accumulation) ----
    x2d = x_ref[...].reshape(M, Cin)                            # bf16
    h1 = jnp.dot(x2d, w1_ref[...], preferred_element_type=jnp.float32)
    h1 = jnp.maximum(h1 * s1_ref[...] + b1_ref[...], 0.0)       # (M, Wd) f32
    h1_4d = h1.reshape(BB, H, W, Wd)

    # ---- build the lane-concatenated dx-shifted slab in VMEM --------------
    # slab layout: (BB, H+2, W, 3*Wd) bf16, lanes = [dx=0 | dx=1 | dx=2].
    # Only the two H border rows are zeroed (every step; scratch is per-core).
    border = jnp.zeros((BB, 1, W, 3 * Wd), slab_ref.dtype)
    slab_ref[:, 0:1, :, :] = border
    slab_ref[:, H + 1:H + 2, :, :] = border

    # dx shifts along W via XLU roll + VPU where (no misaligned sublane I/O).
    col = lax.broadcasted_iota(jnp.int32, (1, 1, W, Wd), 2)
    left = jnp.where(col == 0, 0.0,
                     pltpu.roll(h1_4d, shift=1, axis=2))        # in[.., x-1, :]
    right = jnp.where(col == W - 1, 0.0,
                      pltpu.roll(h1_4d, shift=W - 1, axis=2))   # in[.., x+1, :]

    slab_ref[:, 1:H + 1, :, 0:Wd] = left.astype(slab_ref.dtype)
    slab_ref[:, 1:H + 1, :, Wd:2 * Wd] = h1_4d.astype(slab_ref.dtype)
    slab_ref[:, 1:H + 1, :, 2 * Wd:3 * Wd] = right.astype(slab_ref.dtype)

    # ---- conv2 (3x3) as 3 MXU matmuls with K = 3*Wd ------------------------
    acc = None
    for dy in range(3):                                          # static unroll
        trip = slab_ref[:, dy:dy + H, :, :].reshape(M, 3 * Wd)   # bf16, aligned
        part = jnp.dot(trip, w2_ref[dy],
                       preferred_element_type=jnp.float32)       # (M, Wd)
        acc = part if acc is None else acc + part
    h2 = jnp.maximum(acc * s2_ref[...] + b2_ref[...], 0.0)

    # ---- conv3 (1x1) + BN3, residual (re-read x_ref), final ReLU ----------
    h3 = jnp.dot(h2.astype(jnp.bfloat16), w3_ref[...],
                 preferred_element_type=jnp.float32)             # (M, Cout)
    h3 = h3 * s3_ref[...] + b3_ref[...]
    identity = x_ref[...].reshape(M, Cout).astype(jnp.float32)
    y = jnp.maximum(h3 + identity, 0.0)
    o_ref[...] = y.reshape(BB, H, W, Cout).astype(o_ref.dtype)


# --------------------------------------------------------------------------
# Batch-block selection + VMEM budgeting
# --------------------------------------------------------------------------
def _vmem_estimate(BB, H, W, C, Wd):
    blk = BB * H * W
    return (2 * 2 * blk * C * 2                    # x + out blocks, 2x buffered, bf16
            + BB * (H + 2) * W * 3 * Wd * 2        # shifted-slab scratch, bf16
            + 5 * blk * max(C, Wd) * 4)            # f32 temporaries (h1/acc/h2/h3/y)


def _auto_batch_block(B, H, W, C, Wd, requested=None,
                      vmem_budget=40 * 1024 * 1024):
    if requested is not None:
        assert B % requested == 0, "batch_block must divide batch"
        return requested
    target = max(1, -(-1024 // (H * W)))           # M = BB*H*W >= 1024
    best = 1
    for d in range(1, B + 1):
        if B % d != 0 or d > target:
            continue
        if B // d < 2 and d != 1:                  # keep grid >= 2 (v7x megacore)
            continue
        if _vmem_estimate(d, H, W, C, Wd) > vmem_budget:
            continue
        best = d
    return best


# --------------------------------------------------------------------------
# pallas_call wrapper (NHWC, bf16 activation I/O)
# --------------------------------------------------------------------------
def bottleneck_pallas(x_nhwc, p, *, batch_block=None):
    B, H, W, Cin = x_nhwc.shape
    Wd = p['w1'].shape[1]
    Cout = p['w3'].shape[1]
    assert Cin == Cout, "identity shortcut requires Cin == Cout"

    BB = _auto_batch_block(B, H, W, Cin, Wd, batch_block)
    vmem_limit = int(min(48 * 1024 * 1024,
                         max(32 * 1024 * 1024,
                             2 * _vmem_estimate(BB, H, W, Cin, Wd))))

    weights = [p['w1'], p['s1'], p['b1'],
               p['w2'], p['s2'], p['b2'],
               p['w3'], p['s3'], p['b3']]

    def wspec(arr):
        nd = arr.ndim
        return pl.BlockSpec(arr.shape, lambda b, _n=nd: (0,) * _n)

    return pl.pallas_call(
        _bottleneck_kernel,
        out_shape=jax.ShapeDtypeStruct((B, H, W, Cout), jnp.bfloat16),
        grid=(B // BB,),
        in_specs=[pl.BlockSpec((BB, H, W, Cin), lambda b: (b, 0, 0, 0))]
                 + [wspec(w) for w in weights],
        out_specs=pl.BlockSpec((BB, H, W, Cout), lambda b: (b, 0, 0, 0)),
        scratch_shapes=[pltpu.VMEM((BB, H + 2, W, 3 * Wd), jnp.bfloat16)],
        compiler_params=pltpu.CompilerParams(
            dimension_semantics=("parallel",),
            vmem_limit_bytes=vmem_limit),
    )(x_nhwc, *weights)


def bottleneck_forward(x_nchw, params, *, batch_block=None):
    # bf16 activation I/O at the HBM boundary; in a real network the adjacent
    # layers would already produce/consume bf16, so these casts disappear.
    x = x_nchw.transpose(0, 2, 3, 1).astype(jnp.bfloat16)        # NCHW -> NHWC
    y = bottleneck_pallas(x, params['kern'], batch_block=batch_block)
    return y.astype(jnp.float32).transpose(0, 3, 1, 2)           # back to NCHW


# --------------------------------------------------------------------------
# Parameter init (deterministic synthetic weights; BN folded, inference mode)
# --------------------------------------------------------------------------
def _conv_weight(key, kh, kw, cin, cout):
    fan_in = kh * kw * cin
    return jax.random.normal(key, (kh, kw, cin, cout), jnp.float32) / jnp.sqrt(fan_in)


def _bn_fold(key, c):
    k1, k2, k3, k4 = jax.random.split(key, 4)
    gamma = 1.0 + 0.1 * jax.random.normal(k1, (c,), jnp.float32)
    beta = 0.1 * jax.random.normal(k2, (c,), jnp.float32)
    r_mean = 0.1 * jax.random.normal(k3, (c,), jnp.float32)
    r_var = jnp.abs(1.0 + 0.1 * jax.random.normal(k4, (c,), jnp.float32))
    scale = gamma / jnp.sqrt(r_var + BN_EPS)
    bias = beta - r_mean * scale
    return scale, bias


def init_params(key, inplanes, planes, base_width=64):
    width = int(planes * (base_width / 64.0))
    cout = planes * 1                       # expansion = 1
    ks = jax.random.split(key, 6)
    w1 = _conv_weight(ks[0], 1, 1, inplanes, width)    # HWIO
    w2 = _conv_weight(ks[1], 3, 3, width, width)
    w3 = _conv_weight(ks[2], 1, 1, width, cout)
    s1, b1 = _bn_fold(ks[3], width)
    s2, b2 = _bn_fold(ks[4], width)
    s3, b3 = _bn_fold(ks[5], cout)

    ref = dict(w1=w1, w2=w2, w3=w3, s1=s1, b1=b1, s2=s2, b2=b2, s3=s3, b3=b3)
    kern = dict(
        w1=w1.reshape(inplanes, width).astype(jnp.bfloat16),
        # (3,3,Cin,Cout) -> (3, 3*Cin, Cout): per-dy slab, rows ordered
        # [dx=0 channels | dx=1 channels | dx=2 channels] to match the kernel's
        # lane-concatenated shifted slab.
        w2=w2.reshape(3, 3 * width, width).astype(jnp.bfloat16),
        w3=w3.reshape(width, cout).astype(jnp.bfloat16),
        s1=s1.reshape(1, width), b1=b1.reshape(1, width),
        s2=s2.reshape(1, width), b2=b2.reshape(1, width),
        s3=s3.reshape(1, cout), b3=b3.reshape(1, cout),
    )
    return dict(ref=ref, kern=kern)


# --------------------------------------------------------------------------
# Pure-JAX f32 reference (correctness check only)
# --------------------------------------------------------------------------
def _ref_forward(x_nchw, params):
    pf = params['ref']
    dn = ('NHWC', 'HWIO', 'NHWC')
    x = x_nchw.transpose(0, 2, 3, 1)

    def bn(h, s, b):
        return h * s.reshape(1, 1, 1, -1) + b.reshape(1, 1, 1, -1)

    h = lax.conv_general_dilated(x, pf['w1'], (1, 1), 'VALID', dimension_numbers=dn)
    h = jax.nn.relu(bn(h, pf['s1'], pf['b1']))
    h = lax.conv_general_dilated(h, pf['w2'], (1, 1), 'SAME', dimension_numbers=dn)
    h = jax.nn.relu(bn(h, pf['s2'], pf['b2']))
    h = lax.conv_general_dilated(h, pf['w3'], (1, 1), 'VALID', dimension_numbers=dn)
    h = bn(h, pf['s3'], pf['b3'])
    y = jax.nn.relu(h + x)
    return y.transpose(0, 3, 1, 2)


# --------------------------------------------------------------------------
if __name__ == "__main__":
    key = jax.random.PRNGKey(0)
    kp, kx = jax.random.split(key)

    B, H, W = 8, 16, 16
    inplanes = planes = 128                 # width = 128 (base_width=64)
    params = init_params(kp, inplanes, planes)
    x = jax.random.normal(kx, (B, inplanes, H, W), jnp.float32)

    fwd = jax.jit(bottleneck_forward)
    out = jax.block_until_ready(fwd(x, params))

    ref = _ref_forward(x, params)
    err = float(jnp.max(jnp.abs(out - ref)))
    denom = max(1.0, float(jnp.max(jnp.abs(ref))))

    assert out.shape == (B, planes, H, W)
    assert bool(jnp.all(jnp.isfinite(out)))
    assert err / denom < 3e-2, f"mismatch vs reference: abs={err} rel={err / denom}"
    print("KERNEL_OK")
</pallas_src>

<mosaic_0001>
module attributes {stable_mosaic.version = 11 : i64} {
  func.func @_bottleneck_kernel(%arg0: i32, %arg1: memref<4x16x16x128xbf16, #tpu.memory_space<vmem>>, %arg2: memref<128x128xbf16, #tpu.memory_space<vmem>>, %arg3: memref<1x128xf32, #tpu.memory_space<vmem>>, %arg4: memref<1x128xf32, #tpu.memory_space<vmem>>, %arg5: memref<3x384x128xbf16, #tpu.memory_space<vmem>>, %arg6: memref<1x128xf32, #tpu.memory_space<vmem>>, %arg7: memref<1x128xf32, #tpu.memory_space<vmem>>, %arg8: memref<128x128xbf16, #tpu.memory_space<vmem>>, %arg9: memref<1x128xf32, #tpu.memory_space<vmem>>, %arg10: memref<1x128xf32, #tpu.memory_space<vmem>>, %arg11: memref<4x16x16x128xbf16, #tpu.memory_space<vmem>>, %arg12: memref<4x18x16x384xbf16, #tpu.memory_space<vmem>>) attributes {dimension_semantics = [#tpu.dimension_semantics<parallel>], iteration_bounds = array<i64: 2>, scalar_prefetch = 0 : i64, scratch_operands = 1 : i64, tpu.core_type = #tpu.core_type<tc>, window_params = [{transform_indices = @transform_0, window_bounds = array<i64: 4, 16, 16, 128>}, {pipeline_mode = #tpu.pipeline_mode<synchronous>, transform_indices = @transform_1, window_bounds = array<i64: 128, 128>}, {pipeline_mode = #tpu.pipeline_mode<synchronous>, transform_indices = @transform_2, window_bounds = array<i64: 1, 128>}, {pipeline_mode = #tpu.pipeline_mode<synchronous>, transform_indices = @transform_3, window_bounds = array<i64: 1, 128>}, {pipeline_mode = #tpu.pipeline_mode<synchronous>, transform_indices = @transform_4, window_bounds = array<i64: 3, 384, 128>}, {pipeline_mode = #tpu.pipeline_mode<synchronous>, transform_indices = @transform_5, window_bounds = array<i64: 1, 128>}, {pipeline_mode = #tpu.pipeline_mode<synchronous>, transform_indices = @transform_6, window_bounds = array<i64: 1, 128>}, {pipeline_mode = #tpu.pipeline_mode<synchronous>, transform_indices = @transform_7, window_bounds = array<i64: 128, 128>}, {pipeline_mode = #tpu.pipeline_mode<synchronous>, transform_indices = @transform_8, window_bounds = array<i64: 1, 128>}, {pipeline_mode = #tpu.pipeline_mode<synchronous>, transform_indices = @transform_9, window_bounds = array<i64: 1, 128>}, {transform_indices = @transform_10, window_bounds = array<i64: 4, 16, 16, 128>}]} {
    %c0 = arith.constant 0 : index
    %c0_0 = arith.constant 0 : index
    %c0_1 = arith.constant 0 : index
    %c0_2 = arith.constant 0 : index
    %0 = vector.load %arg1[%c0, %c0_0, %c0_1, %c0_2] : memref<4x16x16x128xbf16, #tpu.memory_space<vmem>>, vector<4x16x16x128xbf16>
    %1 = vector.shape_cast %0 : vector<4x16x16x128xbf16> to vector<1024x128xbf16>
    %c0_3 = arith.constant 0 : index
    %c0_4 = arith.constant 0 : index
    %2 = vector.load %arg2[%c0_3, %c0_4] : memref<128x128xbf16, #tpu.memory_space<vmem>>, vector<128x128xbf16>
    %cst = arith.constant dense<0.000000e+00> : vector<1024x128xf32>
    %3 = tpu.matmul %1, %2, %cst {dimension_numbers = #tpu.dot_dimension_numbers<[1], [0], [0], [1], [0, 0, 1, 1], [], []>} : vector<1024x128xbf16>, vector<128x128xbf16>, vector<1024x128xf32> -> vector<1024x128xf32>
    %c0_5 = arith.constant 0 : index
    %c0_6 = arith.constant 0 : index
    %4 = vector.load %arg3[%c0_5, %c0_6] : memref<1x128xf32, #tpu.memory_space<vmem>>, vector<1x128xf32>
    %5 = vector.broadcast %4 : vector<1x128xf32> to vector<1024x128xf32>
    %6 = arith.mulf %3, %5 : vector<1024x128xf32>
    %c0_7 = arith.constant 0 : index
    %c0_8 = arith.constant 0 : index
    %7 = vector.load %arg4[%c0_7, %c0_8] : memref<1x128xf32, #tpu.memory_space<vmem>>, vector<1x128xf32>
    %8 = vector.broadcast %7 : vector<1x128xf32> to vector<1024x128xf32>
    %9 = arith.addf %6, %8 : vector<1024x128xf32>
    %cst_9 = arith.constant 0.000000e+00 : f32
    %10 = vector.broadcast %cst_9 : f32 to vector<1024x128xf32>
    %11 = arith.maximumf %9, %10 : vector<1024x128xf32>
    %12 = vector.shape_cast %11 : vector<1024x128xf32> to vector<4x16x16x128xf32>
    %cst_10 = arith.constant 0.000000e+00 : bf16
    %13 = vector.broadcast %cst_10 : bf16 to vector<4x1x16x384xbf16>
    %c0_11 = arith.constant 0 : index
    %c0_12 = arith.constant 0 : index
    %c0_13 = arith.constant 0 : index
    %c0_14 = arith.constant 0 : index
    %14 = vector.load %arg12[%c0_11, %c0_12, %c0_13, %c0_14] : memref<4x18x16x384xbf16, #tpu.memory_space<vmem>>, vector<4x1x16x384xbf16>
    tpu.vector_store %arg12[%c0_11, %c0_12, %c0_13, %c0_14], %13 {strides = array<i32>} : memref<4x18x16x384xbf16, #tpu.memory_space<vmem>>, vector<4x1x16x384xbf16>,
    %c0_15 = arith.constant 0 : index
    %c17 = arith.constant 17 : index
    %c0_16 = arith.constant 0 : index
    %c0_17 = arith.constant 0 : index
    %15 = vector.load %arg12[%c0_15, %c17, %c0_16, %c0_17] : memref<4x18x16x384xbf16, #tpu.memory_space<vmem>>, vector<4x1x16x384xbf16>
    tpu.vector_store %arg12[%c0_15, %c17, %c0_16, %c0_17], %13 {strides = array<i32>} : memref<4x18x16x384xbf16, #tpu.memory_space<vmem>>, vector<4x1x16x384xbf16>,
    %16 = tpu.iota {dimensions = array<i32: 2>} : vector<1x1x16x128xi32>
    %c0_i32 = arith.constant 0 : i32
    %17 = vector.broadcast %c0_i32 : i32 to vector<1x1x16x128xi32>
    %18 = arith.cmpi eq, %16, %17 : vector<1x1x16x128xi32>
    %c1_i32 = arith.constant 1 : i32
    %19 = tpu.dynamic_rotate %12 by %c1_i32 dim 2 : vector<4x16x16x128xf32>, i32 -> vector<4x16x16x128xf32>
    %cst_18 = arith.constant 0.000000e+00 : f32
    %20 = vector.shape_cast %18 : vector<1x1x16x128xi1> to vector<1x1x16x128xi1>
    %21 = vector.broadcast %20 : vector<1x1x16x128xi1> to vector<4x16x16x128xi1>
    %22 = vector.broadcast %cst_18 : f32 to vector<4x16x16x128xf32>
    %23 = arith.select %21, %22, %19 : vector<4x16x16x128xi1>, vector<4x16x16x128xf32>
    %c15_i32 = arith.constant 15 : i32
    %24 = vector.broadcast %c15_i32 : i32 to vector<1x1x16x128xi32>
    %25 = arith.cmpi eq, %16, %24 : vector<1x1x16x128xi32>
    %c15_i32_19 = arith.constant 15 : i32
    %26 = tpu.dynamic_rotate %12 by %c15_i32_19 dim 2 : vector<4x16x16x128xf32>, i32 -> vector<4x16x16x128xf32>
    %cst_20 = arith.constant 0.000000e+00 : f32
    %27 = vector.shape_cast %25 : vector<1x1x16x128xi1> to vector<1x1x16x128xi1>
    %28 = vector.broadcast %27 : vector<1x1x16x128xi1> to vector<4x16x16x128xi1>
    %29 = vector.broadcast %cst_20 : f32 to vector<4x16x16x128xf32>
    %30 = arith.select %28, %29, %26 : vector<4x16x16x128xi1>, vector<4x16x16x128xf32>
    %31 = arith.truncf %23 : vector<4x16x16x128xf32> to vector<4x16x16x128xbf16>
    %c0_21 = arith.constant 0 : index
    %c1 = arith.constant 1 : index
    %c0_22 = arith.constant 0 : index
    %c0_23 = arith.constant 0 : index
    %32 = vector.load %arg12[%c0_21, %c1, %c0_22, %c0_23] : memref<4x18x16x384xbf16, #tpu.memory_space<vmem>>, vector<4x16x16x128xbf16>
    tpu.vector_store %arg12[%c0_21, %c1, %c0_22, %c0_23], %31 {strides = array<i32>} : memref<4x18x16x384xbf16, #tpu.memory_space<vmem>>, vector<4x16x16x128xbf16>,
    %33 = arith.truncf %12 : vector<4x16x16x128xf32> to vector<4x16x16x128xbf16>
    %c0_24 = arith.constant 0 : index
    %c1_25 = arith.constant 1 : index
    %c0_26 = arith.constant 0 : index
    %c128 = arith.constant 128 : index
    %34 = vector.load %arg12[%c0_24, %c1_25, %c0_26, %c128] : memref<4x18x16x384xbf16, #tpu.memory_space<vmem>>, vector<4x16x16x128xbf16>
    tpu.vector_store %arg12[%c0_24, %c1_25, %c0_26, %c128], %33 {strides = array<i32>} : memref<4x18x16x384xbf16, #tpu.memory_space<vmem>>, vector<4x16x16x128xbf16>,
    %35 = arith.truncf %30 : vector<4x16x16x128xf32> to vector<4x16x16x128xbf16>
    %c0_27 = arith.constant 0 : index
    %c1_28 = arith.constant 1 : index
    %c0_29 = arith.constant 0 : index
    %c256 = arith.constant 256 : index
    %36 = vector.load %arg12[%c0_27, %c1_28, %c0_29, %c256] : memref<4x18x16x384xbf16, #tpu.memory_space<vmem>>, vector<4x16x16x128xbf16>
    tpu.vector_store %arg12[%c0_27, %c1_28, %c0_29, %c256], %35 {strides = array<i32>} : memref<4x18x16x384xbf16, #tpu.memory_space<vmem>>, vector<4x16x16x128xbf16>,
    %c0_30 = arith.constant 0 : index
    %c0_31 = arith.constant 0 : index
    %c0_32 = arith.constant 0 : index
    %c0_33 = arith.constant 0 : index
    %37 = vector.load %arg12[%c0_30, %c0_31, %c0_32, %c0_33] : memref<4x18x16x384xbf16, #tpu.memory_space<vmem>>, vector<4x16x16x384xbf16>
    %38 = vector.shape_cast %37 : vector<4x16x16x384xbf16> to vector<1024x384xbf16>
    %c0_34 = arith.constant 0 : index
    %c0_35 = arith.constant 0 : index
    %c0_36 = arith.constant 0 : index
    %39 = vector.load %arg5[%c0_34, %c0_35, %c0_36] : memref<3x384x128xbf16, #tpu.memory_space<vmem>>, vector<1x384x128xbf16>
    %40 = vector.shape_cast %39 : vector<1x384x128xbf16> to vector<384x128xbf16>
    %cst_37 = arith.constant dense<0.000000e+00> : vector<1024x128xf32>
    %41 = tpu.matmul %38, %40, %cst_37 {dimension_numbers = #tpu.dot_dimension_numbers<[1], [0], [0], [1], [0, 0, 1, 1], [], []>} : vector<1024x384xbf16>, vector<384x128xbf16>, vector<1024x128xf32> -> vector<1024x128xf32>
    %c0_38 = arith.constant 0 : index
    %c1_39 = arith.constant 1 : index
    %c0_40 = arith.constant 0 : index
    %c0_41 = arith.constant 0 : index
    %42 = vector.load %arg12[%c0_38, %c1_39, %c0_40, %c0_41] : memref<4x18x16x384xbf16, #tpu.memory_space<vmem>>, vector<4x16x16x384xbf16>
    %43 = vector.shape_cast %42 : vector<4x16x16x384xbf16> to vector<1024x384xbf16>
    %c1_42 = arith.constant 1 : index
    %c0_43 = arith.constant 0 : index
    %c0_44 = arith.constant 0 : index
    %44 = vector.load %arg5[%c1_42, %c0_43, %c0_44] : memref<3x384x128xbf16, #tpu.memory_space<vmem>>, vector<1x384x128xbf16>
    %45 = vector.shape_cast %44 : vector<1x384x128xbf16> to vector<384x128xbf16>
    %cst_45 = arith.constant dense<0.000000e+00> : vector<1024x128xf32>
    %46 = tpu.matmul %43, %45, %cst_45 {dimension_numbers = #tpu.dot_dimension_numbers<[1], [0], [0], [1], [0, 0, 1, 1], [], []>} : vector<1024x384xbf16>, vector<384x128xbf16>, vector<1024x128xf32> -> vector<1024x128xf32>
    %47 = arith.addf %41, %46 : vector<1024x128xf32>
    %c0_46 = arith.constant 0 : index
    %c2 = arith.constant 2 : index
    %c0_47 = arith.constant 0 : index
    %c0_48 = arith.constant 0 : index
    %48 = vector.load %arg12[%c0_46, %c2, %c0_47, %c0_48] : memref<4x18x16x384xbf16, #tpu.memory_space<vmem>>, vector<4x16x16x384xbf16>
    %49 = vector.shape_cast %48 : vector<4x16x16x384xbf16> to vector<1024x384xbf16>
    %c2_49 = arith.constant 2 : index
    %c0_50 = arith.constant 0 : index
    %c0_51 = arith.constant 0 : index
    %50 = vector.load %arg5[%c2_49, %c0_50, %c0_51] : memref<3x384x128xbf16, #tpu.memory_space<vmem>>, vector<1x384x128xbf16>
    %51 = vector.shape_cast %50 : vector<1x384x128xbf16> to vector<384x128xbf16>
    %cst_52 = arith.constant dense<0.000000e+00> : vector<1024x128xf32>
    %52 = tpu.matmul %49, %51, %cst_52 {dimension_numbers = #tpu.dot_dimension_numbers<[1], [0], [0], [1], [0, 0, 1, 1], [], []>} : vector<1024x384xbf16>, vector<384x128xbf16>, vector<1024x128xf32> -> vector<1024x128xf32>
    %53 = arith.addf %47, %52 : vector<1024x128xf32>
    %c0_53 = arith.constant 0 : index
    %c0_54 = arith.constant 0 : index
    %54 = vector.load %arg6[%c0_53, %c0_54] : memref<1x128xf32, #tpu.memory_space<vmem>>, vector<1x128xf32>
    %55 = vector.broadcast %54 : vector<1x128xf32> to vector<1024x128xf32>
    %56 = arith.mulf %53, %55 : vector<1024x128xf32>
    %c0_55 = arith.constant 0 : index
    %c0_56 = arith.constant 0 : index
    %57 = vector.load %arg7[%c0_55, %c0_56] : memref<1x128xf32, #tpu.memory_space<vmem>>, vector<1x128xf32>
    %58 = vector.broadcast %57 : vector<1x128xf32> to vector<1024x128xf32>
    %59 = arith.addf %56, %58 : vector<1024x128xf32>
    %cst_57 = arith.constant 0.000000e+00 : f32
    %60 = vector.broadcast %cst_57 : f32 to vector<1024x128xf32>
    %61 = arith.maximumf %59, %60 : vector<1024x128xf32>
    %62 = arith.truncf %61 : vector<1024x128xf32> to vector<1024x128xbf16>
    %c0_58 = arith.constant 0 : index
    %c0_59 = arith.constant 0 : index
    %63 = vector.load %arg8[%c0_58, %c0_59] : memref<128x128xbf16, #tpu.memory_space<vmem>>, vector<128x128xbf16>
    %cst_60 = arith.constant dense<0.000000e+00> : vector<1024x128xf32>
    %64 = tpu.matmul %62, %63, %cst_60 {dimension_numbers = #tpu.dot_dimension_numbers<[1], [0], [0], [1], [0, 0, 1, 1], [], []>} : vector<1024x128xbf16>, vector<128x128xbf16>, vector<1024x128xf32> -> vector<1024x128xf32>
    %c0_61 = arith.constant 0 : index
    %c0_62 = arith.constant 0 : index
    %65 = vector.load %arg9[%c0_61, %c0_62] : memref<1x128xf32, #tpu.memory_space<vmem>>, vector<1x128xf32>
    %66 = vector.broadcast %65 : vector<1x128xf32> to vector<1024x128xf32>
    %67 = arith.mulf %64, %66 : vector<1024x128xf32>
    %c0_63 = arith.constant 0 : index
    %c0_64 = arith.constant 0 : index
    %68 = vector.load %arg10[%c0_63, %c0_64] : memref<1x128xf32, #tpu.memory_space<vmem>>, vector<1x128xf32>
    %69 = vector.broadcast %68 : vector<1x128xf32> to vector<1024x128xf32>
    %70 = arith.addf %67, %69 : vector<1024x128xf32>
    %c0_65 = arith.constant 0 : index
    %c0_66 = arith.constant 0 : index
    %c0_67 = arith.constant 0 : index
    %c0_68 = arith.constant 0 : index
    %71 = vector.load %arg1[%c0_65, %c0_66, %c0_67, %c0_68] : memref<4x16x16x128xbf16, #tpu.memory_space<vmem>>, vector<4x16x16x128xbf16>
    %72 = vector.shape_cast %71 : vector<4x16x16x128xbf16> to vector<1024x128xbf16>
    %73 = arith.extf %72 : vector<1024x128xbf16> to vector<1024x128xf32>
    %74 = arith.addf %70, %73 : vector<1024x128xf32>
    %cst_69 = arith.constant 0.000000e+00 : f32
    %75 = vector.broadcast %cst_69 : f32 to vector<1024x128xf32>
    %76 = arith.maximumf %74, %75 : vector<1024x128xf32>
    %77 = vector.shape_cast %76 : vector<1024x128xf32> to vector<4x16x16x128xf32>
    %78 = arith.truncf %77 : vector<4x16x16x128xf32> to vector<4x16x16x128xbf16>
    %c0_70 = arith.constant 0 : index
    %c0_71 = arith.constant 0 : index
    %c0_72 = arith.constant 0 : index
    %c0_73 = arith.constant 0 : index
    %79 = vector.load %arg11[%c0_70, %c0_71, %c0_72, %c0_73] : memref<4x16x16x128xbf16, #tpu.memory_space<vmem>>, vector<4x16x16x128xbf16>
    tpu.vector_store %arg11[%c0_70, %c0_71, %c0_72, %c0_73], %78 {strides = array<i32>} : memref<4x16x16x128xbf16, #tpu.memory_space<vmem>>, vector<4x16x16x128xbf16>,
    return
  }
  func.func @transform_0(%arg0: i32) -> (i32, i32, i32, i32) {
    %c0_i32 = arith.constant 0 : i32
    %c0_i32_0 = arith.constant 0 : i32
    %c0_i32_1 = arith.constant 0 : i32
    %c0_i32_2 = arith.constant 0 : i32
    return %arg0, %c0_i32, %c0_i32_0, %c0_i32_1 : i32, i32, i32, i32
  }
  func.func @transform_1(%arg0: i32) -> (i32, i32) {
    %c0_i32 = arith.constant 0 : i32
    %c0_i32_0 = arith.constant 0 : i32
    %c0_i32_1 = arith.constant 0 : i32
    return %c0_i32, %c0_i32_0 : i32, i32
  }
  func.func @transform_2(%arg0: i32) -> (i32, i32) {
    %c0_i32 = arith.constant 0 : i32
    %c0_i32_0 = arith.constant 0 : i32
    %c0_i32_1 = arith.constant 0 : i32
    return %c0_i32, %c0_i32_0 : i32, i32
  }
  func.func @transform_3(%arg0: i32) -> (i32, i32) {
    %c0_i32 = arith.constant 0 : i32
    %c0_i32_0 = arith.constant 0 : i32
    %c0_i32_1 = arith.constant 0 : i32
    return %c0_i32, %c0_i32_0 : i32, i32
  }
  func.func @transform_4(%arg0: i32) -> (i32, i32, i32) {
    %c0_i32 = arith.constant 0 : i32
    %c0_i32_0 = arith.constant 0 : i32
    %c0_i32_1 = arith.constant 0 : i32
    %c0_i32_2 = arith.constant 0 : i32
    return %c0_i32, %c0_i32_0, %c0_i32_1 : i32, i32, i32
  }
  func.func @transform_5(%arg0: i32) -> (i32, i32) {
    %c0_i32 = arith.constant 0 : i32
    %c0_i32_0 = arith.constant 0 : i32
    %c0_i32_1 = arith.constant 0 : i32
    return %c0_i32, %c0_i32_0 : i32, i32
  }
  func.func @transform_6(%arg0: i32) -> (i32, i32) {
    %c0_i32 = arith.constant 0 : i32
    %c0_i32_0 = arith.constant 0 : i32
    %c0_i32_1 = arith.constant 0 : i32
    return %c0_i32, %c0_i32_0 : i32, i32
  }
  func.func @transform_7(%arg0: i32) -> (i32, i32) {
    %c0_i32 = arith.constant 0 : i32
    %c0_i32_0 = arith.constant 0 : i32
    %c0_i32_1 = arith.constant 0 : i32
    return %c0_i32, %c0_i32_0 : i32, i32
  }
  func.func @transform_8(%arg0: i32) -> (i32, i32) {
    %c0_i32 = arith.constant 0 : i32
    %c0_i32_0 = arith.constant 0 : i32
    %c0_i32_1 = arith.constant 0 : i32
    return %c0_i32, %c0_i32_0 : i32, i32
  }
  func.func @transform_9(%arg0: i32) -> (i32, i32) {
    %c0_i32 = arith.constant 0 : i32
    %c0_i32_0 = arith.constant 0 : i32
    %c0_i32_1 = arith.constant 0 : i32
    return %c0_i32, %c0_i32_0 : i32, i32
  }
  func.func @transform_10(%arg0: i32) -> (i32, i32, i32, i32) {
    %c0_i32 = arith.constant 0 : i32
    %c0_i32_0 = arith.constant 0 : i32
    %c0_i32_1 = arith.constant 0 : i32
    %c0_i32_2 = arith.constant 0 : i32
    return %arg0, %c0_i32, %c0_i32_0, %c0_i32_1 : i32, i32, i32, i32
  }
}

</mosaic_0001>

<llo_original>
// kernel: bottleneck_forward.1
$region0: #{bottleneck_forward.1}
  #allocation0 [shape = 'u32[]', space=smem, size = 0x4, offset = 0x4, fixed_abs, tag = 'smem constant byte address 0x4 - core index']
  #allocation1 [shape = 'u32[72,128]{1,0:T(1,128)}', space=vmem, size = 0x9000, scoped, tag = 'internal scratch']
  #allocation2 [shape = 'bf16[4,18,16,384]{3,2,1,0:T(8,128)(2,1)}', space=vmem, size = 0xd8000, scoped, tag = 'scratch operand']
  %s0 = inlined_call_operand.vmem [shape: bf16[8,16,16,128], index: 0, kind: input, shape index: {}]
  %s1 = inlined_call_operand.vmem [shape: bf16[128,128], index: 1, kind: input, shape index: {}]
  %s2 = inlined_call_operand.vmem [shape: f32[1,128], index: 2, kind: input, shape index: {}]
  %s3 = inlined_call_operand.vmem [shape: f32[1,128], index: 3, kind: input, shape index: {}]
  %s4 = inlined_call_operand.vmem [shape: bf16[3,384,128], index: 4, kind: input, shape index: {}]
  %s5 = inlined_call_operand.vmem [shape: f32[1,128], index: 5, kind: input, shape index: {}]
  %s6 = inlined_call_operand.vmem [shape: f32[1,128], index: 6, kind: input, shape index: {}]
  %s7 = inlined_call_operand.vmem [shape: bf16[128,128], index: 7, kind: input, shape index: {}]
  %s8 = inlined_call_operand.vmem [shape: f32[1,128], index: 8, kind: input, shape index: {}]
  %s9 = inlined_call_operand.vmem [shape: f32[1,128], index: 9, kind: input, shape index: {}]
  %s10 = inlined_call_operand.vmem [shape: bf16[8,16,16,128], index: 10, kind: output, shape index: {}]
  %s11 = sld [smem:[#allocation0]]
  $region73: #{bottleneck_forward.1} parent=0
    _
  %s13 = ssub.s32 1, %s11
  %s14 = scalar_select 0, %s13, %s11
  loop: start=0, step=1, limit=4
  $region2: #{bottleneck_forward.1} parent=0 // loop_pre_header
    _
  $region3: #{bottleneck_forward.1} parent=0 // loop_header
    %s16 = sphi 0, %s20
    %p17 = scmp.ge.s32.totalorder %s16, 4
    %s26 = sphi 0, %s28
    %s29 = sphi 0, %s26
    %s30 = sphi 0, %s29
    %s46 = sphi 0, %s30
    %s50 = sphi 0, %s50
    %s52 = sphi 0, %s50
    %s53 = sphi 0, %s52
    %s67 = sphi 0, %s53
    %s71 = sphi 0, %s71
    %s73 = sphi 0, %s71
    %s74 = sphi 0, %s73
    %s88 = sphi 0, %s74
    %s92 = sphi 0, %s92
    %s94 = sphi 0, %s92
    %s95 = sphi 0, %s94
    %s109 = sphi 0, %s95
    %s113 = sphi 0, %s113
    %s115 = sphi 0, %s113
    %s116 = sphi 0, %s115
    %s130 = sphi 0, %s116
    %s134 = sphi 0, %s134
    %s136 = sphi 0, %s134
    %s137 = sphi 0, %s136
    %s151 = sphi 0, %s137
    %s155 = sphi 0, %s155
    %s157 = sphi 0, %s155
    %s158 = sphi 0, %s157
    %s172 = sphi 0, %s158
    %s176 = sphi 0, %s176
    %s178 = sphi 0, %s176
    %s179 = sphi 0, %s178
    %s193 = sphi 0, %s179
    %s197 = sphi 0, %s197
    %s199 = sphi 0, %s197
    %s200 = sphi 0, %s199
    %s214 = sphi 0, %s200
    %s218 = sphi 0, %s218
    %s220 = sphi 0, %s218
    %s221 = sphi 0, %s220
    %s235 = sphi 0, %s221
    %s241 = sphi 0, %s243
    %s244 = sphi 0, %s241
    %s245 = sphi 0, %s244
    %s261 = sphi 0, %s245
  $region4: #{bottleneck_forward.1} parent=0 // loop_header_branch
    %19 = sbr.rel (%p17) target = $region8
  $region5: #{bottleneck_forward.1} parent=0 // loop_body
    %s21 = ssub.s32 %s16, 1
    %s22 = ssub.s32 %s16, 2
    %s23 = sadd.s32 %s16, 1
    %s24 = ssub.s32 %s16, %s23
    %p25 = scmp.eq.s32.totalorder %s24, 0
    %s27 = sadd.s32 %s26, 1
    %s28 = scalar_select %p25, %s26, %s27
    %p31 = pneg %p25
    %p32 = scmp.eq.s32.totalorder %s16, 1
    %p33 = por %p31, %p32
    %p34 = scmp.ne.s32.totalorder %s26, %s29
    %p35 = scmp.eq.s32.totalorder %s16, 0
    %p36 = por %p34, %p35
    %p37 = scmp.ne.s32.totalorder %s26, %s29
    %p38 = scmp.eq.s32.totalorder %s21, 1
    %p39 = por %p37, %p38
    %p40 = scmp.ne.s32.totalorder %s29, %s30
    %p41 = scmp.eq.s32.totalorder %s21, 0
    %p42 = por %p40, %p41
    %p43 = scmp.ne.s32.totalorder %s29, %s30
    %p44 = scmp.eq.s32.totalorder %s22, 1
    %p45 = por %p43, %p44
    %p47 = scmp.ne.s32.totalorder %s30, %s46
    %p48 = scmp.eq.s32.totalorder %s22, 0
    %p49 = por %p47, %p48
    %s51 = sadd.s32 %s50, 1
    %p54 = scmp.eq.s32.totalorder %s16, 1
    %p55 = scmp.ne.s32.totalorder %s50, %s52
    %p56 = scmp.eq.s32.totalorder %s16, 0
    %p57 = por %p55, %p56
    %p58 = scmp.ne.s32.totalorder %s50, %s52
    %p59 = scmp.eq.s32.totalorder %s21, 1
    %p60 = por %p58, %p59
    %p61 = scmp.ne.s32.totalorder %s52, %s53
    %p62 = scmp.eq.s32.totalorder %s21, 0
    %p63 = por %p61, %p62
    %p64 = scmp.ne.s32.totalorder %s52, %s53
    %p65 = scmp.eq.s32.totalorder %s22, 1
    %p66 = por %p64, %p65
    %p68 = scmp.ne.s32.totalorder %s53, %s67
    %p69 = scmp.eq.s32.totalorder %s22, 0
    %p70 = por %p68, %p69
    %s72 = sadd.s32 %s71, 1
    %p75 = scmp.eq.s32.totalorder %s16, 1
    %p76 = scmp.ne.s32.totalorder %s71, %s73
    %p77 = scmp.eq.s32.totalorder %s16, 0
    %p78 = por %p76, %p77
    %p79 = scmp.ne.s32.totalorder %s71, %s73
    %p80 = scmp.eq.s32.totalorder %s21, 1
    %p81 = por %p79, %p80
    %p82 = scmp.ne.s32.totalorder %s73, %s74
    %p83 = scmp.eq.s32.totalorder %s21, 0
    %p84 = por %p82, %p83
    %p85 = scmp.ne.s32.totalorder %s73, %s74
    %p86 = scmp.eq.s32.totalorder %s22, 1
    %p87 = por %p85, %p86
    %p89 = scmp.ne.s32.totalorder %s74, %s88
    %p90 = scmp.eq.s32.totalorder %s22, 0
    %p91 = por %p89, %p90
    %s93 = sadd.s32 %s92, 1
    %p96 = scmp.eq.s32.totalorder %s16, 1
    %p97 = scmp.ne.s32.totalorder %s92, %s94
    %p98 = scmp.eq.s32.totalorder %s16, 0
    %p99 = por %p97, %p98
    %p100 = scmp.ne.s32.totalorder %s92, %s94
    %p101 = scmp.eq.s32.totalorder %s21, 1
    %p102 = por %p100, %p101
    %p103 = scmp.ne.s32.totalorder %s94, %s95
    %p104 = scmp.eq.s32.totalorder %s21, 0
    %p105 = por %p103, %p104
    %p106 = scmp.ne.s32.totalorder %s94, %s95
    %p107 = scmp.eq.s32.totalorder %s22, 1
    %p108 = por %p106, %p107
    %p110 = scmp.ne.s32.totalorder %s95, %s109
    %p111 = scmp.eq.s32.totalorder %s22, 0
    %p112 = por %p110, %p111
    %s114 = sadd.s32 %s113, 1
    %p117 = scmp.eq.s32.totalorder %s16, 1
    %p118 = scmp.ne.s32.totalorder %s113, %s115
    %p119 = scmp.eq.s32.totalorder %s16, 0
    %p120 = por %p118, %p119
    %p121 = scmp.ne.s32.totalorder %s113, %s115
    %p122 = scmp.eq.s32.totalorder %s21, 1
    %p123 = por %p121, %p122
    %p124 = scmp.ne.s32.totalorder %s115, %s116
    %p125 = scmp.eq.s32.totalorder %s21, 0
    %p126 = por %p124, %p125
    %p127 = scmp.ne.s32.totalorder %s115, %s116
    %p128 = scmp.eq.s32.totalorder %s22, 1
    %p129 = por %p127, %p128
    %p131 = scmp.ne.s32.totalorder %s116, %s130
    %p132 = scmp.eq.s32.totalorder %s22, 0
    %p133 = por %p131, %p132
    %s135 = sadd.s32 %s134, 1
    %p138 = scmp.eq.s32.totalorder %s16, 1
    %p139 = scmp.ne.s32.totalorder %s134, %s136
    %p140 = scmp.eq.s32.totalorder %s16, 0
    %p141 = por %p139, %p140
    %p142 = scmp.ne.s32.totalorder %s134, %s136
    %p143 = scmp.eq.s32.totalorder %s21, 1
    %p144 = por %p142, %p143
    %p145 = scmp.ne.s32.totalorder %s136, %s137
    %p146 = scmp.eq.s32.totalorder %s21, 0
    %p147 = por %p145, %p146
    %p148 = scmp.ne.s32.totalorder %s136, %s137
    %p149 = scmp.eq.s32.totalorder %s22, 1
    %p150 = por %p148, %p149
    %p152 = scmp.ne.s32.totalorder %s137, %s151
    %p153 = scmp.eq.s32.totalorder %s22, 0
    %p154 = por %p152, %p153
    %s156 = sadd.s32 %s155, 1
    %p159 = scmp.eq.s32.totalorder %s16, 1
    %p160 = scmp.ne.s32.totalorder %s155, %s157
    %p161 = scmp.eq.s32.totalorder %s16, 0
    %p162 = por %p160, %p161
    %p163 = scmp.ne.s32.totalorder %s155, %s157
    %p164 = scmp.eq.s32.totalorder %s21, 1
    %p165 = por %p163, %p164
    %p166 = scmp.ne.s32.totalorder %s157, %s158
    %p167 = scmp.eq.s32.totalorder %s21, 0
    %p168 = por %p166, %p167
    %p169 = scmp.ne.s32.totalorder %s157, %s158
    %p170 = scmp.eq.s32.totalorder %s22, 1
    %p171 = por %p169, %p170
    %p173 = scmp.ne.s32.totalorder %s158, %s172
    %p174 = scmp.eq.s32.totalorder %s22, 0
    %p175 = por %p173, %p174
    %s177 = sadd.s32 %s176, 1
    %p180 = scmp.eq.s32.totalorder %s16, 1
    %p181 = scmp.ne.s32.totalorder %s176, %s178
    %p182 = scmp.eq.s32.totalorder %s16, 0
    %p183 = por %p181, %p182
    %p184 = scmp.ne.s32.totalorder %s176, %s178
    %p185 = scmp.eq.s32.totalorder %s21, 1
    %p186 = por %p184, %p185
    %p187 = scmp.ne.s32.totalorder %s178, %s179
    %p188 = scmp.eq.s32.totalorder %s21, 0
    %p189 = por %p187, %p188
    %p190 = scmp.ne.s32.totalorder %s178, %s179
    %p191 = scmp.eq.s32.totalorder %s22, 1
    %p192 = por %p190, %p191
    %p194 = scmp.ne.s32.totalorder %s179, %s193
    %p195 = scmp.eq.s32.totalorder %s22, 0
    %p196 = por %p194, %p195
    %s198 = sadd.s32 %s197, 1
    %p201 = scmp.eq.s32.totalorder %s16, 1
    %p202 = scmp.ne.s32.totalorder %s197, %s199
    %p203 = scmp.eq.s32.totalorder %s16, 0
    %p204 = por %p202, %p203
    %p205 = scmp.ne.s32.totalorder %s197, %s199
    %p206 = scmp.eq.s32.totalorder %s21, 1
    %p207 = por %p205, %p206
    %p208 = scmp.ne.s32.totalorder %s199, %s200
    %p209 = scmp.eq.s32.totalorder %s21, 0
    %p210 = por %p208, %p209
    %p211 = scmp.ne.s32.totalorder %s199, %s200
    %p212 = scmp.eq.s32.totalorder %s22, 1
    %p213 = por %p211, %p212
    %p215 = scmp.ne.s32.totalorder %s200, %s214
    %p216 = scmp.eq.s32.totalorder %s22, 0
    %p217 = por %p215, %p216
    %s219 = sadd.s32 %s218, 1
    %p222 = scmp.eq.s32.totalorder %s16, 1
    %p223 = scmp.ne.s32.totalorder %s218, %s220
    %p224 = scmp.eq.s32.totalorder %s16, 0
    %p225 = por %p223, %p224
    %p226 = scmp.ne.s32.totalorder %s218, %s220
    %p227 = scmp.eq.s32.totalorder %s21, 1
    %p228 = por %p226, %p227
    %p229 = scmp.ne.s32.totalorder %s220, %s221
    %p230 = scmp.eq.s32.totalorder %s21, 0
    %p231 = por %p229, %p230
    %p232 = scmp.ne.s32.totalorder %s220, %s221
    %p233 = scmp.eq.s32.totalorder %s22, 1
    %p234 = por %p232, %p233
    %p236 = scmp.ne.s32.totalorder %s221, %s235
    %p237 = scmp.eq.s32.totalorder %s22, 0
    %p238 = por %p236, %p237
    %s239 = ssub.s32 %s16, %s23
    %p240 = scmp.eq.s32.totalorder %s239, 0
    %s242 = sadd.s32 %s241, 1
    %s243 = scalar_select %p240, %s241, %s242
    %p246 = pneg %p240
    %p247 = scmp.eq.s32.totalorder %s16, 1
    %p248 = por %p246, %p247
    %p249 = scmp.ne.s32.totalorder %s241, %s244
    %p250 = scmp.eq.s32.totalorder %s16, 0
    %p251 = por %p249, %p250
    %p252 = scmp.ne.s32.totalorder %s241, %s244
    %p253 = scmp.eq.s32.totalorder %s21, 1
    %p254 = por %p252, %p253
    %p255 = scmp.ne.s32.totalorder %s244, %s245
    %p256 = scmp.eq.s32.totalorder %s21, 0
    %p257 = por %p255, %p256
    %p258 = scmp.ne.s32.totalorder %s244, %s245
    %p259 = scmp.eq.s32.totalorder %s22, 1
    %p260 = por %p258, %p259
    %p262 = scmp.ne.s32.totalorder %s245, %s261
    %p263 = scmp.eq.s32.totalorder %s22, 0
    %p264 = por %p262, %p263
    %p265 = scmp.le.s32.totalorder 1, %s16
    %p266 = scmp.lt.s32.totalorder %s16, 3
    %p267 = pnand %p265, %p266
    %p268 = pneg %p267
    // Predicated region
    $region9: #{bottleneck_forward.1} parent=5 // pred_check
      _
    $region10: #{bottleneck_forward.1} parent=5 // pred_check_branch
      %270 = sbr.rel (%p267) target = $region12
    $region11: #{bottleneck_forward.1} parent=5 // pred_region
      %s271 = ssub.s32 %s16, 1
      // Predicated region
      $region13: #{bottleneck_forward.1} parent=11 // pred_check
        %p272 = pneg %p63
      $region14: #{bottleneck_forward.1} parent=11 // pred_check_branch
        %274 = sbr.rel (%p272) target = $region16
      $region15: #{bottleneck_forward.1} parent=11 // pred_region
        _
      $region16: #{bottleneck_forward.1} parent=11 // pred_fallthru
        _
      // Predicated region
      $region17: #{bottleneck_forward.1} parent=11 // pred_check
        %p275 = pneg %p84
      $region18: #{bottleneck_forward.1} parent=11 // pred_check_branch
        %277 = sbr.rel (%p275) target = $region20
      $region19: #{bottleneck_forward.1} parent=11 // pred_region
        _
      $region20: #{bottleneck_forward.1} parent=11 // pred_fallthru
        _
      // Predicated region
      $region21: #{bottleneck_forward.1} parent=11 // pred_check
        %p278 = pneg %p105
      $region22: #{bottleneck_forward.1} parent=11 // pred_check_branch
        %280 = sbr.rel (%p278) target = $region24
      $region23: #{bottleneck_forward.1} parent=11 // pred_region
        _
      $region24: #{bottleneck_forward.1} parent=11 // pred_fallthru
        _
      // Predicated region
      $region25: #{bottleneck_forward.1} parent=11 // pred_check
        %p281 = pneg %p126
      $region26: #{bottleneck_forward.1} parent=11 // pred_check_branch
        %283 = sbr.rel (%p281) target = $region28
      $region27: #{bottleneck_forward.1} parent=11 // pred_region
        _
      $region28: #{bottleneck_forward.1} parent=11 // pred_fallthru
        _
      // Predicated region
      $region29: #{bottleneck_forward.1} parent=11 // pred_check
        %p284 = pneg %p147
      $region30: #{bottleneck_forward.1} parent=11 // pred_check_branch
        %286 = sbr.rel (%p284) target = $region32
      $region31: #{bottleneck_forward.1} parent=11 // pred_region
        _
      $region32: #{bottleneck_forward.1} parent=11 // pred_fallthru
        _
      // Predicated region
      $region33: #{bottleneck_forward.1} parent=11 // pred_check
        %p287 = pneg %p168
      $region34: #{bottleneck_forward.1} parent=11 // pred_check_branch
        %289 = sbr.rel (%p287) target = $region36
      $region35: #{bottleneck_forward.1} parent=11 // pred_region
        _
      $region36: #{bottleneck_forward.1} parent=11 // pred_fallthru
        _
      // Predicated region
      $region37: #{bottleneck_forward.1} parent=11 // pred_check
        %p290 = pneg %p189
      $region38: #{bottleneck_forward.1} parent=11 // pred_check_branch
        %292 = sbr.rel (%p290) target = $region40
      $region39: #{bottleneck_forward.1} parent=11 // pred_region
        _
      $region40: #{bottleneck_forward.1} parent=11 // pred_fallthru
        _
      // Predicated region
      $region41: #{bottleneck_forward.1} parent=11 // pred_check
        %p293 = pneg %p210
      $region42: #{bottleneck_forward.1} parent=11 // pred_check_branch
        %295 = sbr.rel (%p293) target = $region44
      $region43: #{bottleneck_forward.1} parent=11 // pred_region
        _
      $region44: #{bottleneck_forward.1} parent=11 // pred_fallthru
        _
      // Predicated region
      $region45: #{bottleneck_forward.1} parent=11 // pred_check
        %p296 = pneg %p231
      $region46: #{bottleneck_forward.1} parent=11 // pred_check_branch
        %298 = sbr.rel (%p296) target = $region48
      $region47: #{bottleneck_forward.1} parent=11 // pred_region
        _
      $region48: #{bottleneck_forward.1} parent=11 // pred_fallthru
        _
    $region12: #{bottleneck_forward.1} parent=5 // pred_fallthru
      _
    %p299 = scmp.lt.s32.totalorder %s16, 2
    // Predicated region
    $region49: #{bottleneck_forward.1} parent=5 // pred_check
      %p300 = pneg %p299
    $region50: #{bottleneck_forward.1} parent=5 // pred_check_branch
      %302 = sbr.rel (%p300) target = $region52
    $region51: #{bottleneck_forward.1} parent=5 // pred_region
      // Predicated region
      $region53: #{bottleneck_forward.1} parent=51 // pred_check
        %p303 = pneg %p36
      $region54: #{bottleneck_forward.1} parent=51 // pred_check_branch
        %305 = sbr.rel (%p303) target = $region56
      $region55: #{bottleneck_forward.1} parent=51 // pred_region
        %s306 = smul.u32 4, %s16
        %p307 = scmp.lt.s32.totalorder %s306, 7
        %s308 = scalar_select %p307, %s306, 7
        %s309 = smul.addr %s308, 32
        %s310 = smul.addr %s309, 4
        %s311 = scalar_lea.vmem %s0, %s310
        %s312 = smul.u32 4, %s16
      $region56: #{bottleneck_forward.1} parent=51 // pred_fallthru
        _
    $region52: #{bottleneck_forward.1} parent=5 // pred_fallthru
      _
    %p313 = scmp.le.s32.totalorder 1, %s16
    %p314 = scmp.lt.s32.totalorder %s16, 3
    %p315 = pnand %p313, %p314
    %p316 = pneg %p315
    // Predicated region
    $region57: #{bottleneck_forward.1} parent=5 // pred_check
      _
    $region58: #{bottleneck_forward.1} parent=5 // pred_check_branch
      %318 = sbr.rel (%p315) target = $region60
    $region59: #{bottleneck_forward.1} parent=5 // pred_region
      %s319 = ssub.s32 %s16, 1
      %s320 = smul.u32 4, %s21
      %p321 = scmp.lt.s32.totalorder %s320, 7
      %s322 = scalar_select %p321, %s320, 7
      %s323 = smul.addr %s322, 32
      %s324 = smul.addr %s323, 4
      %s325 = scalar_lea.vmem %s0, %s324
      %p326 = pneg %p42
      %p327 = pneg %p39
      %p328 = pneg %p63
      %p329 = pneg %p60
      %p330 = pneg %p84
      %p331 = pneg %p81
      %p332 = pneg %p105
      %p333 = pneg %p102
      %p334 = pneg %p126
      %p335 = pneg %p123
      %p336 = pneg %p147
      %p337 = pneg %p144
      %p338 = pneg %p168
      %p339 = pneg %p165
      %p340 = pneg %p189
      %p341 = pneg %p186
      %p342 = pneg %p210
      %p343 = pneg %p207
      %p344 = pneg %p231
      %p345 = pneg %p228
      %p346 = pneg %p257
      %p347 = pneg %p254
      %s348 = smul.u32 4, %s21
      %p349 = scmp.lt.s32.totalorder %s348, 7
      %s350 = scalar_select %p349, %s348, 7
      %s351 = smul.addr %s350, 32
      %s352 = smul.addr %s351, 4
      %s353 = scalar_lea.vmem %s10, %s352
      %s354 = smul.u32 4, %s21
      %p355 = scmp.lt.s32.totalorder %s354, 7
      %s356 = scalar_select %p355, %s354, 7
      %s357 = smul.addr %s356, 32
      %s358 = smul.addr %s357, 4
      %s359 = scalar_lea.vmem %s0, %s358
      %s360 = smul.u32 4, %s21
      %s361 = smul.u32 4, %s21
      %p362 = scmp.lt.s32.totalorder %s361, 7
      %s363 = scalar_select %p362, %s361, 7
      %s364 = smul.addr %s363, 32
      %s365 = smul.addr %s364, 4
      %s366 = scalar_lea.vmem %s10, %s365
      %s367 = smul.u32 4, %s21
      %v369 = vld [vmem:[%s359] sm:$0xf]
      %v370 = vld [vmem:[%s359 + $0x4] sm:$0xf]
      %v371 = vld [vmem:[%s359 + $0x8] sm:$0xf]
      %v372 = vld [vmem:[%s359 + $0xc] sm:$0xf]
      %v373 = vld [vmem:[%s359 + $0x10] sm:$0xf]
      %v374 = vld [vmem:[%s359 + $0x14] sm:$0xf]
      %v375 = vld [vmem:[%s359 + $0x18] sm:$0xf]
      %v376 = vld [vmem:[%s359 + $0x1c] sm:$0xf]
      %v377 = vld [vmem:[%s359 + $0x20] sm:$0xf]
      %v378 = vld [vmem:[%s359 + $0x24] sm:$0xf]
      %v379 = vld [vmem:[%s359 + $0x28] sm:$0xf]
      %v380 = vld [vmem:[%s359 + $0x2c] sm:$0xf]
      %v381 = vld [vmem:[%s359 + $0x30] sm:$0xf]
      %v382 = vld [vmem:[%s359 + $0x34] sm:$0xf]
      %v383 = vld [vmem:[%s359 + $0x38] sm:$0xf]
      %v384 = vld [vmem:[%s359 + $0x3c] sm:$0xf]
      %v385 = vld [vmem:[%s359 + $0x40] sm:$0xf]
      %v386 = vld [vmem:[%s359 + $0x44] sm:$0xf]
      %v387 = vld [vmem:[%s359 + $0x48] sm:$0xf]
      %v388 = vld [vmem:[%s359 + $0x4c] sm:$0xf]
      %v389 = vld [vmem:[%s359 + $0x50] sm:$0xf]
      %v390 = vld [vmem:[%s359 + $0x54] sm:$0xf]
      %v391 = vld [vmem:[%s359 + $0x58] sm:$0xf]
      %v392 = vld [vmem:[%s359 + $0x5c] sm:$0xf]
      %v393 = vld [vmem:[%s359 + $0x60] sm:$0xf]
      %v394 = vld [vmem:[%s359 + $0x64] sm:$0xf]
      %v395 = vld [vmem:[%s359 + $0x68] sm:$0xf]
      %v396 = vld [vmem:[%s359 + $0x6c] sm:$0xf]
      %v397 = vld [vmem:[%s359 + $0x70] sm:$0xf]
      %v398 = vld [vmem:[%s359 + $0x74] sm:$0xf]
      %v399 = vld [vmem:[%s359 + $0x78] sm:$0xf]
      %v400 = vld [vmem:[%s359 + $0x7c] sm:$0xf]
      %v401 = vld [vmem:[%s359 + $0x80] sm:$0xf]
      %v402 = vld [vmem:[%s359 + $0x84] sm:$0xf]
      %v403 = vld [vmem:[%s359 + $0x88] sm:$0xf]
      %v404 = vld [vmem:[%s359 + $0x8c] sm:$0xf]
      %v405 = vld [vmem:[%s359 + $0x90] sm:$0xf]
      %v406 = vld [vmem:[%s359 + $0x94] sm:$0xf]
      %v407 = vld [vmem:[%s359 + $0x98] sm:$0xf]
      %v408 = vld [vmem:[%s359 + $0x9c] sm:$0xf]
      %v409 = vld [vmem:[%s359 + $0xa0] sm:$0xf]
      %v410 = vld [vmem:[%s359 + $0xa4] sm:$0xf]
      %v411 = vld [vmem:[%s359 + $0xa8] sm:$0xf]
      %v412 = vld [vmem:[%s359 + $0xac] sm:$0xf]
      %v413 = vld [vmem:[%s359 + $0xb0] sm:$0xf]
      %v414 = vld [vmem:[%s359 + $0xb4] sm:$0xf]
      %v415 = vld [vmem:[%s359 + $0xb8] sm:$0xf]
      %v416 = vld [vmem:[%s359 + $0xbc] sm:$0xf]
      %v417 = vld [vmem:[%s359 + $0xc0] sm:$0xf]
      %v418 = vld [vmem:[%s359 + $0xc4] sm:$0xf]
      %v419 = vld [vmem:[%s359 + $0xc8] sm:$0xf]
      %v420 = vld [vmem:[%s359 + $0xcc] sm:$0xf]
      %v421 = vld [vmem:[%s359 + $0xd0] sm:$0xf]
      %v422 = vld [vmem:[%s359 + $0xd4] sm:$0xf]
      %v423 = vld [vmem:[%s359 + $0xd8] sm:$0xf]
      %v424 = vld [vmem:[%s359 + $0xdc] sm:$0xf]
      %v425 = vld [vmem:[%s359 + $0xe0] sm:$0xf]
      %v426 = vld [vmem:[%s359 + $0xe4] sm:$0xf]
      %v427 = vld [vmem:[%s359 + $0xe8] sm:$0xf]
      %v428 = vld [vmem:[%s359 + $0xec] sm:$0xf]
      %v429 = vld [vmem:[%s359 + $0xf0] sm:$0xf]
      %v430 = vld [vmem:[%s359 + $0xf4] sm:$0xf]
      %v431 = vld [vmem:[%s359 + $0xf8] sm:$0xf]
      %v432 = vld [vmem:[%s359 + $0xfc] sm:$0xf]
      %v433 = vld [vmem:[%s359 + $0x100] sm:$0xf]
      %v434 = vld [vmem:[%s359 + $0x104] sm:$0xf]
      %v435 = vld [vmem:[%s359 + $0x108] sm:$0xf]
      %v436 = vld [vmem:[%s359 + $0x10c] sm:$0xf]
      %v437 = vld [vmem:[%s359 + $0x110] sm:$0xf]
      %v438 = vld [vmem:[%s359 + $0x114] sm:$0xf]
      %v439 = vld [vmem:[%s359 + $0x118] sm:$0xf]
      %v440 = vld [vmem:[%s359 + $0x11c] sm:$0xf]
      %v441 = vld [vmem:[%s359 + $0x120] sm:$0xf]
      %v442 = vld [vmem:[%s359 + $0x124] sm:$0xf]
      %v443 = vld [vmem:[%s359 + $0x128] sm:$0xf]
      %v444 = vld [vmem:[%s359 + $0x12c] sm:$0xf]
      %v445 = vld [vmem:[%s359 + $0x130] sm:$0xf]
      %v446 = vld [vmem:[%s359 + $0x134] sm:$0xf]
      %v447 = vld [vmem:[%s359 + $0x138] sm:$0xf]
      %v448 = vld [vmem:[%s359 + $0x13c] sm:$0xf]
      %v449 = vld [vmem:[%s359 + $0x140] sm:$0xf]
      %v450 = vld [vmem:[%s359 + $0x144] sm:$0xf]
      %v451 = vld [vmem:[%s359 + $0x148] sm:$0xf]
      %v452 = vld [vmem:[%s359 + $0x14c] sm:$0xf]
      %v453 = vld [vmem:[%s359 + $0x150] sm:$0xf]
      %v454 = vld [vmem:[%s359 + $0x154] sm:$0xf]
      %v455 = vld [vmem:[%s359 + $0x158] sm:$0xf]
      %v456 = vld [vmem:[%s359 + $0x15c] sm:$0xf]
      %v457 = vld [vmem:[%s359 + $0x160] sm:$0xf]
      %v458 = vld [vmem:[%s359 + $0x164] sm:$0xf]
      %v459 = vld [vmem:[%s359 + $0x168] sm:$0xf]
      %v460 = vld [vmem:[%s359 + $0x16c] sm:$0xf]
      %v461 = vld [vmem:[%s359 + $0x170] sm:$0xf]
      %v462 = vld [vmem:[%s359 + $0x174] sm:$0xf]
      %v463 = vld [vmem:[%s359 + $0x178] sm:$0xf]
      %v464 = vld [vmem:[%s359 + $0x17c] sm:$0xf]
      %v465 = vld [vmem:[%s359 + $0x180] sm:$0xf]
      %v466 = vld [vmem:[%s359 + $0x184] sm:$0xf]
      %v467 = vld [vmem:[%s359 + $0x188] sm:$0xf]
      %v468 = vld [vmem:[%s359 + $0x18c] sm:$0xf]
      %v469 = vld [vmem:[%s359 + $0x190] sm:$0xf]
      %v470 = vld [vmem:[%s359 + $0x194] sm:$0xf]
      %v471 = vld [vmem:[%s359 + $0x198] sm:$0xf]
      %v472 = vld [vmem:[%s359 + $0x19c] sm:$0xf]
      %v473 = vld [vmem:[%s359 + $0x1a0] sm:$0xf]
      %v474 = vld [vmem:[%s359 + $0x1a4] sm:$0xf]
      %v475 = vld [vmem:[%s359 + $0x1a8] sm:$0xf]
      %v476 = vld [vmem:[%s359 + $0x1ac] sm:$0xf]
      %v477 = vld [vmem:[%s359 + $0x1b0] sm:$0xf]
      %v478 = vld [vmem:[%s359 + $0x1b4] sm:$0xf]
      %v479 = vld [vmem:[%s359 + $0x1b8] sm:$0xf]
      %v480 = vld [vmem:[%s359 + $0x1bc] sm:$0xf]
      %v481 = vld [vmem:[%s359 + $0x1c0] sm:$0xf]
      %v482 = vld [vmem:[%s359 + $0x1c4] sm:$0xf]
      %v483 = vld [vmem:[%s359 + $0x1c8] sm:$0xf]
      %v484 = vld [vmem:[%s359 + $0x1cc] sm:$0xf]
      %v485 = vld [vmem:[%s359 + $0x1d0] sm:$0xf]
      %v486 = vld [vmem:[%s359 + $0x1d4] sm:$0xf]
      %v487 = vld [vmem:[%s359 + $0x1d8] sm:$0xf]
      %v488 = vld [vmem:[%s359 + $0x1dc] sm:$0xf]
      %v489 = vld [vmem:[%s359 + $0x1e0] sm:$0xf]
      %v490 = vld [vmem:[%s359 + $0x1e4] sm:$0xf]
      %v491 = vld [vmem:[%s359 + $0x1e8] sm:$0xf]
      %v492 = vld [vmem:[%s359 + $0x1ec] sm:$0xf]
      %v493 = vld [vmem:[%s359 + $0x1f0] sm:$0xf]
      %v494 = vld [vmem:[%s359 + $0x1f4] sm:$0xf]
      %v495 = vld [vmem:[%s359 + $0x1f8] sm:$0xf]
      %v496 = vld [vmem:[%s359 + $0x1fc] sm:$0xf]
      %v497 = vld [vmem:[%s1] sm:$0xf]
      %v498 = vld [vmem:[%s1 + $0x4] sm:$0xf]
      %v499 = vld [vmem:[%s1 + $0x8] sm:$0xf]
      %v500 = vld [vmem:[%s1 + $0xc] sm:$0xf]
      %v501 = vld [vmem:[%s1 + $0x10] sm:$0xf]
      %v502 = vld [vmem:[%s1 + $0x14] sm:$0xf]
      %v503 = vld [vmem:[%s1 + $0x18] sm:$0xf]
      %v504 = vld [vmem:[%s1 + $0x1c] sm:$0xf]
      %v505 = vld [vmem:[%s1 + $0x20] sm:$0xf]
      %v506 = vld [vmem:[%s1 + $0x24] sm:$0xf]
      %v507 = vld [vmem:[%s1 + $0x28] sm:$0xf]
      %v508 = vld [vmem:[%s1 + $0x2c] sm:$0xf]
      %v509 = vld [vmem:[%s1 + $0x30] sm:$0xf]
      %v510 = vld [vmem:[%s1 + $0x34] sm:$0xf]
      %v511 = vld [vmem:[%s1 + $0x38] sm:$0xf]
      %v512 = vld [vmem:[%s1 + $0x3c] sm:$0xf]
      %v641 = vunpack.c.l.b16 %v369
      %v642 = vunpack.c.l.b16 %v370
      %v643 = vunpack.c.l.b16 %v371
      %v644 = vunpack.c.l.b16 %v372
      %v645 = vunpack.c.l.b16 %v373
      %v646 = vunpack.c.l.b16 %v374
      %v647 = vunpack.c.l.b16 %v375
      %v648 = vunpack.c.l.b16 %v376
      %v649 = vunpack.c.l.b16 %v377
      %v650 = vunpack.c.l.b16 %v378
      %v651 = vunpack.c.l.b16 %v379
      %v652 = vunpack.c.l.b16 %v380
      %v653 = vunpack.c.l.b16 %v381
      %v654 = vunpack.c.l.b16 %v382
      %v655 = vunpack.c.l.b16 %v383
      %v656 = vunpack.c.l.b16 %v384
      %v657 = vunpack.c.l.b16 %v385
      %v658 = vunpack.c.l.b16 %v386
      %v659 = vunpack.c.l.b16 %v387
      %v660 = vunpack.c.l.b16 %v388
      %v661 = vunpack.c.l.b16 %v389
      %v662 = vunpack.c.l.b16 %v390
      %v663 = vunpack.c.l.b16 %v391
      %v664 = vunpack.c.l.b16 %v392
      %v665 = vunpack.c.l.b16 %v393
      %v666 = vunpack.c.l.b16 %v394
      %v667 = vunpack.c.l.b16 %v395
      %v668 = vunpack.c.l.b16 %v396
      %v669 = vunpack.c.l.b16 %v397
      %v670 = vunpack.c.l.b16 %v398
      %v671 = vunpack.c.l.b16 %v399
      %v672 = vunpack.c.l.b16 %v400
      %v673 = vunpack.c.l.b16 %v401
      %v674 = vunpack.c.l.b16 %v402
      %v675 = vunpack.c.l.b16 %v403
      %v676 = vunpack.c.l.b16 %v404
      %v677 = vunpack.c.l.b16 %v405
      %v678 = vunpack.c.l.b16 %v406
      %v679 = vunpack.c.l.b16 %v407
      %v680 = vunpack.c.l.b16 %v408
      %v681 = vunpack.c.l.b16 %v409
      %v682 = vunpack.c.l.b16 %v410
      %v683 = vunpack.c.l.b16 %v411
      %v684 = vunpack.c.l.b16 %v412
      %v685 = vunpack.c.l.b16 %v413
      %v686 = vunpack.c.l.b16 %v414
      %v687 = vunpack.c.l.b16 %v415
      %v688 = vunpack.c.l.b16 %v416
      %v689 = vunpack.c.l.b16 %v417
      %v690 = vunpack.c.l.b16 %v418
      %v691 = vunpack.c.l.b16 %v419
      %v692 = vunpack.c.l.b16 %v420
      %v693 = vunpack.c.l.b16 %v421
      %v694 = vunpack.c.l.b16 %v422
      %v695 = vunpack.c.l.b16 %v423
      %v696 = vunpack.c.l.b16 %v424
      %v697 = vunpack.c.l.b16 %v425
      %v698 = vunpack.c.l.b16 %v426
      %v699 = vunpack.c.l.b16 %v427
      %v700 = vunpack.c.l.b16 %v428
      %v701 = vunpack.c.l.b16 %v429
      %v702 = vunpack.c.l.b16 %v430
      %v703 = vunpack.c.l.b16 %v431
      %v704 = vunpack.c.l.b16 %v432
      %v705 = vunpack.c.l.b16 %v433
      %v706 = vunpack.c.l.b16 %v434
      %v707 = vunpack.c.l.b16 %v435
      %v708 = vunpack.c.l.b16 %v436
      %v709 = vunpack.c.l.b16 %v437
      %v710 = vunpack.c.l.b16 %v438
      %v711 = vunpack.c.l.b16 %v439
      %v712 = vunpack.c.l.b16 %v440
      %v713 = vunpack.c.l.b16 %v441
      %v714 = vunpack.c.l.b16 %v442
      %v715 = vunpack.c.l.b16 %v443
      %v716 = vunpack.c.l.b16 %v444
      %v717 = vunpack.c.l.b16 %v445
      %v718 = vunpack.c.l.b16 %v446
      %v719 = vunpack.c.l.b16 %v447
      %v720 = vunpack.c.l.b16 %v448
      %v721 = vunpack.c.l.b16 %v449
      %v722 = vunpack.c.l.b16 %v450
      %v723 = vunpack.c.l.b16 %v451
      %v724 = vunpack.c.l.b16 %v452
      %v725 = vunpack.c.l.b16 %v453
      %v726 = vunpack.c.l.b16 %v454
      %v727 = vunpack.c.l.b16 %v455
      %v728 = vunpack.c.l.b16 %v456
      %v729 = vunpack.c.l.b16 %v457
      %v730 = vunpack.c.l.b16 %v458
      %v731 = vunpack.c.l.b16 %v459
      %v732 = vunpack.c.l.b16 %v460
      %v733 = vunpack.c.l.b16 %v461
      %v734 = vunpack.c.l.b16 %v462
      %v735 = vunpack.c.l.b16 %v463
      %v736 = vunpack.c.l.b16 %v464
      %v737 = vunpack.c.l.b16 %v465
      %v738 = vunpack.c.l.b16 %v466
      %v739 = vunpack.c.l.b16 %v467
      %v740 = vunpack.c.l.b16 %v468
      %v741 = vunpack.c.l.b16 %v469
      %v742 = vunpack.c.l.b16 %v470
      %v743 = vunpack.c.l.b16 %v471
      %v744 = vunpack.c.l.b16 %v472
      %v745 = vunpack.c.l.b16 %v473
      %v746 = vunpack.c.l.b16 %v474
      %v747 = vunpack.c.l.b16 %v475
      %v748 = vunpack.c.l.b16 %v476
      %v749 = vunpack.c.l.b16 %v477
      %v750 = vunpack.c.l.b16 %v478
      %v751 = vunpack.c.l.b16 %v479
      %v752 = vunpack.c.l.b16 %v480
      %v753 = vunpack.c.l.b16 %v481
      %v754 = vunpack.c.l.b16 %v482
      %v755 = vunpack.c.l.b16 %v483
      %v756 = vunpack.c.l.b16 %v484
      %v757 = vunpack.c.l.b16 %v485
      %v758 = vunpack.c.l.b16 %v486
      %v759 = vunpack.c.l.b16 %v487
      %v760 = vunpack.c.l.b16 %v488
      %v761 = vunpack.c.l.b16 %v489
      %v762 = vunpack.c.l.b16 %v490
      %v763 = vunpack.c.l.b16 %v491
      %v764 = vunpack.c.l.b16 %v492
      %v765 = vunpack.c.l.b16 %v493
      %v766 = vunpack.c.l.b16 %v494
      %v767 = vunpack.c.l.b16 %v495
      %v768 = vunpack.c.l.b16 %v496
      %v769 = vpack.c.b16 %v642, %v641
      %v770 = vpack.c.b16 %v644, %v643
      %v771 = vpack.c.b16 %v646, %v645
      %v772 = vpack.c.b16 %v648, %v647
      %v773 = vpack.c.b16 %v650, %v649
      %v774 = vpack.c.b16 %v652, %v651
      %v775 = vpack.c.b16 %v654, %v653
      %v776 = vpack.c.b16 %v656, %v655
      %v777 = vpack.c.b16 %v658, %v657
      %v778 = vpack.c.b16 %v660, %v659
      %v779 = vpack.c.b16 %v662, %v661
      %v780 = vpack.c.b16 %v664, %v663
      %v781 = vpack.c.b16 %v666, %v665
      %v782 = vpack.c.b16 %v668, %v667
      %v783 = vpack.c.b16 %v670, %v669
      %v784 = vpack.c.b16 %v672, %v671
      %v785 = vpack.c.b16 %v674, %v673
      %v786 = vpack.c.b16 %v676, %v675
      %v787 = vpack.c.b16 %v678, %v677
      %v788 = vpack.c.b16 %v680, %v679
      %v789 = vpack.c.b16 %v682, %v681
      %v790 = vpack.c.b16 %v684, %v683
      %v791 = vpack.c.b16 %v686, %v685
      %v792 = vpack.c.b16 %v688, %v687
      %v793 = vpack.c.b16 %v690, %v689
      %v794 = vpack.c.b16 %v692, %v691
      %v795 = vpack.c.b16 %v694, %v693
      %v796 = vpack.c.b16 %v696, %v695
      %v797 = vpack.c.b16 %v698, %v697
      %v798 = vpack.c.b16 %v700, %v699
      %v799 = vpack.c.b16 %v702, %v701
      %v800 = vpack.c.b16 %v704, %v703
      %v801 = vpack.c.b16 %v706, %v705
      %v802 = vpack.c.b16 %v708, %v707
      %v803 = vpack.c.b16 %v710, %v709
      %v804 = vpack.c.b16 %v712, %v711
      %v805 = vpack.c.b16 %v714, %v713
      %v806 = vpack.c.b16 %v716, %v715
      %v807 = vpack.c.b16 %v718, %v717
      %v808 = vpack.c.b16 %v720, %v719
      %v809 = vpack.c.b16 %v722, %v721
      %v810 = vpack.c.b16 %v724, %v723
      %v811 = vpack.c.b16 %v726, %v725
      %v812 = vpack.c.b16 %v728, %v727
      %v813 = vpack.c.b16 %v730, %v729
      %v814 = vpack.c.b16 %v732, %v731
      %v815 = vpack.c.b16 %v734, %v733
      %v816 = vpack.c.b16 %v736, %v735
      %v817 = vpack.c.b16 %v738, %v737
      %v818 = vpack.c.b16 %v740, %v739
      %v819 = vpack.c.b16 %v742, %v741
      %v820 = vpack.c.b16 %v744, %v743
      %v821 = vpack.c.b16 %v746, %v745
      %v822 = vpack.c.b16 %v748, %v747
      %v823 = vpack.c.b16 %v750, %v749
      %v824 = vpack.c.b16 %v752, %v751
      %v825 = vpack.c.b16 %v754, %v753
      %v826 = vpack.c.b16 %v756, %v755
      %v827 = vpack.c.b16 %v758, %v757
      %v828 = vpack.c.b16 %v760, %v759
      %v829 = vpack.c.b16 %v762, %v761
      %v830 = vpack.c.b16 %v764, %v763
      %v831 = vpack.c.b16 %v766, %v765
      %v832 = vpack.c.b16 %v768, %v767
      %v913 = vunpack.c.l.b16 %v497
      %v914 = vunpack.c.l.b16 %v498
      %v915 = vunpack.c.l.b16 %v499
      %v916 = vunpack.c.l.b16 %v500
      %v917 = vunpack.c.l.b16 %v501
      %v918 = vunpack.c.l.b16 %v502
      %v919 = vunpack.c.l.b16 %v503
      %v920 = vunpack.c.l.b16 %v504
      %v921 = vunpack.c.l.b16 %v505
      %v922 = vunpack.c.l.b16 %v506
      %v923 = vunpack.c.l.b16 %v507
      %v924 = vunpack.c.l.b16 %v508
      %v925 = vunpack.c.l.b16 %v509
      %v926 = vunpack.c.l.b16 %v510
      %v927 = vunpack.c.l.b16 %v511
      %v928 = vunpack.c.l.b16 %v512
      %v929 = vpack.c.b16 %v914, %v913
      %v930 = vpack.c.b16 %v916, %v915
      %v931 = vpack.c.b16 %v918, %v917
      %v932 = vpack.c.b16 %v920, %v919
      %v933 = vpack.c.b16 %v922, %v921
      %v934 = vpack.c.b16 %v924, %v923
      %v935 = vpack.c.b16 %v926, %v925
      %v936 = vpack.c.b16 %v928, %v927
      %945 = vmatpush.bf16.msra.mxu0 %v936
      %946 = vmatpush.bf16.msra.mxu0 %v935
      %947 = vmatpush.bf16.msra.mxu0 %v934
      %948 = vmatpush.bf16.msra.mxu0 %v933
      %949 = vmatpush.bf16.msra.mxu0 %v932
      %950 = vmatpush.bf16.msra.mxu0 %v931
      %951 = vmatpush.bf16.msra.mxu0 %v930
      %952 = vmatpush.bf16.msra.mxu0 %v929
      %953 = vmatmul.bf16.gmra.mxu0 %v769
      %v954 = vpop.f32.mrf.mxu0
      %v955 = vadd.f32 0.0, %v954
      %v956 = vpop.f32.mrf.mxu0
      %v957 = vadd.f32 0.0, %v956
      %958 = vmatmul.bf16.gmra.mxu0 %v770
      %v959 = vpop.f32.mrf.mxu0
      %v960 = vadd.f32 0.0, %v959
      %v961 = vpop.f32.mrf.mxu0
      %v962 = vadd.f32 0.0, %v961
      %963 = vmatmul.bf16.gmra.mxu0 %v771
      %v964 = vpop.f32.mrf.mxu0
      %v965 = vadd.f32 0.0, %v964
      %v966 = vpop.f32.mrf.mxu0
      %v967 = vadd.f32 0.0, %v966
      %968 = vmatmul.bf16.gmra.mxu0 %v772
      %v969 = vpop.f32.mrf.mxu0
      %v970 = vadd.f32 0.0, %v969
      %v971 = vpop.f32.mrf.mxu0
      %v972 = vadd.f32 0.0, %v971
      %973 = vmatmul.bf16.gmra.mxu0 %v773
      %v974 = vpop.f32.mrf.mxu0
      %v975 = vadd.f32 0.0, %v974
      %v976 = vpop.f32.mrf.mxu0
      %v977 = vadd.f32 0.0, %v976
      %978 = vmatmul.bf16.gmra.mxu0 %v774
      %v979 = vpop.f32.mrf.mxu0
      %v980 = vadd.f32 0.0, %v979
      %v981 = vpop.f32.mrf.mxu0
      %v982 = vadd.f32 0.0, %v981
      %983 = vmatmul.bf16.gmra.mxu0 %v775
      %v984 = vpop.f32.mrf.mxu0
      %v985 = vadd.f32 0.0, %v984
      %v986 = vpop.f32.mrf.mxu0
      %v987 = vadd.f32 0.0, %v986
      %988 = vmatmul.bf16.gmra.mxu0 %v776
      %v989 = vpop.f32.mrf.mxu0
      %v990 = vadd.f32 0.0, %v989
      %v991 = vpop.f32.mrf.mxu0
      %v992 = vadd.f32 0.0, %v991
      %993 = vmatmul.bf16.gmra.mxu0 %v777
      %v994 = vpop.f32.mrf.mxu0
      %v995 = vadd.f32 0.0, %v994
      %v996 = vpop.f32.mrf.mxu0
      %v997 = vadd.f32 0.0, %v996
      %998 = vmatmul.bf16.gmra.mxu0 %v778
      %v999 = vpop.f32.mrf.mxu0
      %v1000 = vadd.f32 0.0, %v999
      %v1001 = vpop.f32.mrf.mxu0
      %v1002 = vadd.f32 0.0, %v1001
      %1003 = vmatmul.bf16.gmra.mxu0 %v779
      %v1004 = vpop.f32.mrf.mxu0
      %v1005 = vadd.f32 0.0, %v1004
      %v1006 = vpop.f32.mrf.mxu0
      %v1007 = vadd.f32 0.0, %v1006
      %1008 = vmatmul.bf16.gmra.mxu0 %v780
      %v1009 = vpop.f32.mrf.mxu0
      %v1010 = vadd.f32 0.0, %v1009
      %v1011 = vpop.f32.mrf.mxu0
      %v1012 = vadd.f32 0.0, %v1011
      %1013 = vmatmul.bf16.gmra.mxu0 %v781
      %v1014 = vpop.f32.mrf.mxu0
      %v1015 = vadd.f32 0.0, %v1014
      %v1016 = vpop.f32.mrf.mxu0
      %v1017 = vadd.f32 0.0, %v1016
      %1018 = vmatmul.bf16.gmra.mxu0 %v782
      %v1019 = vpop.f32.mrf.mxu0
      %v1020 = vadd.f32 0.0, %v1019
      %v1021 = vpop.f32.mrf.mxu0
      %v1022 = vadd.f32 0.0, %v1021
      %1023 = vmatmul.bf16.gmra.mxu0 %v783
      %v1024 = vpop.f32.mrf.mxu0
      %v1025 = vadd.f32 0.0, %v1024
      %v1026 = vpop.f32.mrf.mxu0
      %v1027 = vadd.f32 0.0, %v1026
      %1028 = vmatmul.bf16.gmra.mxu0 %v784
      %v1029 = vpop.f32.mrf.mxu0
      %v1030 = vadd.f32 0.0, %v1029
      %v1031 = vpop.f32.mrf.mxu0
      %v1032 = vadd.f32 0.0, %v1031
      %1033 = vmatmul.bf16.gmra.mxu0 %v785
      %v1034 = vpop.f32.mrf.mxu0
      %v1035 = vadd.f32 0.0, %v1034
      %v1036 = vpop.f32.mrf.mxu0
      %v1037 = vadd.f32 0.0, %v1036
      %1038 = vmatmul.bf16.gmra.mxu0 %v786
      %v1039 = vpop.f32.mrf.mxu0
      %v1040 = vadd.f32 0.0, %v1039
      %v1041 = vpop.f32.mrf.mxu0
      %v1042 = vadd.f32 0.0, %v1041
      %1043 = vmatmul.bf16.gmra.mxu0 %v787
      %v1044 = vpop.f32.mrf.mxu0
      %v1045 = vadd.f32 0.0, %v1044
      %v1046 = vpop.f32.mrf.mxu0
      %v1047 = vadd.f32 0.0, %v1046
      %1048 = vmatmul.bf16.gmra.mxu0 %v788
      %v1049 = vpop.f32.mrf.mxu0
      %v1050 = vadd.f32 0.0, %v1049
      %v1051 = vpop.f32.mrf.mxu0
      %v1052 = vadd.f32 0.0, %v1051
      %1053 = vmatmul.bf16.gmra.mxu0 %v789
      %v1054 = vpop.f32.mrf.mxu0
      %v1055 = vadd.f32 0.0, %v1054
      %v1056 = vpop.f32.mrf.mxu0
      %v1057 = vadd.f32 0.0, %v1056
      %1058 = vmatmul.bf16.gmra.mxu0 %v790
      %v1059 = vpop.f32.mrf.mxu0
      %v1060 = vadd.f32 0.0, %v1059
      %v1061 = vpop.f32.mrf.mxu0
      %v1062 = vadd.f32 0.0, %v1061
      %1063 = vmatmul.bf16.gmra.mxu0 %v791
      %v1064 = vpop.f32.mrf.mxu0
      %v1065 = vadd.f32 0.0, %v1064
      %v1066 = vpop.f32.mrf.mxu0
      %v1067 = vadd.f32 0.0, %v1066
      %1068 = vmatmul.bf16.gmra.mxu0 %v792
      %v1069 = vpop.f32.mrf.mxu0
      %v1070 = vadd.f32 0.0, %v1069
      %v1071 = vpop.f32.mrf.mxu0
      %v1072 = vadd.f32 0.0, %v1071
      %1073 = vmatmul.bf16.gmra.mxu0 %v793
      %v1074 = vpop.f32.mrf.mxu0
      %v1075 = vadd.f32 0.0, %v1074
      %v1076 = vpop.f32.mrf.mxu0
      %v1077 = vadd.f32 0.0, %v1076
      %1078 = vmatmul.bf16.gmra.mxu0 %v794
      %v1079 = vpop.f32.mrf.mxu0
      %v1080 = vadd.f32 0.0, %v1079
      %v1081 = vpop.f32.mrf.mxu0
      %v1082 = vadd.f32 0.0, %v1081
      %1083 = vmatmul.bf16.gmra.mxu0 %v795
      %v1084 = vpop.f32.mrf.mxu0
      %v1085 = vadd.f32 0.0, %v1084
      %v1086 = vpop.f32.mrf.mxu0
      %v1087 = vadd.f32 0.0, %v1086
      %1088 = vmatmul.bf16.gmra.mxu0 %v796
      %v1089 = vpop.f32.mrf.mxu0
      %v1090 = vadd.f32 0.0, %v1089
      %v1091 = vpop.f32.mrf.mxu0
      %v1092 = vadd.f32 0.0, %v1091
      %1093 = vmatmul.bf16.gmra.mxu0 %v797
      %v1094 = vpop.f32.mrf.mxu0
      %v1095 = vadd.f32 0.0, %v1094
      %v1096 = vpop.f32.mrf.mxu0
      %v1097 = vadd.f32 0.0, %v1096
      %1098 = vmatmul.bf16.gmra.mxu0 %v798
      %v1099 = vpop.f32.mrf.mxu0
      %v1100 = vadd.f32 0.0, %v1099
      %v1101 = vpop.f32.mrf.mxu0
      %v1102 = vadd.f32 0.0, %v1101
      %1103 = vmatmul.bf16.gmra.mxu0 %v799
      %v1104 = vpop.f32.mrf.mxu0
      %v1105 = vadd.f32 0.0, %v1104
      %v1106 = vpop.f32.mrf.mxu0
      %v1107 = vadd.f32 0.0, %v1106
      %1108 = vmatmul.bf16.gmra.mxu0 %v800
      %v1109 = vpop.f32.mrf.mxu0
      %v1110 = vadd.f32 0.0, %v1109
      %v1111 = vpop.f32.mrf.mxu0
      %v1112 = vadd.f32 0.0, %v1111
      %1113 = vmatmul.bf16.gmra.mxu0 %v801
      %v1114 = vpop.f32.mrf.mxu0
      %v1115 = vadd.f32 0.0, %v1114
      %v1116 = vpop.f32.mrf.mxu0
      %v1117 = vadd.f32 0.0, %v1116
      %1118 = vmatmul.bf16.gmra.mxu0 %v802
      %v1119 = vpop.f32.mrf.mxu0
      %v1120 = vadd.f32 0.0, %v1119
      %v1121 = vpop.f32.mrf.mxu0
      %v1122 = vadd.f32 0.0, %v1121
      %1123 = vmatmul.bf16.gmra.mxu0 %v803
      %v1124 = vpop.f32.mrf.mxu0
      %v1125 = vadd.f32 0.0, %v1124
      %v1126 = vpop.f32.mrf.mxu0
      %v1127 = vadd.f32 0.0, %v1126
      %1128 = vmatmul.bf16.gmra.mxu0 %v804
      %v1129 = vpop.f32.mrf.mxu0
      %v1130 = vadd.f32 0.0, %v1129
      %v1131 = vpop.f32.mrf.mxu0
      %v1132 = vadd.f32 0.0, %v1131
      %1133 = vmatmul.bf16.gmra.mxu0 %v805
      %v1134 = vpop.f32.mrf.mxu0
      %v1135 = vadd.f32 0.0, %v1134
      %v1136 = vpop.f32.mrf.mxu0
      %v1137 = vadd.f32 0.0, %v1136
      %1138 = vmatmul.bf16.gmra.mxu0 %v806
      %v1139 = vpop.f32.mrf.mxu0
      %v1140 = vadd.f32 0.0, %v1139
      %v1141 = vpop.f32.mrf.mxu0
      %v1142 = vadd.f32 0.0, %v1141
      %1143 = vmatmul.bf16.gmra.mxu0 %v807
      %v1144 = vpop.f32.mrf.mxu0
      %v1145 = vadd.f32 0.0, %v1144
      %v1146 = vpop.f32.mrf.mxu0
      %v1147 = vadd.f32 0.0, %v1146
      %1148 = vmatmul.bf16.gmra.mxu0 %v808
      %v1149 = vpop.f32.mrf.mxu0
      %v1150 = vadd.f32 0.0, %v1149
      %v1151 = vpop.f32.mrf.mxu0
      %v1152 = vadd.f32 0.0, %v1151
      %1153 = vmatmul.bf16.gmra.mxu0 %v809
      %v1154 = vpop.f32.mrf.mxu0
      %v1155 = vadd.f32 0.0, %v1154
      %v1156 = vpop.f32.mrf.mxu0
      %v1157 = vadd.f32 0.0, %v1156
      %1158 = vmatmul.bf16.gmra.mxu0 %v810
      %v1159 = vpop.f32.mrf.mxu0
      %v1160 = vadd.f32 0.0, %v1159
      %v1161 = vpop.f32.mrf.mxu0
      %v1162 = vadd.f32 0.0, %v1161
      %1163 = vmatmul.bf16.gmra.mxu0 %v811
      %v1164 = vpop.f32.mrf.mxu0
      %v1165 = vadd.f32 0.0, %v1164
      %v1166 = vpop.f32.mrf.mxu0
      %v1167 = vadd.f32 0.0, %v1166
      %1168 = vmatmul.bf16.gmra.mxu0 %v812
      %v1169 = vpop.f32.mrf.mxu0
      %v1170 = vadd.f32 0.0, %v1169
      %v1171 = vpop.f32.mrf.mxu0
      %v1172 = vadd.f32 0.0, %v1171
      %1173 = vmatmul.bf16.gmra.mxu0 %v813
      %v1174 = vpop.f32.mrf.mxu0
      %v1175 = vadd.f32 0.0, %v1174
      %v1176 = vpop.f32.mrf.mxu0
      %v1177 = vadd.f32 0.0, %v1176
      %1178 = vmatmul.bf16.gmra.mxu0 %v814
      %v1179 = vpop.f32.mrf.mxu0
      %v1180 = vadd.f32 0.0, %v1179
      %v1181 = vpop.f32.mrf.mxu0
      %v1182 = vadd.f32 0.0, %v1181
      %1183 = vmatmul.bf16.gmra.mxu0 %v815
      %v1184 = vpop.f32.mrf.mxu0
      %v1185 = vadd.f32 0.0, %v1184
      %v1186 = vpop.f32.mrf.mxu0
      %v1187 = vadd.f32 0.0, %v1186
      %1188 = vmatmul.bf16.gmra.mxu0 %v816
      %v1189 = vpop.f32.mrf.mxu0
      %v1190 = vadd.f32 0.0, %v1189
      %v1191 = vpop.f32.mrf.mxu0
      %v1192 = vadd.f32 0.0, %v1191
      %1193 = vmatmul.bf16.gmra.mxu0 %v817
      %v1194 = vpop.f32.mrf.mxu0
      %v1195 = vadd.f32 0.0, %v1194
      %v1196 = vpop.f32.mrf.mxu0
      %v1197 = vadd.f32 0.0, %v1196
      %1198 = vmatmul.bf16.gmra.mxu0 %v818
      %v1199 = vpop.f32.mrf.mxu0
      %v1200 = vadd.f32 0.0, %v1199
      %v1201 = vpop.f32.mrf.mxu0
      %v1202 = vadd.f32 0.0, %v1201
      %1203 = vmatmul.bf16.gmra.mxu0 %v819
      %v1204 = vpop.f32.mrf.mxu0
      %v1205 = vadd.f32 0.0, %v1204
      %v1206 = vpop.f32.mrf.mxu0
      %v1207 = vadd.f32 0.0, %v1206
      %1208 = vmatmul.bf16.gmra.mxu0 %v820
      %v1209 = vpop.f32.mrf.mxu0
      %v1210 = vadd.f32 0.0, %v1209
      %v1211 = vpop.f32.mrf.mxu0
      %v1212 = vadd.f32 0.0, %v1211
      %1213 = vmatmul.bf16.gmra.mxu0 %v821
      %v1214 = vpop.f32.mrf.mxu0
      %v1215 = vadd.f32 0.0, %v1214
      %v1216 = vpop.f32.mrf.mxu0
      %v1217 = vadd.f32 0.0, %v1216
      %1218 = vmatmul.bf16.gmra.mxu0 %v822
      %v1219 = vpop.f32.mrf.mxu0
      %v1220 = vadd.f32 0.0, %v1219
      %v1221 = vpop.f32.mrf.mxu0
      %v1222 = vadd.f32 0.0, %v1221
      %1223 = vmatmul.bf16.gmra.mxu0 %v823
      %v1224 = vpop.f32.mrf.mxu0
      %v1225 = vadd.f32 0.0, %v1224
      %v1226 = vpop.f32.mrf.mxu0
      %v1227 = vadd.f32 0.0, %v1226
      %1228 = vmatmul.bf16.gmra.mxu0 %v824
      %v1229 = vpop.f32.mrf.mxu0
      %v1230 = vadd.f32 0.0, %v1229
      %v1231 = vpop.f32.mrf.mxu0
      %v1232 = vadd.f32 0.0, %v1231
      %1233 = vmatmul.bf16.gmra.mxu0 %v825
      %v1234 = vpop.f32.mrf.mxu0
      %v1235 = vadd.f32 0.0, %v1234
      %v1236 = vpop.f32.mrf.mxu0
      %v1237 = vadd.f32 0.0, %v1236
      %1238 = vmatmul.bf16.gmra.mxu0 %v826
      %v1239 = vpop.f32.mrf.mxu0
      %v1240 = vadd.f32 0.0, %v1239
      %v1241 = vpop.f32.mrf.mxu0
      %v1242 = vadd.f32 0.0, %v1241
      %1243 = vmatmul.bf16.gmra.mxu0 %v827
      %v1244 = vpop.f32.mrf.mxu0
      %v1245 = vadd.f32 0.0, %v1244
      %v1246 = vpop.f32.mrf.mxu0
      %v1247 = vadd.f32 0.0, %v1246
      %1248 = vmatmul.bf16.gmra.mxu0 %v828
      %v1249 = vpop.f32.mrf.mxu0
      %v1250 = vadd.f32 0.0, %v1249
      %v1251 = vpop.f32.mrf.mxu0
      %v1252 = vadd.f32 0.0, %v1251
      %1253 = vmatmul.bf16.gmra.mxu0 %v829
      %v1254 = vpop.f32.mrf.mxu0
      %v1255 = vadd.f32 0.0, %v1254
      %v1256 = vpop.f32.mrf.mxu0
      %v1257 = vadd.f32 0.0, %v1256
      %1258 = vmatmul.bf16.gmra.mxu0 %v830
      %v1259 = vpop.f32.mrf.mxu0
      %v1260 = vadd.f32 0.0, %v1259
      %v1261 = vpop.f32.mrf.mxu0
      %v1262 = vadd.f32 0.0, %v1261
      %1263 = vmatmul.bf16.gmra.mxu0 %v831
      %v1264 = vpop.f32.mrf.mxu0
      %v1265 = vadd.f32 0.0, %v1264
      %v1266 = vpop.f32.mrf.mxu0
      %v1267 = vadd.f32 0.0, %v1266
      %1268 = vmatmul.bf16.gmra.mxu0 %v832
      %v1269 = vpop.f32.mrf.mxu0
      %v1270 = vadd.f32 0.0, %v1269
      %v1271 = vpop.f32.mrf.mxu0
      %v1272 = vadd.f32 0.0, %v1271
      %1273 = vdwg.mxu0
      %v1274 = vld [vmem:[%s2] sm:$0x1]
      %v1276 = vperm.slane %v1274, 0
      %v1278 = vmul.f32 %v955, %v1276
      %v1279 = vmul.f32 %v957, %v1276
      %v1280 = vmul.f32 %v960, %v1276
      %v1281 = vmul.f32 %v962, %v1276
      %v1282 = vmul.f32 %v965, %v1276
      %v1283 = vmul.f32 %v967, %v1276
      %v1284 = vmul.f32 %v970, %v1276
      %v1285 = vmul.f32 %v972, %v1276
      %v1286 = vmul.f32 %v975, %v1276
      %v1287 = vmul.f32 %v977, %v1276
      %v1288 = vmul.f32 %v980, %v1276
      %v1289 = vmul.f32 %v982, %v1276
      %v1290 = vmul.f32 %v985, %v1276
      %v1291 = vmul.f32 %v987, %v1276
      %v1292 = vmul.f32 %v990, %v1276
      %v1293 = vmul.f32 %v992, %v1276
      %v1294 = vmul.f32 %v995, %v1276
      %v1295 = vmul.f32 %v997, %v1276
      %v1296 = vmul.f32 %v1000, %v1276
      %v1297 = vmul.f32 %v1002, %v1276
      %v1298 = vmul.f32 %v1005, %v1276
      %v1299 = vmul.f32 %v1007, %v1276
      %v1300 = vmul.f32 %v1010, %v1276
      %v1301 = vmul.f32 %v1012, %v1276
      %v1302 = vmul.f32 %v1015, %v1276
      %v1303 = vmul.f32 %v1017, %v1276
      %v1304 = vmul.f32 %v1020, %v1276
      %v1305 = vmul.f32 %v1022, %v1276
      %v1306 = vmul.f32 %v1025, %v1276
      %v1307 = vmul.f32 %v1027, %v1276
      %v1308 = vmul.f32 %v1030, %v1276
      %v1309 = vmul.f32 %v1032, %v1276
      %v1310 = vmul.f32 %v1035, %v1276
      %v1311 = vmul.f32 %v1037, %v1276
      %v1312 = vmul.f32 %v1040, %v1276
      %v1313 = vmul.f32 %v1042, %v1276
      %v1314 = vmul.f32 %v1045, %v1276
      %v1315 = vmul.f32 %v1047, %v1276
      %v1316 = vmul.f32 %v1050, %v1276
      %v1317 = vmul.f32 %v1052, %v1276
      %v1318 = vmul.f32 %v1055, %v1276
      %v1319 = vmul.f32 %v1057, %v1276
      %v1320 = vmul.f32 %v1060, %v1276
      %v1321 = vmul.f32 %v1062, %v1276
      %v1322 = vmul.f32 %v1065, %v1276
      %v1323 = vmul.f32 %v1067, %v1276
      %v1324 = vmul.f32 %v1070, %v1276
      %v1325 = vmul.f32 %v1072, %v1276
      %v1326 = vmul.f32 %v1075, %v1276
      %v1327 = vmul.f32 %v1077, %v1276
      %v1328 = vmul.f32 %v1080, %v1276
      %v1329 = vmul.f32 %v1082, %v1276
      %v1330 = vmul.f32 %v1085, %v1276
      %v1331 = vmul.f32 %v1087, %v1276
      %v1332 = vmul.f32 %v1090, %v1276
      %v1333 = vmul.f32 %v1092, %v1276
      %v1334 = vmul.f32 %v1095, %v1276
      %v1335 = vmul.f32 %v1097, %v1276
      %v1336 = vmul.f32 %v1100, %v1276
      %v1337 = vmul.f32 %v1102, %v1276
      %v1338 = vmul.f32 %v1105, %v1276
      %v1339 = vmul.f32 %v1107, %v1276
      %v1340 = vmul.f32 %v1110, %v1276
      %v1341 = vmul.f32 %v1112, %v1276
      %v1342 = vmul.f32 %v1115, %v1276
      %v1343 = vmul.f32 %v1117, %v1276
      %v1344 = vmul.f32 %v1120, %v1276
      %v1345 = vmul.f32 %v1122, %v1276
      %v1346 = vmul.f32 %v1125, %v1276
      %v1347 = vmul.f32 %v1127, %v1276
      %v1348 = vmul.f32 %v1130, %v1276
      %v1349 = vmul.f32 %v1132, %v1276
      %v1350 = vmul.f32 %v1135, %v1276
      %v1351 = vmul.f32 %v1137, %v1276
      %v1352 = vmul.f32 %v1140, %v1276
      %v1353 = vmul.f32 %v1142, %v1276
      %v1354 = vmul.f32 %v1145, %v1276
      %v1355 = vmul.f32 %v1147, %v1276
      %v1356 = vmul.f32 %v1150, %v1276
      %v1357 = vmul.f32 %v1152, %v1276
      %v1358 = vmul.f32 %v1155, %v1276
      %v1359 = vmul.f32 %v1157, %v1276
      %v1360 = vmul.f32 %v1160, %v1276
      %v1361 = vmul.f32 %v1162, %v1276
      %v1362 = vmul.f32 %v1165, %v1276
      %v1363 = vmul.f32 %v1167, %v1276
      %v1364 = vmul.f32 %v1170, %v1276
      %v1365 = vmul.f32 %v1172, %v1276
      %v1366 = vmul.f32 %v1175, %v1276
      %v1367 = vmul.f32 %v1177, %v1276
      %v1368 = vmul.f32 %v1180, %v1276
      %v1369 = vmul.f32 %v1182, %v1276
      %v1370 = vmul.f32 %v1185, %v1276
      %v1371 = vmul.f32 %v1187, %v1276
      %v1372 = vmul.f32 %v1190, %v1276
      %v1373 = vmul.f32 %v1192, %v1276
      %v1374 = vmul.f32 %v1195, %v1276
      %v1375 = vmul.f32 %v1197, %v1276
      %v1376 = vmul.f32 %v1200, %v1276
      %v1377 = vmul.f32 %v1202, %v1276
      %v1378 = vmul.f32 %v1205, %v1276
      %v1379 = vmul.f32 %v1207, %v1276
      %v1380 = vmul.f32 %v1210, %v1276
      %v1381 = vmul.f32 %v1212, %v1276
      %v1382 = vmul.f32 %v1215, %v1276
      %v1383 = vmul.f32 %v1217, %v1276
      %v1384 = vmul.f32 %v1220, %v1276
      %v1385 = vmul.f32 %v1222, %v1276
      %v1386 = vmul.f32 %v1225, %v1276
      %v1387 = vmul.f32 %v1227, %v1276
      %v1388 = vmul.f32 %v1230, %v1276
      %v1389 = vmul.f32 %v1232, %v1276
      %v1390 = vmul.f32 %v1235, %v1276
      %v1391 = vmul.f32 %v1237, %v1276
      %v1392 = vmul.f32 %v1240, %v1276
      %v1393 = vmul.f32 %v1242, %v1276
      %v1394 = vmul.f32 %v1245, %v1276
      %v1395 = vmul.f32 %v1247, %v1276
      %v1396 = vmul.f32 %v1250, %v1276
      %v1397 = vmul.f32 %v1252, %v1276
      %v1398 = vmul.f32 %v1255, %v1276
      %v1399 = vmul.f32 %v1257, %v1276
      %v1400 = vmul.f32 %v1260, %v1276
      %v1401 = vmul.f32 %v1262, %v1276
      %v1402 = vmul.f32 %v1265, %v1276
      %v1403 = vmul.f32 %v1267, %v1276
      %v1404 = vmul.f32 %v1270, %v1276
      %v1405 = vmul.f32 %v1272, %v1276
      %v1406 = vld [vmem:[%s3] sm:$0x1]
      %v1408 = vperm.slane %v1406, 0
      %v1410 = vadd.f32 %v1278, %v1408
      %v1411 = vadd.f32 %v1279, %v1408
      %v1412 = vadd.f32 %v1280, %v1408
      %v1413 = vadd.f32 %v1281, %v1408
      %v1414 = vadd.f32 %v1282, %v1408
      %v1415 = vadd.f32 %v1283, %v1408
      %v1416 = vadd.f32 %v1284, %v1408
      %v1417 = vadd.f32 %v1285, %v1408
      %v1418 = vadd.f32 %v1286, %v1408
      %v1419 = vadd.f32 %v1287, %v1408
      %v1420 = vadd.f32 %v1288, %v1408
      %v1421 = vadd.f32 %v1289, %v1408
      %v1422 = vadd.f32 %v1290, %v1408
      %v1423 = vadd.f32 %v1291, %v1408
      %v1424 = vadd.f32 %v1292, %v1408
      %v1425 = vadd.f32 %v1293, %v1408
      %v1426 = vadd.f32 %v1294, %v1408
      %v1427 = vadd.f32 %v1295, %v1408
      %v1428 = vadd.f32 %v1296, %v1408
      %v1429 = vadd.f32 %v1297, %v1408
      %v1430 = vadd.f32 %v1298, %v1408
      %v1431 = vadd.f32 %v1299, %v1408
      %v1432 = vadd.f32 %v1300, %v1408
      %v1433 = vadd.f32 %v1301, %v1408
      %v1434 = vadd.f32 %v1302, %v1408
      %v1435 = vadd.f32 %v1303, %v1408
      %v1436 = vadd.f32 %v1304, %v1408
      %v1437 = vadd.f32 %v1305, %v1408
      %v1438 = vadd.f32 %v1306, %v1408
      %v1439 = vadd.f32 %v1307, %v1408
      %v1440 = vadd.f32 %v1308, %v1408
      %v1441 = vadd.f32 %v1309, %v1408
      %v1442 = vadd.f32 %v1310, %v1408
      %v1443 = vadd.f32 %v1311, %v1408
      %v1444 = vadd.f32 %v1312, %v1408
      %v1445 = vadd.f32 %v1313, %v1408
      %v1446 = vadd.f32 %v1314, %v1408
      %v1447 = vadd.f32 %v1315, %v1408
      %v1448 = vadd.f32 %v1316, %v1408
      %v1449 = vadd.f32 %v1317, %v1408
      %v1450 = vadd.f32 %v1318, %v1408
      %v1451 = vadd.f32 %v1319, %v1408
      %v1452 = vadd.f32 %v1320, %v1408
      %v1453 = vadd.f32 %v1321, %v1408
      %v1454 = vadd.f32 %v1322, %v1408
      %v1455 = vadd.f32 %v1323, %v1408
      %v1456 = vadd.f32 %v1324, %v1408
      %v1457 = vadd.f32 %v1325, %v1408
      %v1458 = vadd.f32 %v1326, %v1408
      %v1459 = vadd.f32 %v1327, %v1408
      %v1460 = vadd.f32 %v1328, %v1408
      %v1461 = vadd.f32 %v1329, %v1408
      %v1462 = vadd.f32 %v1330, %v1408
      %v1463 = vadd.f32 %v1331, %v1408
      %v1464 = vadd.f32 %v1332, %v1408
      %v1465 = vadd.f32 %v1333, %v1408
      %v1466 = vadd.f32 %v1334, %v1408
      %v1467 = vadd.f32 %v1335, %v1408
      %v1468 = vadd.f32 %v1336, %v1408
      %v1469 = vadd.f32 %v1337, %v1408
      %v1470 = vadd.f32 %v1338, %v1408
      %v1471 = vadd.f32 %v1339, %v1408
      %v1472 = vadd.f32 %v1340, %v1408
      %v1473 = vadd.f32 %v1341, %v1408
      %v1474 = vadd.f32 %v1342, %v1408
      %v1475 = vadd.f32 %v1343, %v1408
      %v1476 = vadd.f32 %v1344, %v1408
      %v1477 = vadd.f32 %v1345, %v1408
      %v1478 = vadd.f32 %v1346, %v1408
      %v1479 = vadd.f32 %v1347, %v1408
      %v1480 = vadd.f32 %v1348, %v1408
      %v1481 = vadd.f32 %v1349, %v1408
      %v1482 = vadd.f32 %v1350, %v1408
      %v1483 = vadd.f32 %v1351, %v1408
      %v1484 = vadd.f32 %v1352, %v1408
      %v1485 = vadd.f32 %v1353, %v1408
      %v1486 = vadd.f32 %v1354, %v1408
      %v1487 = vadd.f32 %v1355, %v1408
      %v1488 = vadd.f32 %v1356, %v1408
      %v1489 = vadd.f32 %v1357, %v1408
      %v1490 = vadd.f32 %v1358, %v1408
      %v1491 = vadd.f32 %v1359, %v1408
      %v1492 = vadd.f32 %v1360, %v1408
      %v1493 = vadd.f32 %v1361, %v1408
      %v1494 = vadd.f32 %v1362, %v1408
      %v1495 = vadd.f32 %v1363, %v1408
      %v1496 = vadd.f32 %v1364, %v1408
      %v1497 = vadd.f32 %v1365, %v1408
      %v1498 = vadd.f32 %v1366, %v1408
      %v1499 = vadd.f32 %v1367, %v1408
      %v1500 = vadd.f32 %v1368, %v1408
      %v1501 = vadd.f32 %v1369, %v1408
      %v1502 = vadd.f32 %v1370, %v1408
      %v1503 = vadd.f32 %v1371, %v1408
      %v1504 = vadd.f32 %v1372, %v1408
      %v1505 = vadd.f32 %v1373, %v1408
      %v1506 = vadd.f32 %v1374, %v1408
      %v1507 = vadd.f32 %v1375, %v1408
      %v1508 = vadd.f32 %v1376, %v1408
      %v1509 = vadd.f32 %v1377, %v1408
      %v1510 = vadd.f32 %v1378, %v1408
      %v1511 = vadd.f32 %v1379, %v1408
      %v1512 = vadd.f32 %v1380, %v1408
      %v1513 = vadd.f32 %v1381, %v1408
      %v1514 = vadd.f32 %v1382, %v1408
      %v1515 = vadd.f32 %v1383, %v1408
      %v1516 = vadd.f32 %v1384, %v1408
      %v1517 = vadd.f32 %v1385, %v1408
      %v1518 = vadd.f32 %v1386, %v1408
      %v1519 = vadd.f32 %v1387, %v1408
      %v1520 = vadd.f32 %v1388, %v1408
      %v1521 = vadd.f32 %v1389, %v1408
      %v1522 = vadd.f32 %v1390, %v1408
      %v1523 = vadd.f32 %v1391, %v1408
      %v1524 = vadd.f32 %v1392, %v1408
      %v1525 = vadd.f32 %v1393, %v1408
      %v1526 = vadd.f32 %v1394, %v1408
      %v1527 = vadd.f32 %v1395, %v1408
      %v1528 = vadd.f32 %v1396, %v1408
      %v1529 = vadd.f32 %v1397, %v1408
      %v1530 = vadd.f32 %v1398, %v1408
      %v1531 = vadd.f32 %v1399, %v1408
      %v1532 = vadd.f32 %v1400, %v1408
      %v1533 = vadd.f32 %v1401, %v1408
      %v1534 = vadd.f32 %v1402, %v1408
      %v1535 = vadd.f32 %v1403, %v1408
      %v1536 = vadd.f32 %v1404, %v1408
      %v1537 = vadd.f32 %v1405, %v1408
      %v1538 = vmax.f32 %v1410, 0.0
      %v1539 = vmax.f32 %v1411, 0.0
      %v1540 = vmax.f32 %v1412, 0.0
      %v1541 = vmax.f32 %v1413, 0.0
      %v1542 = vmax.f32 %v1414, 0.0
      %v1543 = vmax.f32 %v1415, 0.0
      %v1544 = vmax.f32 %v1416, 0.0
      %v1545 = vmax.f32 %v1417, 0.0
      %v1546 = vmax.f32 %v1418, 0.0
      %v1547 = vmax.f32 %v1419, 0.0
      %v1548 = vmax.f32 %v1420, 0.0
      %v1549 = vmax.f32 %v1421, 0.0
      %v1550 = vmax.f32 %v1422, 0.0
      %v1551 = vmax.f32 %v1423, 0.0
      %v1552 = vmax.f32 %v1424, 0.0
      %v1553 = vmax.f32 %v1425, 0.0
      %v1554 = vmax.f32 %v1426, 0.0
      %v1555 = vmax.f32 %v1427, 0.0
      %v1556 = vmax.f32 %v1428, 0.0
      %v1557 = vmax.f32 %v1429, 0.0
      %v1558 = vmax.f32 %v1430, 0.0
      %v1559 = vmax.f32 %v1431, 0.0
      %v1560 = vmax.f32 %v1432, 0.0
      %v1561 = vmax.f32 %v1433, 0.0
      %v1562 = vmax.f32 %v1434, 0.0
      %v1563 = vmax.f32 %v1435, 0.0
      %v1564 = vmax.f32 %v1436, 0.0
      %v1565 = vmax.f32 %v1437, 0.0
      %v1566 = vmax.f32 %v1438, 0.0
      %v1567 = vmax.f32 %v1439, 0.0
      %v1568 = vmax.f32 %v1440, 0.0
      %v1569 = vmax.f32 %v1441, 0.0
      %v1570 = vmax.f32 %v1442, 0.0
      %v1571 = vmax.f32 %v1443, 0.0
      %v1572 = vmax.f32 %v1444, 0.0
      %v1573 = vmax.f32 %v1445, 0.0
      %v1574 = vmax.f32 %v1446, 0.0
      %v1575 = vmax.f32 %v1447, 0.0
      %v1576 = vmax.f32 %v1448, 0.0
      %v1577 = vmax.f32 %v1449, 0.0
      %v1578 = vmax.f32 %v1450, 0.0
      %v1579 = vmax.f32 %v1451, 0.0
      %v1580 = vmax.f32 %v1452, 0.0
      %v1581 = vmax.f32 %v1453, 0.0
      %v1582 = vmax.f32 %v1454, 0.0
      %v1583 = vmax.f32 %v1455, 0.0
      %v1584 = vmax.f32 %v1456, 0.0
      %v1585 = vmax.f32 %v1457, 0.0
      %v1586 = vmax.f32 %v1458, 0.0
      %v1587 = vmax.f32 %v1459, 0.0
      %v1588 = vmax.f32 %v1460, 0.0
      %v1589 = vmax.f32 %v1461, 0.0
      %v1590 = vmax.f32 %v1462, 0.0
      %v1591 = vmax.f32 %v1463, 0.0
      %v1592 = vmax.f32 %v1464, 0.0
      %v1593 = vmax.f32 %v1465, 0.0
      %v1594 = vmax.f32 %v1466, 0.0
      %v1595 = vmax.f32 %v1467, 0.0
      %v1596 = vmax.f32 %v1468, 0.0
      %v1597 = vmax.f32 %v1469, 0.0
      %v1598 = vmax.f32 %v1470, 0.0
      %v1599 = vmax.f32 %v1471, 0.0
      %v1600 = vmax.f32 %v1472, 0.0
      %v1601 = vmax.f32 %v1473, 0.0
      %v1602 = vmax.f32 %v1474, 0.0
      %v1603 = vmax.f32 %v1475, 0.0
      %v1604 = vmax.f32 %v1476, 0.0
      %v1605 = vmax.f32 %v1477, 0.0
      %v1606 = vmax.f32 %v1478, 0.0
      %v1607 = vmax.f32 %v1479, 0.0
      %v1608 = vmax.f32 %v1480, 0.0
      %v1609 = vmax.f32 %v1481, 0.0
      %v1610 = vmax.f32 %v1482, 0.0
      %v1611 = vmax.f32 %v1483, 0.0
      %v1612 = vmax.f32 %v1484, 0.0
      %v1613 = vmax.f32 %v1485, 0.0
      %v1614 = vmax.f32 %v1486, 0.0
      %v1615 = vmax.f32 %v1487, 0.0
      %v1616 = vmax.f32 %v1488, 0.0
      %v1617 = vmax.f32 %v1489, 0.0
      %v1618 = vmax.f32 %v1490, 0.0
      %v1619 = vmax.f32 %v1491, 0.0
      %v1620 = vmax.f32 %v1492, 0.0
      %v1621 = vmax.f32 %v1493, 0.0
      %v1622 = vmax.f32 %v1494, 0.0
      %v1623 = vmax.f32 %v1495, 0.0
      %v1624 = vmax.f32 %v1496, 0.0
      %v1625 = vmax.f32 %v1497, 0.0
      %v1626 = vmax.f32 %v1498, 0.0
      %v1627 = vmax.f32 %v1499, 0.0
      %v1628 = vmax.f32 %v1500, 0.0
      %v1629 = vmax.f32 %v1501, 0.0
      %v1630 = vmax.f32 %v1502, 0.0
      %v1631 = vmax.f32 %v1503, 0.0
      %v1632 = vmax.f32 %v1504, 0.0
      %v1633 = vmax.f32 %v1505, 0.0
      %v1634 = vmax.f32 %v1506, 0.0
      %v1635 = vmax.f32 %v1507, 0.0
      %v1636 = vmax.f32 %v1508, 0.0
      %v1637 = vmax.f32 %v1509, 0.0
      %v1638 = vmax.f32 %v1510, 0.0
      %v1639 = vmax.f32 %v1511, 0.0
      %v1640 = vmax.f32 %v1512, 0.0
      %v1641 = vmax.f32 %v1513, 0.0
      %v1642 = vmax.f32 %v1514, 0.0
      %v1643 = vmax.f32 %v1515, 0.0
      %v1644 = vmax.f32 %v1516, 0.0
      %v1645 = vmax.f32 %v1517, 0.0
      %v1646 = vmax.f32 %v1518, 0.0
      %v1647 = vmax.f32 %v1519, 0.0
      %v1648 = vmax.f32 %v1520, 0.0
      %v1649 = vmax.f32 %v1521, 0.0
      %v1650 = vmax.f32 %v1522, 0.0
      %v1651 = vmax.f32 %v1523, 0.0
      %v1652 = vmax.f32 %v1524, 0.0
      %v1653 = vmax.f32 %v1525, 0.0
      %v1654 = vmax.f32 %v1526, 0.0
      %v1655 = vmax.f32 %v1527, 0.0
      %v1656 = vmax.f32 %v1528, 0.0
      %v1657 = vmax.f32 %v1529, 0.0
      %v1658 = vmax.f32 %v1530, 0.0
      %v1659 = vmax.f32 %v1531, 0.0
      %v1660 = vmax.f32 %v1532, 0.0
      %v1661 = vmax.f32 %v1533, 0.0
      %v1662 = vmax.f32 %v1534, 0.0
      %v1663 = vmax.f32 %v1535, 0.0
      %v1664 = vmax.f32 %v1536, 0.0
      %v1665 = vmax.f32 %v1537, 0.0
      %1666 = vst [vmem:[#allocation2] sm:$0xff] 0
      %1667 = vst [vmem:[#allocation2 + $0x8] sm:$0xf] 0
      %1668 = vst [vmem:[#allocation2 + $0xc] sm:$0xff] 0
      %1669 = vst [vmem:[#allocation2 + $0x14] sm:$0xf] 0
      %1670 = vst [vmem:[#allocation2 + $0x1b0] sm:$0xff] 0
      %1671 = vst [vmem:[#allocation2 + $0x1b8] sm:$0xf] 0
      %1672 = vst [vmem:[#allocation2 + $0x1bc] sm:$0xff] 0
      %1673 = vst [vmem:[#allocation2 + $0x1c4] sm:$0xf] 0
      %1674 = vst [vmem:[#allocation2 + $0x360] sm:$0xff] 0
      %1675 = vst [vmem:[#allocation2 + $0x368] sm:$0xf] 0
      %1676 = vst [vmem:[#allocation2 + $0x36c] sm:$0xff] 0
      %1677 = vst [vmem:[#allocation2 + $0x374] sm:$0xf] 0
      %1678 = vst [vmem:[#allocation2 + $0x510] sm:$0xff] 0
      %1679 = vst [vmem:[#allocation2 + $0x518] sm:$0xf] 0
      %1680 = vst [vmem:[#allocation2 + $0x51c] sm:$0xff] 0
      %1681 = vst [vmem:[#allocation2 + $0x524] sm:$0xf] 0
      %s1682 = scalar_lea.vmem [#allocation2], 408
      %1683 = vst [vmem:[%s1682] sm:$0xff] 0
      %1684 = vst [vmem:[%s1682 + $0x8] sm:$0xf] 0
      %1685 = vst [vmem:[%s1682 + $0xc] sm:$0xff] 0
      %1686 = vst [vmem:[%s1682 + $0x14] sm:$0xf] 0
      %1687 = vst [vmem:[%s1682 + $0x1b0] sm:$0xff] 0
      %1688 = vst [vmem:[%s1682 + $0x1b8] sm:$0xf] 0
      %1689 = vst [vmem:[%s1682 + $0x1bc] sm:$0xff] 0
      %1690 = vst [vmem:[%s1682 + $0x1c4] sm:$0xf] 0
      %1691 = vst [vmem:[%s1682 + $0x360] sm:$0xff] 0
      %1692 = vst [vmem:[%s1682 + $0x368] sm:$0xf] 0
      %1693 = vst [vmem:[%s1682 + $0x36c] sm:$0xff] 0
      %1694 = vst [vmem:[%s1682 + $0x374] sm:$0xf] 0
      %1695 = vst [vmem:[%s1682 + $0x510] sm:$0xff] 0
      %1696 = vst [vmem:[%s1682 + $0x518] sm:$0xf] 0
      %1697 = vst [vmem:[%s1682 + $0x51c] sm:$0xff] 0
      %1698 = vst [vmem:[%s1682 + $0x524] sm:$0xf] 0
      %v1699 = vlaneseq
      %v1700 = vshrl.u32 %v1699, 7
      %v1701 = vadd.s32 %v1700, 8
      %vm1702 = vcmp.eq.s32.totalorder %v1700, 0
      %vm1703 = vcmp.eq.s32.totalorder %v1701, 0
      %v1704 = vrot.slane %v1538, 7
      %v1705 = vrot.slane %v1540, 7
      %v1706 = vrot.slane %v1542, 7
      %v1707 = vrot.slane %v1544, 7
      %v1708 = vrot.slane %v1546, 7
      %v1709 = vrot.slane %v1548, 7
      %v1710 = vrot.slane %v1550, 7
      %v1711 = vrot.slane %v1552, 7
      %v1712 = vrot.slane %v1554, 7
      %v1713 = vrot.slane %v1556, 7
      %v1714 = vrot.slane %v1558, 7
      %v1715 = vrot.slane %v1560, 7
      %v1716 = vrot.slane %v1562, 7
      %v1717 = vrot.slane %v1564, 7
      %v1718 = vrot.slane %v1566, 7
      %v1719 = vrot.slane %v1568, 7
      %v1720 = vrot.slane %v1570, 7
      %v1721 = vrot.slane %v1572, 7
      %v1722 = vrot.slane %v1574, 7
      %v1723 = vrot.slane %v1576, 7
      %v1724 = vrot.slane %v1578, 7
      %v1725 = vrot.slane %v1580, 7
      %v1726 = vrot.slane %v1582, 7
      %v1727 = vrot.slane %v1584, 7
      %v1728 = vrot.slane %v1586, 7
      %v1729 = vrot.slane %v1588, 7
      %v1730 = vrot.slane %v1590, 7
      %v1731 = vrot.slane %v1592, 7
      %v1732 = vrot.slane %v1594, 7
      %v1733 = vrot.slane %v1596, 7
      %v1734 = vrot.slane %v1598, 7
      %v1735 = vrot.slane %v1600, 7
      %v1736 = vrot.slane %v1602, 7
      %v1737 = vrot.slane %v1604, 7
      %v1738 = vrot.slane %v1606, 7
      %v1739 = vrot.slane %v1608, 7
      %v1740 = vrot.slane %v1610, 7
      %v1741 = vrot.slane %v1612, 7
      %v1742 = vrot.slane %v1614, 7
      %v1743 = vrot.slane %v1616, 7
      %v1744 = vrot.slane %v1618, 7
      %v1745 = vrot.slane %v1620, 7
      %v1746 = vrot.slane %v1622, 7
      %v1747 = vrot.slane %v1624, 7
      %v1748 = vrot.slane %v1626, 7
      %v1749 = vrot.slane %v1628, 7
      %v1750 = vrot.slane %v1630, 7
      %v1751 = vrot.slane %v1632, 7
      %v1752 = vrot.slane %v1634, 7
      %v1753 = vrot.slane %v1636, 7
      %v1754 = vrot.slane %v1638, 7
      %v1755 = vrot.slane %v1640, 7
      %v1756 = vrot.slane %v1642, 7
      %v1757 = vrot.slane %v1644, 7
      %v1758 = vrot.slane %v1646, 7
      %v1759 = vrot.slane %v1648, 7
      %v1760 = vrot.slane %v1650, 7
      %v1761 = vrot.slane %v1652, 7
      %v1762 = vrot.slane %v1654, 7
      %v1763 = vrot.slane %v1656, 7
      %v1764 = vrot.slane %v1658, 7
      %v1765 = vrot.slane %v1660, 7
      %v1766 = vrot.slane %v1662, 7
      %v1767 = vrot.slane %v1664, 7
      %v1768 = vrot.slane %v1539, 7
      %v1769 = vrot.slane %v1541, 7
      %v1770 = vrot.slane %v1543, 7
      %v1771 = vrot.slane %v1545, 7
      %v1772 = vrot.slane %v1547, 7
      %v1773 = vrot.slane %v1549, 7
      %v1774 = vrot.slane %v1551, 7
      %v1775 = vrot.slane %v1553, 7
      %v1776 = vrot.slane %v1555, 7
      %v1777 = vrot.slane %v1557, 7
      %v1778 = vrot.slane %v1559, 7
      %v1779 = vrot.slane %v1561, 7
      %v1780 = vrot.slane %v1563, 7
      %v1781 = vrot.slane %v1565, 7
      %v1782 = vrot.slane %v1567, 7
      %v1783 = vrot.slane %v1569, 7
      %v1784 = vrot.slane %v1571, 7
      %v1785 = vrot.slane %v1573, 7
      %v1786 = vrot.slane %v1575, 7
      %v1787 = vrot.slane %v1577, 7
      %v1788 = vrot.slane %v1579, 7
      %v1789 = vrot.slane %v1581, 7
      %v1790 = vrot.slane %v1583, 7
      %v1791 = vrot.slane %v1585, 7
      %v1792 = vrot.slane %v1587, 7
      %v1793 = vrot.slane %v1589, 7
      %v1794 = vrot.slane %v1591, 7
      %v1795 = vrot.slane %v1593, 7
      %v1796 = vrot.slane %v1595, 7
      %v1797 = vrot.slane %v1597, 7
      %v1798 = vrot.slane %v1599, 7
      %v1799 = vrot.slane %v1601, 7
      %v1800 = vrot.slane %v1603, 7
      %v1801 = vrot.slane %v1605, 7
      %v1802 = vrot.slane %v1607, 7
      %v1803 = vrot.slane %v1609, 7
      %v1804 = vrot.slane %v1611, 7
      %v1805 = vrot.slane %v1613, 7
      %v1806 = vrot.slane %v1615, 7
      %v1807 = vrot.slane %v1617, 7
      %v1808 = vrot.slane %v1619, 7
      %v1809 = vrot.slane %v1621, 7
      %v1810 = vrot.slane %v1623, 7
      %v1811 = vrot.slane %v1625, 7
      %v1812 = vrot.slane %v1627, 7
      %v1813 = vrot.slane %v1629, 7
      %v1814 = vrot.slane %v1631, 7
      %v1815 = vrot.slane %v1633, 7
      %v1816 = vrot.slane %v1635, 7
      %v1817 = vrot.slane %v1637, 7
      %v1818 = vrot.slane %v1639, 7
      %v1819 = vrot.slane %v1641, 7
      %v1820 = vrot.slane %v1643, 7
      %v1821 = vrot.slane %v1645, 7
      %v1822 = vrot.slane %v1647, 7
      %v1823 = vrot.slane %v1649, 7
      %v1824 = vrot.slane %v1651, 7
      %v1825 = vrot.slane %v1653, 7
      %v1826 = vrot.slane %v1655, 7
      %v1827 = vrot.slane %v1657, 7
      %v1828 = vrot.slane %v1659, 7
      %v1829 = vrot.slane %v1661, 7
      %v1830 = vrot.slane %v1663, 7
      %v1831 = vrot.slane %v1665, 7
      %vm1832 = vcmp.lt.s32.totalorder %v1700, 1
      %v1833 = vsel %vm1832, %v1704, %v1768
      %v1834 = vsel %vm1832, %v1705, %v1769
      %v1835 = vsel %vm1832, %v1706, %v1770
      %v1836 = vsel %vm1832, %v1707, %v1771
      %v1837 = vsel %vm1832, %v1708, %v1772
      %v1838 = vsel %vm1832, %v1709, %v1773
      %v1839 = vsel %vm1832, %v1710, %v1774
      %v1840 = vsel %vm1832, %v1711, %v1775
      %v1841 = vsel %vm1832, %v1712, %v1776
      %v1842 = vsel %vm1832, %v1713, %v1777
      %v1843 = vsel %vm1832, %v1714, %v1778
      %v1844 = vsel %vm1832, %v1715, %v1779
      %v1845 = vsel %vm1832, %v1716, %v1780
      %v1846 = vsel %vm1832, %v1717, %v1781
      %v1847 = vsel %vm1832, %v1718, %v1782
      %v1848 = vsel %vm1832, %v1719, %v1783
      %v1849 = vsel %vm1832, %v1720, %v1784
      %v1850 = vsel %vm1832, %v1721, %v1785
      %v1851 = vsel %vm1832, %v1722, %v1786
      %v1852 = vsel %vm1832, %v1723, %v1787
      %v1853 = vsel %vm1832, %v1724, %v1788
      %v1854 = vsel %vm1832, %v1725, %v1789
      %v1855 = vsel %vm1832, %v1726, %v1790
      %v1856 = vsel %vm1832, %v1727, %v1791
      %v1857 = vsel %vm1832, %v1728, %v1792
      %v1858 = vsel %vm1832, %v1729, %v1793
      %v1859 = vsel %vm1832, %v1730, %v1794
      %v1860 = vsel %vm1832, %v1731, %v1795
      %v1861 = vsel %vm1832, %v1732, %v1796
      %v1862 = vsel %vm1832, %v1733, %v1797
      %v1863 = vsel %vm1832, %v1734, %v1798
      %v1864 = vsel %vm1832, %v1735, %v1799
      %v1865 = vsel %vm1832, %v1736, %v1800
      %v1866 = vsel %vm1832, %v1737, %v1801
      %v1867 = vsel %vm1832, %v1738, %v1802
      %v1868 = vsel %vm1832, %v1739, %v1803
      %v1869 = vsel %vm1832, %v1740, %v1804
      %v1870 = vsel %vm1832, %v1741, %v1805
      %v1871 = vsel %vm1832, %v1742, %v1806
      %v1872 = vsel %vm1832, %v1743, %v1807
      %v1873 = vsel %vm1832, %v1744, %v1808
      %v1874 = vsel %vm1832, %v1745, %v1809
      %v1875 = vsel %vm1832, %v1746, %v1810
      %v1876 = vsel %vm1832, %v1747, %v1811
      %v1877 = vsel %vm1832, %v1748, %v1812
      %v1878 = vsel %vm1832, %v1749, %v1813
      %v1879 = vsel %vm1832, %v1750, %v1814
      %v1880 = vsel %vm1832, %v1751, %v1815
      %v1881 = vsel %vm1832, %v1752, %v1816
      %v1882 = vsel %vm1832, %v1753, %v1817
      %v1883 = vsel %vm1832, %v1754, %v1818
      %v1884 = vsel %vm1832, %v1755, %v1819
      %v1885 = vsel %vm1832, %v1756, %v1820
      %v1886 = vsel %vm1832, %v1757, %v1821
      %v1887 = vsel %vm1832, %v1758, %v1822
      %v1888 = vsel %vm1832, %v1759, %v1823
      %v1889 = vsel %vm1832, %v1760, %v1824
      %v1890 = vsel %vm1832, %v1761, %v1825
      %v1891 = vsel %vm1832, %v1762, %v1826
      %v1892 = vsel %vm1832, %v1763, %v1827
      %v1893 = vsel %vm1832, %v1764, %v1828
      %v1894 = vsel %vm1832, %v1765, %v1829
      %v1895 = vsel %vm1832, %v1766, %v1830
      %v1896 = vsel %vm1832, %v1767, %v1831
      %v1897 = vsel %vm1832, %v1768, %v1704
      %v1898 = vsel %vm1832, %v1769, %v1705
      %v1899 = vsel %vm1832, %v1770, %v1706
      %v1900 = vsel %vm1832, %v1771, %v1707
      %v1901 = vsel %vm1832, %v1772, %v1708
      %v1902 = vsel %vm1832, %v1773, %v1709
      %v1903 = vsel %vm1832, %v1774, %v1710
      %v1904 = vsel %vm1832, %v1775, %v1711
      %v1905 = vsel %vm1832, %v1776, %v1712
      %v1906 = vsel %vm1832, %v1777, %v1713
      %v1907 = vsel %vm1832, %v1778, %v1714
      %v1908 = vsel %vm1832, %v1779, %v1715
      %v1909 = vsel %vm1832, %v1780, %v1716
      %v1910 = vsel %vm1832, %v1781, %v1717
      %v1911 = vsel %vm1832, %v1782, %v1718
      %v1912 = vsel %vm1832, %v1783, %v1719
      %v1913 = vsel %vm1832, %v1784, %v1720
      %v1914 = vsel %vm1832, %v1785, %v1721
      %v1915 = vsel %vm1832, %v1786, %v1722
      %v1916 = vsel %vm1832, %v1787, %v1723
      %v1917 = vsel %vm1832, %v1788, %v1724
      %v1918 = vsel %vm1832, %v1789, %v1725
      %v1919 = vsel %vm1832, %v1790, %v1726
      %v1920 = vsel %vm1832, %v1791, %v1727
      %v1921 = vsel %vm1832, %v1792, %v1728
      %v1922 = vsel %vm1832, %v1793, %v1729
      %v1923 = vsel %vm1832, %v1794, %v1730
      %v1924 = vsel %vm1832, %v1795, %v1731
      %v1925 = vsel %vm1832, %v1796, %v1732
      %v1926 = vsel %vm1832, %v1797, %v1733
      %v1927 = vsel %vm1832, %v1798, %v1734
      %v1928 = vsel %vm1832, %v1799, %v1735
      %v1929 = vsel %vm1832, %v1800, %v1736
      %v1930 = vsel %vm1832, %v1801, %v1737
      %v1931 = vsel %vm1832, %v1802, %v1738
      %v1932 = vsel %vm1832, %v1803, %v1739
      %v1933 = vsel %vm1832, %v1804, %v1740
      %v1934 = vsel %vm1832, %v1805, %v1741
      %v1935 = vsel %vm1832, %v1806, %v1742
      %v1936 = vsel %vm1832, %v1807, %v1743
      %v1937 = vsel %vm1832, %v1808, %v1744
      %v1938 = vsel %vm1832, %v1809, %v1745
      %v1939 = vsel %vm1832, %v1810, %v1746
      %v1940 = vsel %vm1832, %v1811, %v1747
      %v1941 = vsel %vm1832, %v1812, %v1748
      %v1942 = vsel %vm1832, %v1813, %v1749
      %v1943 = vsel %vm1832, %v1814, %v1750
      %v1944 = vsel %vm1832, %v1815, %v1751
      %v1945 = vsel %vm1832, %v1816, %v1752
      %v1946 = vsel %vm1832, %v1817, %v1753
      %v1947 = vsel %vm1832, %v1818, %v1754
      %v1948 = vsel %vm1832, %v1819, %v1755
      %v1949 = vsel %vm1832, %v1820, %v1756
      %v1950 = vsel %vm1832, %v1821, %v1757
      %v1951 = vsel %vm1832, %v1822, %v1758
      %v1952 = vsel %vm1832, %v1823, %v1759
      %v1953 = vsel %vm1832, %v1824, %v1760
      %v1954 = vsel %vm1832, %v1825, %v1761
      %v1955 = vsel %vm1832, %v1826, %v1762
      %v1956 = vsel %vm1832, %v1827, %v1763
      %v1957 = vsel %vm1832, %v1828, %v1764
      %v1958 = vsel %vm1832, %v1829, %v1765
      %v1959 = vsel %vm1832, %v1830, %v1766
      %v1960 = vsel %vm1832, %v1831, %v1767
      %v1961 = vsel %vm1702, 1, 0
      %v1962 = vsel %vm1703, 1, 0
      %vm1963 = vcmp.eq.s32.totalorder %v1961, 1
      %vm1964 = vcmp.eq.s32.totalorder %v1962, 1
      %v1965 = vsel %vm1963, 0.0, %v1897
      %v1966 = vsel %vm1964, 0.0, %v1833
      %v1967 = vsel %vm1963, 0.0, %v1898
      %v1968 = vsel %vm1964, 0.0, %v1834
      %v1969 = vsel %vm1963, 0.0, %v1899
      %v1970 = vsel %vm1964, 0.0, %v1835
      %v1971 = vsel %vm1963, 0.0, %v1900
      %v1972 = vsel %vm1964, 0.0, %v1836
      %v1973 = vsel %vm1963, 0.0, %v1901
      %v1974 = vsel %vm1964, 0.0, %v1837
      %v1975 = vsel %vm1963, 0.0, %v1902
      %v1976 = vsel %vm1964, 0.0, %v1838
      %v1977 = vsel %vm1963, 0.0, %v1903
      %v1978 = vsel %vm1964, 0.0, %v1839
      %v1979 = vsel %vm1963, 0.0, %v1904
      %v1980 = vsel %vm1964, 0.0, %v1840
      %v1981 = vsel %vm1963, 0.0, %v1905
      %v1982 = vsel %vm1964, 0.0, %v1841
      %v1983 = vsel %vm1963, 0.0, %v1906
      %v1984 = vsel %vm1964, 0.0, %v1842
      %v1985 = vsel %vm1963, 0.0, %v1907
      %v1986 = vsel %vm1964, 0.0, %v1843
      %v1987 = vsel %vm1963, 0.0, %v1908
      %v1988 = vsel %vm1964, 0.0, %v1844
      %v1989 = vsel %vm1963, 0.0, %v1909
      %v1990 = vsel %vm1964, 0.0, %v1845
      %v1991 = vsel %vm1963, 0.0, %v1910
      %v1992 = vsel %vm1964, 0.0, %v1846
      %v1993 = vsel %vm1963, 0.0, %v1911
      %v1994 = vsel %vm1964, 0.0, %v1847
      %v1995 = vsel %vm1963, 0.0, %v1912
      %v1996 = vsel %vm1964, 0.0, %v1848
      %v1997 = vsel %vm1963, 0.0, %v1913
      %v1998 = vsel %vm1964, 0.0, %v1849
      %v1999 = vsel %vm1963, 0.0, %v1914
      %v2000 = vsel %vm1964, 0.0, %v1850
      %v2001 = vsel %vm1963, 0.0, %v1915
      %v2002 = vsel %vm1964, 0.0, %v1851
      %v2003 = vsel %vm1963, 0.0, %v1916
      %v2004 = vsel %vm1964, 0.0, %v1852
      %v2005 = vsel %vm1963, 0.0, %v1917
      %v2006 = vsel %vm1964, 0.0, %v1853
      %v2007 = vsel %vm1963, 0.0, %v1918
      %v2008 = vsel %vm1964, 0.0, %v1854
      %v2009 = vsel %vm1963, 0.0, %v1919
      %v2010 = vsel %vm1964, 0.0, %v1855
      %v2011 = vsel %vm1963, 0.0, %v1920
      %v2012 = vsel %vm1964, 0.0, %v1856
      %v2013 = vsel %vm1963, 0.0, %v1921
      %v2014 = vsel %vm1964, 0.0, %v1857
      %v2015 = vsel %vm1963, 0.0, %v1922
      %v2016 = vsel %vm1964, 0.0, %v1858
      %v2017 = vsel %vm1963, 0.0, %v1923
      %v2018 = vsel %vm1964, 0.0, %v1859
      %v2019 = vsel %vm1963, 0.0, %v1924
      %v2020 = vsel %vm1964, 0.0, %v1860
      %v2021 = vsel %vm1963, 0.0, %v1925
      %v2022 = vsel %vm1964, 0.0, %v1861
      %v2023 = vsel %vm1963, 0.0, %v1926
      %v2024 = vsel %vm1964, 0.0, %v1862
      %v2025 = vsel %vm1963, 0.0, %v1927
      %v2026 = vsel %vm1964, 0.0, %v1863
      %v2027 = vsel %vm1963, 0.0, %v1928
      %v2028 = vsel %vm1964, 0.0, %v1864
      %v2029 = vsel %vm1963, 0.0, %v1929
      %v2030 = vsel %vm1964, 0.0, %v1865
      %v2031 = vsel %vm1963, 0.0, %v1930
      %v2032 = vsel %vm1964, 0.0, %v1866
      %v2033 = vsel %vm1963, 0.0, %v1931
      %v2034 = vsel %vm1964, 0.0, %v1867
      %v2035 = vsel %vm1963, 0.0, %v1932
      %v2036 = vsel %vm1964, 0.0, %v1868
      %v2037 = vsel %vm1963, 0.0, %v1933
      %v2038 = vsel %vm1964, 0.0, %v1869
      %v2039 = vsel %vm1963, 0.0, %v1934
      %v2040 = vsel %vm1964, 0.0, %v1870
      %v2041 = vsel %vm1963, 0.0, %v1935
      %v2042 = vsel %vm1964, 0.0, %v1871
      %v2043 = vsel %vm1963, 0.0, %v1936
      %v2044 = vsel %vm1964, 0.0, %v1872
      %v2045 = vsel %vm1963, 0.0, %v1937
      %v2046 = vsel %vm1964, 0.0, %v1873
      %v2047 = vsel %vm1963, 0.0, %v1938
      %v2048 = vsel %vm1964, 0.0, %v1874
      %v2049 = vsel %vm1963, 0.0, %v1939
      %v2050 = vsel %vm1964, 0.0, %v1875
      %v2051 = vsel %vm1963, 0.0, %v1940
      %v2052 = vsel %vm1964, 0.0, %v1876
      %v2053 = vsel %vm1963, 0.0, %v1941
      %v2054 = vsel %vm1964, 0.0, %v1877
      %v2055 = vsel %vm1963, 0.0, %v1942
      %v2056 = vsel %vm1964, 0.0, %v1878
      %v2057 = vsel %vm1963, 0.0, %v1943
      %v2058 = vsel %vm1964, 0.0, %v1879
      %v2059 = vsel %vm1963, 0.0, %v1944
      %v2060 = vsel %vm1964, 0.0, %v1880
      %v2061 = vsel %vm1963, 0.0, %v1945
      %v2062 = vsel %vm1964, 0.0, %v1881
      %v2063 = vsel %vm1963, 0.0, %v1946
      %v2064 = vsel %vm1964, 0.0, %v1882
      %v2065 = vsel %vm1963, 0.0, %v1947
      %v2066 = vsel %vm1964, 0.0, %v1883
      %v2067 = vsel %vm1963, 0.0, %v1948
      %v2068 = vsel %vm1964, 0.0, %v1884
      %v2069 = vsel %vm1963, 0.0, %v1949
      %v2070 = vsel %vm1964, 0.0, %v1885
      %v2071 = vsel %vm1963, 0.0, %v1950
      %v2072 = vsel %vm1964, 0.0, %v1886
      %v2073 = vsel %vm1963, 0.0, %v1951
      %v2074 = vsel %vm1964, 0.0, %v1887
      %v2075 = vsel %vm1963, 0.0, %v1952
      %v2076 = vsel %vm1964, 0.0, %v1888
      %v2077 = vsel %vm1963, 0.0, %v1953
      %v2078 = vsel %vm1964, 0.0, %v1889
      %v2079 = vsel %vm1963, 0.0, %v1954
      %v2080 = vsel %vm1964, 0.0, %v1890
      %v2081 = vsel %vm1963, 0.0, %v1955
      %v2082 = vsel %vm1964, 0.0, %v1891
      %v2083 = vsel %vm1963, 0.0, %v1956
      %v2084 = vsel %vm1964, 0.0, %v1892
      %v2085 = vsel %vm1963, 0.0, %v1957
      %v2086 = vsel %vm1964, 0.0, %v1893
      %v2087 = vsel %vm1963, 0.0, %v1958
      %v2088 = vsel %vm1964, 0.0, %v1894
      %v2089 = vsel %vm1963, 0.0, %v1959
      %v2090 = vsel %vm1964, 0.0, %v1895
      %v2091 = vsel %vm1963, 0.0, %v1960
      %v2092 = vsel %vm1964, 0.0, %v1896
      %vm2093 = vcmp.eq.s32.totalorder %v1700, 15
      %vm2094 = vcmp.eq.s32.totalorder %v1701, 15
      %v2095 = vrot.slane %v1538, 1
      %v2096 = vrot.slane %v1540, 1
      %v2097 = vrot.slane %v1542, 1
      %v2098 = vrot.slane %v1544, 1
      %v2099 = vrot.slane %v1546, 1
      %v2100 = vrot.slane %v1548, 1
      %v2101 = vrot.slane %v1550, 1
      %v2102 = vrot.slane %v1552, 1
      %v2103 = vrot.slane %v1554, 1
      %v2104 = vrot.slane %v1556, 1
      %v2105 = vrot.slane %v1558, 1
      %v2106 = vrot.slane %v1560, 1
      %v2107 = vrot.slane %v1562, 1
      %v2108 = vrot.slane %v1564, 1
      %v2109 = vrot.slane %v1566, 1
      %v2110 = vrot.slane %v1568, 1
      %v2111 = vrot.slane %v1570, 1
      %v2112 = vrot.slane %v1572, 1
      %v2113 = vrot.slane %v1574, 1
      %v2114 = vrot.slane %v1576, 1
      %v2115 = vrot.slane %v1578, 1
      %v2116 = vrot.slane %v1580, 1
      %v2117 = vrot.slane %v1582, 1
      %v2118 = vrot.slane %v1584, 1
      %v2119 = vrot.slane %v1586, 1
      %v2120 = vrot.slane %v1588, 1
      %v2121 = vrot.slane %v1590, 1
      %v2122 = vrot.slane %v1592, 1
      %v2123 = vrot.slane %v1594, 1
      %v2124 = vrot.slane %v1596, 1
      %v2125 = vrot.slane %v1598, 1
      %v2126 = vrot.slane %v1600, 1
      %v2127 = vrot.slane %v1602, 1
      %v2128 = vrot.slane %v1604, 1
      %v2129 = vrot.slane %v1606, 1
      %v2130 = vrot.slane %v1608, 1
      %v2131 = vrot.slane %v1610, 1
      %v2132 = vrot.slane %v1612, 1
      %v2133 = vrot.slane %v1614, 1
      %v2134 = vrot.slane %v1616, 1
      %v2135 = vrot.slane %v1618, 1
      %v2136 = vrot.slane %v1620, 1
      %v2137 = vrot.slane %v1622, 1
      %v2138 = vrot.slane %v1624, 1
      %v2139 = vrot.slane %v1626, 1
      %v2140 = vrot.slane %v1628, 1
      %v2141 = vrot.slane %v1630, 1
      %v2142 = vrot.slane %v1632, 1
      %v2143 = vrot.slane %v1634, 1
      %v2144 = vrot.slane %v1636, 1
      %v2145 = vrot.slane %v1638, 1
      %v2146 = vrot.slane %v1640, 1
      %v2147 = vrot.slane %v1642, 1
      %v2148 = vrot.slane %v1644, 1
      %v2149 = vrot.slane %v1646, 1
      %v2150 = vrot.slane %v1648, 1
      %v2151 = vrot.slane %v1650, 1
      %v2152 = vrot.slane %v1652, 1
      %v2153 = vrot.slane %v1654, 1
      %v2154 = vrot.slane %v1656, 1
      %v2155 = vrot.slane %v1658, 1
      %v2156 = vrot.slane %v1660, 1
      %v2157 = vrot.slane %v1662, 1
      %v2158 = vrot.slane %v1664, 1
      %v2159 = vrot.slane %v1539, 1
      %v2160 = vrot.slane %v1541, 1
      %v2161 = vrot.slane %v1543, 1
      %v2162 = vrot.slane %v1545, 1
      %v2163 = vrot.slane %v1547, 1
      %v2164 = vrot.slane %v1549, 1
      %v2165 = vrot.slane %v1551, 1
      %v2166 = vrot.slane %v1553, 1
      %v2167 = vrot.slane %v1555, 1
      %v2168 = vrot.slane %v1557, 1
      %v2169 = vrot.slane %v1559, 1
      %v2170 = vrot.slane %v1561, 1
      %v2171 = vrot.slane %v1563, 1
      %v2172 = vrot.slane %v1565, 1
      %v2173 = vrot.slane %v1567, 1
      %v2174 = vrot.slane %v1569, 1
      %v2175 = vrot.slane %v1571, 1
      %v2176 = vrot.slane %v1573, 1
      %v2177 = vrot.slane %v1575, 1
      %v2178 = vrot.slane %v1577, 1
      %v2179 = vrot.slane %v1579, 1
      %v2180 = vrot.slane %v1581, 1
      %v2181 = vrot.slane %v1583, 1
      %v2182 = vrot.slane %v1585, 1
      %v2183 = vrot.slane %v1587, 1
      %v2184 = vrot.slane %v1589, 1
      %v2185 = vrot.slane %v1591, 1
      %v2186 = vrot.slane %v1593, 1
      %v2187 = vrot.slane %v1595, 1
      %v2188 = vrot.slane %v1597, 1
      %v2189 = vrot.slane %v1599, 1
      %v2190 = vrot.slane %v1601, 1
      %v2191 = vrot.slane %v1603, 1
      %v2192 = vrot.slane %v1605, 1
      %v2193 = vrot.slane %v1607, 1
      %v2194 = vrot.slane %v1609, 1
      %v2195 = vrot.slane %v1611, 1
      %v2196 = vrot.slane %v1613, 1
      %v2197 = vrot.slane %v1615, 1
      %v2198 = vrot.slane %v1617, 1
      %v2199 = vrot.slane %v1619, 1
      %v2200 = vrot.slane %v1621, 1
      %v2201 = vrot.slane %v1623, 1
      %v2202 = vrot.slane %v1625, 1
      %v2203 = vrot.slane %v1627, 1
      %v2204 = vrot.slane %v1629, 1
      %v2205 = vrot.slane %v1631, 1
      %v2206 = vrot.slane %v1633, 1
      %v2207 = vrot.slane %v1635, 1
      %v2208 = vrot.slane %v1637, 1
      %v2209 = vrot.slane %v1639, 1
      %v2210 = vrot.slane %v1641, 1
      %v2211 = vrot.slane %v1643, 1
      %v2212 = vrot.slane %v1645, 1
      %v2213 = vrot.slane %v1647, 1
      %v2214 = vrot.slane %v1649, 1
      %v2215 = vrot.slane %v1651, 1
      %v2216 = vrot.slane %v1653, 1
      %v2217 = vrot.slane %v1655, 1
      %v2218 = vrot.slane %v1657, 1
      %v2219 = vrot.slane %v1659, 1
      %v2220 = vrot.slane %v1661, 1
      %v2221 = vrot.slane %v1663, 1
      %v2222 = vrot.slane %v1665, 1
      %vm2223 = vcmp.lt.s32.totalorder %v1700, 7
      %v2224 = vsel %vm2223, %v2095, %v2159
      %v2225 = vsel %vm2223, %v2096, %v2160
      %v2226 = vsel %vm2223, %v2097, %v2161
      %v2227 = vsel %vm2223, %v2098, %v2162
      %v2228 = vsel %vm2223, %v2099, %v2163
      %v2229 = vsel %vm2223, %v2100, %v2164
      %v2230 = vsel %vm2223, %v2101, %v2165
      %v2231 = vsel %vm2223, %v2102, %v2166
      %v2232 = vsel %vm2223, %v2103, %v2167
      %v2233 = vsel %vm2223, %v2104, %v2168
      %v2234 = vsel %vm2223, %v2105, %v2169
      %v2235 = vsel %vm2223, %v2106, %v2170
      %v2236 = vsel %vm2223, %v2107, %v2171
      %v2237 = vsel %vm2223, %v2108, %v2172
      %v2238 = vsel %vm2223, %v2109, %v2173
      %v2239 = vsel %vm2223, %v2110, %v2174
      %v2240 = vsel %vm2223, %v2111, %v2175
      %v2241 = vsel %vm2223, %v2112, %v2176
      %v2242 = vsel %vm2223, %v2113, %v2177
      %v2243 = vsel %vm2223, %v2114, %v2178
      %v2244 = vsel %vm2223, %v2115, %v2179
      %v2245 = vsel %vm2223, %v2116, %v2180
      %v2246 = vsel %vm2223, %v2117, %v2181
      %v2247 = vsel %vm2223, %v2118, %v2182
      %v2248 = vsel %vm2223, %v2119, %v2183
      %v2249 = vsel %vm2223, %v2120, %v2184
      %v2250 = vsel %vm2223, %v2121, %v2185
      %v2251 = vsel %vm2223, %v2122, %v2186
      %v2252 = vsel %vm2223, %v2123, %v2187
      %v2253 = vsel %vm2223, %v2124, %v2188
      %v2254 = vsel %vm2223, %v2125, %v2189
      %v2255 = vsel %vm2223, %v2126, %v2190
      %v2256 = vsel %vm2223, %v2127, %v2191
      %v2257 = vsel %vm2223, %v2128, %v2192
      %v2258 = vsel %vm2223, %v2129, %v2193
      %v2259 = vsel %vm2223, %v2130, %v2194
      %v2260 = vsel %vm2223, %v2131, %v2195
      %v2261 = vsel %vm2223, %v2132, %v2196
      %v2262 = vsel %vm2223, %v2133, %v2197
      %v2263 = vsel %vm2223, %v2134, %v2198
      %v2264 = vsel %vm2223, %v2135, %v2199
      %v2265 = vsel %vm2223, %v2136, %v2200
      %v2266 = vsel %vm2223, %v2137, %v2201
      %v2267 = vsel %vm2223, %v2138, %v2202
      %v2268 = vsel %vm2223, %v2139, %v2203
      %v2269 = vsel %vm2223, %v2140, %v2204
      %v2270 = vsel %vm2223, %v2141, %v2205
      %v2271 = vsel %vm2223, %v2142, %v2206
      %v2272 = vsel %vm2223, %v2143, %v2207
      %v2273 = vsel %vm2223, %v2144, %v2208
      %v2274 = vsel %vm2223, %v2145, %v2209
      %v2275 = vsel %vm2223, %v2146, %v2210
      %v2276 = vsel %vm2223, %v2147, %v2211
      %v2277 = vsel %vm2223, %v2148, %v2212
      %v2278 = vsel %vm2223, %v2149, %v2213
      %v2279 = vsel %vm2223, %v2150, %v2214
      %v2280 = vsel %vm2223, %v2151, %v2215
      %v2281 = vsel %vm2223, %v2152, %v2216
      %v2282 = vsel %vm2223, %v2153, %v2217
      %v2283 = vsel %vm2223, %v2154, %v2218
      %v2284 = vsel %vm2223, %v2155, %v2219
      %v2285 = vsel %vm2223, %v2156, %v2220
      %v2286 = vsel %vm2223, %v2157, %v2221
      %v2287 = vsel %vm2223, %v2158, %v2222
      %v2288 = vsel %vm2223, %v2159, %v2095
      %v2289 = vsel %vm2223, %v2160, %v2096
      %v2290 = vsel %vm2223, %v2161, %v2097
      %v2291 = vsel %vm2223, %v2162, %v2098
      %v2292 = vsel %vm2223, %v2163, %v2099
      %v2293 = vsel %vm2223, %v2164, %v2100
      %v2294 = vsel %vm2223, %v2165, %v2101
      %v2295 = vsel %vm2223, %v2166, %v2102
      %v2296 = vsel %vm2223, %v2167, %v2103
      %v2297 = vsel %vm2223, %v2168, %v2104
      %v2298 = vsel %vm2223, %v2169, %v2105
      %v2299 = vsel %vm2223, %v2170, %v2106
      %v2300 = vsel %vm2223, %v2171, %v2107
      %v2301 = vsel %vm2223, %v2172, %v2108
      %v2302 = vsel %vm2223, %v2173, %v2109
      %v2303 = vsel %vm2223, %v2174, %v2110
      %v2304 = vsel %vm2223, %v2175, %v2111
      %v2305 = vsel %vm2223, %v2176, %v2112
      %v2306 = vsel %vm2223, %v2177, %v2113
      %v2307 = vsel %vm2223, %v2178, %v2114
      %v2308 = vsel %vm2223, %v2179, %v2115
      %v2309 = vsel %vm2223, %v2180, %v2116
      %v2310 = vsel %vm2223, %v2181, %v2117
      %v2311 = vsel %vm2223, %v2182, %v2118
      %v2312 = vsel %vm2223, %v2183, %v2119
      %v2313 = vsel %vm2223, %v2184, %v2120
      %v2314 = vsel %vm2223, %v2185, %v2121
      %v2315 = vsel %vm2223, %v2186, %v2122
      %v2316 = vsel %vm2223, %v2187, %v2123
      %v2317 = vsel %vm2223, %v2188, %v2124
      %v2318 = vsel %vm2223, %v2189, %v2125
      %v2319 = vsel %vm2223, %v2190, %v2126
      %v2320 = vsel %vm2223, %v2191, %v2127
      %v2321 = vsel %vm2223, %v2192, %v2128
      %v2322 = vsel %vm2223, %v2193, %v2129
      %v2323 = vsel %vm2223, %v2194, %v2130
      %v2324 = vsel %vm2223, %v2195, %v2131
      %v2325 = vsel %vm2223, %v2196, %v2132
      %v2326 = vsel %vm2223, %v2197, %v2133
      %v2327 = vsel %vm2223, %v2198, %v2134
      %v2328 = vsel %vm2223, %v2199, %v2135
      %v2329 = vsel %vm2223, %v2200, %v2136
      %v2330 = vsel %vm2223, %v2201, %v2137
      %v2331 = vsel %vm2223, %v2202, %v2138
      %v2332 = vsel %vm2223, %v2203, %v2139
      %v2333 = vsel %vm2223, %v2204, %v2140
      %v2334 = vsel %vm2223, %v2205, %v2141
      %v2335 = vsel %vm2223, %v2206, %v2142
      %v2336 = vsel %vm2223, %v2207, %v2143
      %v2337 = vsel %vm2223, %v2208, %v2144
      %v2338 = vsel %vm2223, %v2209, %v2145
      %v2339 = vsel %vm2223, %v2210, %v2146
      %v2340 = vsel %vm2223, %v2211, %v2147
      %v2341 = vsel %vm2223, %v2212, %v2148
      %v2342 = vsel %vm2223, %v2213, %v2149
      %v2343 = vsel %vm2223, %v2214, %v2150
      %v2344 = vsel %vm2223, %v2215, %v2151
      %v2345 = vsel %vm2223, %v2216, %v2152
      %v2346 = vsel %vm2223, %v2217, %v2153
      %v2347 = vsel %vm2223, %v2218, %v2154
      %v2348 = vsel %vm2223, %v2219, %v2155
      %v2349 = vsel %vm2223, %v2220, %v2156
      %v2350 = vsel %vm2223, %v2221, %v2157
      %v2351 = vsel %vm2223, %v2222, %v2158
      %v2352 = vsel %vm2093, 1, 0
      %v2353 = vsel %vm2094, 1, 0
      %vm2354 = vcmp.eq.s32.totalorder %v2352, 1
      %vm2355 = vcmp.eq.s32.totalorder %v2353, 1
      %v2356 = vsel %vm2354, 0.0, %v2224
      %v2357 = vsel %vm2355, 0.0, %v2288
      %v2358 = vsel %vm2354, 0.0, %v2225
      %v2359 = vsel %vm2355, 0.0, %v2289
      %v2360 = vsel %vm2354, 0.0, %v2226
      %v2361 = vsel %vm2355, 0.0, %v2290
      %v2362 = vsel %vm2354, 0.0, %v2227
      %v2363 = vsel %vm2355, 0.0, %v2291
      %v2364 = vsel %vm2354, 0.0, %v2228
      %v2365 = vsel %vm2355, 0.0, %v2292
      %v2366 = vsel %vm2354, 0.0, %v2229
      %v2367 = vsel %vm2355, 0.0, %v2293
      %v2368 = vsel %vm2354, 0.0, %v2230
      %v2369 = vsel %vm2355, 0.0, %v2294
      %v2370 = vsel %vm2354, 0.0, %v2231
      %v2371 = vsel %vm2355, 0.0, %v2295
      %v2372 = vsel %vm2354, 0.0, %v2232
      %v2373 = vsel %vm2355, 0.0, %v2296
      %v2374 = vsel %vm2354, 0.0, %v2233
      %v2375 = vsel %vm2355, 0.0, %v2297
      %v2376 = vsel %vm2354, 0.0, %v2234
      %v2377 = vsel %vm2355, 0.0, %v2298
      %v2378 = vsel %vm2354, 0.0, %v2235
      %v2379 = vsel %vm2355, 0.0, %v2299
      %v2380 = vsel %vm2354, 0.0, %v2236
      %v2381 = vsel %vm2355, 0.0, %v2300
      %v2382 = vsel %vm2354, 0.0, %v2237
      %v2383 = vsel %vm2355, 0.0, %v2301
      %v2384 = vsel %vm2354, 0.0, %v2238
      %v2385 = vsel %vm2355, 0.0, %v2302
      %v2386 = vsel %vm2354, 0.0, %v2239
      %v2387 = vsel %vm2355, 0.0, %v2303
      %v2388 = vsel %vm2354, 0.0, %v2240
      %v2389 = vsel %vm2355, 0.0, %v2304
      %v2390 = vsel %vm2354, 0.0, %v2241
      %v2391 = vsel %vm2355, 0.0, %v2305
      %v2392 = vsel %vm2354, 0.0, %v2242
      %v2393 = vsel %vm2355, 0.0, %v2306
      %v2394 = vsel %vm2354, 0.0, %v2243
      %v2395 = vsel %vm2355, 0.0, %v2307
      %v2396 = vsel %vm2354, 0.0, %v2244
      %v2397 = vsel %vm2355, 0.0, %v2308
      %v2398 = vsel %vm2354, 0.0, %v2245
      %v2399 = vsel %vm2355, 0.0, %v2309
      %v2400 = vsel %vm2354, 0.0, %v2246
      %v2401 = vsel %vm2355, 0.0, %v2310
      %v2402 = vsel %vm2354, 0.0, %v2247
      %v2403 = vsel %vm2355, 0.0, %v2311
      %v2404 = vsel %vm2354, 0.0, %v2248
      %v2405 = vsel %vm2355, 0.0, %v2312
      %v2406 = vsel %vm2354, 0.0, %v2249
      %v2407 = vsel %vm2355, 0.0, %v2313
      %v2408 = vsel %vm2354, 0.0, %v2250
      %v2409 = vsel %vm2355, 0.0, %v2314
      %v2410 = vsel %vm2354, 0.0, %v2251
      %v2411 = vsel %vm2355, 0.0, %v2315
      %v2412 = vsel %vm2354, 0.0, %v2252
      %v2413 = vsel %vm2355, 0.0, %v2316
      %v2414 = vsel %vm2354, 0.0, %v2253
      %v2415 = vsel %vm2355, 0.0, %v2317
      %v2416 = vsel %vm2354, 0.0, %v2254
      %v2417 = vsel %vm2355, 0.0, %v2318
      %v2418 = vsel %vm2354, 0.0, %v2255
      %v2419 = vsel %vm2355, 0.0, %v2319
      %v2420 = vsel %vm2354, 0.0, %v2256
      %v2421 = vsel %vm2355, 0.0, %v2320
      %v2422 = vsel %vm2354, 0.0, %v2257
      %v2423 = vsel %vm2355, 0.0, %v2321
      %v2424 = vsel %vm2354, 0.0, %v2258
      %v2425 = vsel %vm2355, 0.0, %v2322
      %v2426 = vsel %vm2354, 0.0, %v2259
      %v2427 = vsel %vm2355, 0.0, %v2323
      %v2428 = vsel %vm2354, 0.0, %v2260
      %v2429 = vsel %vm2355, 0.0, %v2324
      %v2430 = vsel %vm2354, 0.0, %v2261
      %v2431 = vsel %vm2355, 0.0, %v2325
      %v2432 = vsel %vm2354, 0.0, %v2262
      %v2433 = vsel %vm2355, 0.0, %v2326
      %v2434 = vsel %vm2354, 0.0, %v2263
      %v2435 = vsel %vm2355, 0.0, %v2327
      %v2436 = vsel %vm2354, 0.0, %v2264
      %v2437 = vsel %vm2355, 0.0, %v2328
      %v2438 = vsel %vm2354, 0.0, %v2265
      %v2439 = vsel %vm2355, 0.0, %v2329
      %v2440 = vsel %vm2354, 0.0, %v2266
      %v2441 = vsel %vm2355, 0.0, %v2330
      %v2442 = vsel %vm2354, 0.0, %v2267
      %v2443 = vsel %vm2355, 0.0, %v2331
      %v2444 = vsel %vm2354, 0.0, %v2268
      %v2445 = vsel %vm2355, 0.0, %v2332
      %v2446 = vsel %vm2354, 0.0, %v2269
      %v2447 = vsel %vm2355, 0.0, %v2333
      %v2448 = vsel %vm2354, 0.0, %v2270
      %v2449 = vsel %vm2355, 0.0, %v2334
      %v2450 = vsel %vm2354, 0.0, %v2271
      %v2451 = vsel %vm2355, 0.0, %v2335
      %v2452 = vsel %vm2354, 0.0, %v2272
      %v2453 = vsel %vm2355, 0.0, %v2336
      %v2454 = vsel %vm2354, 0.0, %v2273
      %v2455 = vsel %vm2355, 0.0, %v2337
      %v2456 = vsel %vm2354, 0.0, %v2274
      %v2457 = vsel %vm2355, 0.0, %v2338
      %v2458 = vsel %vm2354, 0.0, %v2275
      %v2459 = vsel %vm2355, 0.0, %v2339
      %v2460 = vsel %vm2354, 0.0, %v2276
      %v2461 = vsel %vm2355, 0.0, %v2340
      %v2462 = vsel %vm2354, 0.0, %v2277
      %v2463 = vsel %vm2355, 0.0, %v2341
      %v2464 = vsel %vm2354, 0.0, %v2278
      %v2465 = vsel %vm2355, 0.0, %v2342
      %v2466 = vsel %vm2354, 0.0, %v2279
      %v2467 = vsel %vm2355, 0.0, %v2343
      %v2468 = vsel %vm2354, 0.0, %v2280
      %v2469 = vsel %vm2355, 0.0, %v2344
      %v2470 = vsel %vm2354, 0.0, %v2281
      %v2471 = vsel %vm2355, 0.0, %v2345
      %v2472 = vsel %vm2354, 0.0, %v2282
      %v2473 = vsel %vm2355, 0.0, %v2346
      %v2474 = vsel %vm2354, 0.0, %v2283
      %v2475 = vsel %vm2355, 0.0, %v2347
      %v2476 = vsel %vm2354, 0.0, %v2284
      %v2477 = vsel %vm2355, 0.0, %v2348
      %v2478 = vsel %vm2354, 0.0, %v2285
      %v2479 = vsel %vm2355, 0.0, %v2349
      %v2480 = vsel %vm2354, 0.0, %v2286
      %v2481 = vsel %vm2355, 0.0, %v2350
      %v2482 = vsel %vm2354, 0.0, %v2287
      %v2483 = vsel %vm2355, 0.0, %v2351
      %v2484 = vpack.c.bf16 %v1965, %v1965
      %v2485 = vpack.c.bf16 %v1966, %v1966
      %v2486 = vpack.c.bf16 %v1967, %v1967
      %v2487 = vpack.c.bf16 %v1968, %v1968
      %v2488 = vpack.c.bf16 %v1969, %v1969
      %v2489 = vpack.c.bf16 %v1970, %v1970
      %v2490 = vpack.c.bf16 %v1971, %v1971
      %v2491 = vpack.c.bf16 %v1972, %v1972
      %v2492 = vpack.c.bf16 %v1973, %v1973
      %v2493 = vpack.c.bf16 %v1974, %v1974
      %v2494 = vpack.c.bf16 %v1975, %v1975
      %v2495 = vpack.c.bf16 %v1976, %v1976
      %v2496 = vpack.c.bf16 %v1977, %v1977
      %v2497 = vpack.c.bf16 %v1978, %v1978
      %v2498 = vpack.c.bf16 %v1979, %v1979
      %v2499 = vpack.c.bf16 %v1980, %v1980
      %v2500 = vpack.c.bf16 %v1981, %v1981
      %v2501 = vpack.c.bf16 %v1982, %v1982
      %v2502 = vpack.c.bf16 %v1983, %v1983
      %v2503 = vpack.c.bf16 %v1984, %v1984
      %v2504 = vpack.c.bf16 %v1985, %v1985
      %v2505 = vpack.c.bf16 %v1986, %v1986
      %v2506 = vpack.c.bf16 %v1987, %v1987
      %v2507 = vpack.c.bf16 %v1988, %v1988
      %v2508 = vpack.c.bf16 %v1989, %v1989
      %v2509 = vpack.c.bf16 %v1990, %v1990
      %v2510 = vpack.c.bf16 %v1991, %v1991
      %v2511 = vpack.c.bf16 %v1992, %v1992
      %v2512 = vpack.c.bf16 %v1993, %v1993
      %v2513 = vpack.c.bf16 %v1994, %v1994
      %v2514 = vpack.c.bf16 %v1995, %v1995
      %v2515 = vpack.c.bf16 %v1996, %v1996
      %v2516 = vpack.c.bf16 %v1997, %v1997
      %v2517 = vpack.c.bf16 %v1998, %v1998
      %v2518 = vpack.c.bf16 %v1999, %v1999
      %v2519 = vpack.c.bf16 %v2000, %v2000
      %v2520 = vpack.c.bf16 %v2001, %v2001
      %v2521 = vpack.c.bf16 %v2002, %v2002
      %v2522 = vpack.c.bf16 %v2003, %v2003
      %v2523 = vpack.c.bf16 %v2004, %v2004
      %v2524 = vpack.c.bf16 %v2005, %v2005
      %v2525 = vpack.c.bf16 %v2006, %v2006
      %v2526 = vpack.c.bf16 %v2007, %v2007
      %v2527 = vpack.c.bf16 %v2008, %v2008
      %v2528 = vpack.c.bf16 %v2009, %v2009
      %v2529 = vpack.c.bf16 %v2010, %v2010
      %v2530 = vpack.c.bf16 %v2011, %v2011
      %v2531 = vpack.c.bf16 %v2012, %v2012
      %v2532 = vpack.c.bf16 %v2013, %v2013
      %v2533 = vpack.c.bf16 %v2014, %v2014
      %v2534 = vpack.c.bf16 %v2015, %v2015
      %v2535 = vpack.c.bf16 %v2016, %v2016
      %v2536 = vpack.c.bf16 %v2017, %v2017
      %v2537 = vpack.c.bf16 %v2018, %v2018
      %v2538 = vpack.c.bf16 %v2019, %v2019
      %v2539 = vpack.c.bf16 %v2020, %v2020
      %v2540 = vpack.c.bf16 %v2021, %v2021
      %v2541 = vpack.c.bf16 %v2022, %v2022
      %v2542 = vpack.c.bf16 %v2023, %v2023
      %v2543 = vpack.c.bf16 %v2024, %v2024
      %v2544 = vpack.c.bf16 %v2025, %v2025
      %v2545 = vpack.c.bf16 %v2026, %v2026
      %v2546 = vpack.c.bf16 %v2027, %v2027
      %v2547 = vpack.c.bf16 %v2028, %v2028
      %v2548 = vpack.c.bf16 %v2029, %v2029
      %v2549 = vpack.c.bf16 %v2030, %v2030
      %v2550 = vpack.c.bf16 %v2031, %v2031
      %v2551 = vpack.c.bf16 %v2032, %v2032
      %v2552 = vpack.c.bf16 %v2033, %v2033
      %v2553 = vpack.c.bf16 %v2034, %v2034
      %v2554 = vpack.c.bf16 %v2035, %v2035
      %v2555 = vpack.c.bf16 %v2036, %v2036
      %v2556 = vpack.c.bf16 %v2037, %v2037
      %v2557 = vpack.c.bf16 %v2038, %v2038
      %v2558 = vpack.c.bf16 %v2039, %v2039
      %v2559 = vpack.c.bf16 %v2040, %v2040
      %v2560 = vpack.c.bf16 %v2041, %v2041
      %v2561 = vpack.c.bf16 %v2042, %v2042
      %v2562 = vpack.c.bf16 %v2043, %v2043
      %v2563 = vpack.c.bf16 %v2044, %v2044
      %v2564 = vpack.c.bf16 %v2045, %v2045
      %v2565 = vpack.c.bf16 %v2046, %v2046
      %v2566 = vpack.c.bf16 %v2047, %v2047
      %v2567 = vpack.c.bf16 %v2048, %v2048
      %v2568 = vpack.c.bf16 %v2049, %v2049
      %v2569 = vpack.c.bf16 %v2050, %v2050
      %v2570 = vpack.c.bf16 %v2051, %v2051
      %v2571 = vpack.c.bf16 %v2052, %v2052
      %v2572 = vpack.c.bf16 %v2053, %v2053
      %v2573 = vpack.c.bf16 %v2054, %v2054
      %v2574 = vpack.c.bf16 %v2055, %v2055
      %v2575 = vpack.c.bf16 %v2056, %v2056
      %v2576 = vpack.c.bf16 %v2057, %v2057
      %v2577 = vpack.c.bf16 %v2058, %v2058
      %v2578 = vpack.c.bf16 %v2059, %v2059
      %v2579 = vpack.c.bf16 %v2060, %v2060
      %v2580 = vpack.c.bf16 %v2061, %v2061
      %v2581 = vpack.c.bf16 %v2062, %v2062
      %v2582 = vpack.c.bf16 %v2063, %v2063
      %v2583 = vpack.c.bf16 %v2064, %v2064
      %v2584 = vpack.c.bf16 %v2065, %v2065
      %v2585 = vpack.c.bf16 %v2066, %v2066
      %v2586 = vpack.c.bf16 %v2067, %v2067
      %v2587 = vpack.c.bf16 %v2068, %v2068
      %v2588 = vpack.c.bf16 %v2069, %v2069
      %v2589 = vpack.c.bf16 %v2070, %v2070
      %v2590 = vpack.c.bf16 %v2071, %v2071
      %v2591 = vpack.c.bf16 %v2072, %v2072
      %v2592 = vpack.c.bf16 %v2073, %v2073
      %v2593 = vpack.c.bf16 %v2074, %v2074
      %v2594 = vpack.c.bf16 %v2075, %v2075
      %v2595 = vpack.c.bf16 %v2076, %v2076
      %v2596 = vpack.c.bf16 %v2077, %v2077
      %v2597 = vpack.c.bf16 %v2078, %v2078
      %v2598 = vpack.c.bf16 %v2079, %v2079
      %v2599 = vpack.c.bf16 %v2080, %v2080
      %v2600 = vpack.c.bf16 %v2081, %v2081
      %v2601 = vpack.c.bf16 %v2082, %v2082
      %v2602 = vpack.c.bf16 %v2083, %v2083
      %v2603 = vpack.c.bf16 %v2084, %v2084
      %v2604 = vpack.c.bf16 %v2085, %v2085
      %v2605 = vpack.c.bf16 %v2086, %v2086
      %v2606 = vpack.c.bf16 %v2087, %v2087
      %v2607 = vpack.c.bf16 %v2088, %v2088
      %v2608 = vpack.c.bf16 %v2089, %v2089
      %v2609 = vpack.c.bf16 %v2090, %v2090
      %v2610 = vpack.c.bf16 %v2091, %v2091
      %v2611 = vpack.c.bf16 %v2092, %v2092
      %s2612 = scalar_lea.vmem [#allocation2], 24
      %2613 = vst [vmem:[%s2612] sm:$0xf] %v2484
      %2614 = vst [vmem:[%s2612 + $0xc] sm:$0xf] %v2485
      %2615 = vst [vmem:[%s2612 + $0x18] sm:$0xf] %v2486
      %2616 = vst [vmem:[%s2612 + $0x24] sm:$0xf] %v2487
      %2617 = vst [vmem:[%s2612 + $0x30] sm:$0xf] %v2488
      %2618 = vst [vmem:[%s2612 + $0x3c] sm:$0xf] %v2489
      %2619 = vst [vmem:[%s2612 + $0x48] sm:$0xf] %v2490
      %2620 = vst [vmem:[%s2612 + $0x54] sm:$0xf] %v2491
      %2621 = vst [vmem:[%s2612 + $0x60] sm:$0xf] %v2492
      %2622 = vst [vmem:[%s2612 + $0x6c] sm:$0xf] %v2493
      %2623 = vst [vmem:[%s2612 + $0x78] sm:$0xf] %v2494
      %2624 = vst [vmem:[%s2612 + $0x84] sm:$0xf] %v2495
      %2625 = vst [vmem:[%s2612 + $0x90] sm:$0xf] %v2496
      %2626 = vst [vmem:[%s2612 + $0x9c] sm:$0xf] %v2497
      %2627 = vst [vmem:[%s2612 + $0xa8] sm:$0xf] %v2498
      %2628 = vst [vmem:[%s2612 + $0xb4] sm:$0xf] %v2499
      %2629 = vst [vmem:[%s2612 + $0xc0] sm:$0xf] %v2500
      %2630 = vst [vmem:[%s2612 + $0xcc] sm:$0xf] %v2501
      %2631 = vst [vmem:[%s2612 + $0xd8] sm:$0xf] %v2502
      %2632 = vst [vmem:[%s2612 + $0xe4] sm:$0xf] %v2503
      %2633 = vst [vmem:[%s2612 + $0xf0] sm:$0xf] %v2504
      %2634 = vst [vmem:[%s2612 + $0xfc] sm:$0xf] %v2505
      %2635 = vst [vmem:[%s2612 + $0x108] sm:$0xf] %v2506
      %2636 = vst [vmem:[%s2612 + $0x114] sm:$0xf] %v2507
      %2637 = vst [vmem:[%s2612 + $0x120] sm:$0xf] %v2508
      %2638 = vst [vmem:[%s2612 + $0x12c] sm:$0xf] %v2509
      %2639 = vst [vmem:[%s2612 + $0x138] sm:$0xf] %v2510
      %2640 = vst [vmem:[%s2612 + $0x144] sm:$0xf] %v2511
      %2641 = vst [vmem:[%s2612 + $0x150] sm:$0xf] %v2512
      %2642 = vst [vmem:[%s2612 + $0x15c] sm:$0xf] %v2513
      %2643 = vst [vmem:[%s2612 + $0x168] sm:$0xf] %v2514
      %2644 = vst [vmem:[%s2612 + $0x174] sm:$0xf] %v2515
      %2645 = vst [vmem:[%s2612 + $0x1b0] sm:$0xf] %v2516
      %2646 = vst [vmem:[%s2612 + $0x1bc] sm:$0xf] %v2517
      %2647 = vst [vmem:[%s2612 + $0x1c8] sm:$0xf] %v2518
      %2648 = vst [vmem:[%s2612 + $0x1d4] sm:$0xf] %v2519
      %2649 = vst [vmem:[%s2612 + $0x1e0] sm:$0xf] %v2520
      %2650 = vst [vmem:[%s2612 + $0x1ec] sm:$0xf] %v2521
      %2651 = vst [vmem:[%s2612 + $0x1f8] sm:$0xf] %v2522
      %2652 = vst [vmem:[%s2612 + $0x204] sm:$0xf] %v2523
      %2653 = vst [vmem:[%s2612 + $0x210] sm:$0xf] %v2524
      %2654 = vst [vmem:[%s2612 + $0x21c] sm:$0xf] %v2525
      %2655 = vst [vmem:[%s2612 + $0x228] sm:$0xf] %v2526
      %2656 = vst [vmem:[%s2612 + $0x234] sm:$0xf] %v2527
      %2657 = vst [vmem:[%s2612 + $0x240] sm:$0xf] %v2528
      %2658 = vst [vmem:[%s2612 + $0x24c] sm:$0xf] %v2529
      %2659 = vst [vmem:[%s2612 + $0x258] sm:$0xf] %v2530
      %2660 = vst [vmem:[%s2612 + $0x264] sm:$0xf] %v2531
      %2661 = vst [vmem:[%s2612 + $0x270] sm:$0xf] %v2532
      %2662 = vst [vmem:[%s2612 + $0x27c] sm:$0xf] %v2533
      %2663 = vst [vmem:[%s2612 + $0x288] sm:$0xf] %v2534
      %2664 = vst [vmem:[%s2612 + $0x294] sm:$0xf] %v2535
      %2665 = vst [vmem:[%s2612 + $0x2a0] sm:$0xf] %v2536
      %2666 = vst [vmem:[%s2612 + $0x2ac] sm:$0xf] %v2537
      %2667 = vst [vmem:[%s2612 + $0x2b8] sm:$0xf] %v2538
      %2668 = vst [vmem:[%s2612 + $0x2c4] sm:$0xf] %v2539
      %2669 = vst [vmem:[%s2612 + $0x2d0] sm:$0xf] %v2540
      %2670 = vst [vmem:[%s2612 + $0x2dc] sm:$0xf] %v2541
      %2671 = vst [vmem:[%s2612 + $0x2e8] sm:$0xf] %v2542
      %2672 = vst [vmem:[%s2612 + $0x2f4] sm:$0xf] %v2543
      %2673 = vst [vmem:[%s2612 + $0x300] sm:$0xf] %v2544
      %2674 = vst [vmem:[%s2612 + $0x30c] sm:$0xf] %v2545
      %2675 = vst [vmem:[%s2612 + $0x318] sm:$0xf] %v2546
      %2676 = vst [vmem:[%s2612 + $0x324] sm:$0xf] %v2547
      %2677 = vst [vmem:[%s2612 + $0x360] sm:$0xf] %v2548
      %2678 = vst [vmem:[%s2612 + $0x36c] sm:$0xf] %v2549
      %2679 = vst [vmem:[%s2612 + $0x378] sm:$0xf] %v2550
      %2680 = vst [vmem:[%s2612 + $0x384] sm:$0xf] %v2551
      %2681 = vst [vmem:[%s2612 + $0x390] sm:$0xf] %v2552
      %2682 = vst [vmem:[%s2612 + $0x39c] sm:$0xf] %v2553
      %2683 = vst [vmem:[%s2612 + $0x3a8] sm:$0xf] %v2554
      %2684 = vst [vmem:[%s2612 + $0x3b4] sm:$0xf] %v2555
      %2685 = vst [vmem:[%s2612 + $0x3c0] sm:$0xf] %v2556
      %2686 = vst [vmem:[%s2612 + $0x3cc] sm:$0xf] %v2557
      %2687 = vst [vmem:[%s2612 + $0x3d8] sm:$0xf] %v2558
      %2688 = vst [vmem:[%s2612 + $0x3e4] sm:$0xf] %v2559
      %2689 = vst [vmem:[%s2612 + $0x3f0] sm:$0xf] %v2560
      %2690 = vst [vmem:[%s2612 + $0x3fc] sm:$0xf] %v2561
      %2691 = vst [vmem:[%s2612 + $0x408] sm:$0xf] %v2562
      %2692 = vst [vmem:[%s2612 + $0x414] sm:$0xf] %v2563
      %2693 = vst [vmem:[%s2612 + $0x420] sm:$0xf] %v2564
      %2694 = vst [vmem:[%s2612 + $0x42c] sm:$0xf] %v2565
      %2695 = vst [vmem:[%s2612 + $0x438] sm:$0xf] %v2566
      %2696 = vst [vmem:[%s2612 + $0x444] sm:$0xf] %v2567
      %2697 = vst [vmem:[%s2612 + $0x450] sm:$0xf] %v2568
      %2698 = vst [vmem:[%s2612 + $0x45c] sm:$0xf] %v2569
      %2699 = vst [vmem:[%s2612 + $0x468] sm:$0xf] %v2570
      %2700 = vst [vmem:[%s2612 + $0x474] sm:$0xf] %v2571
      %2701 = vst [vmem:[%s2612 + $0x480] sm:$0xf] %v2572
      %2702 = vst [vmem:[%s2612 + $0x48c] sm:$0xf] %v2573
      %2703 = vst [vmem:[%s2612 + $0x498] sm:$0xf] %v2574
      %2704 = vst [vmem:[%s2612 + $0x4a4] sm:$0xf] %v2575
      %2705 = vst [vmem:[%s2612 + $0x4b0] sm:$0xf] %v2576
      %2706 = vst [vmem:[%s2612 + $0x4bc] sm:$0xf] %v2577
      %2707 = vst [vmem:[%s2612 + $0x4c8] sm:$0xf] %v2578
      %2708 = vst [vmem:[%s2612 + $0x4d4] sm:$0xf] %v2579
      %2709 = vst [vmem:[%s2612 + $0x510] sm:$0xf] %v2580
      %2710 = vst [vmem:[%s2612 + $0x51c] sm:$0xf] %v2581
      %2711 = vst [vmem:[%s2612 + $0x528] sm:$0xf] %v2582
      %2712 = vst [vmem:[%s2612 + $0x534] sm:$0xf] %v2583
      %2713 = vst [vmem:[%s2612 + $0x540] sm:$0xf] %v2584
      %2714 = vst [vmem:[%s2612 + $0x54c] sm:$0xf] %v2585
      %2715 = vst [vmem:[%s2612 + $0x558] sm:$0xf] %v2586
      %2716 = vst [vmem:[%s2612 + $0x564] sm:$0xf] %v2587
      %2717 = vst [vmem:[%s2612 + $0x570] sm:$0xf] %v2588
      %2718 = vst [vmem:[%s2612 + $0x57c] sm:$0xf] %v2589
      %2719 = vst [vmem:[%s2612 + $0x588] sm:$0xf] %v2590
      %2720 = vst [vmem:[%s2612 + $0x594] sm:$0xf] %v2591
      %2721 = vst [vmem:[%s2612 + $0x5a0] sm:$0xf] %v2592
      %2722 = vst [vmem:[%s2612 + $0x5ac] sm:$0xf] %v2593
      %2723 = vst [vmem:[%s2612 + $0x5b8] sm:$0xf] %v2594
      %2724 = vst [vmem:[%s2612 + $0x5c4] sm:$0xf] %v2595
      %2725 = vst [vmem:[%s2612 + $0x5d0] sm:$0xf] %v2596
      %2726 = vst [vmem:[%s2612 + $0x5dc] sm:$0xf] %v2597
      %2727 = vst [vmem:[%s2612 + $0x5e8] sm:$0xf] %v2598
      %2728 = vst [vmem:[%s2612 + $0x5f4] sm:$0xf] %v2599
      %2729 = vst [vmem:[%s2612 + $0x600] sm:$0xf] %v2600
      %2730 = vst [vmem:[%s2612 + $0x60c] sm:$0xf] %v2601
      %2731 = vst [vmem:[%s2612 + $0x618] sm:$0xf] %v2602
      %2732 = vst [vmem:[%s2612 + $0x624] sm:$0xf] %v2603
      %2733 = vst [vmem:[%s2612 + $0x630] sm:$0xf] %v2604
      %2734 = vst [vmem:[%s2612 + $0x63c] sm:$0xf] %v2605
      %2735 = vst [vmem:[%s2612 + $0x648] sm:$0xf] %v2606
      %2736 = vst [vmem:[%s2612 + $0x654] sm:$0xf] %v2607
      %2737 = vst [vmem:[%s2612 + $0x660] sm:$0xf] %v2608
      %2738 = vst [vmem:[%s2612 + $0x66c] sm:$0xf] %v2609
      %2739 = vst [vmem:[%s2612 + $0x678] sm:$0xf] %v2610
      %2740 = vst [vmem:[%s2612 + $0x684] sm:$0xf] %v2611
      %v2741 = vpack.c.bf16 %v1538, %v1538
      %v2742 = vpack.c.bf16 %v1539, %v1539
      %v2743 = vpack.c.bf16 %v1540, %v1540
      %v2744 = vpack.c.bf16 %v1541, %v1541
      %v2745 = vpack.c.bf16 %v1542, %v1542
      %v2746 = vpack.c.bf16 %v1543, %v1543
      %v2747 = vpack.c.bf16 %v1544, %v1544
      %v2748 = vpack.c.bf16 %v1545, %v1545
      %v2749 = vpack.c.bf16 %v1546, %v1546
      %v2750 = vpack.c.bf16 %v1547, %v1547
      %v2751 = vpack.c.bf16 %v1548, %v1548
      %v2752 = vpack.c.bf16 %v1549, %v1549
      %v2753 = vpack.c.bf16 %v1550, %v1550
      %v2754 = vpack.c.bf16 %v1551, %v1551
      %v2755 = vpack.c.bf16 %v1552, %v1552
      %v2756 = vpack.c.bf16 %v1553, %v1553
      %v2757 = vpack.c.bf16 %v1554, %v1554
      %v2758 = vpack.c.bf16 %v1555, %v1555
      %v2759 = vpack.c.bf16 %v1556, %v1556
      %v2760 = vpack.c.bf16 %v1557, %v1557
      %v2761 = vpack.c.bf16 %v1558, %v1558
      %v2762 = vpack.c.bf16 %v1559, %v1559
      %v2763 = vpack.c.bf16 %v1560, %v1560
      %v2764 = vpack.c.bf16 %v1561, %v1561
      %v2765 = vpack.c.bf16 %v1562, %v1562
      %v2766 = vpack.c.bf16 %v1563, %v1563
      %v2767 = vpack.c.bf16 %v1564, %v1564
      %v2768 = vpack.c.bf16 %v1565, %v1565
      %v2769 = vpack.c.bf16 %v1566, %v1566
      %v2770 = vpack.c.bf16 %v1567, %v1567
      %v2771 = vpack.c.bf16 %v1568, %v1568
      %v2772 = vpack.c.bf16 %v1569, %v1569
      %v2773 = vpack.c.bf16 %v1570, %v1570
      %v2774 = vpack.c.bf16 %v1571, %v1571
      %v2775 = vpack.c.bf16 %v1572, %v1572
      %v2776 = vpack.c.bf16 %v1573, %v1573
      %v2777 = vpack.c.bf16 %v1574, %v1574
      %v2778 = vpack.c.bf16 %v1575, %v1575
      %v2779 = vpack.c.bf16 %v1576, %v1576
      %v2780 = vpack.c.bf16 %v1577, %v1577
      %v2781 = vpack.c.bf16 %v1578, %v1578
      %v2782 = vpack.c.bf16 %v1579, %v1579
      %v2783 = vpack.c.bf16 %v1580, %v1580
      %v2784 = vpack.c.bf16 %v1581, %v1581
      %v2785 = vpack.c.bf16 %v1582, %v1582
      %v2786 = vpack.c.bf16 %v1583, %v1583
      %v2787 = vpack.c.bf16 %v1584, %v1584
      %v2788 = vpack.c.bf16 %v1585, %v1585
      %v2789 = vpack.c.bf16 %v1586, %v1586
      %v2790 = vpack.c.bf16 %v1587, %v1587
      %v2791 = vpack.c.bf16 %v1588, %v1588
      %v2792 = vpack.c.bf16 %v1589, %v1589
      %v2793 = vpack.c.bf16 %v1590, %v1590
      %v2794 = vpack.c.bf16 %v1591, %v1591
      %v2795 = vpack.c.bf16 %v1592, %v1592
      %v2796 = vpack.c.bf16 %v1593, %v1593
      %v2797 = vpack.c.bf16 %v1594, %v1594
      %v2798 = vpack.c.bf16 %v1595, %v1595
      %v2799 = vpack.c.bf16 %v1596, %v1596
      %v2800 = vpack.c.bf16 %v1597, %v1597
      %v2801 = vpack.c.bf16 %v1598, %v1598
      %v2802 = vpack.c.bf16 %v1599, %v1599
      %v2803 = vpack.c.bf16 %v1600, %v1600
      %v2804 = vpack.c.bf16 %v1601, %v1601
      %v2805 = vpack.c.bf16 %v1602, %v1602
      %v2806 = vpack.c.bf16 %v1603, %v1603
      %v2807 = vpack.c.bf16 %v1604, %v1604
      %v2808 = vpack.c.bf16 %v1605, %v1605
      %v2809 = vpack.c.bf16 %v1606, %v1606
      %v2810 = vpack.c.bf16 %v1607, %v1607
      %v2811 = vpack.c.bf16 %v1608, %v1608
      %v2812 = vpack.c.bf16 %v1609, %v1609
      %v2813 = vpack.c.bf16 %v1610, %v1610
      %v2814 = vpack.c.bf16 %v1611, %v1611
      %v2815 = vpack.c.bf16 %v1612, %v1612
      %v2816 = vpack.c.bf16 %v1613, %v1613
      %v2817 = vpack.c.bf16 %v1614, %v1614
      %v2818 = vpack.c.bf16 %v1615, %v1615
      %v2819 = vpack.c.bf16 %v1616, %v1616
      %v2820 = vpack.c.bf16 %v1617, %v1617
      %v2821 = vpack.c.bf16 %v1618, %v1618
      %v2822 = vpack.c.bf16 %v1619, %v1619
      %v2823 = vpack.c.bf16 %v1620, %v1620
      %v2824 = vpack.c.bf16 %v1621, %v1621
      %v2825 = vpack.c.bf16 %v1622, %v1622
      %v2826 = vpack.c.bf16 %v1623, %v1623
      %v2827 = vpack.c.bf16 %v1624, %v1624
      %v2828 = vpack.c.bf16 %v1625, %v1625
      %v2829 = vpack.c.bf16 %v1626, %v1626
      %v2830 = vpack.c.bf16 %v1627, %v1627
      %v2831 = vpack.c.bf16 %v1628, %v1628
      %v2832 = vpack.c.bf16 %v1629, %v1629
      %v2833 = vpack.c.bf16 %v1630, %v1630
      %v2834 = vpack.c.bf16 %v1631, %v1631
      %v2835 = vpack.c.bf16 %v1632, %v1632
      %v2836 = vpack.c.bf16 %v1633, %v1633
      %v2837 = vpack.c.bf16 %v1634, %v1634
      %v2838 = vpack.c.bf16 %v1635, %v1635
      %v2839 = vpack.c.bf16 %v1636, %v1636
      %v2840 = vpack.c.bf16 %v1637, %v1637
      %v2841 = vpack.c.bf16 %v1638, %v1638
      %v2842 = vpack.c.bf16 %v1639, %v1639
      %v2843 = vpack.c.bf16 %v1640, %v1640
      %v2844 = vpack.c.bf16 %v1641, %v1641
      %v2845 = vpack.c.bf16 %v1642, %v1642
      %v2846 = vpack.c.bf16 %v1643, %v1643
      %v2847 = vpack.c.bf16 %v1644, %v1644
      %v2848 = vpack.c.bf16 %v1645, %v1645
      %v2849 = vpack.c.bf16 %v1646, %v1646
      %v2850 = vpack.c.bf16 %v1647, %v1647
      %v2851 = vpack.c.bf16 %v1648, %v1648
      %v2852 = vpack.c.bf16 %v1649, %v1649
      %v2853 = vpack.c.bf16 %v1650, %v1650
      %v2854 = vpack.c.bf16 %v1651, %v1651
      %v2855 = vpack.c.bf16 %v1652, %v1652
      %v2856 = vpack.c.bf16 %v1653, %v1653
      %v2857 = vpack.c.bf16 %v1654, %v1654
      %v2858 = vpack.c.bf16 %v1655, %v1655
      %v2859 = vpack.c.bf16 %v1656, %v1656
      %v2860 = vpack.c.bf16 %v1657, %v1657
      %v2861 = vpack.c.bf16 %v1658, %v1658
      %v2862 = vpack.c.bf16 %v1659, %v1659
      %v2863 = vpack.c.bf16 %v1660, %v1660
      %v2864 = vpack.c.bf16 %v1661, %v1661
      %v2865 = vpack.c.bf16 %v1662, %v1662
      %v2866 = vpack.c.bf16 %v1663, %v1663
      %v2867 = vpack.c.bf16 %v1664, %v1664
      %v2868 = vpack.c.bf16 %v1665, %v1665
      %2869 = vst [vmem:[%s2612 + $0x4] sm:$0xf] %v2741
      %2870 = vst [vmem:[%s2612 + $0x10] sm:$0xf] %v2742
      %2871 = vst [vmem:[%s2612 + $0x1c] sm:$0xf] %v2743
      %2872 = vst [vmem:[%s2612 + $0x28] sm:$0xf] %v2744
      %2873 = vst [vmem:[%s2612 + $0x34] sm:$0xf] %v2745
      %2874 = vst [vmem:[%s2612 + $0x40] sm:$0xf] %v2746
      %2875 = vst [vmem:[%s2612 + $0x4c] sm:$0xf] %v2747
      %2876 = vst [vmem:[%s2612 + $0x58] sm:$0xf] %v2748
      %2877 = vst [vmem:[%s2612 + $0x64] sm:$0xf] %v2749
      %2878 = vst [vmem:[%s2612 + $0x70] sm:$0xf] %v2750
      %2879 = vst [vmem:[%s2612 + $0x7c] sm:$0xf] %v2751
      %2880 = vst [vmem:[%s2612 + $0x88] sm:$0xf] %v2752
      %2881 = vst [vmem:[%s2612 + $0x94] sm:$0xf] %v2753
      %2882 = vst [vmem:[%s2612 + $0xa0] sm:$0xf] %v2754
      %2883 = vst [vmem:[%s2612 + $0xac] sm:$0xf] %v2755
      %2884 = vst [vmem:[%s2612 + $0xb8] sm:$0xf] %v2756
      %2885 = vst [vmem:[%s2612 + $0xc4] sm:$0xf] %v2757
      %2886 = vst [vmem:[%s2612 + $0xd0] sm:$0xf] %v2758
      %2887 = vst [vmem:[%s2612 + $0xdc] sm:$0xf] %v2759
      %2888 = vst [vmem:[%s2612 + $0xe8] sm:$0xf] %v2760
      %2889 = vst [vmem:[%s2612 + $0xf4] sm:$0xf] %v2761
      %2890 = vst [vmem:[%s2612 + $0x100] sm:$0xf] %v2762
      %2891 = vst [vmem:[%s2612 + $0x10c] sm:$0xf] %v2763
      %2892 = vst [vmem:[%s2612 + $0x118] sm:$0xf] %v2764
      %2893 = vst [vmem:[%s2612 + $0x124] sm:$0xf] %v2765
      %2894 = vst [vmem:[%s2612 + $0x130] sm:$0xf] %v2766
      %2895 = vst [vmem:[%s2612 + $0x13c] sm:$0xf] %v2767
      %2896 = vst [vmem:[%s2612 + $0x148] sm:$0xf] %v2768
      %2897 = vst [vmem:[%s2612 + $0x154] sm:$0xf] %v2769
      %2898 = vst [vmem:[%s2612 + $0x160] sm:$0xf] %v2770
      %2899 = vst [vmem:[%s2612 + $0x16c] sm:$0xf] %v2771
      %2900 = vst [vmem:[%s2612 + $0x178] sm:$0xf] %v2772
      %2901 = vst [vmem:[%s2612 + $0x1b4] sm:$0xf] %v2773
      %2902 = vst [vmem:[%s2612 + $0x1c0] sm:$0xf] %v2774
      %2903 = vst [vmem:[%s2612 + $0x1cc] sm:$0xf] %v2775
      %2904 = vst [vmem:[%s2612 + $0x1d8] sm:$0xf] %v2776
      %2905 = vst [vmem:[%s2612 + $0x1e4] sm:$0xf] %v2777
      %2906 = vst [vmem:[%s2612 + $0x1f0] sm:$0xf] %v2778
      %2907 = vst [vmem:[%s2612 + $0x1fc] sm:$0xf] %v2779
      %2908 = vst [vmem:[%s2612 + $0x208] sm:$0xf] %v2780
      %2909 = vst [vmem:[%s2612 + $0x214] sm:$0xf] %v2781
      %2910 = vst [vmem:[%s2612 + $0x220] sm:$0xf] %v2782
      %2911 = vst [vmem:[%s2612 + $0x22c] sm:$0xf] %v2783
      %2912 = vst [vmem:[%s2612 + $0x238] sm:$0xf] %v2784
      %2913 = vst [vmem:[%s2612 + $0x244] sm:$0xf] %v2785
      %2914 = vst [vmem:[%s2612 + $0x250] sm:$0xf] %v2786
      %2915 = vst [vmem:[%s2612 + $0x25c] sm:$0xf] %v2787
      %2916 = vst [vmem:[%s2612 + $0x268] sm:$0xf] %v2788
      %2917 = vst [vmem:[%s2612 + $0x274] sm:$0xf] %v2789
      %2918 = vst [vmem:[%s2612 + $0x280] sm:$0xf] %v2790
      %2919 = vst [vmem:[%s2612 + $0x28c] sm:$0xf] %v2791
      %2920 = vst [vmem:[%s2612 + $0x298] sm:$0xf] %v2792
      %2921 = vst [vmem:[%s2612 + $0x2a4] sm:$0xf] %v2793
      %2922 = vst [vmem:[%s2612 + $0x2b0] sm:$0xf] %v2794
      %2923 = vst [vmem:[%s2612 + $0x2bc] sm:$0xf] %v2795
      %2924 = vst [vmem:[%s2612 + $0x2c8] sm:$0xf] %v2796
      %2925 = vst [vmem:[%s2612 + $0x2d4] sm:$0xf] %v2797
      %2926 = vst [vmem:[%s2612 + $0x2e0] sm:$0xf] %v2798
      %2927 = vst [vmem:[%s2612 + $0x2ec] sm:$0xf] %v2799
      %2928 = vst [vmem:[%s2612 + $0x2f8] sm:$0xf] %v2800
      %2929 = vst [vmem:[%s2612 + $0x304] sm:$0xf] %v2801
      %2930 = vst [vmem:[%s2612 + $0x310] sm:$0xf] %v2802
      %2931 = vst [vmem:[%s2612 + $0x31c] sm:$0xf] %v2803
      %2932 = vst [vmem:[%s2612 + $0x328] sm:$0xf] %v2804
      %2933 = vst [vmem:[%s2612 + $0x364] sm:$0xf] %v2805
      %2934 = vst [vmem:[%s2612 + $0x370] sm:$0xf] %v2806
      %2935 = vst [vmem:[%s2612 + $0x37c] sm:$0xf] %v2807
      %2936 = vst [vmem:[%s2612 + $0x388] sm:$0xf] %v2808
      %2937 = vst [vmem:[%s2612 + $0x394] sm:$0xf] %v2809
      %2938 = vst [vmem:[%s2612 + $0x3a0] sm:$0xf] %v2810
      %2939 = vst [vmem:[%s2612 + $0x3ac] sm:$0xf] %v2811
      %2940 = vst [vmem:[%s2612 + $0x3b8] sm:$0xf] %v2812
      %2941 = vst [vmem:[%s2612 + $0x3c4] sm:$0xf] %v2813
      %2942 = vst [vmem:[%s2612 + $0x3d0] sm:$0xf] %v2814
      %2943 = vst [vmem:[%s2612 + $0x3dc] sm:$0xf] %v2815
      %2944 = vst [vmem:[%s2612 + $0x3e8] sm:$0xf] %v2816
      %2945 = vst [vmem:[%s2612 + $0x3f4] sm:$0xf] %v2817
      %2946 = vst [vmem:[%s2612 + $0x400] sm:$0xf] %v2818
      %2947 = vst [vmem:[%s2612 + $0x40c] sm:$0xf] %v2819
      %2948 = vst [vmem:[%s2612 + $0x418] sm:$0xf] %v2820
      %2949 = vst [vmem:[%s2612 + $0x424] sm:$0xf] %v2821
      %2950 = vst [vmem:[%s2612 + $0x430] sm:$0xf] %v2822
      %2951 = vst [vmem:[%s2612 + $0x43c] sm:$0xf] %v2823
      %2952 = vst [vmem:[%s2612 + $0x448] sm:$0xf] %v2824
      %2953 = vst [vmem:[%s2612 + $0x454] sm:$0xf] %v2825
      %2954 = vst [vmem:[%s2612 + $0x460] sm:$0xf] %v2826
      %2955 = vst [vmem:[%s2612 + $0x46c] sm:$0xf] %v2827
      %2956 = vst [vmem:[%s2612 + $0x478] sm:$0xf] %v2828
      %2957 = vst [vmem:[%s2612 + $0x484] sm:$0xf] %v2829
      %2958 = vst [vmem:[%s2612 + $0x490] sm:$0xf] %v2830
      %2959 = vst [vmem:[%s2612 + $0x49c] sm:$0xf] %v2831
      %2960 = vst [vmem:[%s2612 + $0x4a8] sm:$0xf] %v2832
      %2961 = vst [vmem:[%s2612 + $0x4b4] sm:$0xf] %v2833
      %2962 = vst [vmem:[%s2612 + $0x4c0] sm:$0xf] %v2834
      %2963 = vst [vmem:[%s2612 + $0x4cc] sm:$0xf] %v2835
      %2964 = vst [vmem:[%s2612 + $0x4d8] sm:$0xf] %v2836
      %2965 = vst [vmem:[%s2612 + $0x514] sm:$0xf] %v2837
      %2966 = vst [vmem:[%s2612 + $0x520] sm:$0xf] %v2838
      %2967 = vst [vmem:[%s2612 + $0x52c] sm:$0xf] %v2839
      %2968 = vst [vmem:[%s2612 + $0x538] sm:$0xf] %v2840
      %2969 = vst [vmem:[%s2612 + $0x544] sm:$0xf] %v2841
      %2970 = vst [vmem:[%s2612 + $0x550] sm:$0xf] %v2842
      %2971 = vst [vmem:[%s2612 + $0x55c] sm:$0xf] %v2843
      %2972 = vst [vmem:[%s2612 + $0x568] sm:$0xf] %v2844
      %2973 = vst [vmem:[%s2612 + $0x574] sm:$0xf] %v2845
      %2974 = vst [vmem:[%s2612 + $0x580] sm:$0xf] %v2846
      %2975 = vst [vmem:[%s2612 + $0x58c] sm:$0xf] %v2847
      %2976 = vst [vmem:[%s2612 + $0x598] sm:$0xf] %v2848
      %2977 = vst [vmem:[%s2612 + $0x5a4] sm:$0xf] %v2849
      %2978 = vst [vmem:[%s2612 + $0x5b0] sm:$0xf] %v2850
      %2979 = vst [vmem:[%s2612 + $0x5bc] sm:$0xf] %v2851
      %2980 = vst [vmem:[%s2612 + $0x5c8] sm:$0xf] %v2852
      %2981 = vst [vmem:[%s2612 + $0x5d4] sm:$0xf] %v2853
      %2982 = vst [vmem:[%s2612 + $0x5e0] sm:$0xf] %v2854
      %2983 = vst [vmem:[%s2612 + $0x5ec] sm:$0xf] %v2855
      %2984 = vst [vmem:[%s2612 + $0x5f8] sm:$0xf] %v2856
      %2985 = vst [vmem:[%s2612 + $0x604] sm:$0xf] %v2857
      %2986 = vst [vmem:[%s2612 + $0x610] sm:$0xf] %v2858
      %2987 = vst [vmem:[%s2612 + $0x61c] sm:$0xf] %v2859
      %2988 = vst [vmem:[%s2612 + $0x628] sm:$0xf] %v2860
      %2989 = vst [vmem:[%s2612 + $0x634] sm:$0xf] %v2861
      %2990 = vst [vmem:[%s2612 + $0x640] sm:$0xf] %v2862
      %2991 = vst [vmem:[%s2612 + $0x64c] sm:$0xf] %v2863
      %2992 = vst [vmem:[%s2612 + $0x658] sm:$0xf] %v2864
      %2993 = vst [vmem:[%s2612 + $0x664] sm:$0xf] %v2865
      %2994 = vst [vmem:[%s2612 + $0x670] sm:$0xf] %v2866
      %2995 = vst [vmem:[%s2612 + $0x67c] sm:$0xf] %v2867
      %2996 = vst [vmem:[%s2612 + $0x688] sm:$0xf] %v2868
      %v2997 = vpack.c.bf16 %v2356, %v2356
      %v2998 = vpack.c.bf16 %v2357, %v2357
      %v2999 = vpack.c.bf16 %v2358, %v2358
      %v3000 = vpack.c.bf16 %v2359, %v2359
      %v3001 = vpack.c.bf16 %v2360, %v2360
      %v3002 = vpack.c.bf16 %v2361, %v2361
      %v3003 = vpack.c.bf16 %v2362, %v2362
      %v3004 = vpack.c.bf16 %v2363, %v2363
      %v3005 = vpack.c.bf16 %v2364, %v2364
      %v3006 = vpack.c.bf16 %v2365, %v2365
      %v3007 = vpack.c.bf16 %v2366, %v2366
      %v3008 = vpack.c.bf16 %v2367, %v2367
      %v3009 = vpack.c.bf16 %v2368, %v2368
      %v3010 = vpack.c.bf16 %v2369, %v2369
      %v3011 = vpack.c.bf16 %v2370, %v2370
      %v3012 = vpack.c.bf16 %v2371, %v2371
      %v3013 = vpack.c.bf16 %v2372, %v2372
      %v3014 = vpack.c.bf16 %v2373, %v2373
      %v3015 = vpack.c.bf16 %v2374, %v2374
      %v3016 = vpack.c.bf16 %v2375, %v2375
      %v3017 = vpack.c.bf16 %v2376, %v2376
      %v3018 = vpack.c.bf16 %v2377, %v2377
      %v3019 = vpack.c.bf16 %v2378, %v2378
      %v3020 = vpack.c.bf16 %v2379, %v2379
      %v3021 = vpack.c.bf16 %v2380, %v2380
      %v3022 = vpack.c.bf16 %v2381, %v2381
      %v3023 = vpack.c.bf16 %v2382, %v2382
      %v3024 = vpack.c.bf16 %v2383, %v2383
      %v3025 = vpack.c.bf16 %v2384, %v2384
      %v3026 = vpack.c.bf16 %v2385, %v2385
      %v3027 = vpack.c.bf16 %v2386, %v2386
      %v3028 = vpack.c.bf16 %v2387, %v2387
      %v3029 = vpack.c.bf16 %v2388, %v2388
      %v3030 = vpack.c.bf16 %v2389, %v2389
      %v3031 = vpack.c.bf16 %v2390, %v2390
      %v3032 = vpack.c.bf16 %v2391, %v2391
      %v3033 = vpack.c.bf16 %v2392, %v2392
      %v3034 = vpack.c.bf16 %v2393, %v2393
      %v3035 = vpack.c.bf16 %v2394, %v2394
      %v3036 = vpack.c.bf16 %v2395, %v2395
      %v3037 = vpack.c.bf16 %v2396, %v2396
      %v3038 = vpack.c.bf16 %v2397, %v2397
      %v3039 = vpack.c.bf16 %v2398, %v2398
      %v3040 = vpack.c.bf16 %v2399, %v2399
      %v3041 = vpack.c.bf16 %v2400, %v2400
      %v3042 = vpack.c.bf16 %v2401, %v2401
      %v3043 = vpack.c.bf16 %v2402, %v2402
      %v3044 = vpack.c.bf16 %v2403, %v2403
      %v3045 = vpack.c.bf16 %v2404, %v2404
      %v3046 = vpack.c.bf16 %v2405, %v2405
      %v3047 = vpack.c.bf16 %v2406, %v2406
      %v3048 = vpack.c.bf16 %v2407, %v2407
      %v3049 = vpack.c.bf16 %v2408, %v2408
      %v3050 = vpack.c.bf16 %v2409, %v2409
      %v3051 = vpack.c.bf16 %v2410, %v2410
      %v3052 = vpack.c.bf16 %v2411, %v2411
      %v3053 = vpack.c.bf16 %v2412, %v2412
      %v3054 = vpack.c.bf16 %v2413, %v2413
      %v3055 = vpack.c.bf16 %v2414, %v2414
      %v3056 = vpack.c.bf16 %v2415, %v2415
      %v3057 = vpack.c.bf16 %v2416, %v2416
      %v3058 = vpack.c.bf16 %v2417, %v2417
      %v3059 = vpack.c.bf16 %v2418, %v2418
      %v3060 = vpack.c.bf16 %v2419, %v2419
      %v3061 = vpack.c.bf16 %v2420, %v2420
      %v3062 = vpack.c.bf16 %v2421, %v2421
      %v3063 = vpack.c.bf16 %v2422, %v2422
      %v3064 = vpack.c.bf16 %v2423, %v2423
      %v3065 = vpack.c.bf16 %v2424, %v2424
      %v3066 = vpack.c.bf16 %v2425, %v2425
      %v3067 = vpack.c.bf16 %v2426, %v2426
      %v3068 = vpack.c.bf16 %v2427, %v2427
      %v3069 = vpack.c.bf16 %v2428, %v2428
      %v3070 = vpack.c.bf16 %v2429, %v2429
      %v3071 = vpack.c.bf16 %v2430, %v2430
      %v3072 = vpack.c.bf16 %v2431, %v2431
      %v3073 = vpack.c.bf16 %v2432, %v2432
      %v3074 = vpack.c.bf16 %v2433, %v2433
      %v3075 = vpack.c.bf16 %v2434, %v2434
      %v3076 = vpack.c.bf16 %v2435, %v2435
      %v3077 = vpack.c.bf16 %v2436, %v2436
      %v3078 = vpack.c.bf16 %v2437, %v2437
      %v3079 = vpack.c.bf16 %v2438, %v2438
      %v3080 = vpack.c.bf16 %v2439, %v2439
      %v3081 = vpack.c.bf16 %v2440, %v2440
      %v3082 = vpack.c.bf16 %v2441, %v2441
      %v3083 = vpack.c.bf16 %v2442, %v2442
      %v3084 = vpack.c.bf16 %v2443, %v2443
      %v3085 = vpack.c.bf16 %v2444, %v2444
      %v3086 = vpack.c.bf16 %v2445, %v2445
      %v3087 = vpack.c.bf16 %v2446, %v2446
      %v3088 = vpack.c.bf16 %v2447, %v2447
      %v3089 = vpack.c.bf16 %v2448, %v2448
      %v3090 = vpack.c.bf16 %v2449, %v2449
      %v3091 = vpack.c.bf16 %v2450, %v2450
      %v3092 = vpack.c.bf16 %v2451, %v2451
      %v3093 = vpack.c.bf16 %v2452, %v2452
      %v3094 = vpack.c.bf16 %v2453, %v2453
      %v3095 = vpack.c.bf16 %v2454, %v2454
      %v3096 = vpack.c.bf16 %v2455, %v2455
      %v3097 = vpack.c.bf16 %v2456, %v2456
      %v3098 = vpack.c.bf16 %v2457, %v2457
      %v3099 = vpack.c.bf16 %v2458, %v2458
      %v3100 = vpack.c.bf16 %v2459, %v2459
      %v3101 = vpack.c.bf16 %v2460, %v2460
      %v3102 = vpack.c.bf16 %v2461, %v2461
      %v3103 = vpack.c.bf16 %v2462, %v2462
      %v3104 = vpack.c.bf16 %v2463, %v2463
      %v3105 = vpack.c.bf16 %v2464, %v2464
      %v3106 = vpack.c.bf16 %v2465, %v2465
      %v3107 = vpack.c.bf16 %v2466, %v2466
      %v3108 = vpack.c.bf16 %v2467, %v2467
      %v3109 = vpack.c.bf16 %v2468, %v2468
      %v3110 = vpack.c.bf16 %v2469, %v2469
      %v3111 = vpack.c.bf16 %v2470, %v2470
      %v3112 = vpack.c.bf16 %v2471, %v2471
      %v3113 = vpack.c.bf16 %v2472, %v2472
      %v3114 = vpack.c.bf16 %v2473, %v2473
      %v3115 = vpack.c.bf16 %v2474, %v2474
      %v3116 = vpack.c.bf16 %v2475, %v2475
      %v3117 = vpack.c.bf16 %v2476, %v2476
      %v3118 = vpack.c.bf16 %v2477, %v2477
      %v3119 = vpack.c.bf16 %v2478, %v2478
      %v3120 = vpack.c.bf16 %v2479, %v2479
      %v3121 = vpack.c.bf16 %v2480, %v2480
      %v3122 = vpack.c.bf16 %v2481, %v2481
      %v3123 = vpack.c.bf16 %v2482, %v2482
      %v3124 = vpack.c.bf16 %v2483, %v2483
      %3125 = vst [vmem:[%s2612 + $0x8] sm:$0xf] %v2997
      %3126 = vst [vmem:[%s2612 + $0x14] sm:$0xf] %v2998
      %3127 = vst [vmem:[%s2612 + $0x20] sm:$0xf] %v2999
      %3128 = vst [vmem:[%s2612 + $0x2c] sm:$0xf] %v3000
      %3129 = vst [vmem:[%s2612 + $0x38] sm:$0xf] %v3001
      %3130 = vst [vmem:[%s2612 + $0x44] sm:$0xf] %v3002
      %3131 = vst [vmem:[%s2612 + $0x50] sm:$0xf] %v3003
      %3132 = vst [vmem:[%s2612 + $0x5c] sm:$0xf] %v3004
      %3133 = vst [vmem:[%s2612 + $0x68] sm:$0xf] %v3005
      %3134 = vst [vmem:[%s2612 + $0x74] sm:$0xf] %v3006
      %3135 = vst [vmem:[%s2612 + $0x80] sm:$0xf] %v3007
      %3136 = vst [vmem:[%s2612 + $0x8c] sm:$0xf] %v3008
      %3137 = vst [vmem:[%s2612 + $0x98] sm:$0xf] %v3009
      %3138 = vst [vmem:[%s2612 + $0xa4] sm:$0xf] %v3010
      %3139 = vst [vmem:[%s2612 + $0xb0] sm:$0xf] %v3011
      %3140 = vst [vmem:[%s2612 + $0xbc] sm:$0xf] %v3012
      %3141 = vst [vmem:[%s2612 + $0xc8] sm:$0xf] %v3013
      %3142 = vst [vmem:[%s2612 + $0xd4] sm:$0xf] %v3014
      %3143 = vst [vmem:[%s2612 + $0xe0] sm:$0xf] %v3015
      %3144 = vst [vmem:[%s2612 + $0xec] sm:$0xf] %v3016
      %3145 = vst [vmem:[%s2612 + $0xf8] sm:$0xf] %v3017
      %3146 = vst [vmem:[%s2612 + $0x104] sm:$0xf] %v3018
      %3147 = vst [vmem:[%s2612 + $0x110] sm:$0xf] %v3019
      %3148 = vst [vmem:[%s2612 + $0x11c] sm:$0xf] %v3020
      %3149 = vst [vmem:[%s2612 + $0x128] sm:$0xf] %v3021
      %3150 = vst [vmem:[%s2612 + $0x134] sm:$0xf] %v3022
      %3151 = vst [vmem:[%s2612 + $0x140] sm:$0xf] %v3023
      %3152 = vst [vmem:[%s2612 + $0x14c] sm:$0xf] %v3024
      %3153 = vst [vmem:[%s2612 + $0x158] sm:$0xf] %v3025
      %3154 = vst [vmem:[%s2612 + $0x164] sm:$0xf] %v3026
      %3155 = vst [vmem:[%s2612 + $0x170] sm:$0xf] %v3027
      %3156 = vst [vmem:[%s2612 + $0x17c] sm:$0xf] %v3028
      %3157 = vst [vmem:[%s2612 + $0x1b8] sm:$0xf] %v3029
      %3158 = vst [vmem:[%s2612 + $0x1c4] sm:$0xf] %v3030
      %3159 = vst [vmem:[%s2612 + $0x1d0] sm:$0xf] %v3031
      %3160 = vst [vmem:[%s2612 + $0x1dc] sm:$0xf] %v3032
      %3161 = vst [vmem:[%s2612 + $0x1e8] sm:$0xf] %v3033
      %3162 = vst [vmem:[%s2612 + $0x1f4] sm:$0xf] %v3034
      %3163 = vst [vmem:[%s2612 + $0x200] sm:$0xf] %v3035
      %3164 = vst [vmem:[%s2612 + $0x20c] sm:$0xf] %v3036
      %3165 = vst [vmem:[%s2612 + $0x218] sm:$0xf] %v3037
      %3166 = vst [vmem:[%s2612 + $0x224] sm:$0xf] %v3038
      %3167 = vst [vmem:[%s2612 + $0x230] sm:$0xf] %v3039
      %3168 = vst [vmem:[%s2612 + $0x23c] sm:$0xf] %v3040
      %3169 = vst [vmem:[%s2612 + $0x248] sm:$0xf] %v3041
      %3170 = vst [vmem:[%s2612 + $0x254] sm:$0xf] %v3042
      %3171 = vst [vmem:[%s2612 + $0x260] sm:$0xf] %v3043
      %3172 = vst [vmem:[%s2612 + $0x26c] sm:$0xf] %v3044
      %3173 = vst [vmem:[%s2612 + $0x278] sm:$0xf] %v3045
      %3174 = vst [vmem:[%s2612 + $0x284] sm:$0xf] %v3046
      %3175 = vst [vmem:[%s2612 + $0x290] sm:$0xf] %v3047
      %3176 = vst [vmem:[%s2612 + $0x29c] sm:$0xf] %v3048
      %3177 = vst [vmem:[%s2612 + $0x2a8] sm:$0xf] %v3049
      %3178 = vst [vmem:[%s2612 + $0x2b4] sm:$0xf] %v3050
      %3179 = vst [vmem:[%s2612 + $0x2c0] sm:$0xf] %v3051
      %3180 = vst [vmem:[%s2612 + $0x2cc] sm:$0xf] %v3052
      %3181 = vst [vmem:[%s2612 + $0x2d8] sm:$0xf] %v3053
      %3182 = vst [vmem:[%s2612 + $0x2e4] sm:$0xf] %v3054
      %3183 = vst [vmem:[%s2612 + $0x2f0] sm:$0xf] %v3055
      %3184 = vst [vmem:[%s2612 + $0x2fc] sm:$0xf] %v3056
      %3185 = vst [vmem:[%s2612 + $0x308] sm:$0xf] %v3057
      %3186 = vst [vmem:[%s2612 + $0x314] sm:$0xf] %v3058
      %3187 = vst [vmem:[%s2612 + $0x320] sm:$0xf] %v3059
      %3188 = vst [vmem:[%s2612 + $0x32c] sm:$0xf] %v3060
      %3189 = vst [vmem:[%s2612 + $0x368] sm:$0xf] %v3061
      %3190 = vst [vmem:[%s2612 + $0x374] sm:$0xf] %v3062
      %3191 = vst [vmem:[%s2612 + $0x380] sm:$0xf] %v3063
      %3192 = vst [vmem:[%s2612 + $0x38c] sm:$0xf] %v3064
      %3193 = vst [vmem:[%s2612 + $0x398] sm:$0xf] %v3065
      %3194 = vst [vmem:[%s2612 + $0x3a4] sm:$0xf] %v3066
      %3195 = vst [vmem:[%s2612 + $0x3b0] sm:$0xf] %v3067
      %3196 = vst [vmem:[%s2612 + $0x3bc] sm:$0xf] %v3068
      %3197 = vst [vmem:[%s2612 + $0x3c8] sm:$0xf] %v3069
      %3198 = vst [vmem:[%s2612 + $0x3d4] sm:$0xf] %v3070
      %3199 = vst [vmem:[%s2612 + $0x3e0] sm:$0xf] %v3071
      %3200 = vst [vmem:[%s2612 + $0x3ec] sm:$0xf] %v3072
      %3201 = vst [vmem:[%s2612 + $0x3f8] sm:$0xf] %v3073
      %3202 = vst [vmem:[%s2612 + $0x404] sm:$0xf] %v3074
      %3203 = vst [vmem:[%s2612 + $0x410] sm:$0xf] %v3075
      %3204 = vst [vmem:[%s2612 + $0x41c] sm:$0xf] %v3076
      %3205 = vst [vmem:[%s2612 + $0x428] sm:$0xf] %v3077
      %3206 = vst [vmem:[%s2612 + $0x434] sm:$0xf] %v3078
      %3207 = vst [vmem:[%s2612 + $0x440] sm:$0xf] %v3079
      %3208 = vst [vmem:[%s2612 + $0x44c] sm:$0xf] %v3080
      %3209 = vst [vmem:[%s2612 + $0x458] sm:$0xf] %v3081
      %3210 = vst [vmem:[%s2612 + $0x464] sm:$0xf] %v3082
      %3211 = vst [vmem:[%s2612 + $0x470] sm:$0xf] %v3083
      %3212 = vst [vmem:[%s2612 + $0x47c] sm:$0xf] %v3084
      %3213 = vst [vmem:[%s2612 + $0x488] sm:$0xf] %v3085
      %3214 = vst [vmem:[%s2612 + $0x494] sm:$0xf] %v3086
      %3215 = vst [vmem:[%s2612 + $0x4a0] sm:$0xf] %v3087
      %3216 = vst [vmem:[%s2612 + $0x4ac] sm:$0xf] %v3088
      %3217 = vst [vmem:[%s2612 + $0x4b8] sm:$0xf] %v3089
      %3218 = vst [vmem:[%s2612 + $0x4c4] sm:$0xf] %v3090
      %3219 = vst [vmem:[%s2612 + $0x4d0] sm:$0xf] %v3091
      %3220 = vst [vmem:[%s2612 + $0x4dc] sm:$0xf] %v3092
      %3221 = vst [vmem:[%s2612 + $0x518] sm:$0xf] %v3093
      %3222 = vst [vmem:[%s2612 + $0x524] sm:$0xf] %v3094
      %3223 = vst [vmem:[%s2612 + $0x530] sm:$0xf] %v3095
      %3224 = vst [vmem:[%s2612 + $0x53c] sm:$0xf] %v3096
      %3225 = vst [vmem:[%s2612 + $0x548] sm:$0xf] %v3097
      %3226 = vst [vmem:[%s2612 + $0x554] sm:$0xf] %v3098
      %3227 = vst [vmem:[%s2612 + $0x560] sm:$0xf] %v3099
      %3228 = vst [vmem:[%s2612 + $0x56c] sm:$0xf] %v3100
      %3229 = vst [vmem:[%s2612 + $0x578] sm:$0xf] %v3101
      %3230 = vst [vmem:[%s2612 + $0x584] sm:$0xf] %v3102
      %3231 = vst [vmem:[%s2612 + $0x590] sm:$0xf] %v3103
      %3232 = vst [vmem:[%s2612 + $0x59c] sm:$0xf] %v3104
      %3233 = vst [vmem:[%s2612 + $0x5a8] sm:$0xf] %v3105
      %3234 = vst [vmem:[%s2612 + $0x5b4] sm:$0xf] %v3106
      %3235 = vst [vmem:[%s2612 + $0x5c0] sm:$0xf] %v3107
      %3236 = vst [vmem:[%s2612 + $0x5cc] sm:$0xf] %v3108
      %3237 = vst [vmem:[%s2612 + $0x5d8] sm:$0xf] %v3109
      %3238 = vst [vmem:[%s2612 + $0x5e4] sm:$0xf] %v3110
      %3239 = vst [vmem:[%s2612 + $0x5f0] sm:$0xf] %v3111
      %3240 = vst [vmem:[%s2612 + $0x5fc] sm:$0xf] %v3112
      %3241 = vst [vmem:[%s2612 + $0x608] sm:$0xf] %v3113
      %3242 = vst [vmem:[%s2612 + $0x614] sm:$0xf] %v3114
      %3243 = vst [vmem:[%s2612 + $0x620] sm:$0xf] %v3115
      %3244 = vst [vmem:[%s2612 + $0x62c] sm:$0xf] %v3116
      %3245 = vst [vmem:[%s2612 + $0x638] sm:$0xf] %v3117
      %3246 = vst [vmem:[%s2612 + $0x644] sm:$0xf] %v3118
      %3247 = vst [vmem:[%s2612 + $0x650] sm:$0xf] %v3119
      %3248 = vst [vmem:[%s2612 + $0x65c] sm:$0xf] %v3120
      %3249 = vst [vmem:[%s2612 + $0x668] sm:$0xf] %v3121
      %3250 = vst [vmem:[%s2612 + $0x674] sm:$0xf] %v3122
      %3251 = vst [vmem:[%s2612 + $0x680] sm:$0xf] %v3123
      %3252 = vst [vmem:[%s2612 + $0x68c] sm:$0xf] %v3124
      %v3253 = vld [vmem:[#allocation2] sm:$0xff]
      %v3254 = vld [vmem:[#allocation2 + $0x8] sm:$0xf]
      %v3255 = vld [vmem:[#allocation2 + $0xc] sm:$0xff]
      %v3256 = vld [vmem:[#allocation2 + $0x14] sm:$0xf]
      %v3257 = vld [vmem:[#allocation2 + $0x18] sm:$0xff]
      %v3258 = vld [vmem:[#allocation2 + $0x20] sm:$0xf]
      %v3259 = vld [vmem:[#allocation2 + $0x24] sm:$0xff]
      %v3260 = vld [vmem:[#allocation2 + $0x2c] sm:$0xf]
      %v3261 = vld [vmem:[#allocation2 + $0x30] sm:$0xff]
      %v3262 = vld [vmem:[#allocation2 + $0x38] sm:$0xf]
      %v3263 = vld [vmem:[#allocation2 + $0x3c] sm:$0xff]
      %v3264 = vld [vmem:[#allocation2 + $0x44] sm:$0xf]
      %v3265 = vld [vmem:[#allocation2 + $0x48] sm:$0xff]
      %v3266 = vld [vmem:[#allocation2 + $0x50] sm:$0xf]
      %v3267 = vld [vmem:[#allocation2 + $0x54] sm:$0xff]
      %v3268 = vld [vmem:[#allocation2 + $0x5c] sm:$0xf]
      %v3269 = vld [vmem:[#allocation2 + $0x60] sm:$0xff]
      %v3270 = vld [vmem:[#allocation2 + $0x68] sm:$0xf]
      %v3271 = vld [vmem:[#allocation2 + $0x6c] sm:$0xff]
      %v3272 = vld [vmem:[#allocation2 + $0x74] sm:$0xf]
      %v3273 = vld [vmem:[#allocation2 + $0x78] sm:$0xff]
      %v3274 = vld [vmem:[#allocation2 + $0x80] sm:$0xf]
      %v3275 = vld [vmem:[#allocation2 + $0x84] sm:$0xff]
      %v3276 = vld [vmem:[#allocation2 + $0x8c] sm:$0xf]
      %v3277 = vld [vmem:[#allocation2 + $0x90] sm:$0xff]
      %v3278 = vld [vmem:[#allocation2 + $0x98] sm:$0xf]
      %v3279 = vld [vmem:[#allocation2 + $0x9c] sm:$0xff]
      %v3280 = vld [vmem:[#allocation2 + $0xa4] sm:$0xf]
      %v3281 = vld [vmem:[#allocation2 + $0xa8] sm:$0xff]
      %v3282 = vld [vmem:[#allocation2 + $0xb0] sm:$0xf]
      %v3283 = vld [vmem:[#allocation2 + $0xb4] sm:$0xff]
      %v3284 = vld [vmem:[#allocation2 + $0xbc] sm:$0xf]
      %v3285 = vld [vmem:[#allocation2 + $0xc0] sm:$0xff]
      %v3286 = vld [vmem:[#allocation2 + $0xc8] sm:$0xf]
      %v3287 = vld [vmem:[#allocation2 + $0xcc] sm:$0xff]
      %v3288 = vld [vmem:[#allocation2 + $0xd4] sm:$0xf]
      %v3289 = vld [vmem:[#allocation2 + $0xd8] sm:$0xff]
      %v3290 = vld [vmem:[#allocation2 + $0xe0] sm:$0xf]
      %v3291 = vld [vmem:[#allocation2 + $0xe4] sm:$0xff]
      %v3292 = vld [vmem:[#allocation2 + $0xec] sm:$0xf]
      %v3293 = vld [vmem:[#allocation2 + $0xf0] sm:$0xff]
      %v3294 = vld [vmem:[#allocation2 + $0xf8] sm:$0xf]
      %v3295 = vld [vmem:[#allocation2 + $0xfc] sm:$0xff]
      %v3296 = vld [vmem:[#allocation2 + $0x104] sm:$0xf]
      %v3297 = vld [vmem:[#allocation2 + $0x108] sm:$0xff]
      %v3298 = vld [vmem:[#allocation2 + $0x110] sm:$0xf]
      %v3299 = vld [vmem:[#allocation2 + $0x114] sm:$0xff]
      %v3300 = vld [vmem:[#allocation2 + $0x11c] sm:$0xf]
      %v3301 = vld [vmem:[#allocation2 + $0x120] sm:$0xff]
      %v3302 = vld [vmem:[#allocation2 + $0x128] sm:$0xf]
      %v3303 = vld [vmem:[#allocation2 + $0x12c] sm:$0xff]
      %v3304 = vld [vmem:[#allocation2 + $0x134] sm:$0xf]
      %v3305 = vld [vmem:[#allocation2 + $0x138] sm:$0xff]
      %v3306 = vld [vmem:[#allocation2 + $0x140] sm:$0xf]
      %v3307 = vld [vmem:[#allocation2 + $0x144] sm:$0xff]
      %v3308 = vld [vmem:[#allocation2 + $0x14c] sm:$0xf]
      %v3309 = vld [vmem:[#allocation2 + $0x150] sm:$0xff]
      %v3310 = vld [vmem:[#allocation2 + $0x158] sm:$0xf]
      %v3311 = vld [vmem:[#allocation2 + $0x15c] sm:$0xff]
      %v3312 = vld [vmem:[#allocation2 + $0x164] sm:$0xf]
      %v3313 = vld [vmem:[#allocation2 + $0x168] sm:$0xff]
      %v3314 = vld [vmem:[#allocation2 + $0x170] sm:$0xf]
      %v3315 = vld [vmem:[#allocation2 + $0x174] sm:$0xff]
      %v3316 = vld [vmem:[#allocation2 + $0x17c] sm:$0xf]
      %v3317 = vld [vmem:[#allocation2 + $0x1b0] sm:$0xff]
      %v3318 = vld [vmem:[#allocation2 + $0x1b8] sm:$0xf]
      %v3319 = vld [vmem:[#allocation2 + $0x1bc] sm:$0xff]
      %v3320 = vld [vmem:[#allocation2 + $0x1c4] sm:$0xf]
      %v3321 = vld [vmem:[#allocation2 + $0x1c8] sm:$0xff]
      %v3322 = vld [vmem:[#allocation2 + $0x1d0] sm:$0xf]
      %v3323 = vld [vmem:[#allocation2 + $0x1d4] sm:$0xff]
      %v3324 = vld [vmem:[#allocation2 + $0x1dc] sm:$0xf]
      %v3325 = vld [vmem:[#allocation2 + $0x1e0] sm:$0xff]
      %v3326 = vld [vmem:[#allocation2 + $0x1e8] sm:$0xf]
      %v3327 = vld [vmem:[#allocation2 + $0x1ec] sm:$0xff]
      %v3328 = vld [vmem:[#allocation2 + $0x1f4] sm:$0xf]
      %v3329 = vld [vmem:[#allocation2 + $0x1f8] sm:$0xff]
      %v3330 = vld [vmem:[#allocation2 + $0x200] sm:$0xf]
      %v3331 = vld [vmem:[#allocation2 + $0x204] sm:$0xff]
      %v3332 = vld [vmem:[#allocation2 + $0x20c] sm:$0xf]
      %v3333 = vld [vmem:[#allocation2 + $0x210] sm:$0xff]
      %v3334 = vld [vmem:[#allocation2 + $0x218] sm:$0xf]
      %v3335 = vld [vmem:[#allocation2 + $0x21c] sm:$0xff]
      %v3336 = vld [vmem:[#allocation2 + $0x224] sm:$0xf]
      %v3337 = vld [vmem:[#allocation2 + $0x228] sm:$0xff]
      %v3338 = vld [vmem:[#allocation2 + $0x230] sm:$0xf]
      %v3339 = vld [vmem:[#allocation2 + $0x234] sm:$0xff]
      %v3340 = vld [vmem:[#allocation2 + $0x23c] sm:$0xf]
      %v3341 = vld [vmem:[#allocation2 + $0x240] sm:$0xff]
      %v3342 = vld [vmem:[#allocation2 + $0x248] sm:$0xf]
      %v3343 = vld [vmem:[#allocation2 + $0x24c] sm:$0xff]
      %v3344 = vld [vmem:[#allocation2 + $0x254] sm:$0xf]
      %v3345 = vld [vmem:[#allocation2 + $0x258] sm:$0xff]
      %v3346 = vld [vmem:[#allocation2 + $0x260] sm:$0xf]
      %v3347 = vld [vmem:[#allocation2 + $0x264] sm:$0xff]
      %v3348 = vld [vmem:[#allocation2 + $0x26c] sm:$0xf]
      %v3349 = vld [vmem:[#allocation2 + $0x270] sm:$0xff]
      %v3350 = vld [vmem:[#allocation2 + $0x278] sm:$0xf]
      %v3351 = vld [vmem:[#allocation2 + $0x27c] sm:$0xff]
      %v3352 = vld [vmem:[#allocation2 + $0x284] sm:$0xf]
      %v3353 = vld [vmem:[#allocation2 + $0x288] sm:$0xff]
      %v3354 = vld [vmem:[#allocation2 + $0x290] sm:$0xf]
      %v3355 = vld [vmem:[#allocation2 + $0x294] sm:$0xff]
      %v3356 = vld [vmem:[#allocation2 + $0x29c] sm:$0xf]
      %v3357 = vld [vmem:[#allocation2 + $0x2a0] sm:$0xff]
      %v3358 = vld [vmem:[#allocation2 + $0x2a8] sm:$0xf]
      %v3359 = vld [vmem:[#allocation2 + $0x2ac] sm:$0xff]
      %v3360 = vld [vmem:[#allocation2 + $0x2b4] sm:$0xf]
      %v3361 = vld [vmem:[#allocation2 + $0x2b8] sm:$0xff]
      %v3362 = vld [vmem:[#allocation2 + $0x2c0] sm:$0xf]
      %v3363 = vld [vmem:[#allocation2 + $0x2c4] sm:$0xff]
      %v3364 = vld [vmem:[#allocation2 + $0x2cc] sm:$0xf]
      %v3365 = vld [vmem:[#allocation2 + $0x2d0] sm:$0xff]
      %v3366 = vld [vmem:[#allocation2 + $0x2d8] sm:$0xf]
      %v3367 = vld [vmem:[#allocation2 + $0x2dc] sm:$0xff]
      %v3368 = vld [vmem:[#allocation2 + $0x2e4] sm:$0xf]
      %v3369 = vld [vmem:[#allocation2 + $0x2e8] sm:$0xff]
      %v3370 = vld [vmem:[#allocation2 + $0x2f0] sm:$0xf]
      %v3371 = vld [vmem:[#allocation2 + $0x2f4] sm:$0xff]
      %v3372 = vld [vmem:[#allocation2 + $0x2fc] sm:$0xf]
      %v3373 = vld [vmem:[#allocation2 + $0x300] sm:$0xff]
      %v3374 = vld [vmem:[#allocation2 + $0x308] sm:$0xf]
      %v3375 = vld [vmem:[#allocation2 + $0x30c] sm:$0xff]
      %v3376 = vld [vmem:[#allocation2 + $0x314] sm:$0xf]
      %v3377 = vld [vmem:[#allocation2 + $0x318] sm:$0xff]
      %v3378 = vld [vmem:[#allocation2 + $0x320] sm:$0xf]
      %v3379 = vld [vmem:[#allocation2 + $0x324] sm:$0xff]
      %v3380 = vld [vmem:[#allocation2 + $0x32c] sm:$0xf]
      %v3381 = vld [vmem:[#allocation2 + $0x360] sm:$0xff]
      %v3382 = vld [vmem:[#allocation2 + $0x368] sm:$0xf]
      %v3383 = vld [vmem:[#allocation2 + $0x36c] sm:$0xff]
      %v3384 = vld [vmem:[#allocation2 + $0x374] sm:$0xf]
      %v3385 = vld [vmem:[#allocation2 + $0x378] sm:$0xff]
      %v3386 = vld [vmem:[#allocation2 + $0x380] sm:$0xf]
      %v3387 = vld [vmem:[#allocation2 + $0x384] sm:$0xff]
      %v3388 = vld [vmem:[#allocation2 + $0x38c] sm:$0xf]
      %v3389 = vld [vmem:[#allocation2 + $0x390] sm:$0xff]
      %v3390 = vld [vmem:[#allocation2 + $0x398] sm:$0xf]
      %v3391 = vld [vmem:[#allocation2 + $0x39c] sm:$0xff]
      %v3392 = vld [vmem:[#allocation2 + $0x3a4] sm:$0xf]
      %v3393 = vld [vmem:[#allocation2 + $0x3a8] sm:$0xff]
      %v3394 = vld [vmem:[#allocation2 + $0x3b0] sm:$0xf]
      %v3395 = vld [vmem:[#allocation2 + $0x3b4] sm:$0xff]
      %v3396 = vld [vmem:[#allocation2 + $0x3bc] sm:$0xf]
      %v3397 = vld [vmem:[#allocation2 + $0x3c0] sm:$0xff]
      %v3398 = vld [vmem:[#allocation2 + $0x3c8] sm:$0xf]
      %v3399 = vld [vmem:[#allocation2 + $0x3cc] sm:$0xff]
      %v3400 = vld [vmem:[#allocation2 + $0x3d4] sm:$0xf]
      %v3401 = vld [vmem:[#allocation2 + $0x3d8] sm:$0xff]
      %v3402 = vld [vmem:[#allocation2 + $0x3e0] sm:$0xf]
      %v3403 = vld [vmem:[#allocation2 + $0x3e4] sm:$0xff]
      %v3404 = vld [vmem:[#allocation2 + $0x3ec] sm:$0xf]
      %v3405 = vld [vmem:[#allocation2 + $0x3f0] sm:$0xff]
      %v3406 = vld [vmem:[#allocation2 + $0x3f8] sm:$0xf]
      %v3407 = vld [vmem:[#allocation2 + $0x3fc] sm:$0xff]
      %v3408 = vld [vmem:[#allocation2 + $0x404] sm:$0xf]
      %v3409 = vld [vmem:[#allocation2 + $0x408] sm:$0xff]
      %v3410 = vld [vmem:[#allocation2 + $0x410] sm:$0xf]
      %v3411 = vld [vmem:[#allocation2 + $0x414] sm:$0xff]
      %v3412 = vld [vmem:[#allocation2 + $0x41c] sm:$0xf]
      %v3413 = vld [vmem:[#allocation2 + $0x420] sm:$0xff]
      %v3414 = vld [vmem:[#allocation2 + $0x428] sm:$0xf]
      %v3415 = vld [vmem:[#allocation2 + $0x42c] sm:$0xff]
      %v3416 = vld [vmem:[#allocation2 + $0x434] sm:$0xf]
      %v3417 = vld [vmem:[#allocation2 + $0x438] sm:$0xff]
      %v3418 = vld [vmem:[#allocation2 + $0x440] sm:$0xf]
      %v3419 = vld [vmem:[#allocation2 + $0x444] sm:$0xff]
      %v3420 = vld [vmem:[#allocation2 + $0x44c] sm:$0xf]
      %v3421 = vld [vmem:[#allocation2 + $0x450] sm:$0xff]
      %v3422 = vld [vmem:[#allocation2 + $0x458] sm:$0xf]
      %v3423 = vld [vmem:[#allocation2 + $0x45c] sm:$0xff]
      %v3424 = vld [vmem:[#allocation2 + $0x464] sm:$0xf]
      %v3425 = vld [vmem:[#allocation2 + $0x468] sm:$0xff]
      %v3426 = vld [vmem:[#allocation2 + $0x470] sm:$0xf]
      %v3427 = vld [vmem:[#allocation2 + $0x474] sm:$0xff]
      %v3428 = vld [vmem:[#allocation2 + $0x47c] sm:$0xf]
      %v3429 = vld [vmem:[#allocation2 + $0x480] sm:$0xff]
      %v3430 = vld [vmem:[#allocation2 + $0x488] sm:$0xf]
      %v3431 = vld [vmem:[#allocation2 + $0x48c] sm:$0xff]
      %v3432 = vld [vmem:[#allocation2 + $0x494] sm:$0xf]
      %v3433 = vld [vmem:[#allocation2 + $0x498] sm:$0xff]
      %v3434 = vld [vmem:[#allocation2 + $0x4a0] sm:$0xf]
      %v3435 = vld [vmem:[#allocation2 + $0x4a4] sm:$0xff]
      %v3436 = vld [vmem:[#allocation2 + $0x4ac] sm:$0xf]
      %v3437 = vld [vmem:[#allocation2 + $0x4b0] sm:$0xff]
      %v3438 = vld [vmem:[#allocation2 + $0x4b8] sm:$0xf]
      %v3439 = vld [vmem:[#allocation2 + $0x4bc] sm:$0xff]
      %v3440 = vld [vmem:[#allocation2 + $0x4c4] sm:$0xf]
      %v3441 = vld [vmem:[#allocation2 + $0x4c8] sm:$0xff]
      %v3442 = vld [vmem:[#allocation2 + $0x4d0] sm:$0xf]
      %v3443 = vld [vmem:[#allocation2 + $0x4d4] sm:$0xff]
      %v3444 = vld [vmem:[#allocation2 + $0x4dc] sm:$0xf]
      %v3445 = vld [vmem:[#allocation2 + $0x510] sm:$0xff]
      %v3446 = vld [vmem:[#allocation2 + $0x518] sm:$0xf]
      %v3447 = vld [vmem:[#allocation2 + $0x51c] sm:$0xff]
      %v3448 = vld [vmem:[#allocation2 + $0x524] sm:$0xf]
      %v3449 = vld [vmem:[#allocation2 + $0x528] sm:$0xff]
      %v3450 = vld [vmem:[#allocation2 + $0x530] sm:$0xf]
      %v3451 = vld [vmem:[#allocation2 + $0x534] sm:$0xff]
      %v3452 = vld [vmem:[#allocation2 + $0x53c] sm:$0xf]
      %v3453 = vld [vmem:[#allocation2 + $0x540] sm:$0xff]
      %v3454 = vld [vmem:[#allocation2 + $0x548] sm:$0xf]
      %v3455 = vld [vmem:[#allocation2 + $0x54c] sm:$0xff]
      %v3456 = vld [vmem:[#allocation2 + $0x554] sm:$0xf]
      %v3457 = vld [vmem:[#allocation2 + $0x558] sm:$0xff]
      %v3458 = vld [vmem:[#allocation2 + $0x560] sm:$0xf]
      %v3459 = vld [vmem:[#allocation2 + $0x564] sm:$0xff]
      %v3460 = vld [vmem:[#allocation2 + $0x56c] sm:$0xf]
      %v3461 = vld [vmem:[#allocation2 + $0x570] sm:$0xff]
      %v3462 = vld [vmem:[#allocation2 + $0x578] sm:$0xf]
      %v3463 = vld [vmem:[#allocation2 + $0x57c] sm:$0xff]
      %v3464 = vld [vmem:[#allocation2 + $0x584] sm:$0xf]
      %v3465 = vld [vmem:[#allocation2 + $0x588] sm:$0xff]
      %v3466 = vld [vmem:[#allocation2 + $0x590] sm:$0xf]
      %v3467 = vld [vmem:[#allocation2 + $0x594] sm:$0xff]
      %v3468 = vld [vmem:[#allocation2 + $0x59c] sm:$0xf]
      %v3469 = vld [vmem:[#allocation2 + $0x5a0] sm:$0xff]
      %v3470 = vld [vmem:[#allocation2 + $0x5a8] sm:$0xf]
      %v3471 = vld [vmem:[#allocation2 + $0x5ac] sm:$0xff]
      %v3472 = vld [vmem:[#allocation2 + $0x5b4] sm:$0xf]
      %v3473 = vld [vmem:[#allocation2 + $0x5b8] sm:$0xff]
      %v3474 = vld [vmem:[#allocation2 + $0x5c0] sm:$0xf]
      %v3475 = vld [vmem:[#allocation2 + $0x5c4] sm:$0xff]
      %v3476 = vld [vmem:[#allocation2 + $0x5cc] sm:$0xf]
      %v3477 = vld [vmem:[#allocation2 + $0x5d0] sm:$0xff]
      %v3478 = vld [vmem:[#allocation2 + $0x5d8] sm:$0xf]
      %v3479 = vld [vmem:[#allocation2 + $0x5dc] sm:$0xff]
      %v3480 = vld [vmem:[#allocation2 + $0x5e4] sm:$0xf]
      %v3481 = vld [vmem:[#allocation2 + $0x5e8] sm:$0xff]
      %v3482 = vld [vmem:[#allocation2 + $0x5f0] sm:$0xf]
      %v3483 = vld [vmem:[#allocation2 + $0x5f4] sm:$0xff]
      %v3484 = vld [vmem:[#allocation2 + $0x5fc] sm:$0xf]
      %v3485 = vld [vmem:[#allocation2 + $0x600] sm:$0xff]
      %v3486 = vld [vmem:[#allocation2 + $0x608] sm:$0xf]
      %v3487 = vld [vmem:[#allocation2 + $0x60c] sm:$0xff]
      %v3488 = vld [vmem:[#allocation2 + $0x614] sm:$0xf]
      %v3489 = vld [vmem:[#allocation2 + $0x618] sm:$0xff]
      %v3490 = vld [vmem:[#allocation2 + $0x620] sm:$0xf]
      %v3491 = vld [vmem:[#allocation2 + $0x624] sm:$0xff]
      %v3492 = vld [vmem:[#allocation2 + $0x62c] sm:$0xf]
      %v3493 = vld [vmem:[#allocation2 + $0x630] sm:$0xff]
      %v3494 = vld [vmem:[#allocation2 + $0x638] sm:$0xf]
      %v3495 = vld [vmem:[#allocation2 + $0x63c] sm:$0xff]
      %v3496 = vld [vmem:[#allocation2 + $0x644] sm:$0xf]
      %v3497 = vld [vmem:[#allocation2 + $0x648] sm:$0xff]
      %v3498 = vld [vmem:[#allocation2 + $0x650] sm:$0xf]
      %v3499 = vld [vmem:[#allocation2 + $0x654] sm:$0xff]
      %v3500 = vld [vmem:[#allocation2 + $0x65c] sm:$0xf]
      %v3501 = vld [vmem:[#allocation2 + $0x660] sm:$0xff]
      %v3502 = vld [vmem:[#allocation2 + $0x668] sm:$0xf]
      %v3503 = vld [vmem:[#allocation2 + $0x66c] sm:$0xff]
      %v3504 = vld [vmem:[#allocation2 + $0x674] sm:$0xf]
      %v3505 = vld [vmem:[#allocation2 + $0x678] sm:$0xff]
      %v3506 = vld [vmem:[#allocation2 + $0x680] sm:$0xf]
      %v3507 = vld [vmem:[#allocation2 + $0x684] sm:$0xff]
      %v3508 = vld [vmem:[#allocation2 + $0x68c] sm:$0xf]
      %v3509 = vld [vmem:[%s4] sm:$0xf]
      %v3510 = vld [vmem:[%s4 + $0x4] sm:$0xf]
      %v3511 = vld [vmem:[%s4 + $0x8] sm:$0xf]
      %v3512 = vld [vmem:[%s4 + $0xc] sm:$0xf]
      %v3513 = vld [vmem:[%s4 + $0x10] sm:$0xf]
      %v3514 = vld [vmem:[%s4 + $0x14] sm:$0xf]
      %v3515 = vld [vmem:[%s4 + $0x18] sm:$0xf]
      %v3516 = vld [vmem:[%s4 + $0x1c] sm:$0xf]
      %v3517 = vld [vmem:[%s4 + $0x20] sm:$0xf]
      %v3518 = vld [vmem:[%s4 + $0x24] sm:$0xf]
      %v3519 = vld [vmem:[%s4 + $0x28] sm:$0xf]
      %v3520 = vld [vmem:[%s4 + $0x2c] sm:$0xf]
      %v3521 = vld [vmem:[%s4 + $0x30] sm:$0xf]
      %v3522 = vld [vmem:[%s4 + $0x34] sm:$0xf]
      %v3523 = vld [vmem:[%s4 + $0x38] sm:$0xf]
      %v3524 = vld [vmem:[%s4 + $0x3c] sm:$0xf]
      %v3525 = vld [vmem:[%s4 + $0x40] sm:$0xf]
      %v3526 = vld [vmem:[%s4 + $0x44] sm:$0xf]
      %v3527 = vld [vmem:[%s4 + $0x48] sm:$0xf]
      %v3528 = vld [vmem:[%s4 + $0x4c] sm:$0xf]
      %v3529 = vld [vmem:[%s4 + $0x50] sm:$0xf]
      %v3530 = vld [vmem:[%s4 + $0x54] sm:$0xf]
      %v3531 = vld [vmem:[%s4 + $0x58] sm:$0xf]
      %v3532 = vld [vmem:[%s4 + $0x5c] sm:$0xf]
      %v3533 = vld [vmem:[%s4 + $0x60] sm:$0xf]
      %v3534 = vld [vmem:[%s4 + $0x64] sm:$0xf]
      %v3535 = vld [vmem:[%s4 + $0x68] sm:$0xf]
      %v3536 = vld [vmem:[%s4 + $0x6c] sm:$0xf]
      %v3537 = vld [vmem:[%s4 + $0x70] sm:$0xf]
      %v3538 = vld [vmem:[%s4 + $0x74] sm:$0xf]
      %v3539 = vld [vmem:[%s4 + $0x78] sm:$0xf]
      %v3540 = vld [vmem:[%s4 + $0x7c] sm:$0xf]
      %v3541 = vld [vmem:[%s4 + $0x80] sm:$0xf]
      %v3542 = vld [vmem:[%s4 + $0x84] sm:$0xf]
      %v3543 = vld [vmem:[%s4 + $0x88] sm:$0xf]
      %v3544 = vld [vmem:[%s4 + $0x8c] sm:$0xf]
      %v3545 = vld [vmem:[%s4 + $0x90] sm:$0xf]
      %v3546 = vld [vmem:[%s4 + $0x94] sm:$0xf]
      %v3547 = vld [vmem:[%s4 + $0x98] sm:$0xf]
      %v3548 = vld [vmem:[%s4 + $0x9c] sm:$0xf]
      %v3549 = vld [vmem:[%s4 + $0xa0] sm:$0xf]
      %v3550 = vld [vmem:[%s4 + $0xa4] sm:$0xf]
      %v3551 = vld [vmem:[%s4 + $0xa8] sm:$0xf]
      %v3552 = vld [vmem:[%s4 + $0xac] sm:$0xf]
      %v3553 = vld [vmem:[%s4 + $0xb0] sm:$0xf]
      %v3554 = vld [vmem:[%s4 + $0xb4] sm:$0xf]
      %v3555 = vld [vmem:[%s4 + $0xb8] sm:$0xf]
      %v3556 = vld [vmem:[%s4 + $0xbc] sm:$0xf]
      %v3557 = vld [vmem:[%s2612] sm:$0xff]
      %v3558 = vld [vmem:[%s2612 + $0x8] sm:$0xf]
      %v3559 = vld [vmem:[%s2612 + $0xc] sm:$0xff]
      %v3560 = vld [vmem:[%s2612 + $0x14] sm:$0xf]
      %v3561 = vld [vmem:[%s2612 + $0x18] sm:$0xff]
      %v3562 = vld [vmem:[%s2612 + $0x20] sm:$0xf]
      %v3563 = vld [vmem:[%s2612 + $0x24] sm:$0xff]
      %v3564 = vld [vmem:[%s2612 + $0x2c] sm:$0xf]
      %v3565 = vld [vmem:[%s2612 + $0x30] sm:$0xff]
      %v3566 = vld [vmem:[%s2612 + $0x38] sm:$0xf]
      %v3567 = vld [vmem:[%s2612 + $0x3c] sm:$0xff]
      %v3568 = vld [vmem:[%s2612 + $0x44] sm:$0xf]
      %v3569 = vld [vmem:[%s2612 + $0x48] sm:$0xff]
      %v3570 = vld [vmem:[%s2612 + $0x50] sm:$0xf]
      %v3571 = vld [vmem:[%s2612 + $0x54] sm:$0xff]
      %v3572 = vld [vmem:[%s2612 + $0x5c] sm:$0xf]
      %v3573 = vld [vmem:[%s2612 + $0x60] sm:$0xff]
      %v3574 = vld [vmem:[%s2612 + $0x68] sm:$0xf]
      %v3575 = vld [vmem:[%s2612 + $0x6c] sm:$0xff]
      %v3576 = vld [vmem:[%s2612 + $0x74] sm:$0xf]
      %v3577 = vld [vmem:[%s2612 + $0x78] sm:$0xff]
      %v3578 = vld [vmem:[%s2612 + $0x80] sm:$0xf]
      %v3579 = vld [vmem:[%s2612 + $0x84] sm:$0xff]
      %v3580 = vld [vmem:[%s2612 + $0x8c] sm:$0xf]
      %v3581 = vld [vmem:[%s2612 + $0x90] sm:$0xff]
      %v3582 = vld [vmem:[%s2612 + $0x98] sm:$0xf]
      %v3583 = vld [vmem:[%s2612 + $0x9c] sm:$0xff]
      %v3584 = vld [vmem:[%s2612 + $0xa4] sm:$0xf]
      %v3585 = vld [vmem:[%s2612 + $0xa8] sm:$0xff]
      %v3586 = vld [vmem:[%s2612 + $0xb0] sm:$0xf]
      %v3587 = vld [vmem:[%s2612 + $0xb4] sm:$0xff]
      %v3588 = vld [vmem:[%s2612 + $0xbc] sm:$0xf]
      %v3589 = vld [vmem:[%s2612 + $0xc0] sm:$0xff]
      %v3590 = vld [vmem:[%s2612 + $0xc8] sm:$0xf]
      %v3591 = vld [vmem:[%s2612 + $0xcc] sm:$0xff]
      %v3592 = vld [vmem:[%s2612 + $0xd4] sm:$0xf]
      %v3593 = vld [vmem:[%s2612 + $0xd8] sm:$0xff]
      %v3594 = vld [vmem:[%s2612 + $0xe0] sm:$0xf]
      %v3595 = vld [vmem:[%s2612 + $0xe4] sm:$0xff]
      %v3596 = vld [vmem:[%s2612 + $0xec] sm:$0xf]
      %v3597 = vld [vmem:[%s2612 + $0xf0] sm:$0xff]
      %v3598 = vld [vmem:[%s2612 + $0xf8] sm:$0xf]
      %v3599 = vld [vmem:[%s2612 + $0xfc] sm:$0xff]
      %v3600 = vld [vmem:[%s2612 + $0x104] sm:$0xf]
      %v3601 = vld [vmem:[%s2612 + $0x108] sm:$0xff]
      %v3602 = vld [vmem:[%s2612 + $0x110] sm:$0xf]
      %v3603 = vld [vmem:[%s2612 + $0x114] sm:$0xff]
      %v3604 = vld [vmem:[%s2612 + $0x11c] sm:$0xf]
      %v3605 = vld [vmem:[%s2612 + $0x120] sm:$0xff]
      %v3606 = vld [vmem:[%s2612 + $0x128] sm:$0xf]
      %v3607 = vld [vmem:[%s2612 + $0x12c] sm:$0xff]
      %v3608 = vld [vmem:[%s2612 + $0x134] sm:$0xf]
      %v3609 = vld [vmem:[%s2612 + $0x138] sm:$0xff]
      %v3610 = vld [vmem:[%s2612 + $0x140] sm:$0xf]
      %v3611 = vld [vmem:[%s2612 + $0x144] sm:$0xff]
      %v3612 = vld [vmem:[%s2612 + $0x14c] sm:$0xf]
      %v3613 = vld [vmem:[%s2612 + $0x150] sm:$0xff]
      %v3614 = vld [vmem:[%s2612 + $0x158] sm:$0xf]
      %v3615 = vld [vmem:[%s2612 + $0x15c] sm:$0xff]
      %v3616 = vld [vmem:[%s2612 + $0x164] sm:$0xf]
      %v3617 = vld [vmem:[%s2612 + $0x168] sm:$0xff]
      %v3618 = vld [vmem:[%s2612 + $0x170] sm:$0xf]
      %v3619 = vld [vmem:[%s2612 + $0x174] sm:$0xff]
      %v3620 = vld [vmem:[%s2612 + $0x17c] sm:$0xf]
      %v3621 = vld [vmem:[%s2612 + $0x1b0] sm:$0xff]
      %v3622 = vld [vmem:[%s2612 + $0x1b8] sm:$0xf]
      %v3623 = vld [vmem:[%s2612 + $0x1bc] sm:$0xff]
      %v3624 = vld [vmem:[%s2612 + $0x1c4] sm:$0xf]
      %v3625 = vld [vmem:[%s2612 + $0x1c8] sm:$0xff]
      %v3626 = vld [vmem:[%s2612 + $0x1d0] sm:$0xf]
      %v3627 = vld [vmem:[%s2612 + $0x1d4] sm:$0xff]
      %v3628 = vld [vmem:[%s2612 + $0x1dc] sm:$0xf]
      %v3629 = vld [vmem:[%s2612 + $0x1e0] sm:$0xff]
      %v3630 = vld [vmem:[%s2612 + $0x1e8] sm:$0xf]
      %v3631 = vld [vmem:[%s2612 + $0x1ec] sm:$0xff]
      %v3632 = vld [vmem:[%s2612 + $0x1f4] sm:$0xf]
      %v3633 = vld [vmem:[%s2612 + $0x1f8] sm:$0xff]
      %v3634 = vld [vmem:[%s2612 + $0x200] sm:$0xf]
      %v3635 = vld [vmem:[%s2612 + $0x204] sm:$0xff]
      %v3636 = vld [vmem:[%s2612 + $0x20c] sm:$0xf]
      %v3637 = vld [vmem:[%s2612 + $0x210] sm:$0xff]
      %v3638 = vld [vmem:[%s2612 + $0x218] sm:$0xf]
      %v3639 = vld [vmem:[%s2612 + $0x21c] sm:$0xff]
      %v3640 = vld [vmem:[%s2612 + $0x224] sm:$0xf]
      %v3641 = vld [vmem:[%s2612 + $0x228] sm:$0xff]
      %v3642 = vld [vmem:[%s2612 + $0x230] sm:$0xf]
      %v3643 = vld [vmem:[%s2612 + $0x234] sm:$0xff]
      %v3644 = vld [vmem:[%s2612 + $0x23c] sm:$0xf]
      %v3645 = vld [vmem:[%s2612 + $0x240] sm:$0xff]
      %v3646 = vld [vmem:[%s2612 + $0x248] sm:$0xf]
      %v3647 = vld [vmem:[%s2612 + $0x24c] sm:$0xff]
      %v3648 = vld [vmem:[%s2612 + $0x254] sm:$0xf]
      %v3649 = vld [vmem:[%s2612 + $0x258] sm:$0xff]
      %v3650 = vld [vmem:[%s2612 + $0x260] sm:$0xf]
      %v3651 = vld [vmem:[%s2612 + $0x264] sm:$0xff]
      %v3652 = vld [vmem:[%s2612 + $0x26c] sm:$0xf]
      %v3653 = vld [vmem:[%s2612 + $0x270] sm:$0xff]
      %v3654 = vld [vmem:[%s2612 + $0x278] sm:$0xf]
      %v3655 = vld [vmem:[%s2612 + $0x27c] sm:$0xff]
      %v3656 = vld [vmem:[%s2612 + $0x284] sm:$0xf]
      %v3657 = vld [vmem:[%s2612 + $0x288] sm:$0xff]
      %v3658 = vld [vmem:[%s2612 + $0x290] sm:$0xf]
      %v3659 = vld [vmem:[%s2612 + $0x294] sm:$0xff]
      %v3660 = vld [vmem:[%s2612 + $0x29c] sm:$0xf]
      %v3661 = vld [vmem:[%s2612 + $0x2a0] sm:$0xff]
      %v3662 = vld [vmem:[%s2612 + $0x2a8] sm:$0xf]
      %v3663 = vld [vmem:[%s2612 + $0x2ac] sm:$0xff]
      %v3664 = vld [vmem:[%s2612 + $0x2b4] sm:$0xf]
      %v3665 = vld [vmem:[%s2612 + $0x2b8] sm:$0xff]
      %v3666 = vld [vmem:[%s2612 + $0x2c0] sm:$0xf]
      %v3667 = vld [vmem:[%s2612 + $0x2c4] sm:$0xff]
      %v3668 = vld [vmem:[%s2612 + $0x2cc] sm:$0xf]
      %v3669 = vld [vmem:[%s2612 + $0x2d0] sm:$0xff]
      %v3670 = vld [vmem:[%s2612 + $0x2d8] sm:$0xf]
      %v3671 = vld [vmem:[%s2612 + $0x2dc] sm:$0xff]
      %v3672 = vld [vmem:[%s2612 + $0x2e4] sm:$0xf]
      %v3673 = vld [vmem:[%s2612 + $0x2e8] sm:$0xff]
      %v3674 = vld [vmem:[%s2612 + $0x2f0] sm:$0xf]
      %v3675 = vld [vmem:[%s2612 + $0x2f4] sm:$0xff]
      %v3676 = vld [vmem:[%s2612 + $0x2fc] sm:$0xf]
      %v3677 = vld [vmem:[%s2612 + $0x300] sm:$0xff]
      %v3678 = vld [vmem:[%s2612 + $0x308] sm:$0xf]
      %v3679 = vld [vmem:[%s2612 + $0x30c] sm:$0xff]
      %v3680 = vld [vmem:[%s2612 + $0x314] sm:$0xf]
      %v3681 = vld [vmem:[%s2612 + $0x318] sm:$0xff]
      %v3682 = vld [vmem:[%s2612 + $0x320] sm:$0xf]
      %v3683 = vld [vmem:[%s2612 + $0x324] sm:$0xff]
      %v3684 = vld [vmem:[%s2612 + $0x32c] sm:$0xf]
      %v3685 = vld [vmem:[%s2612 + $0x360] sm:$0xff]
      %v3686 = vld [vmem:[%s2612 + $0x368] sm:$0xf]
      %v3687 = vld [vmem:[%s2612 + $0x36c] sm:$0xff]
      %v3688 = vld [vmem:[%s2612 + $0x374] sm:$0xf]
      %v3689 = vld [vmem:[%s2612 + $0x378] sm:$0xff]
      %v3690 = vld [vmem:[%s2612 + $0x380] sm:$0xf]
      %v3691 = vld [vmem:[%s2612 + $0x384] sm:$0xff]
      %v3692 = vld [vmem:[%s2612 + $0x38c] sm:$0xf]
      %v3693 = vld [vmem:[%s2612 + $0x390] sm:$0xff]
      %v3694 = vld [vmem:[%s2612 + $0x398] sm:$0xf]
      %v3695 = vld [vmem:[%s2612 + $0x39c] sm:$0xff]
      %v3696 = vld [vmem:[%s2612 + $0x3a4] sm:$0xf]
      %v3697 = vld [vmem:[%s2612 + $0x3a8] sm:$0xff]
      %v3698 = vld [vmem:[%s2612 + $0x3b0] sm:$0xf]
      %v3699 = vld [vmem:[%s2612 + $0x3b4] sm:$0xff]
      %v3700 = vld [vmem:[%s2612 + $0x3bc] sm:$0xf]
      %v3701 = vld [vmem:[%s2612 + $0x3c0] sm:$0xff]
      %v3702 = vld [vmem:[%s2612 + $0x3c8] sm:$0xf]
      %v3703 = vld [vmem:[%s2612 + $0x3cc] sm:$0xff]
      %v3704 = vld [vmem:[%s2612 + $0x3d4] sm:$0xf]
      %v3705 = vld [vmem:[%s2612 + $0x3d8] sm:$0xff]
      %v3706 = vld [vmem:[%s2612 + $0x3e0] sm:$0xf]
      %v3707 = vld [vmem:[%s2612 + $0x3e4] sm:$0xff]
      %v3708 = vld [vmem:[%s2612 + $0x3ec] sm:$0xf]
      %v3709 = vld [vmem:[%s2612 + $0x3f0] sm:$0xff]
      %v3710 = vld [vmem:[%s2612 + $0x3f8] sm:$0xf]
      %v3711 = vld [vmem:[%s2612 + $0x3fc] sm:$0xff]
      %v3712 = vld [vmem:[%s2612 + $0x404] sm:$0xf]
      %v3713 = vld [vmem:[%s2612 + $0x408] sm:$0xff]
      %v3714 = vld [vmem:[%s2612 + $0x410] sm:$0xf]
      %v3715 = vld [vmem:[%s2612 + $0x414] sm:$0xff]
      %v3716 = vld [vmem:[%s2612 + $0x41c] sm:$0xf]
      %v3717 = vld [vmem:[%s2612 + $0x420] sm:$0xff]
      %v3718 = vld [vmem:[%s2612 + $0x428] sm:$0xf]
      %v3719 = vld [vmem:[%s2612 + $0x42c] sm:$0xff]
      %v3720 = vld [vmem:[%s2612 + $0x434] sm:$0xf]
      %v3721 = vld [vmem:[%s2612 + $0x438] sm:$0xff]
      %v3722 = vld [vmem:[%s2612 + $0x440] sm:$0xf]
      %v3723 = vld [vmem:[%s2612 + $0x444] sm:$0xff]
      %v3724 = vld [vmem:[%s2612 + $0x44c] sm:$0xf]
      %v3725 = vld [vmem:[%s2612 + $0x450] sm:$0xff]
      %v3726 = vld [vmem:[%s2612 + $0x458] sm:$0xf]
      %v3727 = vld [vmem:[%s2612 + $0x45c] sm:$0xff]
      %v3728 = vld [vmem:[%s2612 + $0x464] sm:$0xf]
      %v3729 = vld [vmem:[%s2612 + $0x468] sm:$0xff]
      %v3730 = vld [vmem:[%s2612 + $0x470] sm:$0xf]
      %v3731 = vld [vmem:[%s2612 + $0x474] sm:$0xff]
      %v3732 = vld [vmem:[%s2612 + $0x47c] sm:$0xf]
      %v3733 = vld [vmem:[%s2612 + $0x480] sm:$0xff]
      %v3734 = vld [vmem:[%s2612 + $0x488] sm:$0xf]
      %v3735 = vld [vmem:[%s2612 + $0x48c] sm:$0xff]
      %v3736 = vld [vmem:[%s2612 + $0x494] sm:$0xf]
      %v3737 = vld [vmem:[%s2612 + $0x498] sm:$0xff]
      %v3738 = vld [vmem:[%s2612 + $0x4a0] sm:$0xf]
      %v3739 = vld [vmem:[%s2612 + $0x4a4] sm:$0xff]
      %v3740 = vld [vmem:[%s2612 + $0x4ac] sm:$0xf]
      %v3741 = vld [vmem:[%s2612 + $0x4b0] sm:$0xff]
      %v3742 = vld [vmem:[%s2612 + $0x4b8] sm:$0xf]
      %v3743 = vld [vmem:[%s2612 + $0x4bc] sm:$0xff]
      %v3744 = vld [vmem:[%s2612 + $0x4c4] sm:$0xf]
      %v3745 = vld [vmem:[%s2612 + $0x4c8] sm:$0xff]
      %v3746 = vld [vmem:[%s2612 + $0x4d0] sm:$0xf]
      %v3747 = vld [vmem:[%s2612 + $0x4d4] sm:$0xff]
      %v3748 = vld [vmem:[%s2612 + $0x4dc] sm:$0xf]
      %v3749 = vld [vmem:[%s2612 + $0x510] sm:$0xff]
      %v3750 = vld [vmem:[%s2612 + $0x518] sm:$0xf]
      %v3751 = vld [vmem:[%s2612 + $0x51c] sm:$0xff]
      %v3752 = vld [vmem:[%s2612 + $0x524] sm:$0xf]
      %v3753 = vld [vmem:[%s2612 + $0x528] sm:$0xff]
      %v3754 = vld [vmem:[%s2612 + $0x530] sm:$0xf]
      %v3755 = vld [vmem:[%s2612 + $0x534] sm:$0xff]
      %v3756 = vld [vmem:[%s2612 + $0x53c] sm:$0xf]
      %v3757 = vld [vmem:[%s2612 + $0x540] sm:$0xff]
      %v3758 = vld [vmem:[%s2612 + $0x548] sm:$0xf]
      %v3759 = vld [vmem:[%s2612 + $0x54c] sm:$0xff]
      %v3760 = vld [vmem:[%s2612 + $0x554] sm:$0xf]
      %v3761 = vld [vmem:[%s2612 + $0x558] sm:$0xff]
      %v3762 = vld [vmem:[%s2612 + $0x560] sm:$0xf]
      %v3763 = vld [vmem:[%s2612 + $0x564] sm:$0xff]
      %v3764 = vld [vmem:[%s2612 + $0x56c] sm:$0xf]
      %v3765 = vld [vmem:[%s2612 + $0x570] sm:$0xff]
      %v3766 = vld [vmem:[%s2612 + $0x578] sm:$0xf]
      %v3767 = vld [vmem:[%s2612 + $0x57c] sm:$0xff]
      %v3768 = vld [vmem:[%s2612 + $0x584] sm:$0xf]
      %v3769 = vld [vmem:[%s2612 + $0x588] sm:$0xff]
      %v3770 = vld [vmem:[%s2612 + $0x590] sm:$0xf]
      %v3771 = vld [vmem:[%s2612 + $0x594] sm:$0xff]
      %v3772 = vld [vmem:[%s2612 + $0x59c] sm:$0xf]
      %v3773 = vld [vmem:[%s2612 + $0x5a0] sm:$0xff]
      %v3774 = vld [vmem:[%s2612 + $0x5a8] sm:$0xf]
      %v3775 = vld [vmem:[%s2612 + $0x5ac] sm:$0xff]
      %v3776 = vld [vmem:[%s2612 + $0x5b4] sm:$0xf]
      %v3777 = vld [vmem:[%s2612 + $0x5b8] sm:$0xff]
      %v3778 = vld [vmem:[%s2612 + $0x5c0] sm:$0xf]
      %v3779 = vld [vmem:[%s2612 + $0x5c4] sm:$0xff]
      %v3780 = vld [vmem:[%s2612 + $0x5cc] sm:$0xf]
      %v3781 = vld [vmem:[%s2612 + $0x5d0] sm:$0xff]
      %v3782 = vld [vmem:[%s2612 + $0x5d8] sm:$0xf]
      %v3783 = vld [vmem:[%s2612 + $0x5dc] sm:$0xff]
      %v3784 = vld [vmem:[%s2612 + $0x5e4] sm:$0xf]
      %v3785 = vld [vmem:[%s2612 + $0x5e8] sm:$0xff]
      %v3786 = vld [vmem:[%s2612 + $0x5f0] sm:$0xf]
      %v3787 = vld [vmem:[%s2612 + $0x5f4] sm:$0xff]
      %v3788 = vld [vmem:[%s2612 + $0x5fc] sm:$0xf]
      %v3789 = vld [vmem:[%s2612 + $0x600] sm:$0xff]
      %v3790 = vld [vmem:[%s2612 + $0x608] sm:$0xf]
      %v3791 = vld [vmem:[%s2612 + $0x60c] sm:$0xff]
      %v3792 = vld [vmem:[%s2612 + $0x614] sm:$0xf]
      %v3793 = vld [vmem:[%s2612 + $0x618] sm:$0xff]
      %v3794 = vld [vmem:[%s2612 + $0x620] sm:$0xf]
      %v3795 = vld [vmem:[%s2612 + $0x624] sm:$0xff]
      %v3796 = vld [vmem:[%s2612 + $0x62c] sm:$0xf]
      %v3797 = vld [vmem:[%s2612 + $0x630] sm:$0xff]
      %v3798 = vld [vmem:[%s2612 + $0x638] sm:$0xf]
      %v3799 = vld [vmem:[%s2612 + $0x63c] sm:$0xff]
      %v3800 = vld [vmem:[%s2612 + $0x644] sm:$0xf]
      %v3801 = vld [vmem:[%s2612 + $0x648] sm:$0xff]
      %v3802 = vld [vmem:[%s2612 + $0x650] sm:$0xf]
      %v3803 = vld [vmem:[%s2612 + $0x654] sm:$0xff]
      %v3804 = vld [vmem:[%s2612 + $0x65c] sm:$0xf]
      %v3805 = vld [vmem:[%s2612 + $0x660] sm:$0xff]
      %v3806 = vld [vmem:[%s2612 + $0x668] sm:$0xf]
      %v3807 = vld [vmem:[%s2612 + $0x66c] sm:$0xff]
      %v3808 = vld [vmem:[%s2612 + $0x674] sm:$0xf]
      %v3809 = vld [vmem:[%s2612 + $0x678] sm:$0xff]
      %v3810 = vld [vmem:[%s2612 + $0x680] sm:$0xf]
      %v3811 = vld [vmem:[%s2612 + $0x684] sm:$0xff]
      %v3812 = vld [vmem:[%s2612 + $0x68c] sm:$0xf]
      %s3813 = scalar_lea.vmem %s4, 192
      %v3814 = vld [vmem:[%s3813] sm:$0xf]
      %v3815 = vld [vmem:[%s3813 + $0x4] sm:$0xf]
      %v3816 = vld [vmem:[%s3813 + $0x8] sm:$0xf]
      %v3817 = vld [vmem:[%s3813 + $0xc] sm:$0xf]
      %v3818 = vld [vmem:[%s3813 + $0x10] sm:$0xf]
      %v3819 = vld [vmem:[%s3813 + $0x14] sm:$0xf]
      %v3820 = vld [vmem:[%s3813 + $0x18] sm:$0xf]
      %v3821 = vld [vmem:[%s3813 + $0x1c] sm:$0xf]
      %v3822 = vld [vmem:[%s3813 + $0x20] sm:$0xf]
      %v3823 = vld [vmem:[%s3813 + $0x24] sm:$0xf]
      %v3824 = vld [vmem:[%s3813 + $0x28] sm:$0xf]
      %v3825 = vld [vmem:[%s3813 + $0x2c] sm:$0xf]
      %v3826 = vld [vmem:[%s3813 + $0x30] sm:$0xf]
      %v3827 = vld [vmem:[%s3813 + $0x34] sm:$0xf]
      %v3828 = vld [vmem:[%s3813 + $0x38] sm:$0xf]
      %v3829 = vld [vmem:[%s3813 + $0x3c] sm:$0xf]
      %v3830 = vld [vmem:[%s3813 + $0x40] sm:$0xf]
      %v3831 = vld [vmem:[%s3813 + $0x44] sm:$0xf]
      %v3832 = vld [vmem:[%s3813 + $0x48] sm:$0xf]
      %v3833 = vld [vmem:[%s3813 + $0x4c] sm:$0xf]
      %v3834 = vld [vmem:[%s3813 + $0x50] sm:$0xf]
      %v3835 = vld [vmem:[%s3813 + $0x54] sm:$0xf]
      %v3836 = vld [vmem:[%s3813 + $0x58] sm:$0xf]
      %v3837 = vld [vmem:[%s3813 + $0x5c] sm:$0xf]
      %v3838 = vld [vmem:[%s3813 + $0x60] sm:$0xf]
      %v3839 = vld [vmem:[%s3813 + $0x64] sm:$0xf]
      %v3840 = vld [vmem:[%s3813 + $0x68] sm:$0xf]
      %v3841 = vld [vmem:[%s3813 + $0x6c] sm:$0xf]
      %v3842 = vld [vmem:[%s3813 + $0x70] sm:$0xf]
      %v3843 = vld [vmem:[%s3813 + $0x74] sm:$0xf]
      %v3844 = vld [vmem:[%s3813 + $0x78] sm:$0xf]
      %v3845 = vld [vmem:[%s3813 + $0x7c] sm:$0xf]
      %v3846 = vld [vmem:[%s3813 + $0x80] sm:$0xf]
      %v3847 = vld [vmem:[%s3813 + $0x84] sm:$0xf]
      %v3848 = vld [vmem:[%s3813 + $0x88] sm:$0xf]
      %v3849 = vld [vmem:[%s3813 + $0x8c] sm:$0xf]
      %v3850 = vld [vmem:[%s3813 + $0x90] sm:$0xf]
      %v3851 = vld [vmem:[%s3813 + $0x94] sm:$0xf]
      %v3852 = vld [vmem:[%s3813 + $0x98] sm:$0xf]
      %v3853 = vld [vmem:[%s3813 + $0x9c] sm:$0xf]
      %v3854 = vld [vmem:[%s3813 + $0xa0] sm:$0xf]
      %v3855 = vld [vmem:[%s3813 + $0xa4] sm:$0xf]
      %v3856 = vld [vmem:[%s3813 + $0xa8] sm:$0xf]
      %v3857 = vld [vmem:[%s3813 + $0xac] sm:$0xf]
      %v3858 = vld [vmem:[%s3813 + $0xb0] sm:$0xf]
      %v3859 = vld [vmem:[%s3813 + $0xb4] sm:$0xf]
      %v3860 = vld [vmem:[%s3813 + $0xb8] sm:$0xf]
      %v3861 = vld [vmem:[%s3813 + $0xbc] sm:$0xf]
      %v4118 = vunpack.c.l.b16 %v3557
      %v4119 = vunpack.c.h.b16 %v3557
      %v4120 = vunpack.c.l.b16 %v3558
      %v4121 = vunpack.c.l.b16 %v3559
      %v4122 = vunpack.c.h.b16 %v3559
      %v4123 = vunpack.c.l.b16 %v3560
      %v4124 = vunpack.c.l.b16 %v3561
      %v4125 = vunpack.c.h.b16 %v3561
      %v4126 = vunpack.c.l.b16 %v3562
      %v4127 = vunpack.c.l.b16 %v3563
      %v4128 = vunpack.c.h.b16 %v3563
      %v4129 = vunpack.c.l.b16 %v3564
      %v4130 = vunpack.c.l.b16 %v3565
      %v4131 = vunpack.c.h.b16 %v3565
      %v4132 = vunpack.c.l.b16 %v3566
      %v4133 = vunpack.c.l.b16 %v3567
      %v4134 = vunpack.c.h.b16 %v3567
      %v4135 = vunpack.c.l.b16 %v3568
      %v4136 = vunpack.c.l.b16 %v3569
      %v4137 = vunpack.c.h.b16 %v3569
      %v4138 = vunpack.c.l.b16 %v3570
      %v4139 = vunpack.c.l.b16 %v3571
      %v4140 = vunpack.c.h.b16 %v3571
      %v4141 = vunpack.c.l.b16 %v3572
      %v4142 = vunpack.c.l.b16 %v3573
      %v4143 = vunpack.c.h.b16 %v3573
      %v4144 = vunpack.c.l.b16 %v3574
      %v4145 = vunpack.c.l.b16 %v3575
      %v4146 = vunpack.c.h.b16 %v3575
      %v4147 = vunpack.c.l.b16 %v3576
      %v4148 = vunpack.c.l.b16 %v3577
      %v4149 = vunpack.c.h.b16 %v3577
      %v4150 = vunpack.c.l.b16 %v3578
      %v4151 = vunpack.c.l.b16 %v3579
      %v4152 = vunpack.c.h.b16 %v3579
      %v4153 = vunpack.c.l.b16 %v3580
      %v4154 = vunpack.c.l.b16 %v3581
      %v4155 = vunpack.c.h.b16 %v3581
      %v4156 = vunpack.c.l.b16 %v3582
      %v4157 = vunpack.c.l.b16 %v3583
      %v4158 = vunpack.c.h.b16 %v3583
      %v4159 = vunpack.c.l.b16 %v3584
      %v4160 = vunpack.c.l.b16 %v3585
      %v4161 = vunpack.c.h.b16 %v3585
      %v4162 = vunpack.c.l.b16 %v3586
      %v4163 = vunpack.c.l.b16 %v3587
      %v4164 = vunpack.c.h.b16 %v3587
      %v4165 = vunpack.c.l.b16 %v3588
      %v4166 = vunpack.c.l.b16 %v3589
      %v4167 = vunpack.c.h.b16 %v3589
      %v4168 = vunpack.c.l.b16 %v3590
      %v4169 = vunpack.c.l.b16 %v3591
      %v4170 = vunpack.c.h.b16 %v3591
      %v4171 = vunpack.c.l.b16 %v3592
      %v4172 = vunpack.c.l.b16 %v3593
      %v4173 = vunpack.c.h.b16 %v3593
      %v4174 = vunpack.c.l.b16 %v3594
      %v4175 = vunpack.c.l.b16 %v3595
      %v4176 = vunpack.c.h.b16 %v3595
      %v4177 = vunpack.c.l.b16 %v3596
      %v4178 = vunpack.c.l.b16 %v3597
      %v4179 = vunpack.c.h.b16 %v3597
      %v4180 = vunpack.c.l.b16 %v3598
      %v4181 = vunpack.c.l.b16 %v3599
      %v4182 = vunpack.c.h.b16 %v3599
      %v4183 = vunpack.c.l.b16 %v3600
      %v4184 = vunpack.c.l.b16 %v3601
      %v4185 = vunpack.c.h.b16 %v3601
      %v4186 = vunpack.c.l.b16 %v3602
      %v4187 = vunpack.c.l.b16 %v3603
      %v4188 = vunpack.c.h.b16 %v3603
      %v4189 = vunpack.c.l.b16 %v3604
      %v4190 = vunpack.c.l.b16 %v3605
      %v4191 = vunpack.c.h.b16 %v3605
      %v4192 = vunpack.c.l.b16 %v3606
      %v4193 = vunpack.c.l.b16 %v3607
      %v4194 = vunpack.c.h.b16 %v3607
      %v4195 = vunpack.c.l.b16 %v3608
      %v4196 = vunpack.c.l.b16 %v3609
      %v4197 = vunpack.c.h.b16 %v3609
      %v4198 = vunpack.c.l.b16 %v3610
      %v4199 = vunpack.c.l.b16 %v3611
      %v4200 = vunpack.c.h.b16 %v3611
      %v4201 = vunpack.c.l.b16 %v3612
      %v4202 = vunpack.c.l.b16 %v3613
      %v4203 = vunpack.c.h.b16 %v3613
      %v4204 = vunpack.c.l.b16 %v3614
      %v4205 = vunpack.c.l.b16 %v3615
      %v4206 = vunpack.c.h.b16 %v3615
      %v4207 = vunpack.c.l.b16 %v3616
      %v4208 = vunpack.c.l.b16 %v3617
      %v4209 = vunpack.c.h.b16 %v3617
      %v4210 = vunpack.c.l.b16 %v3618
      %v4211 = vunpack.c.l.b16 %v3619
      %v4212 = vunpack.c.h.b16 %v3619
      %v4213 = vunpack.c.l.b16 %v3620
      %v4214 = vunpack.c.l.b16 %v3621
      %v4215 = vunpack.c.h.b16 %v3621
      %v4216 = vunpack.c.l.b16 %v3622
      %v4217 = vunpack.c.l.b16 %v3623
      %v4218 = vunpack.c.h.b16 %v3623
      %v4219 = vunpack.c.l.b16 %v3624
      %v4220 = vunpack.c.l.b16 %v3625
      %v4221 = vunpack.c.h.b16 %v3625
      %v4222 = vunpack.c.l.b16 %v3626
      %v4223 = vunpack.c.l.b16 %v3627
      %v4224 = vunpack.c.h.b16 %v3627
      %v4225 = vunpack.c.l.b16 %v3628
      %v4226 = vunpack.c.l.b16 %v3629
      %v4227 = vunpack.c.h.b16 %v3629
      %v4228 = vunpack.c.l.b16 %v3630
      %v4229 = vunpack.c.l.b16 %v3631
      %v4230 = vunpack.c.h.b16 %v3631
      %v4231 = vunpack.c.l.b16 %v3632
      %v4232 = vunpack.c.l.b16 %v3633
      %v4233 = vunpack.c.h.b16 %v3633
      %v4234 = vunpack.c.l.b16 %v3634
      %v4235 = vunpack.c.l.b16 %v3635
      %v4236 = vunpack.c.h.b16 %v3635
      %v4237 = vunpack.c.l.b16 %v3636
      %v4238 = vunpack.c.l.b16 %v3637
      %v4239 = vunpack.c.h.b16 %v3637
      %v4240 = vunpack.c.l.b16 %v3638
      %v4241 = vunpack.c.l.b16 %v3639
      %v4242 = vunpack.c.h.b16 %v3639
      %v4243 = vunpack.c.l.b16 %v3640
      %v4244 = vunpack.c.l.b16 %v3641
      %v4245 = vunpack.c.h.b16 %v3641
      %v4246 = vunpack.c.l.b16 %v3642
      %v4247 = vunpack.c.l.b16 %v3643
      %v4248 = vunpack.c.h.b16 %v3643
      %v4249 = vunpack.c.l.b16 %v3644
      %v4250 = vunpack.c.l.b16 %v3645
      %v4251 = vunpack.c.h.b16 %v3645
      %v4252 = vunpack.c.l.b16 %v3646
      %v4253 = vunpack.c.l.b16 %v3647
      %v4254 = vunpack.c.h.b16 %v3647
      %v4255 = vunpack.c.l.b16 %v3648
      %v4256 = vunpack.c.l.b16 %v3649
      %v4257 = vunpack.c.h.b16 %v3649
      %v4258 = vunpack.c.l.b16 %v3650
      %v4259 = vunpack.c.l.b16 %v3651
      %v4260 = vunpack.c.h.b16 %v3651
      %v4261 = vunpack.c.l.b16 %v3652
      %v4262 = vunpack.c.l.b16 %v3653
      %v4263 = vunpack.c.h.b16 %v3653
      %v4264 = vunpack.c.l.b16 %v3654
      %v4265 = vunpack.c.l.b16 %v3655
      %v4266 = vunpack.c.h.b16 %v3655
      %v4267 = vunpack.c.l.b16 %v3656
      %v4268 = vunpack.c.l.b16 %v3657
      %v4269 = vunpack.c.h.b16 %v3657
      %v4270 = vunpack.c.l.b16 %v3658
      %v4271 = vunpack.c.l.b16 %v3659
      %v4272 = vunpack.c.h.b16 %v3659
      %v4273 = vunpack.c.l.b16 %v3660
      %v4274 = vunpack.c.l.b16 %v3661
      %v4275 = vunpack.c.h.b16 %v3661
      %v4276 = vunpack.c.l.b16 %v3662
      %v4277 = vunpack.c.l.b16 %v3663
      %v4278 = vunpack.c.h.b16 %v3663
      %v4279 = vunpack.c.l.b16 %v3664
      %v4280 = vunpack.c.l.b16 %v3665
      %v4281 = vunpack.c.h.b16 %v3665
      %v4282 = vunpack.c.l.b16 %v3666
      %v4283 = vunpack.c.l.b16 %v3667
      %v4284 = vunpack.c.h.b16 %v3667
      %v4285 = vunpack.c.l.b16 %v3668
      %v4286 = vunpack.c.l.b16 %v3669
      %v4287 = vunpack.c.h.b16 %v3669
      %v4288 = vunpack.c.l.b16 %v3670
      %v4289 = vunpack.c.l.b16 %v3671
      %v4290 = vunpack.c.h.b16 %v3671
      %v4291 = vunpack.c.l.b16 %v3672
      %v4292 = vunpack.c.l.b16 %v3673
      %v4293 = vunpack.c.h.b16 %v3673
      %v4294 = vunpack.c.l.b16 %v3674
      %v4295 = vunpack.c.l.b16 %v3675
      %v4296 = vunpack.c.h.b16 %v3675
      %v4297 = vunpack.c.l.b16 %v3676
      %v4298 = vunpack.c.l.b16 %v3677
      %v4299 = vunpack.c.h.b16 %v3677
      %v4300 = vunpack.c.l.b16 %v3678
      %v4301 = vunpack.c.l.b16 %v3679
      %v4302 = vunpack.c.h.b16 %v3679
      %v4303 = vunpack.c.l.b16 %v3680
      %v4304 = vunpack.c.l.b16 %v3681
      %v4305 = vunpack.c.h.b16 %v3681
      %v4306 = vunpack.c.l.b16 %v3682
      %v4307 = vunpack.c.l.b16 %v3683
      %v4308 = vunpack.c.h.b16 %v3683
      %v4309 = vunpack.c.l.b16 %v3684
      %v4310 = vunpack.c.l.b16 %v3685
      %v4311 = vunpack.c.h.b16 %v3685
      %v4312 = vunpack.c.l.b16 %v3686
      %v4313 = vunpack.c.l.b16 %v3687
      %v4314 = vunpack.c.h.b16 %v3687
      %v4315 = vunpack.c.l.b16 %v3688
      %v4316 = vunpack.c.l.b16 %v3689
      %v4317 = vunpack.c.h.b16 %v3689
      %v4318 = vunpack.c.l.b16 %v3690
      %v4319 = vunpack.c.l.b16 %v3691
      %v4320 = vunpack.c.h.b16 %v3691
      %v4321 = vunpack.c.l.b16 %v3692
      %v4322 = vunpack.c.l.b16 %v3693
      %v4323 = vunpack.c.h.b16 %v3693
      %v4324 = vunpack.c.l.b16 %v3694
      %v4325 = vunpack.c.l.b16 %v3695
      %v4326 = vunpack.c.h.b16 %v3695
      %v4327 = vunpack.c.l.b16 %v3696
      %v4328 = vunpack.c.l.b16 %v3697
      %v4329 = vunpack.c.h.b16 %v3697
      %v4330 = vunpack.c.l.b16 %v3698
      %v4331 = vunpack.c.l.b16 %v3699
      %v4332 = vunpack.c.h.b16 %v3699
      %v4333 = vunpack.c.l.b16 %v3700
      %v4334 = vunpack.c.l.b16 %v3701
      %v4335 = vunpack.c.h.b16 %v3701
      %v4336 = vunpack.c.l.b16 %v3702
      %v4337 = vunpack.c.l.b16 %v3703
      %v4338 = vunpack.c.h.b16 %v3703
      %v4339 = vunpack.c.l.b16 %v3704
      %v4340 = vunpack.c.l.b16 %v3705
      %v4341 = vunpack.c.h.b16 %v3705
      %v4342 = vunpack.c.l.b16 %v3706
      %v4343 = vunpack.c.l.b16 %v3707
      %v4344 = vunpack.c.h.b16 %v3707
      %v4345 = vunpack.c.l.b16 %v3708
      %v4346 = vunpack.c.l.b16 %v3709
      %v4347 = vunpack.c.h.b16 %v3709
      %v4348 = vunpack.c.l.b16 %v3710
      %v4349 = vunpack.c.l.b16 %v3711
      %v4350 = vunpack.c.h.b16 %v3711
      %v4351 = vunpack.c.l.b16 %v3712
      %v4352 = vunpack.c.l.b16 %v3713
      %v4353 = vunpack.c.h.b16 %v3713
      %v4354 = vunpack.c.l.b16 %v3714
      %v4355 = vunpack.c.l.b16 %v3715
      %v4356 = vunpack.c.h.b16 %v3715
      %v4357 = vunpack.c.l.b16 %v3716
      %v4358 = vunpack.c.l.b16 %v3717
      %v4359 = vunpack.c.h.b16 %v3717
      %v4360 = vunpack.c.l.b16 %v3718
      %v4361 = vunpack.c.l.b16 %v3719
      %v4362 = vunpack.c.h.b16 %v3719
      %v4363 = vunpack.c.l.b16 %v3720
      %v4364 = vunpack.c.l.b16 %v3721
      %v4365 = vunpack.c.h.b16 %v3721
      %v4366 = vunpack.c.l.b16 %v3722
      %v4367 = vunpack.c.l.b16 %v3723
      %v4368 = vunpack.c.h.b16 %v3723
      %v4369 = vunpack.c.l.b16 %v3724
      %v4370 = vunpack.c.l.b16 %v3725
      %v4371 = vunpack.c.h.b16 %v3725
      %v4372 = vunpack.c.l.b16 %v3726
      %v4373 = vunpack.c.l.b16 %v3727
      %v4374 = vunpack.c.h.b16 %v3727
      %v4375 = vunpack.c.l.b16 %v3728
      %v4376 = vunpack.c.l.b16 %v3729
      %v4377 = vunpack.c.h.b16 %v3729
      %v4378 = vunpack.c.l.b16 %v3730
      %v4379 = vunpack.c.l.b16 %v3731
      %v4380 = vunpack.c.h.b16 %v3731
      %v4381 = vunpack.c.l.b16 %v3732
      %v4382 = vunpack.c.l.b16 %v3733
      %v4383 = vunpack.c.h.b16 %v3733
      %v4384 = vunpack.c.l.b16 %v3734
      %v4385 = vunpack.c.l.b16 %v3735
      %v4386 = vunpack.c.h.b16 %v3735
      %v4387 = vunpack.c.l.b16 %v3736
      %v4388 = vunpack.c.l.b16 %v3737
      %v4389 = vunpack.c.h.b16 %v3737
      %v4390 = vunpack.c.l.b16 %v3738
      %v4391 = vunpack.c.l.b16 %v3739
      %v4392 = vunpack.c.h.b16 %v3739
      %v4393 = vunpack.c.l.b16 %v3740
      %v4394 = vunpack.c.l.b16 %v3741
      %v4395 = vunpack.c.h.b16 %v3741
      %v4396 = vunpack.c.l.b16 %v3742
      %v4397 = vunpack.c.l.b16 %v3743
      %v4398 = vunpack.c.h.b16 %v3743
      %v4399 = vunpack.c.l.b16 %v3744
      %v4400 = vunpack.c.l.b16 %v3745
      %v4401 = vunpack.c.h.b16 %v3745
      %v4402 = vunpack.c.l.b16 %v3746
      %v4403 = vunpack.c.l.b16 %v3747
      %v4404 = vunpack.c.h.b16 %v3747
      %v4405 = vunpack.c.l.b16 %v3748
      %v4406 = vunpack.c.l.b16 %v3749
      %v4407 = vunpack.c.h.b16 %v3749
      %v4408 = vunpack.c.l.b16 %v3750
      %v4409 = vunpack.c.l.b16 %v3751
      %v4410 = vunpack.c.h.b16 %v3751
      %v4411 = vunpack.c.l.b16 %v3752
      %v4412 = vunpack.c.l.b16 %v3753
      %v4413 = vunpack.c.h.b16 %v3753
      %v4414 = vunpack.c.l.b16 %v3754
      %v4415 = vunpack.c.l.b16 %v3755
      %v4416 = vunpack.c.h.b16 %v3755
      %v4417 = vunpack.c.l.b16 %v3756
      %v4418 = vunpack.c.l.b16 %v3757
      %v4419 = vunpack.c.h.b16 %v3757
      %v4420 = vunpack.c.l.b16 %v3758
      %v4421 = vunpack.c.l.b16 %v3759
      %v4422 = vunpack.c.h.b16 %v3759
      %v4423 = vunpack.c.l.b16 %v3760
      %v4424 = vunpack.c.l.b16 %v3761
      %v4425 = vunpack.c.h.b16 %v3761
      %v4426 = vunpack.c.l.b16 %v3762
      %v4427 = vunpack.c.l.b16 %v3763
      %v4428 = vunpack.c.h.b16 %v3763
      %v4429 = vunpack.c.l.b16 %v3764
      %v4430 = vunpack.c.l.b16 %v3765
      %v4431 = vunpack.c.h.b16 %v3765
      %v4432 = vunpack.c.l.b16 %v3766
      %v4433 = vunpack.c.l.b16 %v3767
      %v4434 = vunpack.c.h.b16 %v3767
      %v4435 = vunpack.c.l.b16 %v3768
      %v4436 = vunpack.c.l.b16 %v3769
      %v4437 = vunpack.c.h.b16 %v3769
      %v4438 = vunpack.c.l.b16 %v3770
      %v4439 = vunpack.c.l.b16 %v3771
      %v4440 = vunpack.c.h.b16 %v3771
      %v4441 = vunpack.c.l.b16 %v3772
      %v4442 = vunpack.c.l.b16 %v3773
      %v4443 = vunpack.c.h.b16 %v3773
      %v4444 = vunpack.c.l.b16 %v3774
      %v4445 = vunpack.c.l.b16 %v3775
      %v4446 = vunpack.c.h.b16 %v3775
      %v4447 = vunpack.c.l.b16 %v3776
      %v4448 = vunpack.c.l.b16 %v3777
      %v4449 = vunpack.c.h.b16 %v3777
      %v4450 = vunpack.c.l.b16 %v3778
      %v4451 = vunpack.c.l.b16 %v3779
      %v4452 = vunpack.c.h.b16 %v3779
      %v4453 = vunpack.c.l.b16 %v3780
      %v4454 = vunpack.c.l.b16 %v3781
      %v4455 = vunpack.c.h.b16 %v3781
      %v4456 = vunpack.c.l.b16 %v3782
      %v4457 = vunpack.c.l.b16 %v3783
      %v4458 = vunpack.c.h.b16 %v3783
      %v4459 = vunpack.c.l.b16 %v3784
      %v4460 = vunpack.c.l.b16 %v3785
      %v4461 = vunpack.c.h.b16 %v3785
      %v4462 = vunpack.c.l.b16 %v3786
      %v4463 = vunpack.c.l.b16 %v3787
      %v4464 = vunpack.c.h.b16 %v3787
      %v4465 = vunpack.c.l.b16 %v3788
      %v4466 = vunpack.c.l.b16 %v3789
      %v4467 = vunpack.c.h.b16 %v3789
      %v4468 = vunpack.c.l.b16 %v3790
      %v4469 = vunpack.c.l.b16 %v3791
      %v4470 = vunpack.c.h.b16 %v3791
      %v4471 = vunpack.c.l.b16 %v3792
      %v4472 = vunpack.c.l.b16 %v3793
      %v4473 = vunpack.c.h.b16 %v3793
      %v4474 = vunpack.c.l.b16 %v3794
      %v4475 = vunpack.c.l.b16 %v3795
      %v4476 = vunpack.c.h.b16 %v3795
      %v4477 = vunpack.c.l.b16 %v3796
      %v4478 = vunpack.c.l.b16 %v3797
      %v4479 = vunpack.c.h.b16 %v3797
      %v4480 = vunpack.c.l.b16 %v3798
      %v4481 = vunpack.c.l.b16 %v3799
      %v4482 = vunpack.c.h.b16 %v3799
      %v4483 = vunpack.c.l.b16 %v3800
      %v4484 = vunpack.c.l.b16 %v3801
      %v4485 = vunpack.c.h.b16 %v3801
      %v4486 = vunpack.c.l.b16 %v3802
      %v4487 = vunpack.c.l.b16 %v3803
      %v4488 = vunpack.c.h.b16 %v3803
      %v4489 = vunpack.c.l.b16 %v3804
      %v4490 = vunpack.c.l.b16 %v3805
      %v4491 = vunpack.c.h.b16 %v3805
      %v4492 = vunpack.c.l.b16 %v3806
      %v4493 = vunpack.c.l.b16 %v3807
      %v4494 = vunpack.c.h.b16 %v3807
      %v4495 = vunpack.c.l.b16 %v3808
      %v4496 = vunpack.c.l.b16 %v3809
      %v4497 = vunpack.c.h.b16 %v3809
      %v4498 = vunpack.c.l.b16 %v3810
      %v4499 = vunpack.c.l.b16 %v3811
      %v4500 = vunpack.c.h.b16 %v3811
      %v4501 = vunpack.c.l.b16 %v3812
      %v4502 = vpack.c.b16 %v4121, %v4118
      %v4503 = vpack.c.b16 %v4122, %v4119
      %v4504 = vpack.c.b16 %v4123, %v4120
      %v4505 = vpack.c.b16 %v4127, %v4124
      %v4506 = vpack.c.b16 %v4128, %v4125
      %v4507 = vpack.c.b16 %v4129, %v4126
      %v4508 = vpack.c.b16 %v4133, %v4130
      %v4509 = vpack.c.b16 %v4134, %v4131
      %v4510 = vpack.c.b16 %v4135, %v4132
      %v4511 = vpack.c.b16 %v4139, %v4136
      %v4512 = vpack.c.b16 %v4140, %v4137
      %v4513 = vpack.c.b16 %v4141, %v4138
      %v4514 = vpack.c.b16 %v4145, %v4142
      %v4515 = vpack.c.b16 %v4146, %v4143
      %v4516 = vpack.c.b16 %v4147, %v4144
      %v4517 = vpack.c.b16 %v4151, %v4148
      %v4518 = vpack.c.b16 %v4152, %v4149
      %v4519 = vpack.c.b16 %v4153, %v4150
      %v4520 = vpack.c.b16 %v4157, %v4154
      %v4521 = vpack.c.b16 %v4158, %v4155
      %v4522 = vpack.c.b16 %v4159, %v4156
      %v4523 = vpack.c.b16 %v4163, %v4160
      %v4524 = vpack.c.b16 %v4164, %v4161
      %v4525 = vpack.c.b16 %v4165, %v4162
      %v4526 = vpack.c.b16 %v4169, %v4166
      %v4527 = vpack.c.b16 %v4170, %v4167
      %v4528 = vpack.c.b16 %v4171, %v4168
      %v4529 = vpack.c.b16 %v4175, %v4172
      %v4530 = vpack.c.b16 %v4176, %v4173
      %v4531 = vpack.c.b16 %v4177, %v4174
      %v4532 = vpack.c.b16 %v4181, %v4178
      %v4533 = vpack.c.b16 %v4182, %v4179
      %v4534 = vpack.c.b16 %v4183, %v4180
      %v4535 = vpack.c.b16 %v4187, %v4184
      %v4536 = vpack.c.b16 %v4188, %v4185
      %v4537 = vpack.c.b16 %v4189, %v4186
      %v4538 = vpack.c.b16 %v4193, %v4190
      %v4539 = vpack.c.b16 %v4194, %v4191
      %v4540 = vpack.c.b16 %v4195, %v4192
      %v4541 = vpack.c.b16 %v4199, %v4196
      %v4542 = vpack.c.b16 %v4200, %v4197
      %v4543 = vpack.c.b16 %v4201, %v4198
      %v4544 = vpack.c.b16 %v4205, %v4202
      %v4545 = vpack.c.b16 %v4206, %v4203
      %v4546 = vpack.c.b16 %v4207, %v4204
      %v4547 = vpack.c.b16 %v4211, %v4208
      %v4548 = vpack.c.b16 %v4212, %v4209
      %v4549 = vpack.c.b16 %v4213, %v4210
      %v4550 = vpack.c.b16 %v4217, %v4214
      %v4551 = vpack.c.b16 %v4218, %v4215
      %v4552 = vpack.c.b16 %v4219, %v4216
      %v4553 = vpack.c.b16 %v4223, %v4220
      %v4554 = vpack.c.b16 %v4224, %v4221
      %v4555 = vpack.c.b16 %v4225, %v4222
      %v4556 = vpack.c.b16 %v4229, %v4226
      %v4557 = vpack.c.b16 %v4230, %v4227
      %v4558 = vpack.c.b16 %v4231, %v4228
      %v4559 = vpack.c.b16 %v4235, %v4232
      %v4560 = vpack.c.b16 %v4236, %v4233
      %v4561 = vpack.c.b16 %v4237, %v4234
      %v4562 = vpack.c.b16 %v4241, %v4238
      %v4563 = vpack.c.b16 %v4242, %v4239
      %v4564 = vpack.c.b16 %v4243, %v4240
      %v4565 = vpack.c.b16 %v4247, %v4244
      %v4566 = vpack.c.b16 %v4248, %v4245
      %v4567 = vpack.c.b16 %v4249, %v4246
      %v4568 = vpack.c.b16 %v4253, %v4250
      %v4569 = vpack.c.b16 %v4254, %v4251
      %v4570 = vpack.c.b16 %v4255, %v4252
      %v4571 = vpack.c.b16 %v4259, %v4256
      %v4572 = vpack.c.b16 %v4260, %v4257
      %v4573 = vpack.c.b16 %v4261, %v4258
      %v4574 = vpack.c.b16 %v4265, %v4262
      %v4575 = vpack.c.b16 %v4266, %v4263
      %v4576 = vpack.c.b16 %v4267, %v4264
      %v4577 = vpack.c.b16 %v4271, %v4268
      %v4578 = vpack.c.b16 %v4272, %v4269
      %v4579 = vpack.c.b16 %v4273, %v4270
      %v4580 = vpack.c.b16 %v4277, %v4274
      %v4581 = vpack.c.b16 %v4278, %v4275
      %v4582 = vpack.c.b16 %v4279, %v4276
      %v4583 = vpack.c.b16 %v4283, %v4280
      %v4584 = vpack.c.b16 %v4284, %v4281
      %v4585 = vpack.c.b16 %v4285, %v4282
      %v4586 = vpack.c.b16 %v4289, %v4286
      %v4587 = vpack.c.b16 %v4290, %v4287
      %v4588 = vpack.c.b16 %v4291, %v4288
      %v4589 = vpack.c.b16 %v4295, %v4292
      %v4590 = vpack.c.b16 %v4296, %v4293
      %v4591 = vpack.c.b16 %v4297, %v4294
      %v4592 = vpack.c.b16 %v4301, %v4298
      %v4593 = vpack.c.b16 %v4302, %v4299
      %v4594 = vpack.c.b16 %v4303, %v4300
      %v4595 = vpack.c.b16 %v4307, %v4304
      %v4596 = vpack.c.b16 %v4308, %v4305
      %v4597 = vpack.c.b16 %v4309, %v4306
      %v4598 = vpack.c.b16 %v4313, %v4310
      %v4599 = vpack.c.b16 %v4314, %v4311
      %v4600 = vpack.c.b16 %v4315, %v4312
      %v4601 = vpack.c.b16 %v4319, %v4316
      %v4602 = vpack.c.b16 %v4320, %v4317
      %v4603 = vpack.c.b16 %v4321, %v4318
      %v4604 = vpack.c.b16 %v4325, %v4322
      %v4605 = vpack.c.b16 %v4326, %v4323
      %v4606 = vpack.c.b16 %v4327, %v4324
      %v4607 = vpack.c.b16 %v4331, %v4328
      %v4608 = vpack.c.b16 %v4332, %v4329
      %v4609 = vpack.c.b16 %v4333, %v4330
      %v4610 = vpack.c.b16 %v4337, %v4334
      %v4611 = vpack.c.b16 %v4338, %v4335
      %v4612 = vpack.c.b16 %v4339, %v4336
      %v4613 = vpack.c.b16 %v4343, %v4340
      %v4614 = vpack.c.b16 %v4344, %v4341
      %v4615 = vpack.c.b16 %v4345, %v4342
      %v4616 = vpack.c.b16 %v4349, %v4346
      %v4617 = vpack.c.b16 %v4350, %v4347
      %v4618 = vpack.c.b16 %v4351, %v4348
      %v4619 = vpack.c.b16 %v4355, %v4352
      %v4620 = vpack.c.b16 %v4356, %v4353
      %v4621 = vpack.c.b16 %v4357, %v4354
      %v4622 = vpack.c.b16 %v4361, %v4358
      %v4623 = vpack.c.b16 %v4362, %v4359
      %v4624 = vpack.c.b16 %v4363, %v4360
      %v4625 = vpack.c.b16 %v4367, %v4364
      %v4626 = vpack.c.b16 %v4368, %v4365
      %v4627 = vpack.c.b16 %v4369, %v4366
      %v4628 = vpack.c.b16 %v4373, %v4370
      %v4629 = vpack.c.b16 %v4374, %v4371
      %v4630 = vpack.c.b16 %v4375, %v4372
      %v4631 = vpack.c.b16 %v4379, %v4376
      %v4632 = vpack.c.b16 %v4380, %v4377
      %v4633 = vpack.c.b16 %v4381, %v4378
      %v4634 = vpack.c.b16 %v4385, %v4382
      %v4635 = vpack.c.b16 %v4386, %v4383
      %v4636 = vpack.c.b16 %v4387, %v4384
      %v4637 = vpack.c.b16 %v4391, %v4388
      %v4638 = vpack.c.b16 %v4392, %v4389
      %v4639 = vpack.c.b16 %v4393, %v4390
      %v4640 = vpack.c.b16 %v4397, %v4394
      %v4641 = vpack.c.b16 %v4398, %v4395
      %v4642 = vpack.c.b16 %v4399, %v4396
      %v4643 = vpack.c.b16 %v4403, %v4400
      %v4644 = vpack.c.b16 %v4404, %v4401
      %v4645 = vpack.c.b16 %v4405, %v4402
      %v4646 = vpack.c.b16 %v4409, %v4406
      %v4647 = vpack.c.b16 %v4410, %v4407
      %v4648 = vpack.c.b16 %v4411, %v4408
      %v4649 = vpack.c.b16 %v4415, %v4412
      %v4650 = vpack.c.b16 %v4416, %v4413
      %v4651 = vpack.c.b16 %v4417, %v4414
      %v4652 = vpack.c.b16 %v4421, %v4418
      %v4653 = vpack.c.b16 %v4422, %v4419
      %v4654 = vpack.c.b16 %v4423, %v4420
      %v4655 = vpack.c.b16 %v4427, %v4424
      %v4656 = vpack.c.b16 %v4428, %v4425
      %v4657 = vpack.c.b16 %v4429, %v4426
      %v4658 = vpack.c.b16 %v4433, %v4430
      %v4659 = vpack.c.b16 %v4434, %v4431
      %v4660 = vpack.c.b16 %v4435, %v4432
      %v4661 = vpack.c.b16 %v4439, %v4436
      %v4662 = vpack.c.b16 %v4440, %v4437
      %v4663 = vpack.c.b16 %v4441, %v4438
      %v4664 = vpack.c.b16 %v4445, %v4442
      %v4665 = vpack.c.b16 %v4446, %v4443
      %v4666 = vpack.c.b16 %v4447, %v4444
      %v4667 = vpack.c.b16 %v4451, %v4448
      %v4668 = vpack.c.b16 %v4452, %v4449
      %v4669 = vpack.c.b16 %v4453, %v4450
      %v4670 = vpack.c.b16 %v4457, %v4454
      %v4671 = vpack.c.b16 %v4458, %v4455
      %v4672 = vpack.c.b16 %v4459, %v4456
      %v4673 = vpack.c.b16 %v4463, %v4460
      %v4674 = vpack.c.b16 %v4464, %v4461
      %v4675 = vpack.c.b16 %v4465, %v4462
      %v4676 = vpack.c.b16 %v4469, %v4466
      %v4677 = vpack.c.b16 %v4470, %v4467
      %v4678 = vpack.c.b16 %v4471, %v4468
      %v4679 = vpack.c.b16 %v4475, %v4472
      %v4680 = vpack.c.b16 %v4476, %v4473
      %v4681 = vpack.c.b16 %v4477, %v4474
      %v4682 = vpack.c.b16 %v4481, %v4478
      %v4683 = vpack.c.b16 %v4482, %v4479
      %v4684 = vpack.c.b16 %v4483, %v4480
      %v4685 = vpack.c.b16 %v4487, %v4484
      %v4686 = vpack.c.b16 %v4488, %v4485
      %v4687 = vpack.c.b16 %v4489, %v4486
      %v4688 = vpack.c.b16 %v4493, %v4490
      %v4689 = vpack.c.b16 %v4494, %v4491
      %v4690 = vpack.c.b16 %v4495, %v4492
      %v4691 = vpack.c.b16 %v4499, %v4496
      %v4692 = vpack.c.b16 %v4500, %v4497
      %v4693 = vpack.c.b16 %v4501, %v4498
      %v4934 = vunpack.c.l.b16 %v3814
      %v4935 = vunpack.c.l.b16 %v3815
      %v4936 = vunpack.c.l.b16 %v3816
      %v4937 = vunpack.c.l.b16 %v3817
      %v4938 = vunpack.c.l.b16 %v3818
      %v4939 = vunpack.c.l.b16 %v3819
      %v4940 = vunpack.c.l.b16 %v3820
      %v4941 = vunpack.c.l.b16 %v3821
      %v4942 = vunpack.c.l.b16 %v3822
      %v4943 = vunpack.c.l.b16 %v3823
      %v4944 = vunpack.c.l.b16 %v3824
      %v4945 = vunpack.c.l.b16 %v3825
      %v4946 = vunpack.c.l.b16 %v3826
      %v4947 = vunpack.c.l.b16 %v3827
      %v4948 = vunpack.c.l.b16 %v3828
      %v4949 = vunpack.c.l.b16 %v3829
      %v4950 = vunpack.c.l.b16 %v3830
      %v4951 = vunpack.c.l.b16 %v3831
      %v4952 = vunpack.c.l.b16 %v3832
      %v4953 = vunpack.c.l.b16 %v3833
      %v4954 = vunpack.c.l.b16 %v3834
      %v4955 = vunpack.c.l.b16 %v3835
      %v4956 = vunpack.c.l.b16 %v3836
      %v4957 = vunpack.c.l.b16 %v3837
      %v4958 = vunpack.c.l.b16 %v3838
      %v4959 = vunpack.c.l.b16 %v3839
      %v4960 = vunpack.c.l.b16 %v3840
      %v4961 = vunpack.c.l.b16 %v3841
      %v4962 = vunpack.c.l.b16 %v3842
      %v4963 = vunpack.c.l.b16 %v3843
      %v4964 = vunpack.c.l.b16 %v3844
      %v4965 = vunpack.c.l.b16 %v3845
      %v4966 = vunpack.c.l.b16 %v3846
      %v4967 = vunpack.c.l.b16 %v3847
      %v4968 = vunpack.c.l.b16 %v3848
      %v4969 = vunpack.c.l.b16 %v3849
      %v4970 = vunpack.c.l.b16 %v3850
      %v4971 = vunpack.c.l.b16 %v3851
      %v4972 = vunpack.c.l.b16 %v3852
      %v4973 = vunpack.c.l.b16 %v3853
      %v4974 = vunpack.c.l.b16 %v3854
      %v4975 = vunpack.c.l.b16 %v3855
      %v4976 = vunpack.c.l.b16 %v3856
      %v4977 = vunpack.c.l.b16 %v3857
      %v4978 = vunpack.c.l.b16 %v3858
      %v4979 = vunpack.c.l.b16 %v3859
      %v4980 = vunpack.c.l.b16 %v3860
      %v4981 = vunpack.c.l.b16 %v3861
      %v4982 = vpack.c.b16 %v4935, %v4934
      %v4983 = vpack.c.b16 %v4937, %v4936
      %v4984 = vpack.c.b16 %v4939, %v4938
      %v4985 = vpack.c.b16 %v4941, %v4940
      %v4986 = vpack.c.b16 %v4943, %v4942
      %v4987 = vpack.c.b16 %v4945, %v4944
      %v4988 = vpack.c.b16 %v4947, %v4946
      %v4989 = vpack.c.b16 %v4949, %v4948
      %v4990 = vpack.c.b16 %v4951, %v4950
      %v4991 = vpack.c.b16 %v4953, %v4952
      %v4992 = vpack.c.b16 %v4955, %v4954
      %v4993 = vpack.c.b16 %v4957, %v4956
      %v4994 = vpack.c.b16 %v4959, %v4958
      %v4995 = vpack.c.b16 %v4961, %v4960
      %v4996 = vpack.c.b16 %v4963, %v4962
      %v4997 = vpack.c.b16 %v4965, %v4964
      %v4998 = vpack.c.b16 %v4967, %v4966
      %v4999 = vpack.c.b16 %v4969, %v4968
      %v5000 = vpack.c.b16 %v4971, %v4970
      %v5001 = vpack.c.b16 %v4973, %v4972
      %v5002 = vpack.c.b16 %v4975, %v4974
      %v5003 = vpack.c.b16 %v4977, %v4976
      %v5004 = vpack.c.b16 %v4979, %v4978
      %v5005 = vpack.c.b16 %v4981, %v4980
      %5030 = vmatpush.bf16.msra.mxu0 %v4989
      %5031 = vmatpush.bf16.msra.mxu0 %v4988
      %5032 = vmatpush.bf16.msra.mxu0 %v4987
      %5033 = vmatpush.bf16.msra.mxu0 %v4986
      %5034 = vmatpush.bf16.msra.mxu0 %v4985
      %5035 = vmatpush.bf16.msra.mxu0 %v4984
      %5036 = vmatpush.bf16.msra.mxu0 %v4983
      %5037 = vmatpush.bf16.msra.mxu0 %v4982
      %5038 = vmatmul.bf16.gmra.mxu0 %v4502
      %v5039 = vpop.f32.mrf.mxu0
      %v5040 = vadd.f32 0.0, %v5039
      %v5041 = vpop.f32.mrf.mxu0
      %v5042 = vadd.f32 0.0, %v5041
      %5043 = vmatmul.bf16.gmra.mxu0 %v4505
      %v5044 = vpop.f32.mrf.mxu0
      %v5045 = vadd.f32 0.0, %v5044
      %v5046 = vpop.f32.mrf.mxu0
      %v5047 = vadd.f32 0.0, %v5046
      %5048 = vmatmul.bf16.gmra.mxu0 %v4508
      %v5049 = vpop.f32.mrf.mxu0
      %v5050 = vadd.f32 0.0, %v5049
      %v5051 = vpop.f32.mrf.mxu0
      %v5052 = vadd.f32 0.0, %v5051
      %5053 = vmatmul.bf16.gmra.mxu0 %v4511
      %v5054 = vpop.f32.mrf.mxu0
      %v5055 = vadd.f32 0.0, %v5054
      %v5056 = vpop.f32.mrf.mxu0
      %v5057 = vadd.f32 0.0, %v5056
      %5058 = vmatmul.bf16.gmra.mxu0 %v4514
      %v5059 = vpop.f32.mrf.mxu0
      %v5060 = vadd.f32 0.0, %v5059
      %v5061 = vpop.f32.mrf.mxu0
      %v5062 = vadd.f32 0.0, %v5061
      %5063 = vmatmul.bf16.gmra.mxu0 %v4517
      %v5064 = vpop.f32.mrf.mxu0
      %v5065 = vadd.f32 0.0, %v5064
      %v5066 = vpop.f32.mrf.mxu0
      %v5067 = vadd.f32 0.0, %v5066
      %5068 = vmatmul.bf16.gmra.mxu0 %v4520
      %v5069 = vpop.f32.mrf.mxu0
      %v5070 = vadd.f32 0.0, %v5069
      %v5071 = vpop.f32.mrf.mxu0
      %v5072 = vadd.f32 0.0, %v5071
      %5073 = vmatmul.bf16.gmra.mxu0 %v4523
      %v5074 = vpop.f32.mrf.mxu0
      %v5075 = vadd.f32 0.0, %v5074
      %v5076 = vpop.f32.mrf.mxu0
      %v5077 = vadd.f32 0.0, %v5076
      %5078 = vmatmul.bf16.gmra.mxu0 %v4526
      %v5079 = vpop.f32.mrf.mxu0
      %v5080 = vadd.f32 0.0, %v5079
      %v5081 = vpop.f32.mrf.mxu0
      %v5082 = vadd.f32 0.0, %v5081
      %5083 = vmatmul.bf16.gmra.mxu0 %v4529
      %v5084 = vpop.f32.mrf.mxu0
      %v5085 = vadd.f32 0.0, %v5084
      %v5086 = vpop.f32.mrf.mxu0
      %v5087 = vadd.f32 0.0, %v5086
      %5088 = vmatmul.bf16.gmra.mxu0 %v4532
      %v5089 = vpop.f32.mrf.mxu0
      %v5090 = vadd.f32 0.0, %v5089
      %v5091 = vpop.f32.mrf.mxu0
      %v5092 = vadd.f32 0.0, %v5091
      %5093 = vmatmul.bf16.gmra.mxu0 %v4535
      %v5094 = vpop.f32.mrf.mxu0
      %v5095 = vadd.f32 0.0, %v5094
      %v5096 = vpop.f32.mrf.mxu0
      %v5097 = vadd.f32 0.0, %v5096
      %5098 = vmatmul.bf16.gmra.mxu0 %v4538
      %v5099 = vpop.f32.mrf.mxu0
      %v5100 = vadd.f32 0.0, %v5099
      %v5101 = vpop.f32.mrf.mxu0
      %v5102 = vadd.f32 0.0, %v5101
      %5103 = vmatmul.bf16.gmra.mxu0 %v4541
      %v5104 = vpop.f32.mrf.mxu0
      %v5105 = vadd.f32 0.0, %v5104
      %v5106 = vpop.f32.mrf.mxu0
      %v5107 = vadd.f32 0.0, %v5106
      %5108 = vmatmul.bf16.gmra.mxu0 %v4544
      %v5109 = vpop.f32.mrf.mxu0
      %v5110 = vadd.f32 0.0, %v5109
      %v5111 = vpop.f32.mrf.mxu0
      %v5112 = vadd.f32 0.0, %v5111
      %5113 = vmatmul.bf16.gmra.mxu0 %v4547
      %v5114 = vpop.f32.mrf.mxu0
      %v5115 = vadd.f32 0.0, %v5114
      %v5116 = vpop.f32.mrf.mxu0
      %v5117 = vadd.f32 0.0, %v5116
      %5118 = vmatmul.bf16.gmra.mxu0 %v4550
      %v5119 = vpop.f32.mrf.mxu0
      %v5120 = vadd.f32 0.0, %v5119
      %v5121 = vpop.f32.mrf.mxu0
      %v5122 = vadd.f32 0.0, %v5121
      %5123 = vmatmul.bf16.gmra.mxu0 %v4553
      %v5124 = vpop.f32.mrf.mxu0
      %v5125 = vadd.f32 0.0, %v5124
      %v5126 = vpop.f32.mrf.mxu0
      %v5127 = vadd.f32 0.0, %v5126
      %5128 = vmatmul.bf16.gmra.mxu0 %v4556
      %v5129 = vpop.f32.mrf.mxu0
      %v5130 = vadd.f32 0.0, %v5129
      %v5131 = vpop.f32.mrf.mxu0
      %v5132 = vadd.f32 0.0, %v5131
      %5133 = vmatmul.bf16.gmra.mxu0 %v4559
      %v5134 = vpop.f32.mrf.mxu0
      %v5135 = vadd.f32 0.0, %v5134
      %v5136 = vpop.f32.mrf.mxu0
      %v5137 = vadd.f32 0.0, %v5136
      %5138 = vmatmul.bf16.gmra.mxu0 %v4562
      %v5139 = vpop.f32.mrf.mxu0
      %v5140 = vadd.f32 0.0, %v5139
      %v5141 = vpop.f32.mrf.mxu0
      %v5142 = vadd.f32 0.0, %v5141
      %5143 = vmatmul.bf16.gmra.mxu0 %v4565
      %v5144 = vpop.f32.mrf.mxu0
      %v5145 = vadd.f32 0.0, %v5144
      %v5146 = vpop.f32.mrf.mxu0
      %v5147 = vadd.f32 0.0, %v5146
      %5148 = vmatmul.bf16.gmra.mxu0 %v4568
      %v5149 = vpop.f32.mrf.mxu0
      %v5150 = vadd.f32 0.0, %v5149
      %v5151 = vpop.f32.mrf.mxu0
      %v5152 = vadd.f32 0.0, %v5151
      %5153 = vmatmul.bf16.gmra.mxu0 %v4571
      %v5154 = vpop.f32.mrf.mxu0
      %v5155 = vadd.f32 0.0, %v5154
      %v5156 = vpop.f32.mrf.mxu0
      %v5157 = vadd.f32 0.0, %v5156
      %5158 = vmatmul.bf16.gmra.mxu0 %v4574
      %v5159 = vpop.f32.mrf.mxu0
      %v5160 = vadd.f32 0.0, %v5159
      %v5161 = vpop.f32.mrf.mxu0
      %v5162 = vadd.f32 0.0, %v5161
      %5163 = vmatmul.bf16.gmra.mxu0 %v4577
      %v5164 = vpop.f32.mrf.mxu0
      %v5165 = vadd.f32 0.0, %v5164
      %v5166 = vpop.f32.mrf.mxu0
      %v5167 = vadd.f32 0.0, %v5166
      %5168 = vmatmul.bf16.gmra.mxu0 %v4580
      %v5169 = vpop.f32.mrf.mxu0
      %v5170 = vadd.f32 0.0, %v5169
      %v5171 = vpop.f32.mrf.mxu0
      %v5172 = vadd.f32 0.0, %v5171
      %5173 = vmatmul.bf16.gmra.mxu0 %v4583
      %v5174 = vpop.f32.mrf.mxu0
      %v5175 = vadd.f32 0.0, %v5174
      %v5176 = vpop.f32.mrf.mxu0
      %v5177 = vadd.f32 0.0, %v5176
      %5178 = vmatmul.bf16.gmra.mxu0 %v4586
      %v5179 = vpop.f32.mrf.mxu0
      %v5180 = vadd.f32 0.0, %v5179
      %v5181 = vpop.f32.mrf.mxu0
      %v5182 = vadd.f32 0.0, %v5181
      %5183 = vmatmul.bf16.gmra.mxu0 %v4589
      %v5184 = vpop.f32.mrf.mxu0
      %v5185 = vadd.f32 0.0, %v5184
      %v5186 = vpop.f32.mrf.mxu0
      %v5187 = vadd.f32 0.0, %v5186
      %5188 = vmatmul.bf16.gmra.mxu0 %v4592
      %v5189 = vpop.f32.mrf.mxu0
      %v5190 = vadd.f32 0.0, %v5189
      %v5191 = vpop.f32.mrf.mxu0
      %v5192 = vadd.f32 0.0, %v5191
      %5193 = vmatmul.bf16.gmra.mxu0 %v4595
      %v5194 = vpop.f32.mrf.mxu0
      %v5195 = vadd.f32 0.0, %v5194
      %v5196 = vpop.f32.mrf.mxu0
      %v5197 = vadd.f32 0.0, %v5196
      %5198 = vmatmul.bf16.gmra.mxu0 %v4598
      %v5199 = vpop.f32.mrf.mxu0
      %v5200 = vadd.f32 0.0, %v5199
      %v5201 = vpop.f32.mrf.mxu0
      %v5202 = vadd.f32 0.0, %v5201
      %5203 = vmatmul.bf16.gmra.mxu0 %v4601
      %v5204 = vpop.f32.mrf.mxu0
      %v5205 = vadd.f32 0.0, %v5204
      %v5206 = vpop.f32.mrf.mxu0
      %v5207 = vadd.f32 0.0, %v5206
      %5208 = vmatmul.bf16.gmra.mxu0 %v4604
      %v5209 = vpop.f32.mrf.mxu0
      %v5210 = vadd.f32 0.0, %v5209
      %v5211 = vpop.f32.mrf.mxu0
      %v5212 = vadd.f32 0.0, %v5211
      %5213 = vmatmul.bf16.gmra.mxu0 %v4607
      %v5214 = vpop.f32.mrf.mxu0
      %v5215 = vadd.f32 0.0, %v5214
      %v5216 = vpop.f32.mrf.mxu0
      %v5217 = vadd.f32 0.0, %v5216
      %5218 = vmatmul.bf16.gmra.mxu0 %v4610
      %v5219 = vpop.f32.mrf.mxu0
      %v5220 = vadd.f32 0.0, %v5219
      %v5221 = vpop.f32.mrf.mxu0
      %v5222 = vadd.f32 0.0, %v5221
      %5223 = vmatmul.bf16.gmra.mxu0 %v4613
      %v5224 = vpop.f32.mrf.mxu0
      %v5225 = vadd.f32 0.0, %v5224
      %v5226 = vpop.f32.mrf.mxu0
      %v5227 = vadd.f32 0.0, %v5226
      %5228 = vmatmul.bf16.gmra.mxu0 %v4616
      %v5229 = vpop.f32.mrf.mxu0
      %v5230 = vadd.f32 0.0, %v5229
      %v5231 = vpop.f32.mrf.mxu0
      %v5232 = vadd.f32 0.0, %v5231
      %5233 = vmatmul.bf16.gmra.mxu0 %v4619
      %v5234 = vpop.f32.mrf.mxu0
      %v5235 = vadd.f32 0.0, %v5234
      %v5236 = vpop.f32.mrf.mxu0
      %v5237 = vadd.f32 0.0, %v5236
      %5238 = vmatmul.bf16.gmra.mxu0 %v4622
      %v5239 = vpop.f32.mrf.mxu0
      %v5240 = vadd.f32 0.0, %v5239
      %v5241 = vpop.f32.mrf.mxu0
      %v5242 = vadd.f32 0.0, %v5241
      %5243 = vmatmul.bf16.gmra.mxu0 %v4625
      %v5244 = vpop.f32.mrf.mxu0
      %v5245 = vadd.f32 0.0, %v5244
      %v5246 = vpop.f32.mrf.mxu0
      %v5247 = vadd.f32 0.0, %v5246
      %5248 = vmatmul.bf16.gmra.mxu0 %v4628
      %v5249 = vpop.f32.mrf.mxu0
      %v5250 = vadd.f32 0.0, %v5249
      %v5251 = vpop.f32.mrf.mxu0
      %v5252 = vadd.f32 0.0, %v5251
      %5253 = vmatmul.bf16.gmra.mxu0 %v4631
      %v5254 = vpop.f32.mrf.mxu0
      %v5255 = vadd.f32 0.0, %v5254
      %v5256 = vpop.f32.mrf.mxu0
      %v5257 = vadd.f32 0.0, %v5256
      %5258 = vmatmul.bf16.gmra.mxu0 %v4634
      %v5259 = vpop.f32.mrf.mxu0
      %v5260 = vadd.f32 0.0, %v5259
      %v5261 = vpop.f32.mrf.mxu0
      %v5262 = vadd.f32 0.0, %v5261
      %5263 = vmatmul.bf16.gmra.mxu0 %v4637
      %v5264 = vpop.f32.mrf.mxu0
      %v5265 = vadd.f32 0.0, %v5264
      %v5266 = vpop.f32.mrf.mxu0
      %v5267 = vadd.f32 0.0, %v5266
      %5268 = vmatmul.bf16.gmra.mxu0 %v4640
      %v5269 = vpop.f32.mrf.mxu0
      %v5270 = vadd.f32 0.0, %v5269
      %v5271 = vpop.f32.mrf.mxu0
      %v5272 = vadd.f32 0.0, %v5271
      %5273 = vmatmul.bf16.gmra.mxu0 %v4643
      %v5274 = vpop.f32.mrf.mxu0
      %v5275 = vadd.f32 0.0, %v5274
      %v5276 = vpop.f32.mrf.mxu0
      %v5277 = vadd.f32 0.0, %v5276
      %5278 = vmatmul.bf16.gmra.mxu0 %v4646
      %v5279 = vpop.f32.mrf.mxu0
      %v5280 = vadd.f32 0.0, %v5279
      %v5281 = vpop.f32.mrf.mxu0
      %v5282 = vadd.f32 0.0, %v5281
      %5283 = vmatmul.bf16.gmra.mxu0 %v4649
      %v5284 = vpop.f32.mrf.mxu0
      %v5285 = vadd.f32 0.0, %v5284
      %v5286 = vpop.f32.mrf.mxu0
      %v5287 = vadd.f32 0.0, %v5286
      %5288 = vmatmul.bf16.gmra.mxu0 %v4652
      %v5289 = vpop.f32.mrf.mxu0
      %v5290 = vadd.f32 0.0, %v5289
      %v5291 = vpop.f32.mrf.mxu0
      %v5292 = vadd.f32 0.0, %v5291
      %5293 = vmatmul.bf16.gmra.mxu0 %v4655
      %v5294 = vpop.f32.mrf.mxu0
      %v5295 = vadd.f32 0.0, %v5294
      %v5296 = vpop.f32.mrf.mxu0
      %v5297 = vadd.f32 0.0, %v5296
      %5298 = vmatmul.bf16.gmra.mxu0 %v4658
      %v5299 = vpop.f32.mrf.mxu0
      %v5300 = vadd.f32 0.0, %v5299
      %v5301 = vpop.f32.mrf.mxu0
      %v5302 = vadd.f32 0.0, %v5301
      %5303 = vmatmul.bf16.gmra.mxu0 %v4661
      %v5304 = vpop.f32.mrf.mxu0
      %v5305 = vadd.f32 0.0, %v5304
      %v5306 = vpop.f32.mrf.mxu0
      %v5307 = vadd.f32 0.0, %v5306
      %5308 = vmatmul.bf16.gmra.mxu0 %v4664
      %v5309 = vpop.f32.mrf.mxu0
      %v5310 = vadd.f32 0.0, %v5309
      %v5311 = vpop.f32.mrf.mxu0
      %v5312 = vadd.f32 0.0, %v5311
      %5313 = vmatmul.bf16.gmra.mxu0 %v4667
      %v5314 = vpop.f32.mrf.mxu0
      %v5315 = vadd.f32 0.0, %v5314
      %v5316 = vpop.f32.mrf.mxu0
      %v5317 = vadd.f32 0.0, %v5316
      %5318 = vmatmul.bf16.gmra.mxu0 %v4670
      %v5319 = vpop.f32.mrf.mxu0
      %v5320 = vadd.f32 0.0, %v5319
      %v5321 = vpop.f32.mrf.mxu0
      %v5322 = vadd.f32 0.0, %v5321
      %5323 = vmatmul.bf16.gmra.mxu0 %v4673
      %v5324 = vpop.f32.mrf.mxu0
      %v5325 = vadd.f32 0.0, %v5324
      %v5326 = vpop.f32.mrf.mxu0
      %v5327 = vadd.f32 0.0, %v5326
      %5328 = vmatmul.bf16.gmra.mxu0 %v4676
      %v5329 = vpop.f32.mrf.mxu0
      %v5330 = vadd.f32 0.0, %v5329
      %v5331 = vpop.f32.mrf.mxu0
      %v5332 = vadd.f32 0.0, %v5331
      %5333 = vmatmul.bf16.gmra.mxu0 %v4679
      %v5334 = vpop.f32.mrf.mxu0
      %v5335 = vadd.f32 0.0, %v5334
      %v5336 = vpop.f32.mrf.mxu0
      %v5337 = vadd.f32 0.0, %v5336
      %5338 = vmatmul.bf16.gmra.mxu0 %v4682
      %v5339 = vpop.f32.mrf.mxu0
      %v5340 = vadd.f32 0.0, %v5339
      %v5341 = vpop.f32.mrf.mxu0
      %v5342 = vadd.f32 0.0, %v5341
      %5343 = vmatmul.bf16.gmra.mxu0 %v4685
      %v5344 = vpop.f32.mrf.mxu0
      %v5345 = vadd.f32 0.0, %v5344
      %v5346 = vpop.f32.mrf.mxu0
      %v5347 = vadd.f32 0.0, %v5346
      %5348 = vmatmul.bf16.gmra.mxu0 %v4688
      %v5349 = vpop.f32.mrf.mxu0
      %v5350 = vadd.f32 0.0, %v5349
      %v5351 = vpop.f32.mrf.mxu0
      %v5352 = vadd.f32 0.0, %v5351
      %5353 = vmatmul.bf16.gmra.mxu0 %v4691
      %v5354 = vpop.f32.mrf.mxu0
      %v5355 = vadd.f32 0.0, %v5354
      %v5356 = vpop.f32.mrf.mxu0
      %v5357 = vadd.f32 0.0, %v5356
      %5358 = vdwg.mxu0
      %5359 = vmatpush.bf16.msra.mxu0 %v4997
      %5360 = vmatpush.bf16.msra.mxu0 %v4996
      %5361 = vmatpush.bf16.msra.mxu0 %v4995
      %5362 = vmatpush.bf16.msra.mxu0 %v4994
      %5363 = vmatpush.bf16.msra.mxu0 %v4993
      %5364 = vmatpush.bf16.msra.mxu0 %v4992
      %5365 = vmatpush.bf16.msra.mxu0 %v4991
      %5366 = vmatpush.bf16.msra.mxu0 %v4990
      %5367 = vmatmul.bf16.gmra.mxu0 %v4503
      %v5368 = vpop.f32.mrf.mxu0
      %v5369 = vadd.f32 %v5040, %v5368
      %v5370 = vpop.f32.mrf.mxu0
      %v5371 = vadd.f32 %v5042, %v5370
      %5372 = vmatmul.bf16.gmra.mxu0 %v4506
      %v5373 = vpop.f32.mrf.mxu0
      %v5374 = vadd.f32 %v5045, %v5373
      %v5375 = vpop.f32.mrf.mxu0
      %v5376 = vadd.f32 %v5047, %v5375
      %5377 = vmatmul.bf16.gmra.mxu0 %v4509
      %v5378 = vpop.f32.mrf.mxu0
      %v5379 = vadd.f32 %v5050, %v5378
      %v5380 = vpop.f32.mrf.mxu0
      %v5381 = vadd.f32 %v5052, %v5380
      %5382 = vmatmul.bf16.gmra.mxu0 %v4512
      %v5383 = vpop.f32.mrf.mxu0
      %v5384 = vadd.f32 %v5055, %v5383
      %v5385 = vpop.f32.mrf.mxu0
      %v5386 = vadd.f32 %v5057, %v5385
      %5387 = vmatmul.bf16.gmra.mxu0 %v4515
      %v5388 = vpop.f32.mrf.mxu0
      %v5389 = vadd.f32 %v5060, %v5388
      %v5390 = vpop.f32.mrf.mxu0
      %v5391 = vadd.f32 %v5062, %v5390
      %5392 = vmatmul.bf16.gmra.mxu0 %v4518
      %v5393 = vpop.f32.mrf.mxu0
      %v5394 = vadd.f32 %v5065, %v5393
      %v5395 = vpop.f32.mrf.mxu0
      %v5396 = vadd.f32 %v5067, %v5395
      %5397 = vmatmul.bf16.gmra.mxu0 %v4521
      %v5398 = vpop.f32.mrf.mxu0
      %v5399 = vadd.f32 %v5070, %v5398
      %v5400 = vpop.f32.mrf.mxu0
      %v5401 = vadd.f32 %v5072, %v5400
      %5402 = vmatmul.bf16.gmra.mxu0 %v4524
      %v5403 = vpop.f32.mrf.mxu0
      %v5404 = vadd.f32 %v5075, %v5403
      %v5405 = vpop.f32.mrf.mxu0
      %v5406 = vadd.f32 %v5077, %v5405
      %5407 = vmatmul.bf16.gmra.mxu0 %v4527
      %v5408 = vpop.f32.mrf.mxu0
      %v5409 = vadd.f32 %v5080, %v5408
      %v5410 = vpop.f32.mrf.mxu0
      %v5411 = vadd.f32 %v5082, %v5410
      %5412 = vmatmul.bf16.gmra.mxu0 %v4530
      %v5413 = vpop.f32.mrf.mxu0
      %v5414 = vadd.f32 %v5085, %v5413
      %v5415 = vpop.f32.mrf.mxu0
      %v5416 = vadd.f32 %v5087, %v5415
      %5417 = vmatmul.bf16.gmra.mxu0 %v4533
      %v5418 = vpop.f32.mrf.mxu0
      %v5419 = vadd.f32 %v5090, %v5418
      %v5420 = vpop.f32.mrf.mxu0
      %v5421 = vadd.f32 %v5092, %v5420
      %5422 = vmatmul.bf16.gmra.mxu0 %v4536
      %v5423 = vpop.f32.mrf.mxu0
      %v5424 = vadd.f32 %v5095, %v5423
      %v5425 = vpop.f32.mrf.mxu0
      %v5426 = vadd.f32 %v5097, %v5425
      %5427 = vmatmul.bf16.gmra.mxu0 %v4539
      %v5428 = vpop.f32.mrf.mxu0
      %v5429 = vadd.f32 %v5100, %v5428
      %v5430 = vpop.f32.mrf.mxu0
      %v5431 = vadd.f32 %v5102, %v5430
      %5432 = vmatmul.bf16.gmra.mxu0 %v4542
      %v5433 = vpop.f32.mrf.mxu0
      %v5434 = vadd.f32 %v5105, %v5433
      %v5435 = vpop.f32.mrf.mxu0
      %v5436 = vadd.f32 %v5107, %v5435
      %5437 = vmatmul.bf16.gmra.mxu0 %v4545
      %v5438 = vpop.f32.mrf.mxu0
      %v5439 = vadd.f32 %v5110, %v5438
      %v5440 = vpop.f32.mrf.mxu0
      %v5441 = vadd.f32 %v5112, %v5440
      %5442 = vmatmul.bf16.gmra.mxu0 %v4548
      %v5443 = vpop.f32.mrf.mxu0
      %v5444 = vadd.f32 %v5115, %v5443
      %v5445 = vpop.f32.mrf.mxu0
      %v5446 = vadd.f32 %v5117, %v5445
      %5447 = vmatmul.bf16.gmra.mxu0 %v4551
      %v5448 = vpop.f32.mrf.mxu0
      %v5449 = vadd.f32 %v5120, %v5448
      %v5450 = vpop.f32.mrf.mxu0
      %v5451 = vadd.f32 %v5122, %v5450
      %5452 = vmatmul.bf16.gmra.mxu0 %v4554
      %v5453 = vpop.f32.mrf.mxu0
      %v5454 = vadd.f32 %v5125, %v5453
      %v5455 = vpop.f32.mrf.mxu0
      %v5456 = vadd.f32 %v5127, %v5455
      %5457 = vmatmul.bf16.gmra.mxu0 %v4557
      %v5458 = vpop.f32.mrf.mxu0
      %v5459 = vadd.f32 %v5130, %v5458
      %v5460 = vpop.f32.mrf.mxu0
      %v5461 = vadd.f32 %v5132, %v5460
      %5462 = vmatmul.bf16.gmra.mxu0 %v4560
      %v5463 = vpop.f32.mrf.mxu0
      %v5464 = vadd.f32 %v5135, %v5463
      %v5465 = vpop.f32.mrf.mxu0
      %v5466 = vadd.f32 %v5137, %v5465
      %5467 = vmatmul.bf16.gmra.mxu0 %v4563
      %v5468 = vpop.f32.mrf.mxu0
      %v5469 = vadd.f32 %v5140, %v5468
      %v5470 = vpop.f32.mrf.mxu0
      %v5471 = vadd.f32 %v5142, %v5470
      %5472 = vmatmul.bf16.gmra.mxu0 %v4566
      %v5473 = vpop.f32.mrf.mxu0
      %v5474 = vadd.f32 %v5145, %v5473
      %v5475 = vpop.f32.mrf.mxu0
      %v5476 = vadd.f32 %v5147, %v5475
      %5477 = vmatmul.bf16.gmra.mxu0 %v4569
      %v5478 = vpop.f32.mrf.mxu0
      %v5479 = vadd.f32 %v5150, %v5478
      %v5480 = vpop.f32.mrf.mxu0
      %v5481 = vadd.f32 %v5152, %v5480
      %5482 = vmatmul.bf16.gmra.mxu0 %v4572
      %v5483 = vpop.f32.mrf.mxu0
      %v5484 = vadd.f32 %v5155, %v5483
      %v5485 = vpop.f32.mrf.mxu0
      %v5486 = vadd.f32 %v5157, %v5485
      %5487 = vmatmul.bf16.gmra.mxu0 %v4575
      %v5488 = vpop.f32.mrf.mxu0
      %v5489 = vadd.f32 %v5160, %v5488
      %v5490 = vpop.f32.mrf.mxu0
      %v5491 = vadd.f32 %v5162, %v5490
      %5492 = vmatmul.bf16.gmra.mxu0 %v4578
      %v5493 = vpop.f32.mrf.mxu0
      %v5494 = vadd.f32 %v5165, %v5493
      %v5495 = vpop.f32.mrf.mxu0
      %v5496 = vadd.f32 %v5167, %v5495
      %5497 = vmatmul.bf16.gmra.mxu0 %v4581
      %v5498 = vpop.f32.mrf.mxu0
      %v5499 = vadd.f32 %v5170, %v5498
      %v5500 = vpop.f32.mrf.mxu0
      %v5501 = vadd.f32 %v5172, %v5500
      %5502 = vmatmul.bf16.gmra.mxu0 %v4584
      %v5503 = vpop.f32.mrf.mxu0
      %v5504 = vadd.f32 %v5175, %v5503
      %v5505 = vpop.f32.mrf.mxu0
      %v5506 = vadd.f32 %v5177, %v5505
      %5507 = vmatmul.bf16.gmra.mxu0 %v4587
      %v5508 = vpop.f32.mrf.mxu0
      %v5509 = vadd.f32 %v5180, %v5508
      %v5510 = vpop.f32.mrf.mxu0
      %v5511 = vadd.f32 %v5182, %v5510
      %5512 = vmatmul.bf16.gmra.mxu0 %v4590
      %v5513 = vpop.f32.mrf.mxu0
      %v5514 = vadd.f32 %v5185, %v5513
      %v5515 = vpop.f32.mrf.mxu0
      %v5516 = vadd.f32 %v5187, %v5515
      %5517 = vmatmul.bf16.gmra.mxu0 %v4593
      %v5518 = vpop.f32.mrf.mxu0
      %v5519 = vadd.f32 %v5190, %v5518
      %v5520 = vpop.f32.mrf.mxu0
      %v5521 = vadd.f32 %v5192, %v5520
      %5522 = vmatmul.bf16.gmra.mxu0 %v4596
      %v5523 = vpop.f32.mrf.mxu0
      %v5524 = vadd.f32 %v5195, %v5523
      %v5525 = vpop.f32.mrf.mxu0
      %v5526 = vadd.f32 %v5197, %v5525
      %5527 = vmatmul.bf16.gmra.mxu0 %v4599
      %v5528 = vpop.f32.mrf.mxu0
      %v5529 = vadd.f32 %v5200, %v5528
      %v5530 = vpop.f32.mrf.mxu0
      %v5531 = vadd.f32 %v5202, %v5530
      %5532 = vmatmul.bf16.gmra.mxu0 %v4602
      %v5533 = vpop.f32.mrf.mxu0
      %v5534 = vadd.f32 %v5205, %v5533
      %v5535 = vpop.f32.mrf.mxu0
      %v5536 = vadd.f32 %v5207, %v5535
      %5537 = vmatmul.bf16.gmra.mxu0 %v4605
      %v5538 = vpop.f32.mrf.mxu0
      %v5539 = vadd.f32 %v5210, %v5538
      %v5540 = vpop.f32.mrf.mxu0
      %v5541 = vadd.f32 %v5212, %v5540
      %5542 = vmatmul.bf16.gmra.mxu0 %v4608
      %v5543 = vpop.f32.mrf.mxu0
      %v5544 = vadd.f32 %v5215, %v5543
      %v5545 = vpop.f32.mrf.mxu0
      %v5546 = vadd.f32 %v5217, %v5545
      %5547 = vmatmul.bf16.gmra.mxu0 %v4611
      %v5548 = vpop.f32.mrf.mxu0
      %v5549 = vadd.f32 %v5220, %v5548
      %v5550 = vpop.f32.mrf.mxu0
      %v5551 = vadd.f32 %v5222, %v5550
      %5552 = vmatmul.bf16.gmra.mxu0 %v4614
      %v5553 = vpop.f32.mrf.mxu0
      %v5554 = vadd.f32 %v5225, %v5553
      %v5555 = vpop.f32.mrf.mxu0
      %v5556 = vadd.f32 %v5227, %v5555
      %5557 = vmatmul.bf16.gmra.mxu0 %v4617
      %v5558 = vpop.f32.mrf.mxu0
      %v5559 = vadd.f32 %v5230, %v5558
      %v5560 = vpop.f32.mrf.mxu0
      %v5561 = vadd.f32 %v5232, %v5560
      %5562 = vmatmul.bf16.gmra.mxu0 %v4620
      %v5563 = vpop.f32.mrf.mxu0
      %v5564 = vadd.f32 %v5235, %v5563
      %v5565 = vpop.f32.mrf.mxu0
      %v5566 = vadd.f32 %v5237, %v5565
      %5567 = vmatmul.bf16.gmra.mxu0 %v4623
      %v5568 = vpop.f32.mrf.mxu0
      %v5569 = vadd.f32 %v5240, %v5568
      %v5570 = vpop.f32.mrf.mxu0
      %v5571 = vadd.f32 %v5242, %v5570
      %5572 = vmatmul.bf16.gmra.mxu0 %v4626
      %v5573 = vpop.f32.mrf.mxu0
      %v5574 = vadd.f32 %v5245, %v5573
      %v5575 = vpop.f32.mrf.mxu0
      %v5576 = vadd.f32 %v5247, %v5575
      %5577 = vmatmul.bf16.gmra.mxu0 %v4629
      %v5578 = vpop.f32.mrf.mxu0
      %v5579 = vadd.f32 %v5250, %v5578
      %v5580 = vpop.f32.mrf.mxu0
      %v5581 = vadd.f32 %v5252, %v5580
      %5582 = vmatmul.bf16.gmra.mxu0 %v4632
      %v5583 = vpop.f32.mrf.mxu0
      %v5584 = vadd.f32 %v5255, %v5583
      %v5585 = vpop.f32.mrf.mxu0
      %v5586 = vadd.f32 %v5257, %v5585
      %5587 = vmatmul.bf16.gmra.mxu0 %v4635
      %v5588 = vpop.f32.mrf.mxu0
      %v5589 = vadd.f32 %v5260, %v5588
      %v5590 = vpop.f32.mrf.mxu0
      %v5591 = vadd.f32 %v5262, %v5590
      %5592 = vmatmul.bf16.gmra.mxu0 %v4638
      %v5593 = vpop.f32.mrf.mxu0
      %v5594 = vadd.f32 %v5265, %v5593
      %v5595 = vpop.f32.mrf.mxu0
      %v5596 = vadd.f32 %v5267, %v5595
      %5597 = vmatmul.bf16.gmra.mxu0 %v4641
      %v5598 = vpop.f32.mrf.mxu0
      %v5599 = vadd.f32 %v5270, %v5598
      %v5600 = vpop.f32.mrf.mxu0
      %v5601 = vadd.f32 %v5272, %v5600
      %5602 = vmatmul.bf16.gmra.mxu0 %v4644
      %v5603 = vpop.f32.mrf.mxu0
      %v5604 = vadd.f32 %v5275, %v5603
      %v5605 = vpop.f32.mrf.mxu0
      %v5606 = vadd.f32 %v5277, %v5605
      %5607 = vmatmul.bf16.gmra.mxu0 %v4647
      %v5608 = vpop.f32.mrf.mxu0
      %v5609 = vadd.f32 %v5280, %v5608
      %v5610 = vpop.f32.mrf.mxu0
      %v5611 = vadd.f32 %v5282, %v5610
      %5612 = vmatmul.bf16.gmra.mxu0 %v4650
      %v5613 = vpop.f32.mrf.mxu0
      %v5614 = vadd.f32 %v5285, %v5613
      %v5615 = vpop.f32.mrf.mxu0
      %v5616 = vadd.f32 %v5287, %v5615
      %5617 = vmatmul.bf16.gmra.mxu0 %v4653
      %v5618 = vpop.f32.mrf.mxu0
      %v5619 = vadd.f32 %v5290, %v5618
      %v5620 = vpop.f32.mrf.mxu0
      %v5621 = vadd.f32 %v5292, %v5620
      %5622 = vmatmul.bf16.gmra.mxu0 %v4656
      %v5623 = vpop.f32.mrf.mxu0
      %v5624 = vadd.f32 %v5295, %v5623
      %v5625 = vpop.f32.mrf.mxu0
      %v5626 = vadd.f32 %v5297, %v5625
      %5627 = vmatmul.bf16.gmra.mxu0 %v4659
      %v5628 = vpop.f32.mrf.mxu0
      %v5629 = vadd.f32 %v5300, %v5628
      %v5630 = vpop.f32.mrf.mxu0
      %v5631 = vadd.f32 %v5302, %v5630
      %5632 = vmatmul.bf16.gmra.mxu0 %v4662
      %v5633 = vpop.f32.mrf.mxu0
      %v5634 = vadd.f32 %v5305, %v5633
      %v5635 = vpop.f32.mrf.mxu0
      %v5636 = vadd.f32 %v5307, %v5635
      %5637 = vmatmul.bf16.gmra.mxu0 %v4665
      %v5638 = vpop.f32.mrf.mxu0
      %v5639 = vadd.f32 %v5310, %v5638
      %v5640 = vpop.f32.mrf.mxu0
      %v5641 = vadd.f32 %v5312, %v5640
      %5642 = vmatmul.bf16.gmra.mxu0 %v4668
      %v5643 = vpop.f32.mrf.mxu0
      %v5644 = vadd.f32 %v5315, %v5643
      %v5645 = vpop.f32.mrf.mxu0
      %v5646 = vadd.f32 %v5317, %v5645
      %5647 = vmatmul.bf16.gmra.mxu0 %v4671
      %v5648 = vpop.f32.mrf.mxu0
      %v5649 = vadd.f32 %v5320, %v5648
      %v5650 = vpop.f32.mrf.mxu0
      %v5651 = vadd.f32 %v5322, %v5650
      %5652 = vmatmul.bf16.gmra.mxu0 %v4674
      %v5653 = vpop.f32.mrf.mxu0
      %v5654 = vadd.f32 %v5325, %v5653
      %v5655 = vpop.f32.mrf.mxu0
      %v5656 = vadd.f32 %v5327, %v5655
      %5657 = vmatmul.bf16.gmra.mxu0 %v4677
      %v5658 = vpop.f32.mrf.mxu0
      %v5659 = vadd.f32 %v5330, %v5658
      %v5660 = vpop.f32.mrf.mxu0
      %v5661 = vadd.f32 %v5332, %v5660
      %5662 = vmatmul.bf16.gmra.mxu0 %v4680
      %v5663 = vpop.f32.mrf.mxu0
      %v5664 = vadd.f32 %v5335, %v5663
      %v5665 = vpop.f32.mrf.mxu0
      %v5666 = vadd.f32 %v5337, %v5665
      %5667 = vmatmul.bf16.gmra.mxu0 %v4683
      %v5668 = vpop.f32.mrf.mxu0
      %v5669 = vadd.f32 %v5340, %v5668
      %v5670 = vpop.f32.mrf.mxu0
      %v5671 = vadd.f32 %v5342, %v5670
      %5672 = vmatmul.bf16.gmra.mxu0 %v4686
      %v5673 = vpop.f32.mrf.mxu0
      %v5674 = vadd.f32 %v5345, %v5673
      %v5675 = vpop.f32.mrf.mxu0
      %v5676 = vadd.f32 %v5347, %v5675
      %5677 = vmatmul.bf16.gmra.mxu0 %v4689
      %v5678 = vpop.f32.mrf.mxu0
      %v5679 = vadd.f32 %v5350, %v5678
      %v5680 = vpop.f32.mrf.mxu0
      %v5681 = vadd.f32 %v5352, %v5680
      %5682 = vmatmul.bf16.gmra.mxu0 %v4692
      %v5683 = vpop.f32.mrf.mxu0
      %v5684 = vadd.f32 %v5355, %v5683
      %v5685 = vpop.f32.mrf.mxu0
      %v5686 = vadd.f32 %v5357, %v5685
      %5687 = vdwg.mxu0
      %5688 = vmatpush.bf16.msra.mxu0 %v5005
      %5689 = vmatpush.bf16.msra.mxu0 %v5004
      %5690 = vmatpush.bf16.msra.mxu0 %v5003
      %5691 = vmatpush.bf16.msra.mxu0 %v5002
      %5692 = vmatpush.bf16.msra.mxu0 %v5001
      %5693 = vmatpush.bf16.msra.mxu0 %v5000
      %5694 = vmatpush.bf16.msra.mxu0 %v4999
      %5695 = vmatpush.bf16.msra.mxu0 %v4998
      %5696 = vmatmul.bf16.gmra.mxu0 %v4504
      %v5697 = vpop.f32.mrf.mxu0
      %v5698 = vadd.f32 %v5369, %v5697
      %v5699 = vpop.f32.mrf.mxu0
      %v5700 = vadd.f32 %v5371, %v5699
      %5701 = vmatmul.bf16.gmra.mxu0 %v4507
      %v5702 = vpop.f32.mrf.mxu0
      %v5703 = vadd.f32 %v5374, %v5702
      %v5704 = vpop.f32.mrf.mxu0
      %v5705 = vadd.f32 %v5376, %v5704
      %5706 = vmatmul.bf16.gmra.mxu0 %v4510
      %v5707 = vpop.f32.mrf.mxu0
      %v5708 = vadd.f32 %v5379, %v5707
      %v5709 = vpop.f32.mrf.mxu0
      %v5710 = vadd.f32 %v5381, %v5709
      %5711 = vmatmul.bf16.gmra.mxu0 %v4513
      %v5712 = vpop.f32.mrf.mxu0
      %v5713 = vadd.f32 %v5384, %v5712
      %v5714 = vpop.f32.mrf.mxu0
      %v5715 = vadd.f32 %v5386, %v5714
      %5716 = vmatmul.bf16.gmra.mxu0 %v4516
      %v5717 = vpop.f32.mrf.mxu0
      %v5718 = vadd.f32 %v5389, %v5717
      %v5719 = vpop.f32.mrf.mxu0
      %v5720 = vadd.f32 %v5391, %v5719
      %5721 = vmatmul.bf16.gmra.mxu0 %v4519
      %v5722 = vpop.f32.mrf.mxu0
      %v5723 = vadd.f32 %v5394, %v5722
      %v5724 = vpop.f32.mrf.mxu0
      %v5725 = vadd.f32 %v5396, %v5724
      %5726 = vmatmul.bf16.gmra.mxu0 %v4522
      %v5727 = vpop.f32.mrf.mxu0
      %v5728 = vadd.f32 %v5399, %v5727
      %v5729 = vpop.f32.mrf.mxu0
      %v5730 = vadd.f32 %v5401, %v5729
      %5731 = vmatmul.bf16.gmra.mxu0 %v4525
      %v5732 = vpop.f32.mrf.mxu0
      %v5733 = vadd.f32 %v5404, %v5732
      %v5734 = vpop.f32.mrf.mxu0
      %v5735 = vadd.f32 %v5406, %v5734
      %5736 = vmatmul.bf16.gmra.mxu0 %v4528
      %v5737 = vpop.f32.mrf.mxu0
      %v5738 = vadd.f32 %v5409, %v5737
      %v5739 = vpop.f32.mrf.mxu0
      %v5740 = vadd.f32 %v5411, %v5739
      %5741 = vmatmul.bf16.gmra.mxu0 %v4531
      %v5742 = vpop.f32.mrf.mxu0
      %v5743 = vadd.f32 %v5414, %v5742
      %v5744 = vpop.f32.mrf.mxu0
      %v5745 = vadd.f32 %v5416, %v5744
      %5746 = vmatmul.bf16.gmra.mxu0 %v4534
      %v5747 = vpop.f32.mrf.mxu0
      %v5748 = vadd.f32 %v5419, %v5747
      %v5749 = vpop.f32.mrf.mxu0
      %v5750 = vadd.f32 %v5421, %v5749
      %5751 = vmatmul.bf16.gmra.mxu0 %v4537
      %v5752 = vpop.f32.mrf.mxu0
      %v5753 = vadd.f32 %v5424, %v5752
      %v5754 = vpop.f32.mrf.mxu0
      %v5755 = vadd.f32 %v5426, %v5754
      %5756 = vmatmul.bf16.gmra.mxu0 %v4540
      %v5757 = vpop.f32.mrf.mxu0
      %v5758 = vadd.f32 %v5429, %v5757
      %v5759 = vpop.f32.mrf.mxu0
      %v5760 = vadd.f32 %v5431, %v5759
      %5761 = vmatmul.bf16.gmra.mxu0 %v4543
      %v5762 = vpop.f32.mrf.mxu0
      %v5763 = vadd.f32 %v5434, %v5762
      %v5764 = vpop.f32.mrf.mxu0
      %v5765 = vadd.f32 %v5436, %v5764
      %5766 = vmatmul.bf16.gmra.mxu0 %v4546
      %v5767 = vpop.f32.mrf.mxu0
      %v5768 = vadd.f32 %v5439, %v5767
      %v5769 = vpop.f32.mrf.mxu0
      %v5770 = vadd.f32 %v5441, %v5769
      %5771 = vmatmul.bf16.gmra.mxu0 %v4549
      %v5772 = vpop.f32.mrf.mxu0
      %v5773 = vadd.f32 %v5444, %v5772
      %v5774 = vpop.f32.mrf.mxu0
      %v5775 = vadd.f32 %v5446, %v5774
      %5776 = vmatmul.bf16.gmra.mxu0 %v4552
      %v5777 = vpop.f32.mrf.mxu0
      %v5778 = vadd.f32 %v5449, %v5777
      %v5779 = vpop.f32.mrf.mxu0
      %v5780 = vadd.f32 %v5451, %v5779
      %5781 = vmatmul.bf16.gmra.mxu0 %v4555
      %v5782 = vpop.f32.mrf.mxu0
      %v5783 = vadd.f32 %v5454, %v5782
      %v5784 = vpop.f32.mrf.mxu0
      %v5785 = vadd.f32 %v5456, %v5784
      %5786 = vmatmul.bf16.gmra.mxu0 %v4558
      %v5787 = vpop.f32.mrf.mxu0
      %v5788 = vadd.f32 %v5459, %v5787
      %v5789 = vpop.f32.mrf.mxu0
      %v5790 = vadd.f32 %v5461, %v5789
      %5791 = vmatmul.bf16.gmra.mxu0 %v4561
      %v5792 = vpop.f32.mrf.mxu0
      %v5793 = vadd.f32 %v5464, %v5792
      %v5794 = vpop.f32.mrf.mxu0
      %v5795 = vadd.f32 %v5466, %v5794
      %5796 = vmatmul.bf16.gmra.mxu0 %v4564
      %v5797 = vpop.f32.mrf.mxu0
      %v5798 = vadd.f32 %v5469, %v5797
      %v5799 = vpop.f32.mrf.mxu0
      %v5800 = vadd.f32 %v5471, %v5799
      %5801 = vmatmul.bf16.gmra.mxu0 %v4567
      %v5802 = vpop.f32.mrf.mxu0
      %v5803 = vadd.f32 %v5474, %v5802
      %v5804 = vpop.f32.mrf.mxu0
      %v5805 = vadd.f32 %v5476, %v5804
      %5806 = vmatmul.bf16.gmra.mxu0 %v4570
      %v5807 = vpop.f32.mrf.mxu0
      %v5808 = vadd.f32 %v5479, %v5807
      %v5809 = vpop.f32.mrf.mxu0
      %v5810 = vadd.f32 %v5481, %v5809
      %5811 = vmatmul.bf16.gmra.mxu0 %v4573
      %v5812 = vpop.f32.mrf.mxu0
      %v5813 = vadd.f32 %v5484, %v5812
      %v5814 = vpop.f32.mrf.mxu0
      %v5815 = vadd.f32 %v5486, %v5814
      %5816 = vmatmul.bf16.gmra.mxu0 %v4576
      %v5817 = vpop.f32.mrf.mxu0
      %v5818 = vadd.f32 %v5489, %v5817
      %v5819 = vpop.f32.mrf.mxu0
      %v5820 = vadd.f32 %v5491, %v5819
      %5821 = vmatmul.bf16.gmra.mxu0 %v4579
      %v5822 = vpop.f32.mrf.mxu0
      %v5823 = vadd.f32 %v5494, %v5822
      %v5824 = vpop.f32.mrf.mxu0
      %v5825 = vadd.f32 %v5496, %v5824
      %5826 = vmatmul.bf16.gmra.mxu0 %v4582
      %v5827 = vpop.f32.mrf.mxu0
      %v5828 = vadd.f32 %v5499, %v5827
      %v5829 = vpop.f32.mrf.mxu0
      %v5830 = vadd.f32 %v5501, %v5829
      %5831 = vmatmul.bf16.gmra.mxu0 %v4585
      %v5832 = vpop.f32.mrf.mxu0
      %v5833 = vadd.f32 %v5504, %v5832
      %v5834 = vpop.f32.mrf.mxu0
      %v5835 = vadd.f32 %v5506, %v5834
      %5836 = vmatmul.bf16.gmra.mxu0 %v4588
      %v5837 = vpop.f32.mrf.mxu0
      %v5838 = vadd.f32 %v5509, %v5837
      %v5839 = vpop.f32.mrf.mxu0
      %v5840 = vadd.f32 %v5511, %v5839
      %5841 = vmatmul.bf16.gmra.mxu0 %v4591
      %v5842 = vpop.f32.mrf.mxu0
      %v5843 = vadd.f32 %v5514, %v5842
      %v5844 = vpop.f32.mrf.mxu0
      %v5845 = vadd.f32 %v5516, %v5844
      %5846 = vmatmul.bf16.gmra.mxu0 %v4594
      %v5847 = vpop.f32.mrf.mxu0
      %v5848 = vadd.f32 %v5519, %v5847
      %v5849 = vpop.f32.mrf.mxu0
      %v5850 = vadd.f32 %v5521, %v5849
      %5851 = vmatmul.bf16.gmra.mxu0 %v4597
      %v5852 = vpop.f32.mrf.mxu0
      %v5853 = vadd.f32 %v5524, %v5852
      %v5854 = vpop.f32.mrf.mxu0
      %v5855 = vadd.f32 %v5526, %v5854
      %5856 = vmatmul.bf16.gmra.mxu0 %v4600
      %v5857 = vpop.f32.mrf.mxu0
      %v5858 = vadd.f32 %v5529, %v5857
      %v5859 = vpop.f32.mrf.mxu0
      %v5860 = vadd.f32 %v5531, %v5859
      %5861 = vmatmul.bf16.gmra.mxu0 %v4603
      %v5862 = vpop.f32.mrf.mxu0
      %v5863 = vadd.f32 %v5534, %v5862
      %v5864 = vpop.f32.mrf.mxu0
      %v5865 = vadd.f32 %v5536, %v5864
      %5866 = vmatmul.bf16.gmra.mxu0 %v4606
      %v5867 = vpop.f32.mrf.mxu0
      %v5868 = vadd.f32 %v5539, %v5867
      %v5869 = vpop.f32.mrf.mxu0
      %v5870 = vadd.f32 %v5541, %v5869
      %5871 = vmatmul.bf16.gmra.mxu0 %v4609
      %v5872 = vpop.f32.mrf.mxu0
      %v5873 = vadd.f32 %v5544, %v5872
      %v5874 = vpop.f32.mrf.mxu0
      %v5875 = vadd.f32 %v5546, %v5874
      %5876 = vmatmul.bf16.gmra.mxu0 %v4612
      %v5877 = vpop.f32.mrf.mxu0
      %v5878 = vadd.f32 %v5549, %v5877
      %v5879 = vpop.f32.mrf.mxu0
      %v5880 = vadd.f32 %v5551, %v5879
      %5881 = vmatmul.bf16.gmra.mxu0 %v4615
      %v5882 = vpop.f32.mrf.mxu0
      %v5883 = vadd.f32 %v5554, %v5882
      %v5884 = vpop.f32.mrf.mxu0
      %v5885 = vadd.f32 %v5556, %v5884
      %5886 = vmatmul.bf16.gmra.mxu0 %v4618
      %v5887 = vpop.f32.mrf.mxu0
      %v5888 = vadd.f32 %v5559, %v5887
      %v5889 = vpop.f32.mrf.mxu0
      %v5890 = vadd.f32 %v5561, %v5889
      %5891 = vmatmul.bf16.gmra.mxu0 %v4621
      %v5892 = vpop.f32.mrf.mxu0
      %v5893 = vadd.f32 %v5564, %v5892
      %v5894 = vpop.f32.mrf.mxu0
      %v5895 = vadd.f32 %v5566, %v5894
      %5896 = vmatmul.bf16.gmra.mxu0 %v4624
      %v5897 = vpop.f32.mrf.mxu0
      %v5898 = vadd.f32 %v5569, %v5897
      %v5899 = vpop.f32.mrf.mxu0
      %v5900 = vadd.f32 %v5571, %v5899
      %5901 = vmatmul.bf16.gmra.mxu0 %v4627
      %v5902 = vpop.f32.mrf.mxu0
      %v5903 = vadd.f32 %v5574, %v5902
      %v5904 = vpop.f32.mrf.mxu0
      %v5905 = vadd.f32 %v5576, %v5904
      %5906 = vmatmul.bf16.gmra.mxu0 %v4630
      %v5907 = vpop.f32.mrf.mxu0
      %v5908 = vadd.f32 %v5579, %v5907
      %v5909 = vpop.f32.mrf.mxu0
      %v5910 = vadd.f32 %v5581, %v5909
      %5911 = vmatmul.bf16.gmra.mxu0 %v4633
      %v5912 = vpop.f32.mrf.mxu0
      %v5913 = vadd.f32 %v5584, %v5912
      %v5914 = vpop.f32.mrf.mxu0
      %v5915 = vadd.f32 %v5586, %v5914
      %5916 = vmatmul.bf16.gmra.mxu0 %v4636
      %v5917 = vpop.f32.mrf.mxu0
      %v5918 = vadd.f32 %v5589, %v5917
      %v5919 = vpop.f32.mrf.mxu0
      %v5920 = vadd.f32 %v5591, %v5919
      %5921 = vmatmul.bf16.gmra.mxu0 %v4639
      %v5922 = vpop.f32.mrf.mxu0
      %v5923 = vadd.f32 %v5594, %v5922
      %v5924 = vpop.f32.mrf.mxu0
      %v5925 = vadd.f32 %v5596, %v5924
      %5926 = vmatmul.bf16.gmra.mxu0 %v4642
      %v5927 = vpop.f32.mrf.mxu0
      %v5928 = vadd.f32 %v5599, %v5927
      %v5929 = vpop.f32.mrf.mxu0
      %v5930 = vadd.f32 %v5601, %v5929
      %5931 = vmatmul.bf16.gmra.mxu0 %v4645
      %v5932 = vpop.f32.mrf.mxu0
      %v5933 = vadd.f32 %v5604, %v5932
      %v5934 = vpop.f32.mrf.mxu0
      %v5935 = vadd.f32 %v5606, %v5934
      %5936 = vmatmul.bf16.gmra.mxu0 %v4648
      %v5937 = vpop.f32.mrf.mxu0
      %v5938 = vadd.f32 %v5609, %v5937
      %v5939 = vpop.f32.mrf.mxu0
      %v5940 = vadd.f32 %v5611, %v5939
      %5941 = vmatmul.bf16.gmra.mxu0 %v4651
      %v5942 = vpop.f32.mrf.mxu0
      %v5943 = vadd.f32 %v5614, %v5942
      %v5944 = vpop.f32.mrf.mxu0
      %v5945 = vadd.f32 %v5616, %v5944
      %5946 = vmatmul.bf16.gmra.mxu0 %v4654
      %v5947 = vpop.f32.mrf.mxu0
      %v5948 = vadd.f32 %v5619, %v5947
      %v5949 = vpop.f32.mrf.mxu0
      %v5950 = vadd.f32 %v5621, %v5949
      %5951 = vmatmul.bf16.gmra.mxu0 %v4657
      %v5952 = vpop.f32.mrf.mxu0
      %v5953 = vadd.f32 %v5624, %v5952
      %v5954 = vpop.f32.mrf.mxu0
      %v5955 = vadd.f32 %v5626, %v5954
      %5956 = vmatmul.bf16.gmra.mxu0 %v4660
      %v5957 = vpop.f32.mrf.mxu0
      %v5958 = vadd.f32 %v5629, %v5957
      %v5959 = vpop.f32.mrf.mxu0
      %v5960 = vadd.f32 %v5631, %v5959
      %5961 = vmatmul.bf16.gmra.mxu0 %v4663
      %v5962 = vpop.f32.mrf.mxu0
      %v5963 = vadd.f32 %v5634, %v5962
      %v5964 = vpop.f32.mrf.mxu0
      %v5965 = vadd.f32 %v5636, %v5964
      %5966 = vmatmul.bf16.gmra.mxu0 %v4666
      %v5967 = vpop.f32.mrf.mxu0
      %v5968 = vadd.f32 %v5639, %v5967
      %v5969 = vpop.f32.mrf.mxu0
      %v5970 = vadd.f32 %v5641, %v5969
      %5971 = vmatmul.bf16.gmra.mxu0 %v4669
      %v5972 = vpop.f32.mrf.mxu0
      %v5973 = vadd.f32 %v5644, %v5972
      %v5974 = vpop.f32.mrf.mxu0
      %v5975 = vadd.f32 %v5646, %v5974
      %5976 = vmatmul.bf16.gmra.mxu0 %v4672
      %v5977 = vpop.f32.mrf.mxu0
      %v5978 = vadd.f32 %v5649, %v5977
      %v5979 = vpop.f32.mrf.mxu0
      %v5980 = vadd.f32 %v5651, %v5979
      %5981 = vmatmul.bf16.gmra.mxu0 %v4675
      %v5982 = vpop.f32.mrf.mxu0
      %v5983 = vadd.f32 %v5654, %v5982
      %v5984 = vpop.f32.mrf.mxu0
      %v5985 = vadd.f32 %v5656, %v5984
      %5986 = vmatmul.bf16.gmra.mxu0 %v4678
      %v5987 = vpop.f32.mrf.mxu0
      %v5988 = vadd.f32 %v5659, %v5987
      %v5989 = vpop.f32.mrf.mxu0
      %v5990 = vadd.f32 %v5661, %v5989
      %5991 = vmatmul.bf16.gmra.mxu0 %v4681
      %v5992 = vpop.f32.mrf.mxu0
      %v5993 = vadd.f32 %v5664, %v5992
      %v5994 = vpop.f32.mrf.mxu0
      %v5995 = vadd.f32 %v5666, %v5994
      %5996 = vmatmul.bf16.gmra.mxu0 %v4684
      %v5997 = vpop.f32.mrf.mxu0
      %v5998 = vadd.f32 %v5669, %v5997
      %v5999 = vpop.f32.mrf.mxu0
      %v6000 = vadd.f32 %v5671, %v5999
      %6001 = vmatmul.bf16.gmra.mxu0 %v4687
      %v6002 = vpop.f32.mrf.mxu0
      %v6003 = vadd.f32 %v5674, %v6002
      %v6004 = vpop.f32.mrf.mxu0
      %v6005 = vadd.f32 %v5676, %v6004
      %6006 = vmatmul.bf16.gmra.mxu0 %v4690
      %v6007 = vpop.f32.mrf.mxu0
      %v6008 = vadd.f32 %v5679, %v6007
      %v6009 = vpop.f32.mrf.mxu0
      %v6010 = vadd.f32 %v5681, %v6009
      %6011 = vmatmul.bf16.gmra.mxu0 %v4693
      %v6012 = vpop.f32.mrf.mxu0
      %v6013 = vadd.f32 %v5684, %v6012
      %v6014 = vpop.f32.mrf.mxu0
      %v6015 = vadd.f32 %v5686, %v6014
      %6016 = vdwg.mxu0
      %v6273 = vunpack.c.l.b16 %v3253
      %v6274 = vunpack.c.h.b16 %v3253
      %v6275 = vunpack.c.l.b16 %v3254
      %v6276 = vunpack.c.l.b16 %v3255
      %v6277 = vunpack.c.h.b16 %v3255
      %v6278 = vunpack.c.l.b16 %v3256
      %v6279 = vunpack.c.l.b16 %v3257
      %v6280 = vunpack.c.h.b16 %v3257
      %v6281 = vunpack.c.l.b16 %v3258
      %v6282 = vunpack.c.l.b16 %v3259
      %v6283 = vunpack.c.h.b16 %v3259
      %v6284 = vunpack.c.l.b16 %v3260
      %v6285 = vunpack.c.l.b16 %v3261
      %v6286 = vunpack.c.h.b16 %v3261
      %v6287 = vunpack.c.l.b16 %v3262
      %v6288 = vunpack.c.l.b16 %v3263
      %v6289 = vunpack.c.h.b16 %v3263
      %v6290 = vunpack.c.l.b16 %v3264
      %v6291 = vunpack.c.l.b16 %v3265
      %v6292 = vunpack.c.h.b16 %v3265
      %v6293 = vunpack.c.l.b16 %v3266
      %v6294 = vunpack.c.l.b16 %v3267
      %v6295 = vunpack.c.h.b16 %v3267
      %v6296 = vunpack.c.l.b16 %v3268
      %v6297 = vunpack.c.l.b16 %v3269
      %v6298 = vunpack.c.h.b16 %v3269
      %v6299 = vunpack.c.l.b16 %v3270
      %v6300 = vunpack.c.l.b16 %v3271
      %v6301 = vunpack.c.h.b16 %v3271
      %v6302 = vunpack.c.l.b16 %v3272
      %v6303 = vunpack.c.l.b16 %v3273
      %v6304 = vunpack.c.h.b16 %v3273
      %v6305 = vunpack.c.l.b16 %v3274
      %v6306 = vunpack.c.l.b16 %v3275
      %v6307 = vunpack.c.h.b16 %v3275
      %v6308 = vunpack.c.l.b16 %v3276
      %v6309 = vunpack.c.l.b16 %v3277
      %v6310 = vunpack.c.h.b16 %v3277
      %v6311 = vunpack.c.l.b16 %v3278
      %v6312 = vunpack.c.l.b16 %v3279
      %v6313 = vunpack.c.h.b16 %v3279
      %v6314 = vunpack.c.l.b16 %v3280
      %v6315 = vunpack.c.l.b16 %v3281
      %v6316 = vunpack.c.h.b16 %v3281
      %v6317 = vunpack.c.l.b16 %v3282
      %v6318 = vunpack.c.l.b16 %v3283
      %v6319 = vunpack.c.h.b16 %v3283
      %v6320 = vunpack.c.l.b16 %v3284
      %v6321 = vunpack.c.l.b16 %v3285
      %v6322 = vunpack.c.h.b16 %v3285
      %v6323 = vunpack.c.l.b16 %v3286
      %v6324 = vunpack.c.l.b16 %v3287
      %v6325 = vunpack.c.h.b16 %v3287
      %v6326 = vunpack.c.l.b16 %v3288
      %v6327 = vunpack.c.l.b16 %v3289
      %v6328 = vunpack.c.h.b16 %v3289
      %v6329 = vunpack.c.l.b16 %v3290
      %v6330 = vunpack.c.l.b16 %v3291
      %v6331 = vunpack.c.h.b16 %v3291
      %v6332 = vunpack.c.l.b16 %v3292
      %v6333 = vunpack.c.l.b16 %v3293
      %v6334 = vunpack.c.h.b16 %v3293
      %v6335 = vunpack.c.l.b16 %v3294
      %v6336 = vunpack.c.l.b16 %v3295
      %v6337 = vunpack.c.h.b16 %v3295
      %v6338 = vunpack.c.l.b16 %v3296
      %v6339 = vunpack.c.l.b16 %v3297
      %v6340 = vunpack.c.h.b16 %v3297
      %v6341 = vunpack.c.l.b16 %v3298
      %v6342 = vunpack.c.l.b16 %v3299
      %v6343 = vunpack.c.h.b16 %v3299
      %v6344 = vunpack.c.l.b16 %v3300
      %v6345 = vunpack.c.l.b16 %v3301
      %v6346 = vunpack.c.h.b16 %v3301
      %v6347 = vunpack.c.l.b16 %v3302
      %v6348 = vunpack.c.l.b16 %v3303
      %v6349 = vunpack.c.h.b16 %v3303
      %v6350 = vunpack.c.l.b16 %v3304
      %v6351 = vunpack.c.l.b16 %v3305
      %v6352 = vunpack.c.h.b16 %v3305
      %v6353 = vunpack.c.l.b16 %v3306
      %v6354 = vunpack.c.l.b16 %v3307
      %v6355 = vunpack.c.h.b16 %v3307
      %v6356 = vunpack.c.l.b16 %v3308
      %v6357 = vunpack.c.l.b16 %v3309
      %v6358 = vunpack.c.h.b16 %v3309
      %v6359 = vunpack.c.l.b16 %v3310
      %v6360 = vunpack.c.l.b16 %v3311
      %v6361 = vunpack.c.h.b16 %v3311
      %v6362 = vunpack.c.l.b16 %v3312
      %v6363 = vunpack.c.l.b16 %v3313
      %v6364 = vunpack.c.h.b16 %v3313
      %v6365 = vunpack.c.l.b16 %v3314
      %v6366 = vunpack.c.l.b16 %v3315
      %v6367 = vunpack.c.h.b16 %v3315
      %v6368 = vunpack.c.l.b16 %v3316
      %v6369 = vunpack.c.l.b16 %v3317
      %v6370 = vunpack.c.h.b16 %v3317
      %v6371 = vunpack.c.l.b16 %v3318
      %v6372 = vunpack.c.l.b16 %v3319
      %v6373 = vunpack.c.h.b16 %v3319
      %v6374 = vunpack.c.l.b16 %v3320
      %v6375 = vunpack.c.l.b16 %v3321
      %v6376 = vunpack.c.h.b16 %v3321
      %v6377 = vunpack.c.l.b16 %v3322
      %v6378 = vunpack.c.l.b16 %v3323
      %v6379 = vunpack.c.h.b16 %v3323
      %v6380 = vunpack.c.l.b16 %v3324
      %v6381 = vunpack.c.l.b16 %v3325
      %v6382 = vunpack.c.h.b16 %v3325
      %v6383 = vunpack.c.l.b16 %v3326
      %v6384 = vunpack.c.l.b16 %v3327
      %v6385 = vunpack.c.h.b16 %v3327
      %v6386 = vunpack.c.l.b16 %v3328
      %v6387 = vunpack.c.l.b16 %v3329
      %v6388 = vunpack.c.h.b16 %v3329
      %v6389 = vunpack.c.l.b16 %v3330
      %v6390 = vunpack.c.l.b16 %v3331
      %v6391 = vunpack.c.h.b16 %v3331
      %v6392 = vunpack.c.l.b16 %v3332
      %v6393 = vunpack.c.l.b16 %v3333
      %v6394 = vunpack.c.h.b16 %v3333
      %v6395 = vunpack.c.l.b16 %v3334
      %v6396 = vunpack.c.l.b16 %v3335
      %v6397 = vunpack.c.h.b16 %v3335
      %v6398 = vunpack.c.l.b16 %v3336
      %v6399 = vunpack.c.l.b16 %v3337
      %v6400 = vunpack.c.h.b16 %v3337
      %v6401 = vunpack.c.l.b16 %v3338
      %v6402 = vunpack.c.l.b16 %v3339
      %v6403 = vunpack.c.h.b16 %v3339
      %v6404 = vunpack.c.l.b16 %v3340
      %v6405 = vunpack.c.l.b16 %v3341
      %v6406 = vunpack.c.h.b16 %v3341
      %v6407 = vunpack.c.l.b16 %v3342
      %v6408 = vunpack.c.l.b16 %v3343
      %v6409 = vunpack.c.h.b16 %v3343
      %v6410 = vunpack.c.l.b16 %v3344
      %v6411 = vunpack.c.l.b16 %v3345
      %v6412 = vunpack.c.h.b16 %v3345
      %v6413 = vunpack.c.l.b16 %v3346
      %v6414 = vunpack.c.l.b16 %v3347
      %v6415 = vunpack.c.h.b16 %v3347
      %v6416 = vunpack.c.l.b16 %v3348
      %v6417 = vunpack.c.l.b16 %v3349
      %v6418 = vunpack.c.h.b16 %v3349
      %v6419 = vunpack.c.l.b16 %v3350
      %v6420 = vunpack.c.l.b16 %v3351
      %v6421 = vunpack.c.h.b16 %v3351
      %v6422 = vunpack.c.l.b16 %v3352
      %v6423 = vunpack.c.l.b16 %v3353
      %v6424 = vunpack.c.h.b16 %v3353
      %v6425 = vunpack.c.l.b16 %v3354
      %v6426 = vunpack.c.l.b16 %v3355
      %v6427 = vunpack.c.h.b16 %v3355
      %v6428 = vunpack.c.l.b16 %v3356
      %v6429 = vunpack.c.l.b16 %v3357
      %v6430 = vunpack.c.h.b16 %v3357
      %v6431 = vunpack.c.l.b16 %v3358
      %v6432 = vunpack.c.l.b16 %v3359
      %v6433 = vunpack.c.h.b16 %v3359
      %v6434 = vunpack.c.l.b16 %v3360
      %v6435 = vunpack.c.l.b16 %v3361
      %v6436 = vunpack.c.h.b16 %v3361
      %v6437 = vunpack.c.l.b16 %v3362
      %v6438 = vunpack.c.l.b16 %v3363
      %v6439 = vunpack.c.h.b16 %v3363
      %v6440 = vunpack.c.l.b16 %v3364
      %v6441 = vunpack.c.l.b16 %v3365
      %v6442 = vunpack.c.h.b16 %v3365
      %v6443 = vunpack.c.l.b16 %v3366
      %v6444 = vunpack.c.l.b16 %v3367
      %v6445 = vunpack.c.h.b16 %v3367
      %v6446 = vunpack.c.l.b16 %v3368
      %v6447 = vunpack.c.l.b16 %v3369
      %v6448 = vunpack.c.h.b16 %v3369
      %v6449 = vunpack.c.l.b16 %v3370
      %v6450 = vunpack.c.l.b16 %v3371
      %v6451 = vunpack.c.h.b16 %v3371
      %v6452 = vunpack.c.l.b16 %v3372
      %v6453 = vunpack.c.l.b16 %v3373
      %v6454 = vunpack.c.h.b16 %v3373
      %v6455 = vunpack.c.l.b16 %v3374
      %v6456 = vunpack.c.l.b16 %v3375
      %v6457 = vunpack.c.h.b16 %v3375
      %v6458 = vunpack.c.l.b16 %v3376
      %v6459 = vunpack.c.l.b16 %v3377
      %v6460 = vunpack.c.h.b16 %v3377
      %v6461 = vunpack.c.l.b16 %v3378
      %v6462 = vunpack.c.l.b16 %v3379
      %v6463 = vunpack.c.h.b16 %v3379
      %v6464 = vunpack.c.l.b16 %v3380
      %v6465 = vunpack.c.l.b16 %v3381
      %v6466 = vunpack.c.h.b16 %v3381
      %v6467 = vunpack.c.l.b16 %v3382
      %v6468 = vunpack.c.l.b16 %v3383
      %v6469 = vunpack.c.h.b16 %v3383
      %v6470 = vunpack.c.l.b16 %v3384
      %v6471 = vunpack.c.l.b16 %v3385
      %v6472 = vunpack.c.h.b16 %v3385
      %v6473 = vunpack.c.l.b16 %v3386
      %v6474 = vunpack.c.l.b16 %v3387
      %v6475 = vunpack.c.h.b16 %v3387
      %v6476 = vunpack.c.l.b16 %v3388
      %v6477 = vunpack.c.l.b16 %v3389
      %v6478 = vunpack.c.h.b16 %v3389
      %v6479 = vunpack.c.l.b16 %v3390
      %v6480 = vunpack.c.l.b16 %v3391
      %v6481 = vunpack.c.h.b16 %v3391
      %v6482 = vunpack.c.l.b16 %v3392
      %v6483 = vunpack.c.l.b16 %v3393
      %v6484 = vunpack.c.h.b16 %v3393
      %v6485 = vunpack.c.l.b16 %v3394
      %v6486 = vunpack.c.l.b16 %v3395
      %v6487 = vunpack.c.h.b16 %v3395
      %v6488 = vunpack.c.l.b16 %v3396
      %v6489 = vunpack.c.l.b16 %v3397
      %v6490 = vunpack.c.h.b16 %v3397
      %v6491 = vunpack.c.l.b16 %v3398
      %v6492 = vunpack.c.l.b16 %v3399
      %v6493 = vunpack.c.h.b16 %v3399
      %v6494 = vunpack.c.l.b16 %v3400
      %v6495 = vunpack.c.l.b16 %v3401
      %v6496 = vunpack.c.h.b16 %v3401
      %v6497 = vunpack.c.l.b16 %v3402
      %v6498 = vunpack.c.l.b16 %v3403
      %v6499 = vunpack.c.h.b16 %v3403
      %v6500 = vunpack.c.l.b16 %v3404
      %v6501 = vunpack.c.l.b16 %v3405
      %v6502 = vunpack.c.h.b16 %v3405
      %v6503 = vunpack.c.l.b16 %v3406
      %v6504 = vunpack.c.l.b16 %v3407
      %v6505 = vunpack.c.h.b16 %v3407
      %v6506 = vunpack.c.l.b16 %v3408
      %v6507 = vunpack.c.l.b16 %v3409
      %v6508 = vunpack.c.h.b16 %v3409
      %v6509 = vunpack.c.l.b16 %v3410
      %v6510 = vunpack.c.l.b16 %v3411
      %v6511 = vunpack.c.h.b16 %v3411
      %v6512 = vunpack.c.l.b16 %v3412
      %v6513 = vunpack.c.l.b16 %v3413
      %v6514 = vunpack.c.h.b16 %v3413
      %v6515 = vunpack.c.l.b16 %v3414
      %v6516 = vunpack.c.l.b16 %v3415
      %v6517 = vunpack.c.h.b16 %v3415
      %v6518 = vunpack.c.l.b16 %v3416
      %v6519 = vunpack.c.l.b16 %v3417
      %v6520 = vunpack.c.h.b16 %v3417
      %v6521 = vunpack.c.l.b16 %v3418
      %v6522 = vunpack.c.l.b16 %v3419
      %v6523 = vunpack.c.h.b16 %v3419
      %v6524 = vunpack.c.l.b16 %v3420
      %v6525 = vunpack.c.l.b16 %v3421
      %v6526 = vunpack.c.h.b16 %v3421
      %v6527 = vunpack.c.l.b16 %v3422
      %v6528 = vunpack.c.l.b16 %v3423
      %v6529 = vunpack.c.h.b16 %v3423
      %v6530 = vunpack.c.l.b16 %v3424
      %v6531 = vunpack.c.l.b16 %v3425
      %v6532 = vunpack.c.h.b16 %v3425
      %v6533 = vunpack.c.l.b16 %v3426
      %v6534 = vunpack.c.l.b16 %v3427
      %v6535 = vunpack.c.h.b16 %v3427
      %v6536 = vunpack.c.l.b16 %v3428
      %v6537 = vunpack.c.l.b16 %v3429
      %v6538 = vunpack.c.h.b16 %v3429
      %v6539 = vunpack.c.l.b16 %v3430
      %v6540 = vunpack.c.l.b16 %v3431
      %v6541 = vunpack.c.h.b16 %v3431
      %v6542 = vunpack.c.l.b16 %v3432
      %v6543 = vunpack.c.l.b16 %v3433
      %v6544 = vunpack.c.h.b16 %v3433
      %v6545 = vunpack.c.l.b16 %v3434
      %v6546 = vunpack.c.l.b16 %v3435
      %v6547 = vunpack.c.h.b16 %v3435
      %v6548 = vunpack.c.l.b16 %v3436
      %v6549 = vunpack.c.l.b16 %v3437
      %v6550 = vunpack.c.h.b16 %v3437
      %v6551 = vunpack.c.l.b16 %v3438
      %v6552 = vunpack.c.l.b16 %v3439
      %v6553 = vunpack.c.h.b16 %v3439
      %v6554 = vunpack.c.l.b16 %v3440
      %v6555 = vunpack.c.l.b16 %v3441
      %v6556 = vunpack.c.h.b16 %v3441
      %v6557 = vunpack.c.l.b16 %v3442
      %v6558 = vunpack.c.l.b16 %v3443
      %v6559 = vunpack.c.h.b16 %v3443
      %v6560 = vunpack.c.l.b16 %v3444
      %v6561 = vunpack.c.l.b16 %v3445
      %v6562 = vunpack.c.h.b16 %v3445
      %v6563 = vunpack.c.l.b16 %v3446
      %v6564 = vunpack.c.l.b16 %v3447
      %v6565 = vunpack.c.h.b16 %v3447
      %v6566 = vunpack.c.l.b16 %v3448
      %v6567 = vunpack.c.l.b16 %v3449
      %v6568 = vunpack.c.h.b16 %v3449
      %v6569 = vunpack.c.l.b16 %v3450
      %v6570 = vunpack.c.l.b16 %v3451
      %v6571 = vunpack.c.h.b16 %v3451
      %v6572 = vunpack.c.l.b16 %v3452
      %v6573 = vunpack.c.l.b16 %v3453
      %v6574 = vunpack.c.h.b16 %v3453
      %v6575 = vunpack.c.l.b16 %v3454
      %v6576 = vunpack.c.l.b16 %v3455
      %v6577 = vunpack.c.h.b16 %v3455
      %v6578 = vunpack.c.l.b16 %v3456
      %v6579 = vunpack.c.l.b16 %v3457
      %v6580 = vunpack.c.h.b16 %v3457
      %v6581 = vunpack.c.l.b16 %v3458
      %v6582 = vunpack.c.l.b16 %v3459
      %v6583 = vunpack.c.h.b16 %v3459
      %v6584 = vunpack.c.l.b16 %v3460
      %v6585 = vunpack.c.l.b16 %v3461
      %v6586 = vunpack.c.h.b16 %v3461
      %v6587 = vunpack.c.l.b16 %v3462
      %v6588 = vunpack.c.l.b16 %v3463
      %v6589 = vunpack.c.h.b16 %v3463
      %v6590 = vunpack.c.l.b16 %v3464
      %v6591 = vunpack.c.l.b16 %v3465
      %v6592 = vunpack.c.h.b16 %v3465
      %v6593 = vunpack.c.l.b16 %v3466
      %v6594 = vunpack.c.l.b16 %v3467
      %v6595 = vunpack.c.h.b16 %v3467
      %v6596 = vunpack.c.l.b16 %v3468
      %v6597 = vunpack.c.l.b16 %v3469
      %v6598 = vunpack.c.h.b16 %v3469
      %v6599 = vunpack.c.l.b16 %v3470
      %v6600 = vunpack.c.l.b16 %v3471
      %v6601 = vunpack.c.h.b16 %v3471
      %v6602 = vunpack.c.l.b16 %v3472
      %v6603 = vunpack.c.l.b16 %v3473
      %v6604 = vunpack.c.h.b16 %v3473
      %v6605 = vunpack.c.l.b16 %v3474
      %v6606 = vunpack.c.l.b16 %v3475
      %v6607 = vunpack.c.h.b16 %v3475
      %v6608 = vunpack.c.l.b16 %v3476
      %v6609 = vunpack.c.l.b16 %v3477
      %v6610 = vunpack.c.h.b16 %v3477
      %v6611 = vunpack.c.l.b16 %v3478
      %v6612 = vunpack.c.l.b16 %v3479
      %v6613 = vunpack.c.h.b16 %v3479
      %v6614 = vunpack.c.l.b16 %v3480
      %v6615 = vunpack.c.l.b16 %v3481
      %v6616 = vunpack.c.h.b16 %v3481
      %v6617 = vunpack.c.l.b16 %v3482
      %v6618 = vunpack.c.l.b16 %v3483
      %v6619 = vunpack.c.h.b16 %v3483
      %v6620 = vunpack.c.l.b16 %v3484
      %v6621 = vunpack.c.l.b16 %v3485
      %v6622 = vunpack.c.h.b16 %v3485
      %v6623 = vunpack.c.l.b16 %v3486
      %v6624 = vunpack.c.l.b16 %v3487
      %v6625 = vunpack.c.h.b16 %v3487
      %v6626 = vunpack.c.l.b16 %v3488
      %v6627 = vunpack.c.l.b16 %v3489
      %v6628 = vunpack.c.h.b16 %v3489
      %v6629 = vunpack.c.l.b16 %v3490
      %v6630 = vunpack.c.l.b16 %v3491
      %v6631 = vunpack.c.h.b16 %v3491
      %v6632 = vunpack.c.l.b16 %v3492
      %v6633 = vunpack.c.l.b16 %v3493
      %v6634 = vunpack.c.h.b16 %v3493
      %v6635 = vunpack.c.l.b16 %v3494
      %v6636 = vunpack.c.l.b16 %v3495
      %v6637 = vunpack.c.h.b16 %v3495
      %v6638 = vunpack.c.l.b16 %v3496
      %v6639 = vunpack.c.l.b16 %v3497
      %v6640 = vunpack.c.h.b16 %v3497
      %v6641 = vunpack.c.l.b16 %v3498
      %v6642 = vunpack.c.l.b16 %v3499
      %v6643 = vunpack.c.h.b16 %v3499
      %v6644 = vunpack.c.l.b16 %v3500
      %v6645 = vunpack.c.l.b16 %v3501
      %v6646 = vunpack.c.h.b16 %v3501
      %v6647 = vunpack.c.l.b16 %v3502
      %v6648 = vunpack.c.l.b16 %v3503
      %v6649 = vunpack.c.h.b16 %v3503
      %v6650 = vunpack.c.l.b16 %v3504
      %v6651 = vunpack.c.l.b16 %v3505
      %v6652 = vunpack.c.h.b16 %v3505
      %v6653 = vunpack.c.l.b16 %v3506
      %v6654 = vunpack.c.l.b16 %v3507
      %v6655 = vunpack.c.h.b16 %v3507
      %v6656 = vunpack.c.l.b16 %v3508
      %v6657 = vpack.c.b16 %v6276, %v6273
      %v6658 = vpack.c.b16 %v6277, %v6274
      %v6659 = vpack.c.b16 %v6278, %v6275
      %v6660 = vpack.c.b16 %v6282, %v6279
      %v6661 = vpack.c.b16 %v6283, %v6280
      %v6662 = vpack.c.b16 %v6284, %v6281
      %v6663 = vpack.c.b16 %v6288, %v6285
      %v6664 = vpack.c.b16 %v6289, %v6286
      %v6665 = vpack.c.b16 %v6290, %v6287
      %v6666 = vpack.c.b16 %v6294, %v6291
      %v6667 = vpack.c.b16 %v6295, %v6292
      %v6668 = vpack.c.b16 %v6296, %v6293
      %v6669 = vpack.c.b16 %v6300, %v6297
      %v6670 = vpack.c.b16 %v6301, %v6298
      %v6671 = vpack.c.b16 %v6302, %v6299
      %v6672 = vpack.c.b16 %v6306, %v6303
      %v6673 = vpack.c.b16 %v6307, %v6304
      %v6674 = vpack.c.b16 %v6308, %v6305
      %v6675 = vpack.c.b16 %v6312, %v6309
      %v6676 = vpack.c.b16 %v6313, %v6310
      %v6677 = vpack.c.b16 %v6314, %v6311
      %v6678 = vpack.c.b16 %v6318, %v6315
      %v6679 = vpack.c.b16 %v6319, %v6316
      %v6680 = vpack.c.b16 %v6320, %v6317
      %v6681 = vpack.c.b16 %v6324, %v6321
      %v6682 = vpack.c.b16 %v6325, %v6322
      %v6683 = vpack.c.b16 %v6326, %v6323
      %v6684 = vpack.c.b16 %v6330, %v6327
      %v6685 = vpack.c.b16 %v6331, %v6328
      %v6686 = vpack.c.b16 %v6332, %v6329
      %v6687 = vpack.c.b16 %v6336, %v6333
      %v6688 = vpack.c.b16 %v6337, %v6334
      %v6689 = vpack.c.b16 %v6338, %v6335
      %v6690 = vpack.c.b16 %v6342, %v6339
      %v6691 = vpack.c.b16 %v6343, %v6340
      %v6692 = vpack.c.b16 %v6344, %v6341
      %v6693 = vpack.c.b16 %v6348, %v6345
      %v6694 = vpack.c.b16 %v6349, %v6346
      %v6695 = vpack.c.b16 %v6350, %v6347
      %v6696 = vpack.c.b16 %v6354, %v6351
      %v6697 = vpack.c.b16 %v6355, %v6352
      %v6698 = vpack.c.b16 %v6356, %v6353
      %v6699 = vpack.c.b16 %v6360, %v6357
      %v6700 = vpack.c.b16 %v6361, %v6358
      %v6701 = vpack.c.b16 %v6362, %v6359
      %v6702 = vpack.c.b16 %v6366, %v6363
      %v6703 = vpack.c.b16 %v6367, %v6364
      %v6704 = vpack.c.b16 %v6368, %v6365
      %v6705 = vpack.c.b16 %v6372, %v6369
      %v6706 = vpack.c.b16 %v6373, %v6370
      %v6707 = vpack.c.b16 %v6374, %v6371
      %v6708 = vpack.c.b16 %v6378, %v6375
      %v6709 = vpack.c.b16 %v6379, %v6376
      %v6710 = vpack.c.b16 %v6380, %v6377
      %v6711 = vpack.c.b16 %v6384, %v6381
      %v6712 = vpack.c.b16 %v6385, %v6382
      %v6713 = vpack.c.b16 %v6386, %v6383
      %v6714 = vpack.c.b16 %v6390, %v6387
      %v6715 = vpack.c.b16 %v6391, %v6388
      %v6716 = vpack.c.b16 %v6392, %v6389
      %v6717 = vpack.c.b16 %v6396, %v6393
      %v6718 = vpack.c.b16 %v6397, %v6394
      %v6719 = vpack.c.b16 %v6398, %v6395
      %v6720 = vpack.c.b16 %v6402, %v6399
      %v6721 = vpack.c.b16 %v6403, %v6400
      %v6722 = vpack.c.b16 %v6404, %v6401
      %v6723 = vpack.c.b16 %v6408, %v6405
      %v6724 = vpack.c.b16 %v6409, %v6406
      %v6725 = vpack.c.b16 %v6410, %v6407
      %v6726 = vpack.c.b16 %v6414, %v6411
      %v6727 = vpack.c.b16 %v6415, %v6412
      %v6728 = vpack.c.b16 %v6416, %v6413
      %v6729 = vpack.c.b16 %v6420, %v6417
      %v6730 = vpack.c.b16 %v6421, %v6418
      %v6731 = vpack.c.b16 %v6422, %v6419
      %v6732 = vpack.c.b16 %v6426, %v6423
      %v6733 = vpack.c.b16 %v6427, %v6424
      %v6734 = vpack.c.b16 %v6428, %v6425
      %v6735 = vpack.c.b16 %v6432, %v6429
      %v6736 = vpack.c.b16 %v6433, %v6430
      %v6737 = vpack.c.b16 %v6434, %v6431
      %v6738 = vpack.c.b16 %v6438, %v6435
      %v6739 = vpack.c.b16 %v6439, %v6436
      %v6740 = vpack.c.b16 %v6440, %v6437
      %v6741 = vpack.c.b16 %v6444, %v6441
      %v6742 = vpack.c.b16 %v6445, %v6442
      %v6743 = vpack.c.b16 %v6446, %v6443
      %v6744 = vpack.c.b16 %v6450, %v6447
      %v6745 = vpack.c.b16 %v6451, %v6448
      %v6746 = vpack.c.b16 %v6452, %v6449
      %v6747 = vpack.c.b16 %v6456, %v6453
      %v6748 = vpack.c.b16 %v6457, %v6454
      %v6749 = vpack.c.b16 %v6458, %v6455
      %v6750 = vpack.c.b16 %v6462, %v6459
      %v6751 = vpack.c.b16 %v6463, %v6460
      %v6752 = vpack.c.b16 %v6464, %v6461
      %v6753 = vpack.c.b16 %v6468, %v6465
      %v6754 = vpack.c.b16 %v6469, %v6466
      %v6755 = vpack.c.b16 %v6470, %v6467
      %v6756 = vpack.c.b16 %v6474, %v6471
      %v6757 = vpack.c.b16 %v6475, %v6472
      %v6758 = vpack.c.b16 %v6476, %v6473
      %v6759 = vpack.c.b16 %v6480, %v6477
      %v6760 = vpack.c.b16 %v6481, %v6478
      %v6761 = vpack.c.b16 %v6482, %v6479
      %v6762 = vpack.c.b16 %v6486, %v6483
      %v6763 = vpack.c.b16 %v6487, %v6484
      %v6764 = vpack.c.b16 %v6488, %v6485
      %v6765 = vpack.c.b16 %v6492, %v6489
      %v6766 = vpack.c.b16 %v6493, %v6490
      %v6767 = vpack.c.b16 %v6494, %v6491
      %v6768 = vpack.c.b16 %v6498, %v6495
      %v6769 = vpack.c.b16 %v6499, %v6496
      %v6770 = vpack.c.b16 %v6500, %v6497
      %v6771 = vpack.c.b16 %v6504, %v6501
      %v6772 = vpack.c.b16 %v6505, %v6502
      %v6773 = vpack.c.b16 %v6506, %v6503
      %v6774 = vpack.c.b16 %v6510, %v6507
      %v6775 = vpack.c.b16 %v6511, %v6508
      %v6776 = vpack.c.b16 %v6512, %v6509
      %v6777 = vpack.c.b16 %v6516, %v6513
      %v6778 = vpack.c.b16 %v6517, %v6514
      %v6779 = vpack.c.b16 %v6518, %v6515
      %v6780 = vpack.c.b16 %v6522, %v6519
      %v6781 = vpack.c.b16 %v6523, %v6520
      %v6782 = vpack.c.b16 %v6524, %v6521
      %v6783 = vpack.c.b16 %v6528, %v6525
      %v6784 = vpack.c.b16 %v6529, %v6526
      %v6785 = vpack.c.b16 %v6530, %v6527
      %v6786 = vpack.c.b16 %v6534, %v6531
      %v6787 = vpack.c.b16 %v6535, %v6532
      %v6788 = vpack.c.b16 %v6536, %v6533
      %v6789 = vpack.c.b16 %v6540, %v6537
      %v6790 = vpack.c.b16 %v6541, %v6538
      %v6791 = vpack.c.b16 %v6542, %v6539
      %v6792 = vpack.c.b16 %v6546, %v6543
      %v6793 = vpack.c.b16 %v6547, %v6544
      %v6794 = vpack.c.b16 %v6548, %v6545
      %v6795 = vpack.c.b16 %v6552, %v6549
      %v6796 = vpack.c.b16 %v6553, %v6550
      %v6797 = vpack.c.b16 %v6554, %v6551
      %v6798 = vpack.c.b16 %v6558, %v6555
      %v6799 = vpack.c.b16 %v6559, %v6556
      %v6800 = vpack.c.b16 %v6560, %v6557
      %v6801 = vpack.c.b16 %v6564, %v6561
      %v6802 = vpack.c.b16 %v6565, %v6562
      %v6803 = vpack.c.b16 %v6566, %v6563
      %v6804 = vpack.c.b16 %v6570, %v6567
      %v6805 = vpack.c.b16 %v6571, %v6568
      %v6806 = vpack.c.b16 %v6572, %v6569
      %v6807 = vpack.c.b16 %v6576, %v6573
      %v6808 = vpack.c.b16 %v6577, %v6574
      %v6809 = vpack.c.b16 %v6578, %v6575
      %v6810 = vpack.c.b16 %v6582, %v6579
      %v6811 = vpack.c.b16 %v6583, %v6580
      %v6812 = vpack.c.b16 %v6584, %v6581
      %v6813 = vpack.c.b16 %v6588, %v6585
      %v6814 = vpack.c.b16 %v6589, %v6586
      %v6815 = vpack.c.b16 %v6590, %v6587
      %v6816 = vpack.c.b16 %v6594, %v6591
      %v6817 = vpack.c.b16 %v6595, %v6592
      %v6818 = vpack.c.b16 %v6596, %v6593
      %v6819 = vpack.c.b16 %v6600, %v6597
      %v6820 = vpack.c.b16 %v6601, %v6598
      %v6821 = vpack.c.b16 %v6602, %v6599
      %v6822 = vpack.c.b16 %v6606, %v6603
      %v6823 = vpack.c.b16 %v6607, %v6604
      %v6824 = vpack.c.b16 %v6608, %v6605
      %v6825 = vpack.c.b16 %v6612, %v6609
      %v6826 = vpack.c.b16 %v6613, %v6610
      %v6827 = vpack.c.b16 %v6614, %v6611
      %v6828 = vpack.c.b16 %v6618, %v6615
      %v6829 = vpack.c.b16 %v6619, %v6616
      %v6830 = vpack.c.b16 %v6620, %v6617
      %v6831 = vpack.c.b16 %v6624, %v6621
      %v6832 = vpack.c.b16 %v6625, %v6622
      %v6833 = vpack.c.b16 %v6626, %v6623
      %v6834 = vpack.c.b16 %v6630, %v6627
      %v6835 = vpack.c.b16 %v6631, %v6628
      %v6836 = vpack.c.b16 %v6632, %v6629
      %v6837 = vpack.c.b16 %v6636, %v6633
      %v6838 = vpack.c.b16 %v6637, %v6634
      %v6839 = vpack.c.b16 %v6638, %v6635
      %v6840 = vpack.c.b16 %v6642, %v6639
      %v6841 = vpack.c.b16 %v6643, %v6640
      %v6842 = vpack.c.b16 %v6644, %v6641
      %v6843 = vpack.c.b16 %v6648, %v6645
      %v6844 = vpack.c.b16 %v6649, %v6646
      %v6845 = vpack.c.b16 %v6650, %v6647
      %v6846 = vpack.c.b16 %v6654, %v6651
      %v6847 = vpack.c.b16 %v6655, %v6652
      %v6848 = vpack.c.b16 %v6656, %v6653
      %v7089 = vunpack.c.l.b16 %v3509
      %v7090 = vunpack.c.l.b16 %v3510
      %v7091 = vunpack.c.l.b16 %v3511
      %v7092 = vunpack.c.l.b16 %v3512
      %v7093 = vunpack.c.l.b16 %v3513
      %v7094 = vunpack.c.l.b16 %v3514
      %v7095 = vunpack.c.l.b16 %v3515
      %v7096 = vunpack.c.l.b16 %v3516
      %v7097 = vunpack.c.l.b16 %v3517
      %v7098 = vunpack.c.l.b16 %v3518
      %v7099 = vunpack.c.l.b16 %v3519
      %v7100 = vunpack.c.l.b16 %v3520
      %v7101 = vunpack.c.l.b16 %v3521
      %v7102 = vunpack.c.l.b16 %v3522
      %v7103 = vunpack.c.l.b16 %v3523
      %v7104 = vunpack.c.l.b16 %v3524
      %v7105 = vunpack.c.l.b16 %v3525
      %v7106 = vunpack.c.l.b16 %v3526
      %v7107 = vunpack.c.l.b16 %v3527
      %v7108 = vunpack.c.l.b16 %v3528
      %v7109 = vunpack.c.l.b16 %v3529
      %v7110 = vunpack.c.l.b16 %v3530
      %v7111 = vunpack.c.l.b16 %v3531
      %v7112 = vunpack.c.l.b16 %v3532
      %v7113 = vunpack.c.l.b16 %v3533
      %v7114 = vunpack.c.l.b16 %v3534
      %v7115 = vunpack.c.l.b16 %v3535
      %v7116 = vunpack.c.l.b16 %v3536
      %v7117 = vunpack.c.l.b16 %v3537
      %v7118 = vunpack.c.l.b16 %v3538
      %v7119 = vunpack.c.l.b16 %v3539
      %v7120 = vunpack.c.l.b16 %v3540
      %v7121 = vunpack.c.l.b16 %v3541
      %v7122 = vunpack.c.l.b16 %v3542
      %v7123 = vunpack.c.l.b16 %v3543
      %v7124 = vunpack.c.l.b16 %v3544
      %v7125 = vunpack.c.l.b16 %v3545
      %v7126 = vunpack.c.l.b16 %v3546
      %v7127 = vunpack.c.l.b16 %v3547
      %v7128 = vunpack.c.l.b16 %v3548
      %v7129 = vunpack.c.l.b16 %v3549
      %v7130 = vunpack.c.l.b16 %v3550
      %v7131 = vunpack.c.l.b16 %v3551
      %v7132 = vunpack.c.l.b16 %v3552
      %v7133 = vunpack.c.l.b16 %v3553
      %v7134 = vunpack.c.l.b16 %v3554
      %v7135 = vunpack.c.l.b16 %v3555
      %v7136 = vunpack.c.l.b16 %v3556
      %v7137 = vpack.c.b16 %v7090, %v7089
      %v7138 = vpack.c.b16 %v7092, %v7091
      %v7139 = vpack.c.b16 %v7094, %v7093
      %v7140 = vpack.c.b16 %v7096, %v7095
      %v7141 = vpack.c.b16 %v7098, %v7097
      %v7142 = vpack.c.b16 %v7100, %v7099
      %v7143 = vpack.c.b16 %v7102, %v7101
      %v7144 = vpack.c.b16 %v7104, %v7103
      %v7145 = vpack.c.b16 %v7106, %v7105
      %v7146 = vpack.c.b16 %v7108, %v7107
      %v7147 = vpack.c.b16 %v7110, %v7109
      %v7148 = vpack.c.b16 %v7112, %v7111
      %v7149 = vpack.c.b16 %v7114, %v7113
      %v7150 = vpack.c.b16 %v7116, %v7115
      %v7151 = vpack.c.b16 %v7118, %v7117
      %v7152 = vpack.c.b16 %v7120, %v7119
      %v7153 = vpack.c.b16 %v7122, %v7121
      %v7154 = vpack.c.b16 %v7124, %v7123
      %v7155 = vpack.c.b16 %v7126, %v7125
      %v7156 = vpack.c.b16 %v7128, %v7127
      %v7157 = vpack.c.b16 %v7130, %v7129
      %v7158 = vpack.c.b16 %v7132, %v7131
      %v7159 = vpack.c.b16 %v7134, %v7133
      %v7160 = vpack.c.b16 %v7136, %v7135
      %7185 = vmatpush.bf16.msra.mxu0 %v7144
      %7186 = vmatpush.bf16.msra.mxu0 %v7143
      %7187 = vmatpush.bf16.msra.mxu0 %v7142
      %7188 = vmatpush.bf16.msra.mxu0 %v7141
      %7189 = vmatpush.bf16.msra.mxu0 %v7140
      %7190 = vmatpush.bf16.msra.mxu0 %v7139
      %7191 = vmatpush.bf16.msra.mxu0 %v7138
      %7192 = vmatpush.bf16.msra.mxu0 %v7137
      %7193 = vmatmul.bf16.gmra.mxu0 %v6657
      %v7194 = vpop.f32.mrf.mxu0
      %v7195 = vadd.f32 %v5698, %v7194
      %v7196 = vpop.f32.mrf.mxu0
      %v7197 = vadd.f32 %v5700, %v7196
      %7198 = vmatmul.bf16.gmra.mxu0 %v6660
      %v7199 = vpop.f32.mrf.mxu0
      %v7200 = vadd.f32 %v5703, %v7199
      %v7201 = vpop.f32.mrf.mxu0
      %v7202 = vadd.f32 %v5705, %v7201
      %7203 = vmatmul.bf16.gmra.mxu0 %v6663
      %v7204 = vpop.f32.mrf.mxu0
      %v7205 = vadd.f32 %v5708, %v7204
      %v7206 = vpop.f32.mrf.mxu0
      %v7207 = vadd.f32 %v5710, %v7206
      %7208 = vmatmul.bf16.gmra.mxu0 %v6666
      %v7209 = vpop.f32.mrf.mxu0
      %v7210 = vadd.f32 %v5713, %v7209
      %v7211 = vpop.f32.mrf.mxu0
      %v7212 = vadd.f32 %v5715, %v7211
      %7213 = vmatmul.bf16.gmra.mxu0 %v6669
      %v7214 = vpop.f32.mrf.mxu0
      %v7215 = vadd.f32 %v5718, %v7214
      %v7216 = vpop.f32.mrf.mxu0
      %v7217 = vadd.f32 %v5720, %v7216
      %7218 = vmatmul.bf16.gmra.mxu0 %v6672
      %v7219 = vpop.f32.mrf.mxu0
      %v7220 = vadd.f32 %v5723, %v7219
      %v7221 = vpop.f32.mrf.mxu0
      %v7222 = vadd.f32 %v5725, %v7221
      %7223 = vmatmul.bf16.gmra.mxu0 %v6675
      %v7224 = vpop.f32.mrf.mxu0
      %v7225 = vadd.f32 %v5728, %v7224
      %v7226 = vpop.f32.mrf.mxu0
      %v7227 = vadd.f32 %v5730, %v7226
      %7228 = vmatmul.bf16.gmra.mxu0 %v6678
      %v7229 = vpop.f32.mrf.mxu0
      %v7230 = vadd.f32 %v5733, %v7229
      %v7231 = vpop.f32.mrf.mxu0
      %v7232 = vadd.f32 %v5735, %v7231
      %7233 = vmatmul.bf16.gmra.mxu0 %v6681
      %v7234 = vpop.f32.mrf.mxu0
      %v7235 = vadd.f32 %v5738, %v7234
      %v7236 = vpop.f32.mrf.mxu0
      %v7237 = vadd.f32 %v5740, %v7236
      %7238 = vmatmul.bf16.gmra.mxu0 %v6684
      %v7239 = vpop.f32.mrf.mxu0
      %v7240 = vadd.f32 %v5743, %v7239
      %v7241 = vpop.f32.mrf.mxu0
      %v7242 = vadd.f32 %v5745, %v7241
      %7243 = vmatmul.bf16.gmra.mxu0 %v6687
      %v7244 = vpop.f32.mrf.mxu0
      %v7245 = vadd.f32 %v5748, %v7244
      %v7246 = vpop.f32.mrf.mxu0
      %v7247 = vadd.f32 %v5750, %v7246
      %7248 = vmatmul.bf16.gmra.mxu0 %v6690
      %v7249 = vpop.f32.mrf.mxu0
      %v7250 = vadd.f32 %v5753, %v7249
      %v7251 = vpop.f32.mrf.mxu0
      %v7252 = vadd.f32 %v5755, %v7251
      %7253 = vmatmul.bf16.gmra.mxu0 %v6693
      %v7254 = vpop.f32.mrf.mxu0
      %v7255 = vadd.f32 %v5758, %v7254
      %v7256 = vpop.f32.mrf.mxu0
      %v7257 = vadd.f32 %v5760, %v7256
      %7258 = vmatmul.bf16.gmra.mxu0 %v6696
      %v7259 = vpop.f32.mrf.mxu0
      %v7260 = vadd.f32 %v5763, %v7259
      %v7261 = vpop.f32.mrf.mxu0
      %v7262 = vadd.f32 %v5765, %v7261
      %7263 = vmatmul.bf16.gmra.mxu0 %v6699
      %v7264 = vpop.f32.mrf.mxu0
      %v7265 = vadd.f32 %v5768, %v7264
      %v7266 = vpop.f32.mrf.mxu0
      %v7267 = vadd.f32 %v5770, %v7266
      %7268 = vmatmul.bf16.gmra.mxu0 %v6702
      %v7269 = vpop.f32.mrf.mxu0
      %v7270 = vadd.f32 %v5773, %v7269
      %v7271 = vpop.f32.mrf.mxu0
      %v7272 = vadd.f32 %v5775, %v7271
      %7273 = vmatmul.bf16.gmra.mxu0 %v6705
      %v7274 = vpop.f32.mrf.mxu0
      %v7275 = vadd.f32 %v5778, %v7274
      %v7276 = vpop.f32.mrf.mxu0
      %v7277 = vadd.f32 %v5780, %v7276
      %7278 = vmatmul.bf16.gmra.mxu0 %v6708
      %v7279 = vpop.f32.mrf.mxu0
      %v7280 = vadd.f32 %v5783, %v7279
      %v7281 = vpop.f32.mrf.mxu0
      %v7282 = vadd.f32 %v5785, %v7281
      %7283 = vmatmul.bf16.gmra.mxu0 %v6711
      %v7284 = vpop.f32.mrf.mxu0
      %v7285 = vadd.f32 %v5788, %v7284
      %v7286 = vpop.f32.mrf.mxu0
      %v7287 = vadd.f32 %v5790, %v7286
      %7288 = vmatmul.bf16.gmra.mxu0 %v6714
      %v7289 = vpop.f32.mrf.mxu0
      %v7290 = vadd.f32 %v5793, %v7289
      %v7291 = vpop.f32.mrf.mxu0
      %v7292 = vadd.f32 %v5795, %v7291
      %7293 = vmatmul.bf16.gmra.mxu0 %v6717
      %v7294 = vpop.f32.mrf.mxu0
      %v7295 = vadd.f32 %v5798, %v7294
      %v7296 = vpop.f32.mrf.mxu0
      %v7297 = vadd.f32 %v5800, %v7296
      %7298 = vmatmul.bf16.gmra.mxu0 %v6720
      %v7299 = vpop.f32.mrf.mxu0
      %v7300 = vadd.f32 %v5803, %v7299
      %v7301 = vpop.f32.mrf.mxu0
      %v7302 = vadd.f32 %v5805, %v7301
      %7303 = vmatmul.bf16.gmra.mxu0 %v6723
      %v7304 = vpop.f32.mrf.mxu0
      %v7305 = vadd.f32 %v5808, %v7304
      %v7306 = vpop.f32.mrf.mxu0
      %v7307 = vadd.f32 %v5810, %v7306
      %7308 = vmatmul.bf16.gmra.mxu0 %v6726
      %v7309 = vpop.f32.mrf.mxu0
      %v7310 = vadd.f32 %v5813, %v7309
      %v7311 = vpop.f32.mrf.mxu0
      %v7312 = vadd.f32 %v5815, %v7311
      %7313 = vmatmul.bf16.gmra.mxu0 %v6729
      %v7314 = vpop.f32.mrf.mxu0
      %v7315 = vadd.f32 %v5818, %v7314
      %v7316 = vpop.f32.mrf.mxu0
      %v7317 = vadd.f32 %v5820, %v7316
      %7318 = vmatmul.bf16.gmra.mxu0 %v6732
      %v7319 = vpop.f32.mrf.mxu0
      %v7320 = vadd.f32 %v5823, %v7319
      %v7321 = vpop.f32.mrf.mxu0
      %v7322 = vadd.f32 %v5825, %v7321
      %7323 = vmatmul.bf16.gmra.mxu0 %v6735
      %v7324 = vpop.f32.mrf.mxu0
      %v7325 = vadd.f32 %v5828, %v7324
      %v7326 = vpop.f32.mrf.mxu0
      %v7327 = vadd.f32 %v5830, %v7326
      %7328 = vmatmul.bf16.gmra.mxu0 %v6738
      %v7329 = vpop.f32.mrf.mxu0
      %v7330 = vadd.f32 %v5833, %v7329
      %v7331 = vpop.f32.mrf.mxu0
      %v7332 = vadd.f32 %v5835, %v7331
      %7333 = vmatmul.bf16.gmra.mxu0 %v6741
      %v7334 = vpop.f32.mrf.mxu0
      %v7335 = vadd.f32 %v5838, %v7334
      %v7336 = vpop.f32.mrf.mxu0
      %v7337 = vadd.f32 %v5840, %v7336
      %7338 = vmatmul.bf16.gmra.mxu0 %v6744
      %v7339 = vpop.f32.mrf.mxu0
      %v7340 = vadd.f32 %v5843, %v7339
      %v7341 = vpop.f32.mrf.mxu0
      %v7342 = vadd.f32 %v5845, %v7341
      %7343 = vmatmul.bf16.gmra.mxu0 %v6747
      %v7344 = vpop.f32.mrf.mxu0
      %v7345 = vadd.f32 %v5848, %v7344
      %v7346 = vpop.f32.mrf.mxu0
      %v7347 = vadd.f32 %v5850, %v7346
      %7348 = vmatmul.bf16.gmra.mxu0 %v6750
      %v7349 = vpop.f32.mrf.mxu0
      %v7350 = vadd.f32 %v5853, %v7349
      %v7351 = vpop.f32.mrf.mxu0
      %v7352 = vadd.f32 %v5855, %v7351
      %7353 = vmatmul.bf16.gmra.mxu0 %v6753
      %v7354 = vpop.f32.mrf.mxu0
      %v7355 = vadd.f32 %v5858, %v7354
      %v7356 = vpop.f32.mrf.mxu0
      %v7357 = vadd.f32 %v5860, %v7356
      %7358 = vmatmul.bf16.gmra.mxu0 %v6756
      %v7359 = vpop.f32.mrf.mxu0
      %v7360 = vadd.f32 %v5863, %v7359
      %v7361 = vpop.f32.mrf.mxu0
      %v7362 = vadd.f32 %v5865, %v7361
      %7363 = vmatmul.bf16.gmra.mxu0 %v6759
      %v7364 = vpop.f32.mrf.mxu0
      %v7365 = vadd.f32 %v5868, %v7364
      %v7366 = vpop.f32.mrf.mxu0
      %v7367 = vadd.f32 %v5870, %v7366
      %7368 = vmatmul.bf16.gmra.mxu0 %v6762
      %v7369 = vpop.f32.mrf.mxu0
      %v7370 = vadd.f32 %v5873, %v7369
      %v7371 = vpop.f32.mrf.mxu0
      %v7372 = vadd.f32 %v5875, %v7371
      %7373 = vmatmul.bf16.gmra.mxu0 %v6765
      %v7374 = vpop.f32.mrf.mxu0
      %v7375 = vadd.f32 %v5878, %v7374
      %v7376 = vpop.f32.mrf.mxu0
      %v7377 = vadd.f32 %v5880, %v7376
      %7378 = vmatmul.bf16.gmra.mxu0 %v6768
      %v7379 = vpop.f32.mrf.mxu0
      %v7380 = vadd.f32 %v5883, %v7379
      %v7381 = vpop.f32.mrf.mxu0
      %v7382 = vadd.f32 %v5885, %v7381
      %7383 = vmatmul.bf16.gmra.mxu0 %v6771
      %v7384 = vpop.f32.mrf.mxu0
      %v7385 = vadd.f32 %v5888, %v7384
      %v7386 = vpop.f32.mrf.mxu0
      %v7387 = vadd.f32 %v5890, %v7386
      %7388 = vmatmul.bf16.gmra.mxu0 %v6774
      %v7389 = vpop.f32.mrf.mxu0
      %v7390 = vadd.f32 %v5893, %v7389
      %v7391 = vpop.f32.mrf.mxu0
      %v7392 = vadd.f32 %v5895, %v7391
      %7393 = vmatmul.bf16.gmra.mxu0 %v6777
      %v7394 = vpop.f32.mrf.mxu0
      %v7395 = vadd.f32 %v5898, %v7394
      %v7396 = vpop.f32.mrf.mxu0
      %v7397 = vadd.f32 %v5900, %v7396
      %7398 = vmatmul.bf16.gmra.mxu0 %v6780
      %v7399 = vpop.f32.mrf.mxu0
      %v7400 = vadd.f32 %v5903, %v7399
      %v7401 = vpop.f32.mrf.mxu0
      %v7402 = vadd.f32 %v5905, %v7401
      %7403 = vmatmul.bf16.gmra.mxu0 %v6783
      %v7404 = vpop.f32.mrf.mxu0
      %v7405 = vadd.f32 %v5908, %v7404
      %v7406 = vpop.f32.mrf.mxu0
      %v7407 = vadd.f32 %v5910, %v7406
      %7408 = vmatmul.bf16.gmra.mxu0 %v6786
      %v7409 = vpop.f32.mrf.mxu0
      %v7410 = vadd.f32 %v5913, %v7409
      %v7411 = vpop.f32.mrf.mxu0
      %v7412 = vadd.f32 %v5915, %v7411
      %7413 = vmatmul.bf16.gmra.mxu0 %v6789
      %v7414 = vpop.f32.mrf.mxu0
      %v7415 = vadd.f32 %v5918, %v7414
      %v7416 = vpop.f32.mrf.mxu0
      %v7417 = vadd.f32 %v5920, %v7416
      %7418 = vmatmul.bf16.gmra.mxu0 %v6792
      %v7419 = vpop.f32.mrf.mxu0
      %v7420 = vadd.f32 %v5923, %v7419
      %v7421 = vpop.f32.mrf.mxu0
      %v7422 = vadd.f32 %v5925, %v7421
      %7423 = vmatmul.bf16.gmra.mxu0 %v6795
      %v7424 = vpop.f32.mrf.mxu0
      %v7425 = vadd.f32 %v5928, %v7424
      %v7426 = vpop.f32.mrf.mxu0
      %v7427 = vadd.f32 %v5930, %v7426
      %7428 = vmatmul.bf16.gmra.mxu0 %v6798
      %v7429 = vpop.f32.mrf.mxu0
      %v7430 = vadd.f32 %v5933, %v7429
      %v7431 = vpop.f32.mrf.mxu0
      %v7432 = vadd.f32 %v5935, %v7431
      %7433 = vmatmul.bf16.gmra.mxu0 %v6801
      %v7434 = vpop.f32.mrf.mxu0
      %v7435 = vadd.f32 %v5938, %v7434
      %v7436 = vpop.f32.mrf.mxu0
      %v7437 = vadd.f32 %v5940, %v7436
      %7438 = vmatmul.bf16.gmra.mxu0 %v6804
      %v7439 = vpop.f32.mrf.mxu0
      %v7440 = vadd.f32 %v5943, %v7439
      %v7441 = vpop.f32.mrf.mxu0
      %v7442 = vadd.f32 %v5945, %v7441
      %7443 = vmatmul.bf16.gmra.mxu0 %v6807
      %v7444 = vpop.f32.mrf.mxu0
      %v7445 = vadd.f32 %v5948, %v7444
      %v7446 = vpop.f32.mrf.mxu0
      %v7447 = vadd.f32 %v5950, %v7446
      %7448 = vmatmul.bf16.gmra.mxu0 %v6810
      %v7449 = vpop.f32.mrf.mxu0
      %v7450 = vadd.f32 %v5953, %v7449
      %v7451 = vpop.f32.mrf.mxu0
      %v7452 = vadd.f32 %v5955, %v7451
      %7453 = vmatmul.bf16.gmra.mxu0 %v6813
      %v7454 = vpop.f32.mrf.mxu0
      %v7455 = vadd.f32 %v5958, %v7454
      %v7456 = vpop.f32.mrf.mxu0
      %v7457 = vadd.f32 %v5960, %v7456
      %7458 = vmatmul.bf16.gmra.mxu0 %v6816
      %v7459 = vpop.f32.mrf.mxu0
      %v7460 = vadd.f32 %v5963, %v7459
      %v7461 = vpop.f32.mrf.mxu0
      %v7462 = vadd.f32 %v5965, %v7461
      %7463 = vmatmul.bf16.gmra.mxu0 %v6819
      %v7464 = vpop.f32.mrf.mxu0
      %v7465 = vadd.f32 %v5968, %v7464
      %v7466 = vpop.f32.mrf.mxu0
      %v7467 = vadd.f32 %v5970, %v7466
      %7468 = vmatmul.bf16.gmra.mxu0 %v6822
      %v7469 = vpop.f32.mrf.mxu0
      %v7470 = vadd.f32 %v5973, %v7469
      %v7471 = vpop.f32.mrf.mxu0
      %v7472 = vadd.f32 %v5975, %v7471
      %7473 = vmatmul.bf16.gmra.mxu0 %v6825
      %v7474 = vpop.f32.mrf.mxu0
      %v7475 = vadd.f32 %v5978, %v7474
      %v7476 = vpop.f32.mrf.mxu0
      %v7477 = vadd.f32 %v5980, %v7476
      %7478 = vmatmul.bf16.gmra.mxu0 %v6828
      %v7479 = vpop.f32.mrf.mxu0
      %v7480 = vadd.f32 %v5983, %v7479
      %v7481 = vpop.f32.mrf.mxu0
      %v7482 = vadd.f32 %v5985, %v7481
      %7483 = vmatmul.bf16.gmra.mxu0 %v6831
      %v7484 = vpop.f32.mrf.mxu0
      %v7485 = vadd.f32 %v5988, %v7484
      %v7486 = vpop.f32.mrf.mxu0
      %v7487 = vadd.f32 %v5990, %v7486
      %7488 = vmatmul.bf16.gmra.mxu0 %v6834
      %v7489 = vpop.f32.mrf.mxu0
      %v7490 = vadd.f32 %v5993, %v7489
      %v7491 = vpop.f32.mrf.mxu0
      %v7492 = vadd.f32 %v5995, %v7491
      %7493 = vmatmul.bf16.gmra.mxu0 %v6837
      %v7494 = vpop.f32.mrf.mxu0
      %v7495 = vadd.f32 %v5998, %v7494
      %v7496 = vpop.f32.mrf.mxu0
      %v7497 = vadd.f32 %v6000, %v7496
      %7498 = vmatmul.bf16.gmra.mxu0 %v6840
      %v7499 = vpop.f32.mrf.mxu0
      %v7500 = vadd.f32 %v6003, %v7499
      %v7501 = vpop.f32.mrf.mxu0
      %v7502 = vadd.f32 %v6005, %v7501
      %7503 = vmatmul.bf16.gmra.mxu0 %v6843
      %v7504 = vpop.f32.mrf.mxu0
      %v7505 = vadd.f32 %v6008, %v7504
      %v7506 = vpop.f32.mrf.mxu0
      %v7507 = vadd.f32 %v6010, %v7506
      %7508 = vmatmul.bf16.gmra.mxu0 %v6846
      %v7509 = vpop.f32.mrf.mxu0
      %v7510 = vadd.f32 %v6013, %v7509
      %v7511 = vpop.f32.mrf.mxu0
      %v7512 = vadd.f32 %v6015, %v7511
      %7513 = vdwg.mxu0
      %7514 = vmatpush.bf16.msra.mxu0 %v7152
      %7515 = vmatpush.bf16.msra.mxu0 %v7151
      %7516 = vmatpush.bf16.msra.mxu0 %v7150
      %7517 = vmatpush.bf16.msra.mxu0 %v7149
      %7518 = vmatpush.bf16.msra.mxu0 %v7148
      %7519 = vmatpush.bf16.msra.mxu0 %v7147
      %7520 = vmatpush.bf16.msra.mxu0 %v7146
      %7521 = vmatpush.bf16.msra.mxu0 %v7145
      %7522 = vmatmul.bf16.gmra.mxu0 %v6658
      %v7523 = vpop.f32.mrf.mxu0
      %v7524 = vadd.f32 %v7195, %v7523
      %v7525 = vpop.f32.mrf.mxu0
      %v7526 = vadd.f32 %v7197, %v7525
      %7527 = vmatmul.bf16.gmra.mxu0 %v6661
      %v7528 = vpop.f32.mrf.mxu0
      %v7529 = vadd.f32 %v7200, %v7528
      %v7530 = vpop.f32.mrf.mxu0
      %v7531 = vadd.f32 %v7202, %v7530
      %7532 = vmatmul.bf16.gmra.mxu0 %v6664
      %v7533 = vpop.f32.mrf.mxu0
      %v7534 = vadd.f32 %v7205, %v7533
      %v7535 = vpop.f32.mrf.mxu0
      %v7536 = vadd.f32 %v7207, %v7535
      %7537 = vmatmul.bf16.gmra.mxu0 %v6667
      %v7538 = vpop.f32.mrf.mxu0
      %v7539 = vadd.f32 %v7210, %v7538
      %v7540 = vpop.f32.mrf.mxu0
      %v7541 = vadd.f32 %v7212, %v7540
      %7542 = vmatmul.bf16.gmra.mxu0 %v6670
      %v7543 = vpop.f32.mrf.mxu0
      %v7544 = vadd.f32 %v7215, %v7543
      %v7545 = vpop.f32.mrf.mxu0
      %v7546 = vadd.f32 %v7217, %v7545
      %7547 = vmatmul.bf16.gmra.mxu0 %v6673
      %v7548 = vpop.f32.mrf.mxu0
      %v7549 = vadd.f32 %v7220, %v7548
      %v7550 = vpop.f32.mrf.mxu0
      %v7551 = vadd.f32 %v7222, %v7550
      %7552 = vmatmul.bf16.gmra.mxu0 %v6676
      %v7553 = vpop.f32.mrf.mxu0
      %v7554 = vadd.f32 %v7225, %v7553
      %v7555 = vpop.f32.mrf.mxu0
      %v7556 = vadd.f32 %v7227, %v7555
      %7557 = vmatmul.bf16.gmra.mxu0 %v6679
      %v7558 = vpop.f32.mrf.mxu0
      %v7559 = vadd.f32 %v7230, %v7558
      %v7560 = vpop.f32.mrf.mxu0
      %v7561 = vadd.f32 %v7232, %v7560
      %7562 = vmatmul.bf16.gmra.mxu0 %v6682
      %v7563 = vpop.f32.mrf.mxu0
      %v7564 = vadd.f32 %v7235, %v7563
      %v7565 = vpop.f32.mrf.mxu0
      %v7566 = vadd.f32 %v7237, %v7565
      %7567 = vmatmul.bf16.gmra.mxu0 %v6685
      %v7568 = vpop.f32.mrf.mxu0
      %v7569 = vadd.f32 %v7240, %v7568
      %v7570 = vpop.f32.mrf.mxu0
      %v7571 = vadd.f32 %v7242, %v7570
      %7572 = vmatmul.bf16.gmra.mxu0 %v6688
      %v7573 = vpop.f32.mrf.mxu0
      %v7574 = vadd.f32 %v7245, %v7573
      %v7575 = vpop.f32.mrf.mxu0
      %v7576 = vadd.f32 %v7247, %v7575
      %7577 = vmatmul.bf16.gmra.mxu0 %v6691
      %v7578 = vpop.f32.mrf.mxu0
      %v7579 = vadd.f32 %v7250, %v7578
      %v7580 = vpop.f32.mrf.mxu0
      %v7581 = vadd.f32 %v7252, %v7580
      %7582 = vmatmul.bf16.gmra.mxu0 %v6694
      %v7583 = vpop.f32.mrf.mxu0
      %v7584 = vadd.f32 %v7255, %v7583
      %v7585 = vpop.f32.mrf.mxu0
      %v7586 = vadd.f32 %v7257, %v7585
      %7587 = vmatmul.bf16.gmra.mxu0 %v6697
      %v7588 = vpop.f32.mrf.mxu0
      %v7589 = vadd.f32 %v7260, %v7588
      %v7590 = vpop.f32.mrf.mxu0
      %v7591 = vadd.f32 %v7262, %v7590
      %7592 = vmatmul.bf16.gmra.mxu0 %v6700
      %v7593 = vpop.f32.mrf.mxu0
      %v7594 = vadd.f32 %v7265, %v7593
      %v7595 = vpop.f32.mrf.mxu0
      %v7596 = vadd.f32 %v7267, %v7595
      %7597 = vmatmul.bf16.gmra.mxu0 %v6703
      %v7598 = vpop.f32.mrf.mxu0
      %v7599 = vadd.f32 %v7270, %v7598
      %v7600 = vpop.f32.mrf.mxu0
      %v7601 = vadd.f32 %v7272, %v7600
      %7602 = vmatmul.bf16.gmra.mxu0 %v6706
      %v7603 = vpop.f32.mrf.mxu0
      %v7604 = vadd.f32 %v7275, %v7603
      %v7605 = vpop.f32.mrf.mxu0
      %v7606 = vadd.f32 %v7277, %v7605
      %7607 = vmatmul.bf16.gmra.mxu0 %v6709
      %v7608 = vpop.f32.mrf.mxu0
      %v7609 = vadd.f32 %v7280, %v7608
      %v7610 = vpop.f32.mrf.mxu0
      %v7611 = vadd.f32 %v7282, %v7610
      %7612 = vmatmul.bf16.gmra.mxu0 %v6712
      %v7613 = vpop.f32.mrf.mxu0
      %v7614 = vadd.f32 %v7285, %v7613
      %v7615 = vpop.f32.mrf.mxu0
      %v7616 = vadd.f32 %v7287, %v7615
      %7617 = vmatmul.bf16.gmra.mxu0 %v6715
      %v7618 = vpop.f32.mrf.mxu0
      %v7619 = vadd.f32 %v7290, %v7618
      %v7620 = vpop.f32.mrf.mxu0
      %v7621 = vadd.f32 %v7292, %v7620
      %7622 = vmatmul.bf16.gmra.mxu0 %v6718
      %v7623 = vpop.f32.mrf.mxu0
      %v7624 = vadd.f32 %v7295, %v7623
      %v7625 = vpop.f32.mrf.mxu0
      %v7626 = vadd.f32 %v7297, %v7625
      %7627 = vmatmul.bf16.gmra.mxu0 %v6721
      %v7628 = vpop.f32.mrf.mxu0
      %v7629 = vadd.f32 %v7300, %v7628
      %v7630 = vpop.f32.mrf.mxu0
      %v7631 = vadd.f32 %v7302, %v7630
      %7632 = vmatmul.bf16.gmra.mxu0 %v6724
      %v7633 = vpop.f32.mrf.mxu0
      %v7634 = vadd.f32 %v7305, %v7633
      %v7635 = vpop.f32.mrf.mxu0
      %v7636 = vadd.f32 %v7307, %v7635
      %7637 = vmatmul.bf16.gmra.mxu0 %v6727
      %v7638 = vpop.f32.mrf.mxu0
      %v7639 = vadd.f32 %v7310, %v7638
      %v7640 = vpop.f32.mrf.mxu0
      %v7641 = vadd.f32 %v7312, %v7640
      %7642 = vmatmul.bf16.gmra.mxu0 %v6730
      %v7643 = vpop.f32.mrf.mxu0
      %v7644 = vadd.f32 %v7315, %v7643
      %v7645 = vpop.f32.mrf.mxu0
      %v7646 = vadd.f32 %v7317, %v7645
      %7647 = vmatmul.bf16.gmra.mxu0 %v6733
      %v7648 = vpop.f32.mrf.mxu0
      %v7649 = vadd.f32 %v7320, %v7648
      %v7650 = vpop.f32.mrf.mxu0
      %v7651 = vadd.f32 %v7322, %v7650
      %7652 = vmatmul.bf16.gmra.mxu0 %v6736
      %v7653 = vpop.f32.mrf.mxu0
      %v7654 = vadd.f32 %v7325, %v7653
      %v7655 = vpop.f32.mrf.mxu0
      %v7656 = vadd.f32 %v7327, %v7655
      %7657 = vmatmul.bf16.gmra.mxu0 %v6739
      %v7658 = vpop.f32.mrf.mxu0
      %v7659 = vadd.f32 %v7330, %v7658
      %v7660 = vpop.f32.mrf.mxu0
      %v7661 = vadd.f32 %v7332, %v7660
      %7662 = vmatmul.bf16.gmra.mxu0 %v6742
      %v7663 = vpop.f32.mrf.mxu0
      %v7664 = vadd.f32 %v7335, %v7663
      %v7665 = vpop.f32.mrf.mxu0
      %v7666 = vadd.f32 %v7337, %v7665
      %7667 = vmatmul.bf16.gmra.mxu0 %v6745
      %v7668 = vpop.f32.mrf.mxu0
      %v7669 = vadd.f32 %v7340, %v7668
      %v7670 = vpop.f32.mrf.mxu0
      %v7671 = vadd.f32 %v7342, %v7670
      %7672 = vmatmul.bf16.gmra.mxu0 %v6748
      %v7673 = vpop.f32.mrf.mxu0
      %v7674 = vadd.f32 %v7345, %v7673
      %v7675 = vpop.f32.mrf.mxu0
      %v7676 = vadd.f32 %v7347, %v7675
      %7677 = vmatmul.bf16.gmra.mxu0 %v6751
      %v7678 = vpop.f32.mrf.mxu0
      %v7679 = vadd.f32 %v7350, %v7678
      %v7680 = vpop.f32.mrf.mxu0
      %v7681 = vadd.f32 %v7352, %v7680
      %7682 = vmatmul.bf16.gmra.mxu0 %v6754
      %v7683 = vpop.f32.mrf.mxu0
      %v7684 = vadd.f32 %v7355, %v7683
      %v7685 = vpop.f32.mrf.mxu0
      %v7686 = vadd.f32 %v7357, %v7685
      %7687 = vmatmul.bf16.gmra.mxu0 %v6757
      %v7688 = vpop.f32.mrf.mxu0
      %v7689 = vadd.f32 %v7360, %v7688
      %v7690 = vpop.f32.mrf.mxu0
      %v7691 = vadd.f32 %v7362, %v7690
      %7692 = vmatmul.bf16.gmra.mxu0 %v6760
      %v7693 = vpop.f32.mrf.mxu0
      %v7694 = vadd.f32 %v7365, %v7693
      %v7695 = vpop.f32.mrf.mxu0
      %v7696 = vadd.f32 %v7367, %v7695
      %7697 = vmatmul.bf16.gmra.mxu0 %v6763
      %v7698 = vpop.f32.mrf.mxu0
      %v7699 = vadd.f32 %v7370, %v7698
      %v7700 = vpop.f32.mrf.mxu0
      %v7701 = vadd.f32 %v7372, %v7700
      %7702 = vmatmul.bf16.gmra.mxu0 %v6766
      %v7703 = vpop.f32.mrf.mxu0
      %v7704 = vadd.f32 %v7375, %v7703
      %v7705 = vpop.f32.mrf.mxu0
      %v7706 = vadd.f32 %v7377, %v7705
      %7707 = vmatmul.bf16.gmra.mxu0 %v6769
      %v7708 = vpop.f32.mrf.mxu0
      %v7709 = vadd.f32 %v7380, %v7708
      %v7710 = vpop.f32.mrf.mxu0
      %v7711 = vadd.f32 %v7382, %v7710
      %7712 = vmatmul.bf16.gmra.mxu0 %v6772
      %v7713 = vpop.f32.mrf.mxu0
      %v7714 = vadd.f32 %v7385, %v7713
      %v7715 = vpop.f32.mrf.mxu0
      %v7716 = vadd.f32 %v7387, %v7715
      %7717 = vmatmul.bf16.gmra.mxu0 %v6775
      %v7718 = vpop.f32.mrf.mxu0
      %v7719 = vadd.f32 %v7390, %v7718
      %v7720 = vpop.f32.mrf.mxu0
      %v7721 = vadd.f32 %v7392, %v7720
      %7722 = vmatmul.bf16.gmra.mxu0 %v6778
      %v7723 = vpop.f32.mrf.mxu0
      %v7724 = vadd.f32 %v7395, %v7723
      %v7725 = vpop.f32.mrf.mxu0
      %v7726 = vadd.f32 %v7397, %v7725
      %7727 = vmatmul.bf16.gmra.mxu0 %v6781
      %v7728 = vpop.f32.mrf.mxu0
      %v7729 = vadd.f32 %v7400, %v7728
      %v7730 = vpop.f32.mrf.mxu0
      %v7731 = vadd.f32 %v7402, %v7730
      %7732 = vmatmul.bf16.gmra.mxu0 %v6784
      %v7733 = vpop.f32.mrf.mxu0
      %v7734 = vadd.f32 %v7405, %v7733
      %v7735 = vpop.f32.mrf.mxu0
      %v7736 = vadd.f32 %v7407, %v7735
      %7737 = vmatmul.bf16.gmra.mxu0 %v6787
      %v7738 = vpop.f32.mrf.mxu0
      %v7739 = vadd.f32 %v7410, %v7738
      %v7740 = vpop.f32.mrf.mxu0
      %v7741 = vadd.f32 %v7412, %v7740
      %7742 = vmatmul.bf16.gmra.mxu0 %v6790
      %v7743 = vpop.f32.mrf.mxu0
      %v7744 = vadd.f32 %v7415, %v7743
      %v7745 = vpop.f32.mrf.mxu0
      %v7746 = vadd.f32 %v7417, %v7745
      %7747 = vmatmul.bf16.gmra.mxu0 %v6793
      %v7748 = vpop.f32.mrf.mxu0
      %v7749 = vadd.f32 %v7420, %v7748
      %v7750 = vpop.f32.mrf.mxu0
      %v7751 = vadd.f32 %v7422, %v7750
      %7752 = vmatmul.bf16.gmra.mxu0 %v6796
      %v7753 = vpop.f32.mrf.mxu0
      %v7754 = vadd.f32 %v7425, %v7753
      %v7755 = vpop.f32.mrf.mxu0
      %v7756 = vadd.f32 %v7427, %v7755
      %7757 = vmatmul.bf16.gmra.mxu0 %v6799
      %v7758 = vpop.f32.mrf.mxu0
      %v7759 = vadd.f32 %v7430, %v7758
      %v7760 = vpop.f32.mrf.mxu0
      %v7761 = vadd.f32 %v7432, %v7760
      %7762 = vmatmul.bf16.gmra.mxu0 %v6802
      %v7763 = vpop.f32.mrf.mxu0
      %v7764 = vadd.f32 %v7435, %v7763
      %v7765 = vpop.f32.mrf.mxu0
      %v7766 = vadd.f32 %v7437, %v7765
      %7767 = vmatmul.bf16.gmra.mxu0 %v6805
      %v7768 = vpop.f32.mrf.mxu0
      %v7769 = vadd.f32 %v7440, %v7768
      %v7770 = vpop.f32.mrf.mxu0
      %v7771 = vadd.f32 %v7442, %v7770
      %7772 = vmatmul.bf16.gmra.mxu0 %v6808
      %v7773 = vpop.f32.mrf.mxu0
      %v7774 = vadd.f32 %v7445, %v7773
      %v7775 = vpop.f32.mrf.mxu0
      %v7776 = vadd.f32 %v7447, %v7775
      %7777 = vmatmul.bf16.gmra.mxu0 %v6811
      %v7778 = vpop.f32.mrf.mxu0
      %v7779 = vadd.f32 %v7450, %v7778
      %v7780 = vpop.f32.mrf.mxu0
      %v7781 = vadd.f32 %v7452, %v7780
      %7782 = vmatmul.bf16.gmra.mxu0 %v6814
      %v7783 = vpop.f32.mrf.mxu0
      %v7784 = vadd.f32 %v7455, %v7783
      %v7785 = vpop.f32.mrf.mxu0
      %v7786 = vadd.f32 %v7457, %v7785
      %7787 = vmatmul.bf16.gmra.mxu0 %v6817
      %v7788 = vpop.f32.mrf.mxu0
      %v7789 = vadd.f32 %v7460, %v7788
      %v7790 = vpop.f32.mrf.mxu0
      %v7791 = vadd.f32 %v7462, %v7790
      %7792 = vmatmul.bf16.gmra.mxu0 %v6820
      %v7793 = vpop.f32.mrf.mxu0
      %v7794 = vadd.f32 %v7465, %v7793
      %v7795 = vpop.f32.mrf.mxu0
      %v7796 = vadd.f32 %v7467, %v7795
      %7797 = vmatmul.bf16.gmra.mxu0 %v6823
      %v7798 = vpop.f32.mrf.mxu0
      %v7799 = vadd.f32 %v7470, %v7798
      %v7800 = vpop.f32.mrf.mxu0
      %v7801 = vadd.f32 %v7472, %v7800
      %7802 = vmatmul.bf16.gmra.mxu0 %v6826
      %v7803 = vpop.f32.mrf.mxu0
      %v7804 = vadd.f32 %v7475, %v7803
      %v7805 = vpop.f32.mrf.mxu0
      %v7806 = vadd.f32 %v7477, %v7805
      %7807 = vmatmul.bf16.gmra.mxu0 %v6829
      %v7808 = vpop.f32.mrf.mxu0
      %v7809 = vadd.f32 %v7480, %v7808
      %v7810 = vpop.f32.mrf.mxu0
      %v7811 = vadd.f32 %v7482, %v7810
      %7812 = vmatmul.bf16.gmra.mxu0 %v6832
      %v7813 = vpop.f32.mrf.mxu0
      %v7814 = vadd.f32 %v7485, %v7813
      %v7815 = vpop.f32.mrf.mxu0
      %v7816 = vadd.f32 %v7487, %v7815
      %7817 = vmatmul.bf16.gmra.mxu0 %v6835
      %v7818 = vpop.f32.mrf.mxu0
      %v7819 = vadd.f32 %v7490, %v7818
      %v7820 = vpop.f32.mrf.mxu0
      %v7821 = vadd.f32 %v7492, %v7820
      %7822 = vmatmul.bf16.gmra.mxu0 %v6838
      %v7823 = vpop.f32.mrf.mxu0
      %v7824 = vadd.f32 %v7495, %v7823
      %v7825 = vpop.f32.mrf.mxu0
      %v7826 = vadd.f32 %v7497, %v7825
      %7827 = vmatmul.bf16.gmra.mxu0 %v6841
      %v7828 = vpop.f32.mrf.mxu0
      %v7829 = vadd.f32 %v7500, %v7828
      %v7830 = vpop.f32.mrf.mxu0
      %v7831 = vadd.f32 %v7502, %v7830
      %7832 = vmatmul.bf16.gmra.mxu0 %v6844
      %v7833 = vpop.f32.mrf.mxu0
      %v7834 = vadd.f32 %v7505, %v7833
      %v7835 = vpop.f32.mrf.mxu0
      %v7836 = vadd.f32 %v7507, %v7835
      %7837 = vmatmul.bf16.gmra.mxu0 %v6847
      %v7838 = vpop.f32.mrf.mxu0
      %v7839 = vadd.f32 %v7510, %v7838
      %v7840 = vpop.f32.mrf.mxu0
      %v7841 = vadd.f32 %v7512, %v7840
      %7842 = vdwg.mxu0
      %7843 = vmatpush.bf16.msra.mxu0 %v7160
      %7844 = vmatpush.bf16.msra.mxu0 %v7159
      %7845 = vmatpush.bf16.msra.mxu0 %v7158
      %7846 = vmatpush.bf16.msra.mxu0 %v7157
      %7847 = vmatpush.bf16.msra.mxu0 %v7156
      %7848 = vmatpush.bf16.msra.mxu0 %v7155
      %7849 = vmatpush.bf16.msra.mxu0 %v7154
      %7850 = vmatpush.bf16.msra.mxu0 %v7153
      %7851 = vmatmul.bf16.gmra.mxu0 %v6659
      %v7852 = vpop.f32.mrf.mxu0
      %v7853 = vadd.f32 %v7524, %v7852
      %v7854 = vpop.f32.mrf.mxu0
      %v7855 = vadd.f32 %v7526, %v7854
      %7856 = vmatmul.bf16.gmra.mxu0 %v6662
      %v7857 = vpop.f32.mrf.mxu0
      %v7858 = vadd.f32 %v7529, %v7857
      %v7859 = vpop.f32.mrf.mxu0
      %v7860 = vadd.f32 %v7531, %v7859
      %7861 = vmatmul.bf16.gmra.mxu0 %v6665
      %v7862 = vpop.f32.mrf.mxu0
      %v7863 = vadd.f32 %v7534, %v7862
      %v7864 = vpop.f32.mrf.mxu0
      %v7865 = vadd.f32 %v7536, %v7864
      %7866 = vmatmul.bf16.gmra.mxu0 %v6668
      %v7867 = vpop.f32.mrf.mxu0
      %v7868 = vadd.f32 %v7539, %v7867
      %v7869 = vpop.f32.mrf.mxu0
      %v7870 = vadd.f32 %v7541, %v7869
      %7871 = vmatmul.bf16.gmra.mxu0 %v6671
      %v7872 = vpop.f32.mrf.mxu0
      %v7873 = vadd.f32 %v7544, %v7872
      %v7874 = vpop.f32.mrf.mxu0
      %v7875 = vadd.f32 %v7546, %v7874
      %7876 = vmatmul.bf16.gmra.mxu0 %v6674
      %v7877 = vpop.f32.mrf.mxu0
      %v7878 = vadd.f32 %v7549, %v7877
      %v7879 = vpop.f32.mrf.mxu0
      %v7880 = vadd.f32 %v7551, %v7879
      %7881 = vmatmul.bf16.gmra.mxu0 %v6677
      %v7882 = vpop.f32.mrf.mxu0
      %v7883 = vadd.f32 %v7554, %v7882
      %v7884 = vpop.f32.mrf.mxu0
      %v7885 = vadd.f32 %v7556, %v7884
      %7886 = vmatmul.bf16.gmra.mxu0 %v6680
      %v7887 = vpop.f32.mrf.mxu0
      %v7888 = vadd.f32 %v7559, %v7887
      %v7889 = vpop.f32.mrf.mxu0
      %v7890 = vadd.f32 %v7561, %v7889
      %7891 = vmatmul.bf16.gmra.mxu0 %v6683
      %v7892 = vpop.f32.mrf.mxu0
      %v7893 = vadd.f32 %v7564, %v7892
      %v7894 = vpop.f32.mrf.mxu0
      %v7895 = vadd.f32 %v7566, %v7894
      %7896 = vmatmul.bf16.gmra.mxu0 %v6686
      %v7897 = vpop.f32.mrf.mxu0
      %v7898 = vadd.f32 %v7569, %v7897
      %v7899 = vpop.f32.mrf.mxu0
      %v7900 = vadd.f32 %v7571, %v7899
      %7901 = vmatmul.bf16.gmra.mxu0 %v6689
      %v7902 = vpop.f32.mrf.mxu0
      %v7903 = vadd.f32 %v7574, %v7902
      %v7904 = vpop.f32.mrf.mxu0
      %v7905 = vadd.f32 %v7576, %v7904
      %7906 = vmatmul.bf16.gmra.mxu0 %v6692
      %v7907 = vpop.f32.mrf.mxu0
      %v7908 = vadd.f32 %v7579, %v7907
      %v7909 = vpop.f32.mrf.mxu0
      %v7910 = vadd.f32 %v7581, %v7909
      %7911 = vmatmul.bf16.gmra.mxu0 %v6695
      %v7912 = vpop.f32.mrf.mxu0
      %v7913 = vadd.f32 %v7584, %v7912
      %v7914 = vpop.f32.mrf.mxu0
      %v7915 = vadd.f32 %v7586, %v7914
      %7916 = vmatmul.bf16.gmra.mxu0 %v6698
      %v7917 = vpop.f32.mrf.mxu0
      %v7918 = vadd.f32 %v7589, %v7917
      %v7919 = vpop.f32.mrf.mxu0
      %v7920 = vadd.f32 %v7591, %v7919
      %7921 = vmatmul.bf16.gmra.mxu0 %v6701
      %v7922 = vpop.f32.mrf.mxu0
      %v7923 = vadd.f32 %v7594, %v7922
      %v7924 = vpop.f32.mrf.mxu0
      %v7925 = vadd.f32 %v7596, %v7924
      %7926 = vmatmul.bf16.gmra.mxu0 %v6704
      %v7927 = vpop.f32.mrf.mxu0
      %v7928 = vadd.f32 %v7599, %v7927
      %v7929 = vpop.f32.mrf.mxu0
      %v7930 = vadd.f32 %v7601, %v7929
      %7931 = vmatmul.bf16.gmra.mxu0 %v6707
      %v7932 = vpop.f32.mrf.mxu0
      %v7933 = vadd.f32 %v7604, %v7932
      %v7934 = vpop.f32.mrf.mxu0
      %v7935 = vadd.f32 %v7606, %v7934
      %7936 = vmatmul.bf16.gmra.mxu0 %v6710
      %v7937 = vpop.f32.mrf.mxu0
      %v7938 = vadd.f32 %v7609, %v7937
      %v7939 = vpop.f32.mrf.mxu0
      %v7940 = vadd.f32 %v7611, %v7939
      %7941 = vmatmul.bf16.gmra.mxu0 %v6713
      %v7942 = vpop.f32.mrf.mxu0
      %v7943 = vadd.f32 %v7614, %v7942
      %v7944 = vpop.f32.mrf.mxu0
      %v7945 = vadd.f32 %v7616, %v7944
      %7946 = vmatmul.bf16.gmra.mxu0 %v6716
      %v7947 = vpop.f32.mrf.mxu0
      %v7948 = vadd.f32 %v7619, %v7947
      %v7949 = vpop.f32.mrf.mxu0
      %v7950 = vadd.f32 %v7621, %v7949
      %7951 = vmatmul.bf16.gmra.mxu0 %v6719
      %v7952 = vpop.f32.mrf.mxu0
      %v7953 = vadd.f32 %v7624, %v7952
      %v7954 = vpop.f32.mrf.mxu0
      %v7955 = vadd.f32 %v7626, %v7954
      %7956 = vmatmul.bf16.gmra.mxu0 %v6722
      %v7957 = vpop.f32.mrf.mxu0
      %v7958 = vadd.f32 %v7629, %v7957
      %v7959 = vpop.f32.mrf.mxu0
      %v7960 = vadd.f32 %v7631, %v7959
      %7961 = vmatmul.bf16.gmra.mxu0 %v6725
      %v7962 = vpop.f32.mrf.mxu0
      %v7963 = vadd.f32 %v7634, %v7962
      %v7964 = vpop.f32.mrf.mxu0
      %v7965 = vadd.f32 %v7636, %v7964
      %7966 = vmatmul.bf16.gmra.mxu0 %v6728
      %v7967 = vpop.f32.mrf.mxu0
      %v7968 = vadd.f32 %v7639, %v7967
      %v7969 = vpop.f32.mrf.mxu0
      %v7970 = vadd.f32 %v7641, %v7969
      %7971 = vmatmul.bf16.gmra.mxu0 %v6731
      %v7972 = vpop.f32.mrf.mxu0
      %v7973 = vadd.f32 %v7644, %v7972
      %v7974 = vpop.f32.mrf.mxu0
      %v7975 = vadd.f32 %v7646, %v7974
      %7976 = vmatmul.bf16.gmra.mxu0 %v6734
      %v7977 = vpop.f32.mrf.mxu0
      %v7978 = vadd.f32 %v7649, %v7977
      %v7979 = vpop.f32.mrf.mxu0
      %v7980 = vadd.f32 %v7651, %v7979
      %7981 = vmatmul.bf16.gmra.mxu0 %v6737
      %v7982 = vpop.f32.mrf.mxu0
      %v7983 = vadd.f32 %v7654, %v7982
      %v7984 = vpop.f32.mrf.mxu0
      %v7985 = vadd.f32 %v7656, %v7984
      %7986 = vmatmul.bf16.gmra.mxu0 %v6740
      %v7987 = vpop.f32.mrf.mxu0
      %v7988 = vadd.f32 %v7659, %v7987
      %v7989 = vpop.f32.mrf.mxu0
      %v7990 = vadd.f32 %v7661, %v7989
      %7991 = vmatmul.bf16.gmra.mxu0 %v6743
      %v7992 = vpop.f32.mrf.mxu0
      %v7993 = vadd.f32 %v7664, %v7992
      %v7994 = vpop.f32.mrf.mxu0
      %v7995 = vadd.f32 %v7666, %v7994
      %7996 = vmatmul.bf16.gmra.mxu0 %v6746
      %v7997 = vpop.f32.mrf.mxu0
      %v7998 = vadd.f32 %v7669, %v7997
      %v7999 = vpop.f32.mrf.mxu0
      %v8000 = vadd.f32 %v7671, %v7999
      %8001 = vmatmul.bf16.gmra.mxu0 %v6749
      %v8002 = vpop.f32.mrf.mxu0
      %v8003 = vadd.f32 %v7674, %v8002
      %v8004 = vpop.f32.mrf.mxu0
      %v8005 = vadd.f32 %v7676, %v8004
      %8006 = vmatmul.bf16.gmra.mxu0 %v6752
      %v8007 = vpop.f32.mrf.mxu0
      %v8008 = vadd.f32 %v7679, %v8007
      %v8009 = vpop.f32.mrf.mxu0
      %v8010 = vadd.f32 %v7681, %v8009
      %8011 = vmatmul.bf16.gmra.mxu0 %v6755
      %v8012 = vpop.f32.mrf.mxu0
      %v8013 = vadd.f32 %v7684, %v8012
      %v8014 = vpop.f32.mrf.mxu0
      %v8015 = vadd.f32 %v7686, %v8014
      %8016 = vmatmul.bf16.gmra.mxu0 %v6758
      %v8017 = vpop.f32.mrf.mxu0
      %v8018 = vadd.f32 %v7689, %v8017
      %v8019 = vpop.f32.mrf.mxu0
      %v8020 = vadd.f32 %v7691, %v8019
      %8021 = vmatmul.bf16.gmra.mxu0 %v6761
      %v8022 = vpop.f32.mrf.mxu0
      %v8023 = vadd.f32 %v7694, %v8022
      %v8024 = vpop.f32.mrf.mxu0
      %v8025 = vadd.f32 %v7696, %v8024
      %8026 = vmatmul.bf16.gmra.mxu0 %v6764
      %v8027 = vpop.f32.mrf.mxu0
      %v8028 = vadd.f32 %v7699, %v8027
      %v8029 = vpop.f32.mrf.mxu0
      %v8030 = vadd.f32 %v7701, %v8029
      %8031 = vmatmul.bf16.gmra.mxu0 %v6767
      %v8032 = vpop.f32.mrf.mxu0
      %v8033 = vadd.f32 %v7704, %v8032
      %v8034 = vpop.f32.mrf.mxu0
      %v8035 = vadd.f32 %v7706, %v8034
      %8036 = vmatmul.bf16.gmra.mxu0 %v6770
      %v8037 = vpop.f32.mrf.mxu0
      %v8038 = vadd.f32 %v7709, %v8037
      %v8039 = vpop.f32.mrf.mxu0
      %v8040 = vadd.f32 %v7711, %v8039
      %8041 = vmatmul.bf16.gmra.mxu0 %v6773
      %v8042 = vpop.f32.mrf.mxu0
      %v8043 = vadd.f32 %v7714, %v8042
      %v8044 = vpop.f32.mrf.mxu0
      %v8045 = vadd.f32 %v7716, %v8044
      %8046 = vmatmul.bf16.gmra.mxu0 %v6776
      %v8047 = vpop.f32.mrf.mxu0
      %v8048 = vadd.f32 %v7719, %v8047
      %v8049 = vpop.f32.mrf.mxu0
      %v8050 = vadd.f32 %v7721, %v8049
      %8051 = vmatmul.bf16.gmra.mxu0 %v6779
      %v8052 = vpop.f32.mrf.mxu0
      %v8053 = vadd.f32 %v7724, %v8052
      %v8054 = vpop.f32.mrf.mxu0
      %v8055 = vadd.f32 %v7726, %v8054
      %8056 = vmatmul.bf16.gmra.mxu0 %v6782
      %v8057 = vpop.f32.mrf.mxu0
      %v8058 = vadd.f32 %v7729, %v8057
      %v8059 = vpop.f32.mrf.mxu0
      %v8060 = vadd.f32 %v7731, %v8059
      %8061 = vmatmul.bf16.gmra.mxu0 %v6785
      %v8062 = vpop.f32.mrf.mxu0
      %v8063 = vadd.f32 %v7734, %v8062
      %v8064 = vpop.f32.mrf.mxu0
      %v8065 = vadd.f32 %v7736, %v8064
      %8066 = vmatmul.bf16.gmra.mxu0 %v6788
      %v8067 = vpop.f32.mrf.mxu0
      %v8068 = vadd.f32 %v7739, %v8067
      %v8069 = vpop.f32.mrf.mxu0
      %v8070 = vadd.f32 %v7741, %v8069
      %8071 = vmatmul.bf16.gmra.mxu0 %v6791
      %v8072 = vpop.f32.mrf.mxu0
      %v8073 = vadd.f32 %v7744, %v8072
      %v8074 = vpop.f32.mrf.mxu0
      %v8075 = vadd.f32 %v7746, %v8074
      %8076 = vmatmul.bf16.gmra.mxu0 %v6794
      %v8077 = vpop.f32.mrf.mxu0
      %v8078 = vadd.f32 %v7749, %v8077
      %v8079 = vpop.f32.mrf.mxu0
      %v8080 = vadd.f32 %v7751, %v8079
      %8081 = vmatmul.bf16.gmra.mxu0 %v6797
      %v8082 = vpop.f32.mrf.mxu0
      %v8083 = vadd.f32 %v7754, %v8082
      %v8084 = vpop.f32.mrf.mxu0
      %v8085 = vadd.f32 %v7756, %v8084
      %8086 = vmatmul.bf16.gmra.mxu0 %v6800
      %v8087 = vpop.f32.mrf.mxu0
      %v8088 = vadd.f32 %v7759, %v8087
      %v8089 = vpop.f32.mrf.mxu0
      %v8090 = vadd.f32 %v7761, %v8089
      %8091 = vmatmul.bf16.gmra.mxu0 %v6803
      %v8092 = vpop.f32.mrf.mxu0
      %v8093 = vadd.f32 %v7764, %v8092
      %v8094 = vpop.f32.mrf.mxu0
      %v8095 = vadd.f32 %v7766, %v8094
      %8096 = vmatmul.bf16.gmra.mxu0 %v6806
      %v8097 = vpop.f32.mrf.mxu0
      %v8098 = vadd.f32 %v7769, %v8097
      %v8099 = vpop.f32.mrf.mxu0
      %v8100 = vadd.f32 %v7771, %v8099
      %8101 = vmatmul.bf16.gmra.mxu0 %v6809
      %v8102 = vpop.f32.mrf.mxu0
      %v8103 = vadd.f32 %v7774, %v8102
      %v8104 = vpop.f32.mrf.mxu0
      %v8105 = vadd.f32 %v7776, %v8104
      %8106 = vmatmul.bf16.gmra.mxu0 %v6812
      %v8107 = vpop.f32.mrf.mxu0
      %v8108 = vadd.f32 %v7779, %v8107
      %v8109 = vpop.f32.mrf.mxu0
      %v8110 = vadd.f32 %v7781, %v8109
      %8111 = vmatmul.bf16.gmra.mxu0 %v6815
      %v8112 = vpop.f32.mrf.mxu0
      %v8113 = vadd.f32 %v7784, %v8112
      %v8114 = vpop.f32.mrf.mxu0
      %v8115 = vadd.f32 %v7786, %v8114
      %8116 = vmatmul.bf16.gmra.mxu0 %v6818
      %v8117 = vpop.f32.mrf.mxu0
      %v8118 = vadd.f32 %v7789, %v8117
      %v8119 = vpop.f32.mrf.mxu0
      %v8120 = vadd.f32 %v7791, %v8119
      %8121 = vmatmul.bf16.gmra.mxu0 %v6821
      %v8122 = vpop.f32.mrf.mxu0
      %v8123 = vadd.f32 %v7794, %v8122
      %v8124 = vpop.f32.mrf.mxu0
      %v8125 = vadd.f32 %v7796, %v8124
      %8126 = vmatmul.bf16.gmra.mxu0 %v6824
      %v8127 = vpop.f32.mrf.mxu0
      %v8128 = vadd.f32 %v7799, %v8127
      %v8129 = vpop.f32.mrf.mxu0
      %v8130 = vadd.f32 %v7801, %v8129
      %8131 = vmatmul.bf16.gmra.mxu0 %v6827
      %v8132 = vpop.f32.mrf.mxu0
      %v8133 = vadd.f32 %v7804, %v8132
      %v8134 = vpop.f32.mrf.mxu0
      %v8135 = vadd.f32 %v7806, %v8134
      %8136 = vmatmul.bf16.gmra.mxu0 %v6830
      %v8137 = vpop.f32.mrf.mxu0
      %v8138 = vadd.f32 %v7809, %v8137
      %v8139 = vpop.f32.mrf.mxu0
      %v8140 = vadd.f32 %v7811, %v8139
      %8141 = vmatmul.bf16.gmra.mxu0 %v6833
      %v8142 = vpop.f32.mrf.mxu0
      %v8143 = vadd.f32 %v7814, %v8142
      %v8144 = vpop.f32.mrf.mxu0
      %v8145 = vadd.f32 %v7816, %v8144
      %8146 = vmatmul.bf16.gmra.mxu0 %v6836
      %v8147 = vpop.f32.mrf.mxu0
      %v8148 = vadd.f32 %v7819, %v8147
      %v8149 = vpop.f32.mrf.mxu0
      %v8150 = vadd.f32 %v7821, %v8149
      %8151 = vmatmul.bf16.gmra.mxu0 %v6839
      %v8152 = vpop.f32.mrf.mxu0
      %v8153 = vadd.f32 %v7824, %v8152
      %v8154 = vpop.f32.mrf.mxu0
      %v8155 = vadd.f32 %v7826, %v8154
      %8156 = vmatmul.bf16.gmra.mxu0 %v6842
      %v8157 = vpop.f32.mrf.mxu0
      %v8158 = vadd.f32 %v7829, %v8157
      %v8159 = vpop.f32.mrf.mxu0
      %v8160 = vadd.f32 %v7831, %v8159
      %8161 = vmatmul.bf16.gmra.mxu0 %v6845
      %v8162 = vpop.f32.mrf.mxu0
      %v8163 = vadd.f32 %v7834, %v8162
      %v8164 = vpop.f32.mrf.mxu0
      %v8165 = vadd.f32 %v7836, %v8164
      %8166 = vmatmul.bf16.gmra.mxu0 %v6848
      %v8167 = vpop.f32.mrf.mxu0
      %v8168 = vadd.f32 %v7839, %v8167
      %v8169 = vpop.f32.mrf.mxu0
      %v8170 = vadd.f32 %v7841, %v8169
      %8171 = vdwg.mxu0
      %s8172 = scalar_lea.vmem [#allocation2], 48
      %v8173 = vld [vmem:[%s8172] sm:$0xff]
      %v8174 = vld [vmem:[%s8172 + $0x8] sm:$0xf]
      %v8175 = vld [vmem:[%s8172 + $0xc] sm:$0xff]
      %v8176 = vld [vmem:[%s8172 + $0x14] sm:$0xf]
      %v8177 = vld [vmem:[%s8172 + $0x18] sm:$0xff]
      %v8178 = vld [vmem:[%s8172 + $0x20] sm:$0xf]
      %v8179 = vld [vmem:[%s8172 + $0x24] sm:$0xff]
      %v8180 = vld [vmem:[%s8172 + $0x2c] sm:$0xf]
      %v8181 = vld [vmem:[%s8172 + $0x30] sm:$0xff]
      %v8182 = vld [vmem:[%s8172 + $0x38] sm:$0xf]
      %v8183 = vld [vmem:[%s8172 + $0x3c] sm:$0xff]
      %v8184 = vld [vmem:[%s8172 + $0x44] sm:$0xf]
      %v8185 = vld [vmem:[%s8172 + $0x48] sm:$0xff]
      %v8186 = vld [vmem:[%s8172 + $0x50] sm:$0xf]
      %v8187 = vld [vmem:[%s8172 + $0x54] sm:$0xff]
      %v8188 = vld [vmem:[%s8172 + $0x5c] sm:$0xf]
      %v8189 = vld [vmem:[%s8172 + $0x60] sm:$0xff]
      %v8190 = vld [vmem:[%s8172 + $0x68] sm:$0xf]
      %v8191 = vld [vmem:[%s8172 + $0x6c] sm:$0xff]
      %v8192 = vld [vmem:[%s8172 + $0x74] sm:$0xf]
      %v8193 = vld [vmem:[%s8172 + $0x78] sm:$0xff]
      %v8194 = vld [vmem:[%s8172 + $0x80] sm:$0xf]
      %v8195 = vld [vmem:[%s8172 + $0x84] sm:$0xff]
      %v8196 = vld [vmem:[%s8172 + $0x8c] sm:$0xf]
      %v8197 = vld [vmem:[%s8172 + $0x90] sm:$0xff]
      %v8198 = vld [vmem:[%s8172 + $0x98] sm:$0xf]
      %v8199 = vld [vmem:[%s8172 + $0x9c] sm:$0xff]
      %v8200 = vld [vmem:[%s8172 + $0xa4] sm:$0xf]
      %v8201 = vld [vmem:[%s8172 + $0xa8] sm:$0xff]
      %v8202 = vld [vmem:[%s8172 + $0xb0] sm:$0xf]
      %v8203 = vld [vmem:[%s8172 + $0xb4] sm:$0xff]
      %v8204 = vld [vmem:[%s8172 + $0xbc] sm:$0xf]
      %v8205 = vld [vmem:[%s8172 + $0xc0] sm:$0xff]
      %v8206 = vld [vmem:[%s8172 + $0xc8] sm:$0xf]
      %v8207 = vld [vmem:[%s8172 + $0xcc] sm:$0xff]
      %v8208 = vld [vmem:[%s8172 + $0xd4] sm:$0xf]
      %v8209 = vld [vmem:[%s8172 + $0xd8] sm:$0xff]
      %v8210 = vld [vmem:[%s8172 + $0xe0] sm:$0xf]
      %v8211 = vld [vmem:[%s8172 + $0xe4] sm:$0xff]
      %v8212 = vld [vmem:[%s8172 + $0xec] sm:$0xf]
      %v8213 = vld [vmem:[%s8172 + $0xf0] sm:$0xff]
      %v8214 = vld [vmem:[%s8172 + $0xf8] sm:$0xf]
      %v8215 = vld [vmem:[%s8172 + $0xfc] sm:$0xff]
      %v8216 = vld [vmem:[%s8172 + $0x104] sm:$0xf]
      %v8217 = vld [vmem:[%s8172 + $0x108] sm:$0xff]
      %v8218 = vld [vmem:[%s8172 + $0x110] sm:$0xf]
      %v8219 = vld [vmem:[%s8172 + $0x114] sm:$0xff]
      %v8220 = vld [vmem:[%s8172 + $0x11c] sm:$0xf]
      %v8221 = vld [vmem:[%s8172 + $0x120] sm:$0xff]
      %v8222 = vld [vmem:[%s8172 + $0x128] sm:$0xf]
      %v8223 = vld [vmem:[%s8172 + $0x12c] sm:$0xff]
      %v8224 = vld [vmem:[%s8172 + $0x134] sm:$0xf]
      %v8225 = vld [vmem:[%s8172 + $0x138] sm:$0xff]
      %v8226 = vld [vmem:[%s8172 + $0x140] sm:$0xf]
      %v8227 = vld [vmem:[%s8172 + $0x144] sm:$0xff]
      %v8228 = vld [vmem:[%s8172 + $0x14c] sm:$0xf]
      %v8229 = vld [vmem:[%s8172 + $0x150] sm:$0xff]
      %v8230 = vld [vmem:[%s8172 + $0x158] sm:$0xf]
      %v8231 = vld [vmem:[%s8172 + $0x15c] sm:$0xff]
      %v8232 = vld [vmem:[%s8172 + $0x164] sm:$0xf]
      %v8233 = vld [vmem:[%s8172 + $0x168] sm:$0xff]
      %v8234 = vld [vmem:[%s8172 + $0x170] sm:$0xf]
      %v8235 = vld [vmem:[%s8172 + $0x174] sm:$0xff]
      %v8236 = vld [vmem:[%s8172 + $0x17c] sm:$0xf]
      %v8237 = vld [vmem:[%s8172 + $0x1b0] sm:$0xff]
      %v8238 = vld [vmem:[%s8172 + $0x1b8] sm:$0xf]
      %v8239 = vld [vmem:[%s8172 + $0x1bc] sm:$0xff]
      %v8240 = vld [vmem:[%s8172 + $0x1c4] sm:$0xf]
      %v8241 = vld [vmem:[%s8172 + $0x1c8] sm:$0xff]
      %v8242 = vld [vmem:[%s8172 + $0x1d0] sm:$0xf]
      %v8243 = vld [vmem:[%s8172 + $0x1d4] sm:$0xff]
      %v8244 = vld [vmem:[%s8172 + $0x1dc] sm:$0xf]
      %v8245 = vld [vmem:[%s8172 + $0x1e0] sm:$0xff]
      %v8246 = vld [vmem:[%s8172 + $0x1e8] sm:$0xf]
      %v8247 = vld [vmem:[%s8172 + $0x1ec] sm:$0xff]
      %v8248 = vld [vmem:[%s8172 + $0x1f4] sm:$0xf]
      %v8249 = vld [vmem:[%s8172 + $0x1f8] sm:$0xff]
      %v8250 = vld [vmem:[%s8172 + $0x200] sm:$0xf]
      %v8251 = vld [vmem:[%s8172 + $0x204] sm:$0xff]
      %v8252 = vld [vmem:[%s8172 + $0x20c] sm:$0xf]
      %v8253 = vld [vmem:[%s8172 + $0x210] sm:$0xff]
      %v8254 = vld [vmem:[%s8172 + $0x218] sm:$0xf]
      %v8255 = vld [vmem:[%s8172 + $0x21c] sm:$0xff]
      %v8256 = vld [vmem:[%s8172 + $0x224] sm:$0xf]
      %v8257 = vld [vmem:[%s8172 + $0x228] sm:$0xff]
      %v8258 = vld [vmem:[%s8172 + $0x230] sm:$0xf]
      %v8259 = vld [vmem:[%s8172 + $0x234] sm:$0xff]
      %v8260 = vld [vmem:[%s8172 + $0x23c] sm:$0xf]
      %v8261 = vld [vmem:[%s8172 + $0x240] sm:$0xff]
      %v8262 = vld [vmem:[%s8172 + $0x248] sm:$0xf]
      %v8263 = vld [vmem:[%s8172 + $0x24c] sm:$0xff]
      %v8264 = vld [vmem:[%s8172 + $0x254] sm:$0xf]
      %v8265 = vld [vmem:[%s8172 + $0x258] sm:$0xff]
      %v8266 = vld [vmem:[%s8172 + $0x260] sm:$0xf]
      %v8267 = vld [vmem:[%s8172 + $0x264] sm:$0xff]
      %v8268 = vld [vmem:[%s8172 + $0x26c] sm:$0xf]
      %v8269 = vld [vmem:[%s8172 + $0x270] sm:$0xff]
      %v8270 = vld [vmem:[%s8172 + $0x278] sm:$0xf]
      %v8271 = vld [vmem:[%s8172 + $0x27c] sm:$0xff]
      %v8272 = vld [vmem:[%s8172 + $0x284] sm:$0xf]
      %v8273 = vld [vmem:[%s8172 + $0x288] sm:$0xff]
      %v8274 = vld [vmem:[%s8172 + $0x290] sm:$0xf]
      %v8275 = vld [vmem:[%s8172 + $0x294] sm:$0xff]
      %v8276 = vld [vmem:[%s8172 + $0x29c] sm:$0xf]
      %v8277 = vld [vmem:[%s8172 + $0x2a0] sm:$0xff]
      %v8278 = vld [vmem:[%s8172 + $0x2a8] sm:$0xf]
      %v8279 = vld [vmem:[%s8172 + $0x2ac] sm:$0xff]
      %v8280 = vld [vmem:[%s8172 + $0x2b4] sm:$0xf]
      %v8281 = vld [vmem:[%s8172 + $0x2b8] sm:$0xff]
      %v8282 = vld [vmem:[%s8172 + $0x2c0] sm:$0xf]
      %v8283 = vld [vmem:[%s8172 + $0x2c4] sm:$0xff]
      %v8284 = vld [vmem:[%s8172 + $0x2cc] sm:$0xf]
      %v8285 = vld [vmem:[%s8172 + $0x2d0] sm:$0xff]
      %v8286 = vld [vmem:[%s8172 + $0x2d8] sm:$0xf]
      %v8287 = vld [vmem:[%s8172 + $0x2dc] sm:$0xff]
      %v8288 = vld [vmem:[%s8172 + $0x2e4] sm:$0xf]
      %v8289 = vld [vmem:[%s8172 + $0x2e8] sm:$0xff]
      %v8290 = vld [vmem:[%s8172 + $0x2f0] sm:$0xf]
      %v8291 = vld [vmem:[%s8172 + $0x2f4] sm:$0xff]
      %v8292 = vld [vmem:[%s8172 + $0x2fc] sm:$0xf]
      %v8293 = vld [vmem:[%s8172 + $0x300] sm:$0xff]
      %v8294 = vld [vmem:[%s8172 + $0x308] sm:$0xf]
      %v8295 = vld [vmem:[%s8172 + $0x30c] sm:$0xff]
      %v8296 = vld [vmem:[%s8172 + $0x314] sm:$0xf]
      %v8297 = vld [vmem:[%s8172 + $0x318] sm:$0xff]
      %v8298 = vld [vmem:[%s8172 + $0x320] sm:$0xf]
      %v8299 = vld [vmem:[%s8172 + $0x324] sm:$0xff]
      %v8300 = vld [vmem:[%s8172 + $0x32c] sm:$0xf]
      %v8301 = vld [vmem:[%s8172 + $0x360] sm:$0xff]
      %v8302 = vld [vmem:[%s8172 + $0x368] sm:$0xf]
      %v8303 = vld [vmem:[%s8172 + $0x36c] sm:$0xff]
      %v8304 = vld [vmem:[%s8172 + $0x374] sm:$0xf]
      %v8305 = vld [vmem:[%s8172 + $0x378] sm:$0xff]
      %v8306 = vld [vmem:[%s8172 + $0x380] sm:$0xf]
      %v8307 = vld [vmem:[%s8172 + $0x384] sm:$0xff]
      %v8308 = vld [vmem:[%s8172 + $0x38c] sm:$0xf]
      %v8309 = vld [vmem:[%s8172 + $0x390] sm:$0xff]
      %v8310 = vld [vmem:[%s8172 + $0x398] sm:$0xf]
      %v8311 = vld [vmem:[%s8172 + $0x39c] sm:$0xff]
      %v8312 = vld [vmem:[%s8172 + $0x3a4] sm:$0xf]
      %v8313 = vld [vmem:[%s8172 + $0x3a8] sm:$0xff]
      %v8314 = vld [vmem:[%s8172 + $0x3b0] sm:$0xf]
      %v8315 = vld [vmem:[%s8172 + $0x3b4] sm:$0xff]
      %v8316 = vld [vmem:[%s8172 + $0x3bc] sm:$0xf]
      %v8317 = vld [vmem:[%s8172 + $0x3c0] sm:$0xff]
      %v8318 = vld [vmem:[%s8172 + $0x3c8] sm:$0xf]
      %v8319 = vld [vmem:[%s8172 + $0x3cc] sm:$0xff]
      %v8320 = vld [vmem:[%s8172 + $0x3d4] sm:$0xf]
      %v8321 = vld [vmem:[%s8172 + $0x3d8] sm:$0xff]
      %v8322 = vld [vmem:[%s8172 + $0x3e0] sm:$0xf]
      %v8323 = vld [vmem:[%s8172 + $0x3e4] sm:$0xff]
      %v8324 = vld [vmem:[%s8172 + $0x3ec] sm:$0xf]
      %v8325 = vld [vmem:[%s8172 + $0x3f0] sm:$0xff]
      %v8326 = vld [vmem:[%s8172 + $0x3f8] sm:$0xf]
      %v8327 = vld [vmem:[%s8172 + $0x3fc] sm:$0xff]
      %v8328 = vld [vmem:[%s8172 + $0x404] sm:$0xf]
      %v8329 = vld [vmem:[%s8172 + $0x408] sm:$0xff]
      %v8330 = vld [vmem:[%s8172 + $0x410] sm:$0xf]
      %v8331 = vld [vmem:[%s8172 + $0x414] sm:$0xff]
      %v8332 = vld [vmem:[%s8172 + $0x41c] sm:$0xf]
      %v8333 = vld [vmem:[%s8172 + $0x420] sm:$0xff]
      %v8334 = vld [vmem:[%s8172 + $0x428] sm:$0xf]
      %v8335 = vld [vmem:[%s8172 + $0x42c] sm:$0xff]
      %v8336 = vld [vmem:[%s8172 + $0x434] sm:$0xf]
      %v8337 = vld [vmem:[%s8172 + $0x438] sm:$0xff]
      %v8338 = vld [vmem:[%s8172 + $0x440] sm:$0xf]
      %v8339 = vld [vmem:[%s8172 + $0x444] sm:$0xff]
      %v8340 = vld [vmem:[%s8172 + $0x44c] sm:$0xf]
      %v8341 = vld [vmem:[%s8172 + $0x450] sm:$0xff]
      %v8342 = vld [vmem:[%s8172 + $0x458] sm:$0xf]
      %v8343 = vld [vmem:[%s8172 + $0x45c] sm:$0xff]
      %v8344 = vld [vmem:[%s8172 + $0x464] sm:$0xf]
      %v8345 = vld [vmem:[%s8172 + $0x468] sm:$0xff]
      %v8346 = vld [vmem:[%s8172 + $0x470] sm:$0xf]
      %v8347 = vld [vmem:[%s8172 + $0x474] sm:$0xff]
      %v8348 = vld [vmem:[%s8172 + $0x47c] sm:$0xf]
      %v8349 = vld [vmem:[%s8172 + $0x480] sm:$0xff]
      %v8350 = vld [vmem:[%s8172 + $0x488] sm:$0xf]
      %v8351 = vld [vmem:[%s8172 + $0x48c] sm:$0xff]
      %v8352 = vld [vmem:[%s8172 + $0x494] sm:$0xf]
      %v8353 = vld [vmem:[%s8172 + $0x498] sm:$0xff]
      %v8354 = vld [vmem:[%s8172 + $0x4a0] sm:$0xf]
      %v8355 = vld [vmem:[%s8172 + $0x4a4] sm:$0xff]
      %v8356 = vld [vmem:[%s8172 + $0x4ac] sm:$0xf]
      %v8357 = vld [vmem:[%s8172 + $0x4b0] sm:$0xff]
      %v8358 = vld [vmem:[%s8172 + $0x4b8] sm:$0xf]
      %v8359 = vld [vmem:[%s8172 + $0x4bc] sm:$0xff]
      %v8360 = vld [vmem:[%s8172 + $0x4c4] sm:$0xf]
      %v8361 = vld [vmem:[%s8172 + $0x4c8] sm:$0xff]
      %v8362 = vld [vmem:[%s8172 + $0x4d0] sm:$0xf]
      %v8363 = vld [vmem:[%s8172 + $0x4d4] sm:$0xff]
      %v8364 = vld [vmem:[%s8172 + $0x4dc] sm:$0xf]
      %v8365 = vld [vmem:[%s8172 + $0x510] sm:$0xff]
      %v8366 = vld [vmem:[%s8172 + $0x518] sm:$0xf]
      %v8367 = vld [vmem:[%s8172 + $0x51c] sm:$0xff]
      %v8368 = vld [vmem:[%s8172 + $0x524] sm:$0xf]
      %v8369 = vld [vmem:[%s8172 + $0x528] sm:$0xff]
      %v8370 = vld [vmem:[%s8172 + $0x530] sm:$0xf]
      %v8371 = vld [vmem:[%s8172 + $0x534] sm:$0xff]
      %v8372 = vld [vmem:[%s8172 + $0x53c] sm:$0xf]
      %v8373 = vld [vmem:[%s8172 + $0x540] sm:$0xff]
      %v8374 = vld [vmem:[%s8172 + $0x548] sm:$0xf]
      %v8375 = vld [vmem:[%s8172 + $0x54c] sm:$0xff]
      %v8376 = vld [vmem:[%s8172 + $0x554] sm:$0xf]
      %v8377 = vld [vmem:[%s8172 + $0x558] sm:$0xff]
      %v8378 = vld [vmem:[%s8172 + $0x560] sm:$0xf]
      %v8379 = vld [vmem:[%s8172 + $0x564] sm:$0xff]
      %v8380 = vld [vmem:[%s8172 + $0x56c] sm:$0xf]
      %v8381 = vld [vmem:[%s8172 + $0x570] sm:$0xff]
      %v8382 = vld [vmem:[%s8172 + $0x578] sm:$0xf]
      %v8383 = vld [vmem:[%s8172 + $0x57c] sm:$0xff]
      %v8384 = vld [vmem:[%s8172 + $0x584] sm:$0xf]
      %v8385 = vld [vmem:[%s8172 + $0x588] sm:$0xff]
      %v8386 = vld [vmem:[%s8172 + $0x590] sm:$0xf]
      %v8387 = vld [vmem:[%s8172 + $0x594] sm:$0xff]
      %v8388 = vld [vmem:[%s8172 + $0x59c] sm:$0xf]
      %v8389 = vld [vmem:[%s8172 + $0x5a0] sm:$0xff]
      %v8390 = vld [vmem:[%s8172 + $0x5a8] sm:$0xf]
      %v8391 = vld [vmem:[%s8172 + $0x5ac] sm:$0xff]
      %v8392 = vld [vmem:[%s8172 + $0x5b4] sm:$0xf]
      %v8393 = vld [vmem:[%s8172 + $0x5b8] sm:$0xff]
      %v8394 = vld [vmem:[%s8172 + $0x5c0] sm:$0xf]
      %v8395 = vld [vmem:[%s8172 + $0x5c4] sm:$0xff]
      %v8396 = vld [vmem:[%s8172 + $0x5cc] sm:$0xf]
      %v8397 = vld [vmem:[%s8172 + $0x5d0] sm:$0xff]
      %v8398 = vld [vmem:[%s8172 + $0x5d8] sm:$0xf]
      %v8399 = vld [vmem:[%s8172 + $0x5dc] sm:$0xff]
      %v8400 = vld [vmem:[%s8172 + $0x5e4] sm:$0xf]
      %v8401 = vld [vmem:[%s8172 + $0x5e8] sm:$0xff]
      %v8402 = vld [vmem:[%s8172 + $0x5f0] sm:$0xf]
      %v8403 = vld [vmem:[%s8172 + $0x5f4] sm:$0xff]
      %v8404 = vld [vmem:[%s8172 + $0x5fc] sm:$0xf]
      %v8405 = vld [vmem:[%s8172 + $0x600] sm:$0xff]
      %v8406 = vld [vmem:[%s8172 + $0x608] sm:$0xf]
      %v8407 = vld [vmem:[%s8172 + $0x60c] sm:$0xff]
      %v8408 = vld [vmem:[%s8172 + $0x614] sm:$0xf]
      %v8409 = vld [vmem:[%s8172 + $0x618] sm:$0xff]
      %v8410 = vld [vmem:[%s8172 + $0x620] sm:$0xf]
      %v8411 = vld [vmem:[%s8172 + $0x624] sm:$0xff]
      %v8412 = vld [vmem:[%s8172 + $0x62c] sm:$0xf]
      %v8413 = vld [vmem:[%s8172 + $0x630] sm:$0xff]
      %v8414 = vld [vmem:[%s8172 + $0x638] sm:$0xf]
      %v8415 = vld [vmem:[%s8172 + $0x63c] sm:$0xff]
      %v8416 = vld [vmem:[%s8172 + $0x644] sm:$0xf]
      %v8417 = vld [vmem:[%s8172 + $0x648] sm:$0xff]
      %v8418 = vld [vmem:[%s8172 + $0x650] sm:$0xf]
      %v8419 = vld [vmem:[%s8172 + $0x654] sm:$0xff]
      %v8420 = vld [vmem:[%s8172 + $0x65c] sm:$0xf]
      %v8421 = vld [vmem:[%s8172 + $0x660] sm:$0xff]
      %v8422 = vld [vmem:[%s8172 + $0x668] sm:$0xf]
      %v8423 = vld [vmem:[%s8172 + $0x66c] sm:$0xff]
      %v8424 = vld [vmem:[%s8172 + $0x674] sm:$0xf]
      %v8425 = vld [vmem:[%s8172 + $0x678] sm:$0xff]
      %v8426 = vld [vmem:[%s8172 + $0x680] sm:$0xf]
      %v8427 = vld [vmem:[%s8172 + $0x684] sm:$0xff]
      %v8428 = vld [vmem:[%s8172 + $0x68c] sm:$0xf]
      %s8429 = scalar_lea.vmem %s4, 384
      %v8430 = vld [vmem:[%s8429] sm:$0xf]
      %v8431 = vld [vmem:[%s8429 + $0x4] sm:$0xf]
      %v8432 = vld [vmem:[%s8429 + $0x8] sm:$0xf]
      %v8433 = vld [vmem:[%s8429 + $0xc] sm:$0xf]
      %v8434 = vld [vmem:[%s8429 + $0x10] sm:$0xf]
      %v8435 = vld [vmem:[%s8429 + $0x14] sm:$0xf]
      %v8436 = vld [vmem:[%s8429 + $0x18] sm:$0xf]
      %v8437 = vld [vmem:[%s8429 + $0x1c] sm:$0xf]
      %v8438 = vld [vmem:[%s8429 + $0x20] sm:$0xf]
      %v8439 = vld [vmem:[%s8429 + $0x24] sm:$0xf]
      %v8440 = vld [vmem:[%s8429 + $0x28] sm:$0xf]
      %v8441 = vld [vmem:[%s8429 + $0x2c] sm:$0xf]
      %v8442 = vld [vmem:[%s8429 + $0x30] sm:$0xf]
      %v8443 = vld [vmem:[%s8429 + $0x34] sm:$0xf]
      %v8444 = vld [vmem:[%s8429 + $0x38] sm:$0xf]
      %v8445 = vld [vmem:[%s8429 + $0x3c] sm:$0xf]
      %v8446 = vld [vmem:[%s8429 + $0x40] sm:$0xf]
      %v8447 = vld [vmem:[%s8429 + $0x44] sm:$0xf]
      %v8448 = vld [vmem:[%s8429 + $0x48] sm:$0xf]
      %v8449 = vld [vmem:[%s8429 + $0x4c] sm:$0xf]
      %v8450 = vld [vmem:[%s8429 + $0x50] sm:$0xf]
      %v8451 = vld [vmem:[%s8429 + $0x54] sm:$0xf]
      %v8452 = vld [vmem:[%s8429 + $0x58] sm:$0xf]
      %v8453 = vld [vmem:[%s8429 + $0x5c] sm:$0xf]
      %v8454 = vld [vmem:[%s8429 + $0x60] sm:$0xf]
      %v8455 = vld [vmem:[%s8429 + $0x64] sm:$0xf]
      %v8456 = vld [vmem:[%s8429 + $0x68] sm:$0xf]
      %v8457 = vld [vmem:[%s8429 + $0x6c] sm:$0xf]
      %v8458 = vld [vmem:[%s8429 + $0x70] sm:$0xf]
      %v8459 = vld [vmem:[%s8429 + $0x74] sm:$0xf]
      %v8460 = vld [vmem:[%s8429 + $0x78] sm:$0xf]
      %v8461 = vld [vmem:[%s8429 + $0x7c] sm:$0xf]
      %v8462 = vld [vmem:[%s8429 + $0x80] sm:$0xf]
      %v8463 = vld [vmem:[%s8429 + $0x84] sm:$0xf]
      %v8464 = vld [vmem:[%s8429 + $0x88] sm:$0xf]
      %v8465 = vld [vmem:[%s8429 + $0x8c] sm:$0xf]
      %v8466 = vld [vmem:[%s8429 + $0x90] sm:$0xf]
      %v8467 = vld [vmem:[%s8429 + $0x94] sm:$0xf]
      %v8468 = vld [vmem:[%s8429 + $0x98] sm:$0xf]
      %v8469 = vld [vmem:[%s8429 + $0x9c] sm:$0xf]
      %v8470 = vld [vmem:[%s8429 + $0xa0] sm:$0xf]
      %v8471 = vld [vmem:[%s8429 + $0xa4] sm:$0xf]
      %v8472 = vld [vmem:[%s8429 + $0xa8] sm:$0xf]
      %v8473 = vld [vmem:[%s8429 + $0xac] sm:$0xf]
      %v8474 = vld [vmem:[%s8429 + $0xb0] sm:$0xf]
      %v8475 = vld [vmem:[%s8429 + $0xb4] sm:$0xf]
      %v8476 = vld [vmem:[%s8429 + $0xb8] sm:$0xf]
      %v8477 = vld [vmem:[%s8429 + $0xbc] sm:$0xf]
      %v8734 = vunpack.c.l.b16 %v8173
      %v8735 = vunpack.c.h.b16 %v8173
      %v8736 = vunpack.c.l.b16 %v8174
      %v8737 = vunpack.c.l.b16 %v8175
      %v8738 = vunpack.c.h.b16 %v8175
      %v8739 = vunpack.c.l.b16 %v8176
      %v8740 = vunpack.c.l.b16 %v8177
      %v8741 = vunpack.c.h.b16 %v8177
      %v8742 = vunpack.c.l.b16 %v8178
      %v8743 = vunpack.c.l.b16 %v8179
      %v8744 = vunpack.c.h.b16 %v8179
      %v8745 = vunpack.c.l.b16 %v8180
      %v8746 = vunpack.c.l.b16 %v8181
      %v8747 = vunpack.c.h.b16 %v8181
      %v8748 = vunpack.c.l.b16 %v8182
      %v8749 = vunpack.c.l.b16 %v8183
      %v8750 = vunpack.c.h.b16 %v8183
      %v8751 = vunpack.c.l.b16 %v8184
      %v8752 = vunpack.c.l.b16 %v8185
      %v8753 = vunpack.c.h.b16 %v8185
      %v8754 = vunpack.c.l.b16 %v8186
      %v8755 = vunpack.c.l.b16 %v8187
      %v8756 = vunpack.c.h.b16 %v8187
      %v8757 = vunpack.c.l.b16 %v8188
      %v8758 = vunpack.c.l.b16 %v8189
      %v8759 = vunpack.c.h.b16 %v8189
      %v8760 = vunpack.c.l.b16 %v8190
      %v8761 = vunpack.c.l.b16 %v8191
      %v8762 = vunpack.c.h.b16 %v8191
      %v8763 = vunpack.c.l.b16 %v8192
      %v8764 = vunpack.c.l.b16 %v8193
      %v8765 = vunpack.c.h.b16 %v8193
      %v8766 = vunpack.c.l.b16 %v8194
      %v8767 = vunpack.c.l.b16 %v8195
      %v8768 = vunpack.c.h.b16 %v8195
      %v8769 = vunpack.c.l.b16 %v8196
      %v8770 = vunpack.c.l.b16 %v8197
      %v8771 = vunpack.c.h.b16 %v8197
      %v8772 = vunpack.c.l.b16 %v8198
      %v8773 = vunpack.c.l.b16 %v8199
      %v8774 = vunpack.c.h.b16 %v8199
      %v8775 = vunpack.c.l.b16 %v8200
      %v8776 = vunpack.c.l.b16 %v8201
      %v8777 = vunpack.c.h.b16 %v8201
      %v8778 = vunpack.c.l.b16 %v8202
      %v8779 = vunpack.c.l.b16 %v8203
      %v8780 = vunpack.c.h.b16 %v8203
      %v8781 = vunpack.c.l.b16 %v8204
      %v8782 = vunpack.c.l.b16 %v8205
      %v8783 = vunpack.c.h.b16 %v8205
      %v8784 = vunpack.c.l.b16 %v8206
      %v8785 = vunpack.c.l.b16 %v8207
      %v8786 = vunpack.c.h.b16 %v8207
      %v8787 = vunpack.c.l.b16 %v8208
      %v8788 = vunpack.c.l.b16 %v8209
      %v8789 = vunpack.c.h.b16 %v8209
      %v8790 = vunpack.c.l.b16 %v8210
      %v8791 = vunpack.c.l.b16 %v8211
      %v8792 = vunpack.c.h.b16 %v8211
      %v8793 = vunpack.c.l.b16 %v8212
      %v8794 = vunpack.c.l.b16 %v8213
      %v8795 = vunpack.c.h.b16 %v8213
      %v8796 = vunpack.c.l.b16 %v8214
      %v8797 = vunpack.c.l.b16 %v8215
      %v8798 = vunpack.c.h.b16 %v8215
      %v8799 = vunpack.c.l.b16 %v8216
      %v8800 = vunpack.c.l.b16 %v8217
      %v8801 = vunpack.c.h.b16 %v8217
      %v8802 = vunpack.c.l.b16 %v8218
      %v8803 = vunpack.c.l.b16 %v8219
      %v8804 = vunpack.c.h.b16 %v8219
      %v8805 = vunpack.c.l.b16 %v8220
      %v8806 = vunpack.c.l.b16 %v8221
      %v8807 = vunpack.c.h.b16 %v8221
      %v8808 = vunpack.c.l.b16 %v8222
      %v8809 = vunpack.c.l.b16 %v8223
      %v8810 = vunpack.c.h.b16 %v8223
      %v8811 = vunpack.c.l.b16 %v8224
      %v8812 = vunpack.c.l.b16 %v8225
      %v8813 = vunpack.c.h.b16 %v8225
      %v8814 = vunpack.c.l.b16 %v8226
      %v8815 = vunpack.c.l.b16 %v8227
      %v8816 = vunpack.c.h.b16 %v8227
      %v8817 = vunpack.c.l.b16 %v8228
      %v8818 = vunpack.c.l.b16 %v8229
      %v8819 = vunpack.c.h.b16 %v8229
      %v8820 = vunpack.c.l.b16 %v8230
      %v8821 = vunpack.c.l.b16 %v8231
      %v8822 = vunpack.c.h.b16 %v8231
      %v8823 = vunpack.c.l.b16 %v8232
      %v8824 = vunpack.c.l.b16 %v8233
      %v8825 = vunpack.c.h.b16 %v8233
      %v8826 = vunpack.c.l.b16 %v8234
      %v8827 = vunpack.c.l.b16 %v8235
      %v8828 = vunpack.c.h.b16 %v8235
      %v8829 = vunpack.c.l.b16 %v8236
      %v8830 = vunpack.c.l.b16 %v8237
      %v8831 = vunpack.c.h.b16 %v8237
      %v8832 = vunpack.c.l.b16 %v8238
      %v8833 = vunpack.c.l.b16 %v8239
      %v8834 = vunpack.c.h.b16 %v8239
      %v8835 = vunpack.c.l.b16 %v8240
      %v8836 = vunpack.c.l.b16 %v8241
      %v8837 = vunpack.c.h.b16 %v8241
      %v8838 = vunpack.c.l.b16 %v8242
      %v8839 = vunpack.c.l.b16 %v8243
      %v8840 = vunpack.c.h.b16 %v8243
      %v8841 = vunpack.c.l.b16 %v8244
      %v8842 = vunpack.c.l.b16 %v8245
      %v8843 = vunpack.c.h.b16 %v8245
      %v8844 = vunpack.c.l.b16 %v8246
      %v8845 = vunpack.c.l.b16 %v8247
      %v8846 = vunpack.c.h.b16 %v8247
      %v8847 = vunpack.c.l.b16 %v8248
      %v8848 = vunpack.c.l.b16 %v8249
      %v8849 = vunpack.c.h.b16 %v8249
      %v8850 = vunpack.c.l.b16 %v8250
      %v8851 = vunpack.c.l.b16 %v8251
      %v8852 = vunpack.c.h.b16 %v8251
      %v8853 = vunpack.c.l.b16 %v8252
      %v8854 = vunpack.c.l.b16 %v8253
      %v8855 = vunpack.c.h.b16 %v8253
      %v8856 = vunpack.c.l.b16 %v8254
      %v8857 = vunpack.c.l.b16 %v8255
      %v8858 = vunpack.c.h.b16 %v8255
      %v8859 = vunpack.c.l.b16 %v8256
      %v8860 = vunpack.c.l.b16 %v8257
      %v8861 = vunpack.c.h.b16 %v8257
      %v8862 = vunpack.c.l.b16 %v8258
      %v8863 = vunpack.c.l.b16 %v8259
      %v8864 = vunpack.c.h.b16 %v8259
      %v8865 = vunpack.c.l.b16 %v8260
      %v8866 = vunpack.c.l.b16 %v8261
      %v8867 = vunpack.c.h.b16 %v8261
      %v8868 = vunpack.c.l.b16 %v8262
      %v8869 = vunpack.c.l.b16 %v8263
      %v8870 = vunpack.c.h.b16 %v8263
      %v8871 = vunpack.c.l.b16 %v8264
      %v8872 = vunpack.c.l.b16 %v8265
      %v8873 = vunpack.c.h.b16 %v8265
      %v8874 = vunpack.c.l.b16 %v8266
      %v8875 = vunpack.c.l.b16 %v8267
      %v8876 = vunpack.c.h.b16 %v8267
      %v8877 = vunpack.c.l.b16 %v8268
      %v8878 = vunpack.c.l.b16 %v8269
      %v8879 = vunpack.c.h.b16 %v8269
      %v8880 = vunpack.c.l.b16 %v8270
      %v8881 = vunpack.c.l.b16 %v8271
      %v8882 = vunpack.c.h.b16 %v8271
      %v8883 = vunpack.c.l.b16 %v8272
      %v8884 = vunpack.c.l.b16 %v8273
      %v8885 = vunpack.c.h.b16 %v8273
      %v8886 = vunpack.c.l.b16 %v8274
      %v8887 = vunpack.c.l.b16 %v8275
      %v8888 = vunpack.c.h.b16 %v8275
      %v8889 = vunpack.c.l.b16 %v8276
      %v8890 = vunpack.c.l.b16 %v8277
      %v8891 = vunpack.c.h.b16 %v8277
      %v8892 = vunpack.c.l.b16 %v8278
      %v8893 = vunpack.c.l.b16 %v8279
      %v8894 = vunpack.c.h.b16 %v8279
      %v8895 = vunpack.c.l.b16 %v8280
      %v8896 = vunpack.c.l.b16 %v8281
      %v8897 = vunpack.c.h.b16 %v8281
      %v8898 = vunpack.c.l.b16 %v8282
      %v8899 = vunpack.c.l.b16 %v8283
      %v8900 = vunpack.c.h.b16 %v8283
      %v8901 = vunpack.c.l.b16 %v8284
      %v8902 = vunpack.c.l.b16 %v8285
      %v8903 = vunpack.c.h.b16 %v8285
      %v8904 = vunpack.c.l.b16 %v8286
      %v8905 = vunpack.c.l.b16 %v8287
      %v8906 = vunpack.c.h.b16 %v8287
      %v8907 = vunpack.c.l.b16 %v8288
      %v8908 = vunpack.c.l.b16 %v8289
      %v8909 = vunpack.c.h.b16 %v8289
      %v8910 = vunpack.c.l.b16 %v8290
      %v8911 = vunpack.c.l.b16 %v8291
      %v8912 = vunpack.c.h.b16 %v8291
      %v8913 = vunpack.c.l.b16 %v8292
      %v8914 = vunpack.c.l.b16 %v8293
      %v8915 = vunpack.c.h.b16 %v8293
      %v8916 = vunpack.c.l.b16 %v8294
      %v8917 = vunpack.c.l.b16 %v8295
      %v8918 = vunpack.c.h.b16 %v8295
      %v8919 = vunpack.c.l.b16 %v8296
      %v8920 = vunpack.c.l.b16 %v8297
      %v8921 = vunpack.c.h.b16 %v8297
      %v8922 = vunpack.c.l.b16 %v8298
      %v8923 = vunpack.c.l.b16 %v8299
      %v8924 = vunpack.c.h.b16 %v8299
      %v8925 = vunpack.c.l.b16 %v8300
      %v8926 = vunpack.c.l.b16 %v8301
      %v8927 = vunpack.c.h.b16 %v8301
      %v8928 = vunpack.c.l.b16 %v8302
      %v8929 = vunpack.c.l.b16 %v8303
      %v8930 = vunpack.c.h.b16 %v8303
      %v8931 = vunpack.c.l.b16 %v8304
      %v8932 = vunpack.c.l.b16 %v8305
      %v8933 = vunpack.c.h.b16 %v8305
      %v8934 = vunpack.c.l.b16 %v8306
      %v8935 = vunpack.c.l.b16 %v8307
      %v8936 = vunpack.c.h.b16 %v8307
      %v8937 = vunpack.c.l.b16 %v8308
      %v8938 = vunpack.c.l.b16 %v8309
      %v8939 = vunpack.c.h.b16 %v8309
      %v8940 = vunpack.c.l.b16 %v8310
      %v8941 = vunpack.c.l.b16 %v8311
      %v8942 = vunpack.c.h.b16 %v8311
      %v8943 = vunpack.c.l.b16 %v8312
      %v8944 = vunpack.c.l.b16 %v8313
      %v8945 = vunpack.c.h.b16 %v8313
      %v8946 = vunpack.c.l.b16 %v8314
      %v8947 = vunpack.c.l.b16 %v8315
      %v8948 = vunpack.c.h.b16 %v8315
      %v8949 = vunpack.c.l.b16 %v8316
      %v8950 = vunpack.c.l.b16 %v8317
      %v8951 = vunpack.c.h.b16 %v8317
      %v8952 = vunpack.c.l.b16 %v8318
      %v8953 = vunpack.c.l.b16 %v8319
      %v8954 = vunpack.c.h.b16 %v8319
      %v8955 = vunpack.c.l.b16 %v8320
      %v8956 = vunpack.c.l.b16 %v8321
      %v8957 = vunpack.c.h.b16 %v8321
      %v8958 = vunpack.c.l.b16 %v8322
      %v8959 = vunpack.c.l.b16 %v8323
      %v8960 = vunpack.c.h.b16 %v8323
      %v8961 = vunpack.c.l.b16 %v8324
      %v8962 = vunpack.c.l.b16 %v8325
      %v8963 = vunpack.c.h.b16 %v8325
      %v8964 = vunpack.c.l.b16 %v8326
      %v8965 = vunpack.c.l.b16 %v8327
      %v8966 = vunpack.c.h.b16 %v8327
      %v8967 = vunpack.c.l.b16 %v8328
      %v8968 = vunpack.c.l.b16 %v8329
      %v8969 = vunpack.c.h.b16 %v8329
      %v8970 = vunpack.c.l.b16 %v8330
      %v8971 = vunpack.c.l.b16 %v8331
      %v8972 = vunpack.c.h.b16 %v8331
      %v8973 = vunpack.c.l.b16 %v8332
      %v8974 = vunpack.c.l.b16 %v8333
      %v8975 = vunpack.c.h.b16 %v8333
      %v8976 = vunpack.c.l.b16 %v8334
      %v8977 = vunpack.c.l.b16 %v8335
      %v8978 = vunpack.c.h.b16 %v8335
      %v8979 = vunpack.c.l.b16 %v8336
      %v8980 = vunpack.c.l.b16 %v8337
      %v8981 = vunpack.c.h.b16 %v8337
      %v8982 = vunpack.c.l.b16 %v8338
      %v8983 = vunpack.c.l.b16 %v8339
      %v8984 = vunpack.c.h.b16 %v8339
      %v8985 = vunpack.c.l.b16 %v8340
      %v8986 = vunpack.c.l.b16 %v8341
      %v8987 = vunpack.c.h.b16 %v8341
      %v8988 = vunpack.c.l.b16 %v8342
      %v8989 = vunpack.c.l.b16 %v8343
      %v8990 = vunpack.c.h.b16 %v8343
      %v8991 = vunpack.c.l.b16 %v8344
      %v8992 = vunpack.c.l.b16 %v8345
      %v8993 = vunpack.c.h.b16 %v8345
      %v8994 = vunpack.c.l.b16 %v8346
      %v8995 = vunpack.c.l.b16 %v8347
      %v8996 = vunpack.c.h.b16 %v8347
      %v8997 = vunpack.c.l.b16 %v8348
      %v8998 = vunpack.c.l.b16 %v8349
      %v8999 = vunpack.c.h.b16 %v8349
      %v9000 = vunpack.c.l.b16 %v8350
      %v9001 = vunpack.c.l.b16 %v8351
      %v9002 = vunpack.c.h.b16 %v8351
      %v9003 = vunpack.c.l.b16 %v8352
      %v9004 = vunpack.c.l.b16 %v8353
      %v9005 = vunpack.c.h.b16 %v8353
      %v9006 = vunpack.c.l.b16 %v8354
      %v9007 = vunpack.c.l.b16 %v8355
      %v9008 = vunpack.c.h.b16 %v8355
      %v9009 = vunpack.c.l.b16 %v8356
      %v9010 = vunpack.c.l.b16 %v8357
      %v9011 = vunpack.c.h.b16 %v8357
      %v9012 = vunpack.c.l.b16 %v8358
      %v9013 = vunpack.c.l.b16 %v8359
      %v9014 = vunpack.c.h.b16 %v8359
      %v9015 = vunpack.c.l.b16 %v8360
      %v9016 = vunpack.c.l.b16 %v8361
      %v9017 = vunpack.c.h.b16 %v8361
      %v9018 = vunpack.c.l.b16 %v8362
      %v9019 = vunpack.c.l.b16 %v8363
      %v9020 = vunpack.c.h.b16 %v8363
      %v9021 = vunpack.c.l.b16 %v8364
      %v9022 = vunpack.c.l.b16 %v8365
      %v9023 = vunpack.c.h.b16 %v8365
      %v9024 = vunpack.c.l.b16 %v8366
      %v9025 = vunpack.c.l.b16 %v8367
      %v9026 = vunpack.c.h.b16 %v8367
      %v9027 = vunpack.c.l.b16 %v8368
      %v9028 = vunpack.c.l.b16 %v8369
      %v9029 = vunpack.c.h.b16 %v8369
      %v9030 = vunpack.c.l.b16 %v8370
      %v9031 = vunpack.c.l.b16 %v8371
      %v9032 = vunpack.c.h.b16 %v8371
      %v9033 = vunpack.c.l.b16 %v8372
      %v9034 = vunpack.c.l.b16 %v8373
      %v9035 = vunpack.c.h.b16 %v8373
      %v9036 = vunpack.c.l.b16 %v8374
      %v9037 = vunpack.c.l.b16 %v8375
      %v9038 = vunpack.c.h.b16 %v8375
      %v9039 = vunpack.c.l.b16 %v8376
      %v9040 = vunpack.c.l.b16 %v8377
      %v9041 = vunpack.c.h.b16 %v8377
      %v9042 = vunpack.c.l.b16 %v8378
      %v9043 = vunpack.c.l.b16 %v8379
      %v9044 = vunpack.c.h.b16 %v8379
      %v9045 = vunpack.c.l.b16 %v8380
      %v9046 = vunpack.c.l.b16 %v8381
      %v9047 = vunpack.c.h.b16 %v8381
      %v9048 = vunpack.c.l.b16 %v8382
      %v9049 = vunpack.c.l.b16 %v8383
      %v9050 = vunpack.c.h.b16 %v8383
      %v9051 = vunpack.c.l.b16 %v8384
      %v9052 = vunpack.c.l.b16 %v8385
      %v9053 = vunpack.c.h.b16 %v8385
      %v9054 = vunpack.c.l.b16 %v8386
      %v9055 = vunpack.c.l.b16 %v8387
      %v9056 = vunpack.c.h.b16 %v8387
      %v9057 = vunpack.c.l.b16 %v8388
      %v9058 = vunpack.c.l.b16 %v8389
      %v9059 = vunpack.c.h.b16 %v8389
      %v9060 = vunpack.c.l.b16 %v8390
      %v9061 = vunpack.c.l.b16 %v8391
      %v9062 = vunpack.c.h.b16 %v8391
      %v9063 = vunpack.c.l.b16 %v8392
      %v9064 = vunpack.c.l.b16 %v8393
      %v9065 = vunpack.c.h.b16 %v8393
      %v9066 = vunpack.c.l.b16 %v8394
      %v9067 = vunpack.c.l.b16 %v8395
      %v9068 = vunpack.c.h.b16 %v8395
      %v9069 = vunpack.c.l.b16 %v8396
      %v9070 = vunpack.c.l.b16 %v8397
      %v9071 = vunpack.c.h.b16 %v8397
      %v9072 = vunpack.c.l.b16 %v8398
      %v9073 = vunpack.c.l.b16 %v8399
      %v9074 = vunpack.c.h.b16 %v8399
      %v9075 = vunpack.c.l.b16 %v8400
      %v9076 = vunpack.c.l.b16 %v8401
      %v9077 = vunpack.c.h.b16 %v8401
      %v9078 = vunpack.c.l.b16 %v8402
      %v9079 = vunpack.c.l.b16 %v8403
      %v9080 = vunpack.c.h.b16 %v8403
      %v9081 = vunpack.c.l.b16 %v8404
      %v9082 = vunpack.c.l.b16 %v8405
      %v9083 = vunpack.c.h.b16 %v8405
      %v9084 = vunpack.c.l.b16 %v8406
      %v9085 = vunpack.c.l.b16 %v8407
      %v9086 = vunpack.c.h.b16 %v8407
      %v9087 = vunpack.c.l.b16 %v8408
      %v9088 = vunpack.c.l.b16 %v8409
      %v9089 = vunpack.c.h.b16 %v8409
      %v9090 = vunpack.c.l.b16 %v8410
      %v9091 = vunpack.c.l.b16 %v8411
      %v9092 = vunpack.c.h.b16 %v8411
      %v9093 = vunpack.c.l.b16 %v8412
      %v9094 = vunpack.c.l.b16 %v8413
      %v9095 = vunpack.c.h.b16 %v8413
      %v9096 = vunpack.c.l.b16 %v8414
      %v9097 = vunpack.c.l.b16 %v8415
      %v9098 = vunpack.c.h.b16 %v8415
      %v9099 = vunpack.c.l.b16 %v8416
      %v9100 = vunpack.c.l.b16 %v8417
      %v9101 = vunpack.c.h.b16 %v8417
      %v9102 = vunpack.c.l.b16 %v8418
      %v9103 = vunpack.c.l.b16 %v8419
      %v9104 = vunpack.c.h.b16 %v8419
      %v9105 = vunpack.c.l.b16 %v8420
      %v9106 = vunpack.c.l.b16 %v8421
      %v9107 = vunpack.c.h.b16 %v8421
      %v9108 = vunpack.c.l.b16 %v8422
      %v9109 = vunpack.c.l.b16 %v8423
      %v9110 = vunpack.c.h.b16 %v8423
      %v9111 = vunpack.c.l.b16 %v8424
      %v9112 = vunpack.c.l.b16 %v8425
      %v9113 = vunpack.c.h.b16 %v8425
      %v9114 = vunpack.c.l.b16 %v8426
      %v9115 = vunpack.c.l.b16 %v8427
      %v9116 = vunpack.c.h.b16 %v8427
      %v9117 = vunpack.c.l.b16 %v8428
      %v9118 = vpack.c.b16 %v8737, %v8734
      %v9119 = vpack.c.b16 %v8738, %v8735
      %v9120 = vpack.c.b16 %v8739, %v8736
      %v9121 = vpack.c.b16 %v8743, %v8740
      %v9122 = vpack.c.b16 %v8744, %v8741
      %v9123 = vpack.c.b16 %v8745, %v8742
      %v9124 = vpack.c.b16 %v8749, %v8746
      %v9125 = vpack.c.b16 %v8750, %v8747
      %v9126 = vpack.c.b16 %v8751, %v8748
      %v9127 = vpack.c.b16 %v8755, %v8752
      %v9128 = vpack.c.b16 %v8756, %v8753
      %v9129 = vpack.c.b16 %v8757, %v8754
      %v9130 = vpack.c.b16 %v8761, %v8758
      %v9131 = vpack.c.b16 %v8762, %v8759
      %v9132 = vpack.c.b16 %v8763, %v8760
      %v9133 = vpack.c.b16 %v8767, %v8764
      %v9134 = vpack.c.b16 %v8768, %v8765
      %v9135 = vpack.c.b16 %v8769, %v8766
      %v9136 = vpack.c.b16 %v8773, %v8770
      %v9137 = vpack.c.b16 %v8774, %v8771
      %v9138 = vpack.c.b16 %v8775, %v8772
      %v9139 = vpack.c.b16 %v8779, %v8776
      %v9140 = vpack.c.b16 %v8780, %v8777
      %v9141 = vpack.c.b16 %v8781, %v8778
      %v9142 = vpack.c.b16 %v8785, %v8782
      %v9143 = vpack.c.b16 %v8786, %v8783
      %v9144 = vpack.c.b16 %v8787, %v8784
      %v9145 = vpack.c.b16 %v8791, %v8788
      %v9146 = vpack.c.b16 %v8792, %v8789
      %v9147 = vpack.c.b16 %v8793, %v8790
      %v9148 = vpack.c.b16 %v8797, %v8794
      %v9149 = vpack.c.b16 %v8798, %v8795
      %v9150 = vpack.c.b16 %v8799, %v8796
      %v9151 = vpack.c.b16 %v8803, %v8800
      %v9152 = vpack.c.b16 %v8804, %v8801
      %v9153 = vpack.c.b16 %v8805, %v8802
      %v9154 = vpack.c.b16 %v8809, %v8806
      %v9155 = vpack.c.b16 %v8810, %v8807
      %v9156 = vpack.c.b16 %v8811, %v8808
      %v9157 = vpack.c.b16 %v8815, %v8812
      %v9158 = vpack.c.b16 %v8816, %v8813
      %v9159 = vpack.c.b16 %v8817, %v8814
      %v9160 = vpack.c.b16 %v8821, %v8818
      %v9161 = vpack.c.b16 %v8822, %v8819
      %v9162 = vpack.c.b16 %v8823, %v8820
      %v9163 = vpack.c.b16 %v8827, %v8824
      %v9164 = vpack.c.b16 %v8828, %v8825
      %v9165 = vpack.c.b16 %v8829, %v8826
      %v9166 = vpack.c.b16 %v8833, %v8830
      %v9167 = vpack.c.b16 %v8834, %v8831
      %v9168 = vpack.c.b16 %v8835, %v8832
      %v9169 = vpack.c.b16 %v8839, %v8836
      %v9170 = vpack.c.b16 %v8840, %v8837
      %v9171 = vpack.c.b16 %v8841, %v8838
      %v9172 = vpack.c.b16 %v8845, %v8842
      %v9173 = vpack.c.b16 %v8846, %v8843
      %v9174 = vpack.c.b16 %v8847, %v8844
      %v9175 = vpack.c.b16 %v8851, %v8848
      %v9176 = vpack.c.b16 %v8852, %v8849
      %v9177 = vpack.c.b16 %v8853, %v8850
      %v9178 = vpack.c.b16 %v8857, %v8854
      %v9179 = vpack.c.b16 %v8858, %v8855
      %v9180 = vpack.c.b16 %v8859, %v8856
      %v9181 = vpack.c.b16 %v8863, %v8860
      %v9182 = vpack.c.b16 %v8864, %v8861
      %v9183 = vpack.c.b16 %v8865, %v8862
      %v9184 = vpack.c.b16 %v8869, %v8866
      %v9185 = vpack.c.b16 %v8870, %v8867
      %v9186 = vpack.c.b16 %v8871, %v8868
      %v9187 = vpack.c.b16 %v8875, %v8872
      %v9188 = vpack.c.b16 %v8876, %v8873
      %v9189 = vpack.c.b16 %v8877, %v8874
      %v9190 = vpack.c.b16 %v8881, %v8878
      %v9191 = vpack.c.b16 %v8882, %v8879
      %v9192 = vpack.c.b16 %v8883, %v8880
      %v9193 = vpack.c.b16 %v8887, %v8884
      %v9194 = vpack.c.b16 %v8888, %v8885
      %v9195 = vpack.c.b16 %v8889, %v8886
      %v9196 = vpack.c.b16 %v8893, %v8890
      %v9197 = vpack.c.b16 %v8894, %v8891
      %v9198 = vpack.c.b16 %v8895, %v8892
      %v9199 = vpack.c.b16 %v8899, %v8896
      %v9200 = vpack.c.b16 %v8900, %v8897
      %v9201 = vpack.c.b16 %v8901, %v8898
      %v9202 = vpack.c.b16 %v8905, %v8902
      %v9203 = vpack.c.b16 %v8906, %v8903
      %v9204 = vpack.c.b16 %v8907, %v8904
      %v9205 = vpack.c.b16 %v8911, %v8908
      %v9206 = vpack.c.b16 %v8912, %v8909
      %v9207 = vpack.c.b16 %v8913, %v8910
      %v9208 = vpack.c.b16 %v8917, %v8914
      %v9209 = vpack.c.b16 %v8918, %v8915
      %v9210 = vpack.c.b16 %v8919, %v8916
      %v9211 = vpack.c.b16 %v8923, %v8920
      %v9212 = vpack.c.b16 %v8924, %v8921
      %v9213 = vpack.c.b16 %v8925, %v8922
      %v9214 = vpack.c.b16 %v8929, %v8926
      %v9215 = vpack.c.b16 %v8930, %v8927
      %v9216 = vpack.c.b16 %v8931, %v8928
      %v9217 = vpack.c.b16 %v8935, %v8932
      %v9218 = vpack.c.b16 %v8936, %v8933
      %v9219 = vpack.c.b16 %v8937, %v8934
      %v9220 = vpack.c.b16 %v8941, %v8938
      %v9221 = vpack.c.b16 %v8942, %v8939
      %v9222 = vpack.c.b16 %v8943, %v8940
      %v9223 = vpack.c.b16 %v8947, %v8944
      %v9224 = vpack.c.b16 %v8948, %v8945
      %v9225 = vpack.c.b16 %v8949, %v8946
      %v9226 = vpack.c.b16 %v8953, %v8950
      %v9227 = vpack.c.b16 %v8954, %v8951
      %v9228 = vpack.c.b16 %v8955, %v8952
      %v9229 = vpack.c.b16 %v8959, %v8956
      %v9230 = vpack.c.b16 %v8960, %v8957
      %v9231 = vpack.c.b16 %v8961, %v8958
      %v9232 = vpack.c.b16 %v8965, %v8962
      %v9233 = vpack.c.b16 %v8966, %v8963
      %v9234 = vpack.c.b16 %v8967, %v8964
      %v9235 = vpack.c.b16 %v8971, %v8968
      %v9236 = vpack.c.b16 %v8972, %v8969
      %v9237 = vpack.c.b16 %v8973, %v8970
      %v9238 = vpack.c.b16 %v8977, %v8974
      %v9239 = vpack.c.b16 %v8978, %v8975
      %v9240 = vpack.c.b16 %v8979, %v8976
      %v9241 = vpack.c.b16 %v8983, %v8980
      %v9242 = vpack.c.b16 %v8984, %v8981
      %v9243 = vpack.c.b16 %v8985, %v8982
      %v9244 = vpack.c.b16 %v8989, %v8986
      %v9245 = vpack.c.b16 %v8990, %v8987
      %v9246 = vpack.c.b16 %v8991, %v8988
      %v9247 = vpack.c.b16 %v8995, %v8992
      %v9248 = vpack.c.b16 %v8996, %v8993
      %v9249 = vpack.c.b16 %v8997, %v8994
      %v9250 = vpack.c.b16 %v9001, %v8998
      %v9251 = vpack.c.b16 %v9002, %v8999
      %v9252 = vpack.c.b16 %v9003, %v9000
      %v9253 = vpack.c.b16 %v9007, %v9004
      %v9254 = vpack.c.b16 %v9008, %v9005
      %v9255 = vpack.c.b16 %v9009, %v9006
      %v9256 = vpack.c.b16 %v9013, %v9010
      %v9257 = vpack.c.b16 %v9014, %v9011
      %v9258 = vpack.c.b16 %v9015, %v9012
      %v9259 = vpack.c.b16 %v9019, %v9016
      %v9260 = vpack.c.b16 %v9020, %v9017
      %v9261 = vpack.c.b16 %v9021, %v9018
      %v9262 = vpack.c.b16 %v9025, %v9022
      %v9263 = vpack.c.b16 %v9026, %v9023
      %v9264 = vpack.c.b16 %v9027, %v9024
      %v9265 = vpack.c.b16 %v9031, %v9028
      %v9266 = vpack.c.b16 %v9032, %v9029
      %v9267 = vpack.c.b16 %v9033, %v9030
      %v9268 = vpack.c.b16 %v9037, %v9034
      %v9269 = vpack.c.b16 %v9038, %v9035
      %v9270 = vpack.c.b16 %v9039, %v9036
      %v9271 = vpack.c.b16 %v9043, %v9040
      %v9272 = vpack.c.b16 %v9044, %v9041
      %v9273 = vpack.c.b16 %v9045, %v9042
      %v9274 = vpack.c.b16 %v9049, %v9046
      %v9275 = vpack.c.b16 %v9050, %v9047
      %v9276 = vpack.c.b16 %v9051, %v9048
      %v9277 = vpack.c.b16 %v9055, %v9052
      %v9278 = vpack.c.b16 %v9056, %v9053
      %v9279 = vpack.c.b16 %v9057, %v9054
      %v9280 = vpack.c.b16 %v9061, %v9058
      %v9281 = vpack.c.b16 %v9062, %v9059
      %v9282 = vpack.c.b16 %v9063, %v9060
      %v9283 = vpack.c.b16 %v9067, %v9064
      %v9284 = vpack.c.b16 %v9068, %v9065
      %v9285 = vpack.c.b16 %v9069, %v9066
      %v9286 = vpack.c.b16 %v9073, %v9070
      %v9287 = vpack.c.b16 %v9074, %v9071
      %v9288 = vpack.c.b16 %v9075, %v9072
      %v9289 = vpack.c.b16 %v9079, %v9076
      %v9290 = vpack.c.b16 %v9080, %v9077
      %v9291 = vpack.c.b16 %v9081, %v9078
      %v9292 = vpack.c.b16 %v9085, %v9082
      %v9293 = vpack.c.b16 %v9086, %v9083
      %v9294 = vpack.c.b16 %v9087, %v9084
      %v9295 = vpack.c.b16 %v9091, %v9088
      %v9296 = vpack.c.b16 %v9092, %v9089
      %v9297 = vpack.c.b16 %v9093, %v9090
      %v9298 = vpack.c.b16 %v9097, %v9094
      %v9299 = vpack.c.b16 %v9098, %v9095
      %v9300 = vpack.c.b16 %v9099, %v9096
      %v9301 = vpack.c.b16 %v9103, %v9100
      %v9302 = vpack.c.b16 %v9104, %v9101
      %v9303 = vpack.c.b16 %v9105, %v9102
      %v9304 = vpack.c.b16 %v9109, %v9106
      %v9305 = vpack.c.b16 %v9110, %v9107
      %v9306 = vpack.c.b16 %v9111, %v9108
      %v9307 = vpack.c.b16 %v9115, %v9112
      %v9308 = vpack.c.b16 %v9116, %v9113
      %v9309 = vpack.c.b16 %v9117, %v9114
      %v9550 = vunpack.c.l.b16 %v8430
      %v9551 = vunpack.c.l.b16 %v8431
      %v9552 = vunpack.c.l.b16 %v8432
      %v9553 = vunpack.c.l.b16 %v8433
      %v9554 = vunpack.c.l.b16 %v8434
      %v9555 = vunpack.c.l.b16 %v8435
      %v9556 = vunpack.c.l.b16 %v8436
      %v9557 = vunpack.c.l.b16 %v8437
      %v9558 = vunpack.c.l.b16 %v8438
      %v9559 = vunpack.c.l.b16 %v8439
      %v9560 = vunpack.c.l.b16 %v8440
      %v9561 = vunpack.c.l.b16 %v8441
      %v9562 = vunpack.c.l.b16 %v8442
      %v9563 = vunpack.c.l.b16 %v8443
      %v9564 = vunpack.c.l.b16 %v8444
      %v9565 = vunpack.c.l.b16 %v8445
      %v9566 = vunpack.c.l.b16 %v8446
      %v9567 = vunpack.c.l.b16 %v8447
      %v9568 = vunpack.c.l.b16 %v8448
      %v9569 = vunpack.c.l.b16 %v8449
      %v9570 = vunpack.c.l.b16 %v8450
      %v9571 = vunpack.c.l.b16 %v8451
      %v9572 = vunpack.c.l.b16 %v8452
      %v9573 = vunpack.c.l.b16 %v8453
      %v9574 = vunpack.c.l.b16 %v8454
      %v9575 = vunpack.c.l.b16 %v8455
      %v9576 = vunpack.c.l.b16 %v8456
      %v9577 = vunpack.c.l.b16 %v8457
      %v9578 = vunpack.c.l.b16 %v8458
      %v9579 = vunpack.c.l.b16 %v8459
      %v9580 = vunpack.c.l.b16 %v8460
      %v9581 = vunpack.c.l.b16 %v8461
      %v9582 = vunpack.c.l.b16 %v8462
      %v9583 = vunpack.c.l.b16 %v8463
      %v9584 = vunpack.c.l.b16 %v8464
      %v9585 = vunpack.c.l.b16 %v8465
      %v9586 = vunpack.c.l.b16 %v8466
      %v9587 = vunpack.c.l.b16 %v8467
      %v9588 = vunpack.c.l.b16 %v8468
      %v9589 = vunpack.c.l.b16 %v8469
      %v9590 = vunpack.c.l.b16 %v8470
      %v9591 = vunpack.c.l.b16 %v8471
      %v9592 = vunpack.c.l.b16 %v8472
      %v9593 = vunpack.c.l.b16 %v8473
      %v9594 = vunpack.c.l.b16 %v8474
      %v9595 = vunpack.c.l.b16 %v8475
      %v9596 = vunpack.c.l.b16 %v8476
      %v9597 = vunpack.c.l.b16 %v8477
      %v9598 = vpack.c.b16 %v9551, %v9550
      %v9599 = vpack.c.b16 %v9553, %v9552
      %v9600 = vpack.c.b16 %v9555, %v9554
      %v9601 = vpack.c.b16 %v9557, %v9556
      %v9602 = vpack.c.b16 %v9559, %v9558
      %v9603 = vpack.c.b16 %v9561, %v9560
      %v9604 = vpack.c.b16 %v9563, %v9562
      %v9605 = vpack.c.b16 %v9565, %v9564
      %v9606 = vpack.c.b16 %v9567, %v9566
      %v9607 = vpack.c.b16 %v9569, %v9568
      %v9608 = vpack.c.b16 %v9571, %v9570
      %v9609 = vpack.c.b16 %v9573, %v9572
      %v9610 = vpack.c.b16 %v9575, %v9574
      %v9611 = vpack.c.b16 %v9577, %v9576
      %v9612 = vpack.c.b16 %v9579, %v9578
      %v9613 = vpack.c.b16 %v9581, %v9580
      %v9614 = vpack.c.b16 %v9583, %v9582
      %v9615 = vpack.c.b16 %v9585, %v9584
      %v9616 = vpack.c.b16 %v9587, %v9586
      %v9617 = vpack.c.b16 %v9589, %v9588
      %v9618 = vpack.c.b16 %v9591, %v9590
      %v9619 = vpack.c.b16 %v9593, %v9592
      %v9620 = vpack.c.b16 %v9595, %v9594
      %v9621 = vpack.c.b16 %v9597, %v9596
      %9646 = vmatpush.bf16.msra.mxu0 %v9605
      %9647 = vmatpush.bf16.msra.mxu0 %v9604
      %9648 = vmatpush.bf16.msra.mxu0 %v9603
      %9649 = vmatpush.bf16.msra.mxu0 %v9602
      %9650 = vmatpush.bf16.msra.mxu0 %v9601
      %9651 = vmatpush.bf16.msra.mxu0 %v9600
      %9652 = vmatpush.bf16.msra.mxu0 %v9599
      %9653 = vmatpush.bf16.msra.mxu0 %v9598
      %9654 = vmatmul.bf16.gmra.mxu0 %v9118
      %v9655 = vpop.f32.mrf.mxu0
      %v9656 = vadd.f32 0.0, %v9655
      %v9657 = vpop.f32.mrf.mxu0
      %v9658 = vadd.f32 0.0, %v9657
      %9659 = vmatmul.bf16.gmra.mxu0 %v9121
      %v9660 = vpop.f32.mrf.mxu0
      %v9661 = vadd.f32 0.0, %v9660
      %v9662 = vpop.f32.mrf.mxu0
      %v9663 = vadd.f32 0.0, %v9662
      %9664 = vmatmul.bf16.gmra.mxu0 %v9124
      %v9665 = vpop.f32.mrf.mxu0
      %v9666 = vadd.f32 0.0, %v9665
      %v9667 = vpop.f32.mrf.mxu0
      %v9668 = vadd.f32 0.0, %v9667
      %9669 = vmatmul.bf16.gmra.mxu0 %v9127
      %v9670 = vpop.f32.mrf.mxu0
      %v9671 = vadd.f32 0.0, %v9670
      %v9672 = vpop.f32.mrf.mxu0
      %v9673 = vadd.f32 0.0, %v9672
      %9674 = vmatmul.bf16.gmra.mxu0 %v9130
      %v9675 = vpop.f32.mrf.mxu0
      %v9676 = vadd.f32 0.0, %v9675
      %v9677 = vpop.f32.mrf.mxu0
      %v9678 = vadd.f32 0.0, %v9677
      %9679 = vmatmul.bf16.gmra.mxu0 %v9133
      %v9680 = vpop.f32.mrf.mxu0
      %v9681 = vadd.f32 0.0, %v9680
      %v9682 = vpop.f32.mrf.mxu0
      %v9683 = vadd.f32 0.0, %v9682
      %9684 = vmatmul.bf16.gmra.mxu0 %v9136
      %v9685 = vpop.f32.mrf.mxu0
      %v9686 = vadd.f32 0.0, %v9685
      %v9687 = vpop.f32.mrf.mxu0
      %v9688 = vadd.f32 0.0, %v9687
      %9689 = vmatmul.bf16.gmra.mxu0 %v9139
      %v9690 = vpop.f32.mrf.mxu0
      %v9691 = vadd.f32 0.0, %v9690
      %v9692 = vpop.f32.mrf.mxu0
      %v9693 = vadd.f32 0.0, %v9692
      %9694 = vmatmul.bf16.gmra.mxu0 %v9142
      %v9695 = vpop.f32.mrf.mxu0
      %v9696 = vadd.f32 0.0, %v9695
      %v9697 = vpop.f32.mrf.mxu0
      %v9698 = vadd.f32 0.0, %v9697
      %9699 = vmatmul.bf16.gmra.mxu0 %v9145
      %v9700 = vpop.f32.mrf.mxu0
      %v9701 = vadd.f32 0.0, %v9700
      %v9702 = vpop.f32.mrf.mxu0
      %v9703 = vadd.f32 0.0, %v9702
      %9704 = vmatmul.bf16.gmra.mxu0 %v9148
      %v9705 = vpop.f32.mrf.mxu0
      %v9706 = vadd.f32 0.0, %v9705
      %v9707 = vpop.f32.mrf.mxu0
      %v9708 = vadd.f32 0.0, %v9707
      %9709 = vmatmul.bf16.gmra.mxu0 %v9151
      %v9710 = vpop.f32.mrf.mxu0
      %v9711 = vadd.f32 0.0, %v9710
      %v9712 = vpop.f32.mrf.mxu0
      %v9713 = vadd.f32 0.0, %v9712
      %9714 = vmatmul.bf16.gmra.mxu0 %v9154
      %v9715 = vpop.f32.mrf.mxu0
      %v9716 = vadd.f32 0.0, %v9715
      %v9717 = vpop.f32.mrf.mxu0
      %v9718 = vadd.f32 0.0, %v9717
      %9719 = vmatmul.bf16.gmra.mxu0 %v9157
      %v9720 = vpop.f32.mrf.mxu0
      %v9721 = vadd.f32 0.0, %v9720
      %v9722 = vpop.f32.mrf.mxu0
      %v9723 = vadd.f32 0.0, %v9722
      %9724 = vmatmul.bf16.gmra.mxu0 %v9160
      %v9725 = vpop.f32.mrf.mxu0
      %v9726 = vadd.f32 0.0, %v9725
      %v9727 = vpop.f32.mrf.mxu0
      %v9728 = vadd.f32 0.0, %v9727
      %9729 = vmatmul.bf16.gmra.mxu0 %v9163
      %v9730 = vpop.f32.mrf.mxu0
      %v9731 = vadd.f32 0.0, %v9730
      %v9732 = vpop.f32.mrf.mxu0
      %v9733 = vadd.f32 0.0, %v9732
      %9734 = vmatmul.bf16.gmra.mxu0 %v9166
      %v9735 = vpop.f32.mrf.mxu0
      %v9736 = vadd.f32 0.0, %v9735
      %v9737 = vpop.f32.mrf.mxu0
      %v9738 = vadd.f32 0.0, %v9737
      %9739 = vmatmul.bf16.gmra.mxu0 %v9169
      %v9740 = vpop.f32.mrf.mxu0
      %v9741 = vadd.f32 0.0, %v9740
      %v9742 = vpop.f32.mrf.mxu0
      %v9743 = vadd.f32 0.0, %v9742
      %9744 = vmatmul.bf16.gmra.mxu0 %v9172
      %v9745 = vpop.f32.mrf.mxu0
      %v9746 = vadd.f32 0.0, %v9745
      %v9747 = vpop.f32.mrf.mxu0
      %v9748 = vadd.f32 0.0, %v9747
      %9749 = vmatmul.bf16.gmra.mxu0 %v9175
      %v9750 = vpop.f32.mrf.mxu0
      %v9751 = vadd.f32 0.0, %v9750
      %v9752 = vpop.f32.mrf.mxu0
      %v9753 = vadd.f32 0.0, %v9752
      %9754 = vmatmul.bf16.gmra.mxu0 %v9178
      %v9755 = vpop.f32.mrf.mxu0
      %v9756 = vadd.f32 0.0, %v9755
      %v9757 = vpop.f32.mrf.mxu0
      %v9758 = vadd.f32 0.0, %v9757
      %9759 = vmatmul.bf16.gmra.mxu0 %v9181
      %v9760 = vpop.f32.mrf.mxu0
      %v9761 = vadd.f32 0.0, %v9760
      %v9762 = vpop.f32.mrf.mxu0
      %v9763 = vadd.f32 0.0, %v9762
      %9764 = vmatmul.bf16.gmra.mxu0 %v9184
      %v9765 = vpop.f32.mrf.mxu0
      %v9766 = vadd.f32 0.0, %v9765
      %v9767 = vpop.f32.mrf.mxu0
      %v9768 = vadd.f32 0.0, %v9767
      %9769 = vmatmul.bf16.gmra.mxu0 %v9187
      %v9770 = vpop.f32.mrf.mxu0
      %v9771 = vadd.f32 0.0, %v9770
      %v9772 = vpop.f32.mrf.mxu0
      %v9773 = vadd.f32 0.0, %v9772
      %9774 = vmatmul.bf16.gmra.mxu0 %v9190
      %v9775 = vpop.f32.mrf.mxu0
      %v9776 = vadd.f32 0.0, %v9775
      %v9777 = vpop.f32.mrf.mxu0
      %v9778 = vadd.f32 0.0, %v9777
      %9779 = vmatmul.bf16.gmra.mxu0 %v9193
      %v9780 = vpop.f32.mrf.mxu0
      %v9781 = vadd.f32 0.0, %v9780
      %v9782 = vpop.f32.mrf.mxu0
      %v9783 = vadd.f32 0.0, %v9782
      %9784 = vmatmul.bf16.gmra.mxu0 %v9196
      %v9785 = vpop.f32.mrf.mxu0
      %v9786 = vadd.f32 0.0, %v9785
      %v9787 = vpop.f32.mrf.mxu0
      %v9788 = vadd.f32 0.0, %v9787
      %9789 = vmatmul.bf16.gmra.mxu0 %v9199
      %v9790 = vpop.f32.mrf.mxu0
      %v9791 = vadd.f32 0.0, %v9790
      %v9792 = vpop.f32.mrf.mxu0
      %v9793 = vadd.f32 0.0, %v9792
      %9794 = vmatmul.bf16.gmra.mxu0 %v9202
      %v9795 = vpop.f32.mrf.mxu0
      %v9796 = vadd.f32 0.0, %v9795
      %v9797 = vpop.f32.mrf.mxu0
      %v9798 = vadd.f32 0.0, %v9797
      %9799 = vmatmul.bf16.gmra.mxu0 %v9205
      %v9800 = vpop.f32.mrf.mxu0
      %v9801 = vadd.f32 0.0, %v9800
      %v9802 = vpop.f32.mrf.mxu0
      %v9803 = vadd.f32 0.0, %v9802
      %9804 = vmatmul.bf16.gmra.mxu0 %v9208
      %v9805 = vpop.f32.mrf.mxu0
      %v9806 = vadd.f32 0.0, %v9805
      %v9807 = vpop.f32.mrf.mxu0
      %v9808 = vadd.f32 0.0, %v9807
      %9809 = vmatmul.bf16.gmra.mxu0 %v9211
      %v9810 = vpop.f32.mrf.mxu0
      %v9811 = vadd.f32 0.0, %v9810
      %v9812 = vpop.f32.mrf.mxu0
      %v9813 = vadd.f32 0.0, %v9812
      %9814 = vmatmul.bf16.gmra.mxu0 %v9214
      %v9815 = vpop.f32.mrf.mxu0
      %v9816 = vadd.f32 0.0, %v9815
      %v9817 = vpop.f32.mrf.mxu0
      %v9818 = vadd.f32 0.0, %v9817
      %9819 = vmatmul.bf16.gmra.mxu0 %v9217
      %v9820 = vpop.f32.mrf.mxu0
      %v9821 = vadd.f32 0.0, %v9820
      %v9822 = vpop.f32.mrf.mxu0
      %v9823 = vadd.f32 0.0, %v9822
      %9824 = vmatmul.bf16.gmra.mxu0 %v9220
      %v9825 = vpop.f32.mrf.mxu0
      %v9826 = vadd.f32 0.0, %v9825
      %v9827 = vpop.f32.mrf.mxu0
      %v9828 = vadd.f32 0.0, %v9827
      %9829 = vmatmul.bf16.gmra.mxu0 %v9223
      %v9830 = vpop.f32.mrf.mxu0
      %v9831 = vadd.f32 0.0, %v9830
      %v9832 = vpop.f32.mrf.mxu0
      %v9833 = vadd.f32 0.0, %v9832
      %9834 = vmatmul.bf16.gmra.mxu0 %v9226
      %v9835 = vpop.f32.mrf.mxu0
      %v9836 = vadd.f32 0.0, %v9835
      %v9837 = vpop.f32.mrf.mxu0
      %v9838 = vadd.f32 0.0, %v9837
      %9839 = vmatmul.bf16.gmra.mxu0 %v9229
      %v9840 = vpop.f32.mrf.mxu0
      %v9841 = vadd.f32 0.0, %v9840
      %v9842 = vpop.f32.mrf.mxu0
      %v9843 = vadd.f32 0.0, %v9842
      %9844 = vmatmul.bf16.gmra.mxu0 %v9232
      %v9845 = vpop.f32.mrf.mxu0
      %v9846 = vadd.f32 0.0, %v9845
      %v9847 = vpop.f32.mrf.mxu0
      %v9848 = vadd.f32 0.0, %v9847
      %9849 = vmatmul.bf16.gmra.mxu0 %v9235
      %v9850 = vpop.f32.mrf.mxu0
      %v9851 = vadd.f32 0.0, %v9850
      %v9852 = vpop.f32.mrf.mxu0
      %v9853 = vadd.f32 0.0, %v9852
      %9854 = vmatmul.bf16.gmra.mxu0 %v9238
      %v9855 = vpop.f32.mrf.mxu0
      %v9856 = vadd.f32 0.0, %v9855
      %v9857 = vpop.f32.mrf.mxu0
      %v9858 = vadd.f32 0.0, %v9857
      %9859 = vmatmul.bf16.gmra.mxu0 %v9241
      %v9860 = vpop.f32.mrf.mxu0
      %v9861 = vadd.f32 0.0, %v9860
      %v9862 = vpop.f32.mrf.mxu0
      %v9863 = vadd.f32 0.0, %v9862
      %9864 = vmatmul.bf16.gmra.mxu0 %v9244
      %v9865 = vpop.f32.mrf.mxu0
      %v9866 = vadd.f32 0.0, %v9865
      %v9867 = vpop.f32.mrf.mxu0
      %v9868 = vadd.f32 0.0, %v9867
      %9869 = vmatmul.bf16.gmra.mxu0 %v9247
      %v9870 = vpop.f32.mrf.mxu0
      %v9871 = vadd.f32 0.0, %v9870
      %v9872 = vpop.f32.mrf.mxu0
      %v9873 = vadd.f32 0.0, %v9872
      %9874 = vmatmul.bf16.gmra.mxu0 %v9250
      %v9875 = vpop.f32.mrf.mxu0
      %v9876 = vadd.f32 0.0, %v9875
      %v9877 = vpop.f32.mrf.mxu0
      %v9878 = vadd.f32 0.0, %v9877
      %9879 = vmatmul.bf16.gmra.mxu0 %v9253
      %v9880 = vpop.f32.mrf.mxu0
      %v9881 = vadd.f32 0.0, %v9880
      %v9882 = vpop.f32.mrf.mxu0
      %v9883 = vadd.f32 0.0, %v9882
      %9884 = vmatmul.bf16.gmra.mxu0 %v9256
      %v9885 = vpop.f32.mrf.mxu0
      %v9886 = vadd.f32 0.0, %v9885
      %v9887 = vpop.f32.mrf.mxu0
      %v9888 = vadd.f32 0.0, %v9887
      %9889 = vmatmul.bf16.gmra.mxu0 %v9259
      %v9890 = vpop.f32.mrf.mxu0
      %v9891 = vadd.f32 0.0, %v9890
      %v9892 = vpop.f32.mrf.mxu0
      %v9893 = vadd.f32 0.0, %v9892
      %9894 = vmatmul.bf16.gmra.mxu0 %v9262
      %v9895 = vpop.f32.mrf.mxu0
      %v9896 = vadd.f32 0.0, %v9895
      %v9897 = vpop.f32.mrf.mxu0
      %v9898 = vadd.f32 0.0, %v9897
      %9899 = vmatmul.bf16.gmra.mxu0 %v9265
      %v9900 = vpop.f32.mrf.mxu0
      %v9901 = vadd.f32 0.0, %v9900
      %v9902 = vpop.f32.mrf.mxu0
      %v9903 = vadd.f32 0.0, %v9902
      %9904 = vmatmul.bf16.gmra.mxu0 %v9268
      %v9905 = vpop.f32.mrf.mxu0
      %v9906 = vadd.f32 0.0, %v9905
      %v9907 = vpop.f32.mrf.mxu0
      %v9908 = vadd.f32 0.0, %v9907
      %9909 = vmatmul.bf16.gmra.mxu0 %v9271
      %v9910 = vpop.f32.mrf.mxu0
      %v9911 = vadd.f32 0.0, %v9910
      %v9912 = vpop.f32.mrf.mxu0
      %v9913 = vadd.f32 0.0, %v9912
      %9914 = vmatmul.bf16.gmra.mxu0 %v9274
      %v9915 = vpop.f32.mrf.mxu0
      %v9916 = vadd.f32 0.0, %v9915
      %v9917 = vpop.f32.mrf.mxu0
      %v9918 = vadd.f32 0.0, %v9917
      %9919 = vmatmul.bf16.gmra.mxu0 %v9277
      %v9920 = vpop.f32.mrf.mxu0
      %v9921 = vadd.f32 0.0, %v9920
      %v9922 = vpop.f32.mrf.mxu0
      %v9923 = vadd.f32 0.0, %v9922
      %9924 = vmatmul.bf16.gmra.mxu0 %v9280
      %v9925 = vpop.f32.mrf.mxu0
      %v9926 = vadd.f32 0.0, %v9925
      %v9927 = vpop.f32.mrf.mxu0
      %v9928 = vadd.f32 0.0, %v9927
      %9929 = vmatmul.bf16.gmra.mxu0 %v9283
      %v9930 = vpop.f32.mrf.mxu0
      %v9931 = vadd.f32 0.0, %v9930
      %v9932 = vpop.f32.mrf.mxu0
      %v9933 = vadd.f32 0.0, %v9932
      %9934 = vmatmul.bf16.gmra.mxu0 %v9286
      %v9935 = vpop.f32.mrf.mxu0
      %v9936 = vadd.f32 0.0, %v9935
      %v9937 = vpop.f32.mrf.mxu0
      %v9938 = vadd.f32 0.0, %v9937
      %9939 = vmatmul.bf16.gmra.mxu0 %v9289
      %v9940 = vpop.f32.mrf.mxu0
      %v9941 = vadd.f32 0.0, %v9940
      %v9942 = vpop.f32.mrf.mxu0
      %v9943 = vadd.f32 0.0, %v9942
      %9944 = vmatmul.bf16.gmra.mxu0 %v9292
      %v9945 = vpop.f32.mrf.mxu0
      %v9946 = vadd.f32 0.0, %v9945
      %v9947 = vpop.f32.mrf.mxu0
      %v9948 = vadd.f32 0.0, %v9947
      %9949 = vmatmul.bf16.gmra.mxu0 %v9295
      %v9950 = vpop.f32.mrf.mxu0
      %v9951 = vadd.f32 0.0, %v9950
      %v9952 = vpop.f32.mrf.mxu0
      %v9953 = vadd.f32 0.0, %v9952
      %9954 = vmatmul.bf16.gmra.mxu0 %v9298
      %v9955 = vpop.f32.mrf.mxu0
      %v9956 = vadd.f32 0.0, %v9955
      %v9957 = vpop.f32.mrf.mxu0
      %v9958 = vadd.f32 0.0, %v9957
      %9959 = vmatmul.bf16.gmra.mxu0 %v9301
      %v9960 = vpop.f32.mrf.mxu0
      %v9961 = vadd.f32 0.0, %v9960
      %v9962 = vpop.f32.mrf.mxu0
      %v9963 = vadd.f32 0.0, %v9962
      %9964 = vmatmul.bf16.gmra.mxu0 %v9304
      %v9965 = vpop.f32.mrf.mxu0
      %v9966 = vadd.f32 0.0, %v9965
      %v9967 = vpop.f32.mrf.mxu0
      %v9968 = vadd.f32 0.0, %v9967
      %9969 = vmatmul.bf16.gmra.mxu0 %v9307
      %v9970 = vpop.f32.mrf.mxu0
      %v9971 = vadd.f32 0.0, %v9970
      %v9972 = vpop.f32.mrf.mxu0
      %v9973 = vadd.f32 0.0, %v9972
      %9974 = vdwg.mxu0
      %9975 = vmatpush.bf16.msra.mxu0 %v9613
      %9976 = vmatpush.bf16.msra.mxu0 %v9612
      %9977 = vmatpush.bf16.msra.mxu0 %v9611
      %9978 = vmatpush.bf16.msra.mxu0 %v9610
      %9979 = vmatpush.bf16.msra.mxu0 %v9609
      %9980 = vmatpush.bf16.msra.mxu0 %v9608
      %9981 = vmatpush.bf16.msra.mxu0 %v9607
      %9982 = vmatpush.bf16.msra.mxu0 %v9606
      %9983 = vmatmul.bf16.gmra.mxu0 %v9119
      %v9984 = vpop.f32.mrf.mxu0
      %v9985 = vadd.f32 %v9656, %v9984
      %v9986 = vpop.f32.mrf.mxu0
      %v9987 = vadd.f32 %v9658, %v9986
      %9988 = vmatmul.bf16.gmra.mxu0 %v9122
      %v9989 = vpop.f32.mrf.mxu0
      %v9990 = vadd.f32 %v9661, %v9989
      %v9991 = vpop.f32.mrf.mxu0
      %v9992 = vadd.f32 %v9663, %v9991
      %9993 = vmatmul.bf16.gmra.mxu0 %v9125
      %v9994 = vpop.f32.mrf.mxu0
      %v9995 = vadd.f32 %v9666, %v9994
      %v9996 = vpop.f32.mrf.mxu0
      %v9997 = vadd.f32 %v9668, %v9996
      %9998 = vmatmul.bf16.gmra.mxu0 %v9128
      %v9999 = vpop.f32.mrf.mxu0
      %v10000 = vadd.f32 %v9671, %v9999
      %v10001 = vpop.f32.mrf.mxu0
      %v10002 = vadd.f32 %v9673, %v10001
      %10003 = vmatmul.bf16.gmra.mxu0 %v9131
      %v10004 = vpop.f32.mrf.mxu0
      %v10005 = vadd.f32 %v9676, %v10004
      %v10006 = vpop.f32.mrf.mxu0
      %v10007 = vadd.f32 %v9678, %v10006
      %10008 = vmatmul.bf16.gmra.mxu0 %v9134
      %v10009 = vpop.f32.mrf.mxu0
      %v10010 = vadd.f32 %v9681, %v10009
      %v10011 = vpop.f32.mrf.mxu0
      %v10012 = vadd.f32 %v9683, %v10011
      %10013 = vmatmul.bf16.gmra.mxu0 %v9137
      %v10014 = vpop.f32.mrf.mxu0
      %v10015 = vadd.f32 %v9686, %v10014
      %v10016 = vpop.f32.mrf.mxu0
      %v10017 = vadd.f32 %v9688, %v10016
      %10018 = vmatmul.bf16.gmra.mxu0 %v9140
      %v10019 = vpop.f32.mrf.mxu0
      %v10020 = vadd.f32 %v9691, %v10019
      %v10021 = vpop.f32.mrf.mxu0
      %v10022 = vadd.f32 %v9693, %v10021
      %10023 = vmatmul.bf16.gmra.mxu0 %v9143
      %v10024 = vpop.f32.mrf.mxu0
      %v10025 = vadd.f32 %v9696, %v10024
      %v10026 = vpop.f32.mrf.mxu0
      %v10027 = vadd.f32 %v9698, %v10026
      %10028 = vmatmul.bf16.gmra.mxu0 %v9146
      %v10029 = vpop.f32.mrf.mxu0
      %v10030 = vadd.f32 %v9701, %v10029
      %v10031 = vpop.f32.mrf.mxu0
      %v10032 = vadd.f32 %v9703, %v10031
      %10033 = vmatmul.bf16.gmra.mxu0 %v9149
      %v10034 = vpop.f32.mrf.mxu0
      %v10035 = vadd.f32 %v9706, %v10034
      %v10036 = vpop.f32.mrf.mxu0
      %v10037 = vadd.f32 %v9708, %v10036
      %10038 = vmatmul.bf16.gmra.mxu0 %v9152
      %v10039 = vpop.f32.mrf.mxu0
      %v10040 = vadd.f32 %v9711, %v10039
      %v10041 = vpop.f32.mrf.mxu0
      %v10042 = vadd.f32 %v9713, %v10041
      %10043 = vmatmul.bf16.gmra.mxu0 %v9155
      %v10044 = vpop.f32.mrf.mxu0
      %v10045 = vadd.f32 %v9716, %v10044
      %v10046 = vpop.f32.mrf.mxu0
      %v10047 = vadd.f32 %v9718, %v10046
      %10048 = vmatmul.bf16.gmra.mxu0 %v9158
      %v10049 = vpop.f32.mrf.mxu0
      %v10050 = vadd.f32 %v9721, %v10049
      %v10051 = vpop.f32.mrf.mxu0
      %v10052 = vadd.f32 %v9723, %v10051
      %10053 = vmatmul.bf16.gmra.mxu0 %v9161
      %v10054 = vpop.f32.mrf.mxu0
      %v10055 = vadd.f32 %v9726, %v10054
      %v10056 = vpop.f32.mrf.mxu0
      %v10057 = vadd.f32 %v9728, %v10056
      %10058 = vmatmul.bf16.gmra.mxu0 %v9164
      %v10059 = vpop.f32.mrf.mxu0
      %v10060 = vadd.f32 %v9731, %v10059
      %v10061 = vpop.f32.mrf.mxu0
      %v10062 = vadd.f32 %v9733, %v10061
      %10063 = vmatmul.bf16.gmra.mxu0 %v9167
      %v10064 = vpop.f32.mrf.mxu0
      %v10065 = vadd.f32 %v9736, %v10064
      %v10066 = vpop.f32.mrf.mxu0
      %v10067 = vadd.f32 %v9738, %v10066
      %10068 = vmatmul.bf16.gmra.mxu0 %v9170
      %v10069 = vpop.f32.mrf.mxu0
      %v10070 = vadd.f32 %v9741, %v10069
      %v10071 = vpop.f32.mrf.mxu0
      %v10072 = vadd.f32 %v9743, %v10071
      %10073 = vmatmul.bf16.gmra.mxu0 %v9173
      %v10074 = vpop.f32.mrf.mxu0
      %v10075 = vadd.f32 %v9746, %v10074
      %v10076 = vpop.f32.mrf.mxu0
      %v10077 = vadd.f32 %v9748, %v10076
      %10078 = vmatmul.bf16.gmra.mxu0 %v9176
      %v10079 = vpop.f32.mrf.mxu0
      %v10080 = vadd.f32 %v9751, %v10079
      %v10081 = vpop.f32.mrf.mxu0
      %v10082 = vadd.f32 %v9753, %v10081
      %10083 = vmatmul.bf16.gmra.mxu0 %v9179
      %v10084 = vpop.f32.mrf.mxu0
      %v10085 = vadd.f32 %v9756, %v10084
      %v10086 = vpop.f32.mrf.mxu0
      %v10087 = vadd.f32 %v9758, %v10086
      %10088 = vmatmul.bf16.gmra.mxu0 %v9182
      %v10089 = vpop.f32.mrf.mxu0
      %v10090 = vadd.f32 %v9761, %v10089
      %v10091 = vpop.f32.mrf.mxu0
      %v10092 = vadd.f32 %v9763, %v10091
      %10093 = vmatmul.bf16.gmra.mxu0 %v9185
      %v10094 = vpop.f32.mrf.mxu0
      %v10095 = vadd.f32 %v9766, %v10094
      %v10096 = vpop.f32.mrf.mxu0
      %v10097 = vadd.f32 %v9768, %v10096
      %10098 = vmatmul.bf16.gmra.mxu0 %v9188
      %v10099 = vpop.f32.mrf.mxu0
      %v10100 = vadd.f32 %v9771, %v10099
      %v10101 = vpop.f32.mrf.mxu0
      %v10102 = vadd.f32 %v9773, %v10101
      %10103 = vmatmul.bf16.gmra.mxu0 %v9191
      %v10104 = vpop.f32.mrf.mxu0
      %v10105 = vadd.f32 %v9776, %v10104
      %v10106 = vpop.f32.mrf.mxu0
      %v10107 = vadd.f32 %v9778, %v10106
      %10108 = vmatmul.bf16.gmra.mxu0 %v9194
      %v10109 = vpop.f32.mrf.mxu0
      %v10110 = vadd.f32 %v9781, %v10109
      %v10111 = vpop.f32.mrf.mxu0
      %v10112 = vadd.f32 %v9783, %v10111
      %10113 = vmatmul.bf16.gmra.mxu0 %v9197
      %v10114 = vpop.f32.mrf.mxu0
      %v10115 = vadd.f32 %v9786, %v10114
      %v10116 = vpop.f32.mrf.mxu0
      %v10117 = vadd.f32 %v9788, %v10116
      %10118 = vmatmul.bf16.gmra.mxu0 %v9200
      %v10119 = vpop.f32.mrf.mxu0
      %v10120 = vadd.f32 %v9791, %v10119
      %v10121 = vpop.f32.mrf.mxu0
      %v10122 = vadd.f32 %v9793, %v10121
      %10123 = vmatmul.bf16.gmra.mxu0 %v9203
      %v10124 = vpop.f32.mrf.mxu0
      %v10125 = vadd.f32 %v9796, %v10124
      %v10126 = vpop.f32.mrf.mxu0
      %v10127 = vadd.f32 %v9798, %v10126
      %10128 = vmatmul.bf16.gmra.mxu0 %v9206
      %v10129 = vpop.f32.mrf.mxu0
      %v10130 = vadd.f32 %v9801, %v10129
      %v10131 = vpop.f32.mrf.mxu0
      %v10132 = vadd.f32 %v9803, %v10131
      %10133 = vmatmul.bf16.gmra.mxu0 %v9209
      %v10134 = vpop.f32.mrf.mxu0
      %v10135 = vadd.f32 %v9806, %v10134
      %v10136 = vpop.f32.mrf.mxu0
      %v10137 = vadd.f32 %v9808, %v10136
      %10138 = vmatmul.bf16.gmra.mxu0 %v9212
      %v10139 = vpop.f32.mrf.mxu0
      %v10140 = vadd.f32 %v9811, %v10139
      %v10141 = vpop.f32.mrf.mxu0
      %v10142 = vadd.f32 %v9813, %v10141
      %10143 = vmatmul.bf16.gmra.mxu0 %v9215
      %v10144 = vpop.f32.mrf.mxu0
      %v10145 = vadd.f32 %v9816, %v10144
      %v10146 = vpop.f32.mrf.mxu0
      %v10147 = vadd.f32 %v9818, %v10146
      %10148 = vmatmul.bf16.gmra.mxu0 %v9218
      %v10149 = vpop.f32.mrf.mxu0
      %v10150 = vadd.f32 %v9821, %v10149
      %v10151 = vpop.f32.mrf.mxu0
      %v10152 = vadd.f32 %v9823, %v10151
      %10153 = vmatmul.bf16.gmra.mxu0 %v9221
      %v10154 = vpop.f32.mrf.mxu0
      %v10155 = vadd.f32 %v9826, %v10154
      %v10156 = vpop.f32.mrf.mxu0
      %v10157 = vadd.f32 %v9828, %v10156
      %10158 = vmatmul.bf16.gmra.mxu0 %v9224
      %v10159 = vpop.f32.mrf.mxu0
      %v10160 = vadd.f32 %v9831, %v10159
      %v10161 = vpop.f32.mrf.mxu0
      %v10162 = vadd.f32 %v9833, %v10161
      %10163 = vmatmul.bf16.gmra.mxu0 %v9227
      %v10164 = vpop.f32.mrf.mxu0
      %v10165 = vadd.f32 %v9836, %v10164
      %v10166 = vpop.f32.mrf.mxu0
      %v10167 = vadd.f32 %v9838, %v10166
      %10168 = vmatmul.bf16.gmra.mxu0 %v9230
      %v10169 = vpop.f32.mrf.mxu0
      %v10170 = vadd.f32 %v9841, %v10169
      %v10171 = vpop.f32.mrf.mxu0
      %v10172 = vadd.f32 %v9843, %v10171
      %10173 = vmatmul.bf16.gmra.mxu0 %v9233
      %v10174 = vpop.f32.mrf.mxu0
      %v10175 = vadd.f32 %v9846, %v10174
      %v10176 = vpop.f32.mrf.mxu0
      %v10177 = vadd.f32 %v9848, %v10176
      %10178 = vmatmul.bf16.gmra.mxu0 %v9236
      %v10179 = vpop.f32.mrf.mxu0
      %v10180 = vadd.f32 %v9851, %v10179
      %v10181 = vpop.f32.mrf.mxu0
      %v10182 = vadd.f32 %v9853, %v10181
      %10183 = vmatmul.bf16.gmra.mxu0 %v9239
      %v10184 = vpop.f32.mrf.mxu0
      %v10185 = vadd.f32 %v9856, %v10184
      %v10186 = vpop.f32.mrf.mxu0
      %v10187 = vadd.f32 %v9858, %v10186
      %10188 = vmatmul.bf16.gmra.mxu0 %v9242
      %v10189 = vpop.f32.mrf.mxu0
      %v10190 = vadd.f32 %v9861, %v10189
      %v10191 = vpop.f32.mrf.mxu0
      %v10192 = vadd.f32 %v9863, %v10191
      %10193 = vmatmul.bf16.gmra.mxu0 %v9245
      %v10194 = vpop.f32.mrf.mxu0
      %v10195 = vadd.f32 %v9866, %v10194
      %v10196 = vpop.f32.mrf.mxu0
      %v10197 = vadd.f32 %v9868, %v10196
      %10198 = vmatmul.bf16.gmra.mxu0 %v9248
      %v10199 = vpop.f32.mrf.mxu0
      %v10200 = vadd.f32 %v9871, %v10199
      %v10201 = vpop.f32.mrf.mxu0
      %v10202 = vadd.f32 %v9873, %v10201
      %10203 = vmatmul.bf16.gmra.mxu0 %v9251
      %v10204 = vpop.f32.mrf.mxu0
      %v10205 = vadd.f32 %v9876, %v10204
      %v10206 = vpop.f32.mrf.mxu0
      %v10207 = vadd.f32 %v9878, %v10206
      %10208 = vmatmul.bf16.gmra.mxu0 %v9254
      %v10209 = vpop.f32.mrf.mxu0
      %v10210 = vadd.f32 %v9881, %v10209
      %v10211 = vpop.f32.mrf.mxu0
      %v10212 = vadd.f32 %v9883, %v10211
      %10213 = vmatmul.bf16.gmra.mxu0 %v9257
      %v10214 = vpop.f32.mrf.mxu0
      %v10215 = vadd.f32 %v9886, %v10214
      %v10216 = vpop.f32.mrf.mxu0
      %v10217 = vadd.f32 %v9888, %v10216
      %10218 = vmatmul.bf16.gmra.mxu0 %v9260
      %v10219 = vpop.f32.mrf.mxu0
      %v10220 = vadd.f32 %v9891, %v10219
      %v10221 = vpop.f32.mrf.mxu0
      %v10222 = vadd.f32 %v9893, %v10221
      %10223 = vmatmul.bf16.gmra.mxu0 %v9263
      %v10224 = vpop.f32.mrf.mxu0
      %v10225 = vadd.f32 %v9896, %v10224
      %v10226 = vpop.f32.mrf.mxu0
      %v10227 = vadd.f32 %v9898, %v10226
      %10228 = vmatmul.bf16.gmra.mxu0 %v9266
      %v10229 = vpop.f32.mrf.mxu0
      %v10230 = vadd.f32 %v9901, %v10229
      %v10231 = vpop.f32.mrf.mxu0
      %v10232 = vadd.f32 %v9903, %v10231
      %10233 = vmatmul.bf16.gmra.mxu0 %v9269
      %v10234 = vpop.f32.mrf.mxu0
      %v10235 = vadd.f32 %v9906, %v10234
      %v10236 = vpop.f32.mrf.mxu0
      %v10237 = vadd.f32 %v9908, %v10236
      %10238 = vmatmul.bf16.gmra.mxu0 %v9272
      %v10239 = vpop.f32.mrf.mxu0
      %v10240 = vadd.f32 %v9911, %v10239
      %v10241 = vpop.f32.mrf.mxu0
      %v10242 = vadd.f32 %v9913, %v10241
      %10243 = vmatmul.bf16.gmra.mxu0 %v9275
      %v10244 = vpop.f32.mrf.mxu0
      %v10245 = vadd.f32 %v9916, %v10244
      %v10246 = vpop.f32.mrf.mxu0
      %v10247 = vadd.f32 %v9918, %v10246
      %10248 = vmatmul.bf16.gmra.mxu0 %v9278
      %v10249 = vpop.f32.mrf.mxu0
      %v10250 = vadd.f32 %v9921, %v10249
      %v10251 = vpop.f32.mrf.mxu0
      %v10252 = vadd.f32 %v9923, %v10251
      %10253 = vmatmul.bf16.gmra.mxu0 %v9281
      %v10254 = vpop.f32.mrf.mxu0
      %v10255 = vadd.f32 %v9926, %v10254
      %v10256 = vpop.f32.mrf.mxu0
      %v10257 = vadd.f32 %v9928, %v10256
      %10258 = vmatmul.bf16.gmra.mxu0 %v9284
      %v10259 = vpop.f32.mrf.mxu0
      %v10260 = vadd.f32 %v9931, %v10259
      %v10261 = vpop.f32.mrf.mxu0
      %v10262 = vadd.f32 %v9933, %v10261
      %10263 = vmatmul.bf16.gmra.mxu0 %v9287
      %v10264 = vpop.f32.mrf.mxu0
      %v10265 = vadd.f32 %v9936, %v10264
      %v10266 = vpop.f32.mrf.mxu0
      %v10267 = vadd.f32 %v9938, %v10266
      %10268 = vmatmul.bf16.gmra.mxu0 %v9290
      %v10269 = vpop.f32.mrf.mxu0
      %v10270 = vadd.f32 %v9941, %v10269
      %v10271 = vpop.f32.mrf.mxu0
      %v10272 = vadd.f32 %v9943, %v10271
      %10273 = vmatmul.bf16.gmra.mxu0 %v9293
      %v10274 = vpop.f32.mrf.mxu0
      %v10275 = vadd.f32 %v9946, %v10274
      %v10276 = vpop.f32.mrf.mxu0
      %v10277 = vadd.f32 %v9948, %v10276
      %10278 = vmatmul.bf16.gmra.mxu0 %v9296
      %v10279 = vpop.f32.mrf.mxu0
      %v10280 = vadd.f32 %v9951, %v10279
      %v10281 = vpop.f32.mrf.mxu0
      %v10282 = vadd.f32 %v9953, %v10281
      %10283 = vmatmul.bf16.gmra.mxu0 %v9299
      %v10284 = vpop.f32.mrf.mxu0
      %v10285 = vadd.f32 %v9956, %v10284
      %v10286 = vpop.f32.mrf.mxu0
      %v10287 = vadd.f32 %v9958, %v10286
      %10288 = vmatmul.bf16.gmra.mxu0 %v9302
      %v10289 = vpop.f32.mrf.mxu0
      %v10290 = vadd.f32 %v9961, %v10289
      %v10291 = vpop.f32.mrf.mxu0
      %v10292 = vadd.f32 %v9963, %v10291
      %10293 = vmatmul.bf16.gmra.mxu0 %v9305
      %v10294 = vpop.f32.mrf.mxu0
      %v10295 = vadd.f32 %v9966, %v10294
      %v10296 = vpop.f32.mrf.mxu0
      %v10297 = vadd.f32 %v9968, %v10296
      %10298 = vmatmul.bf16.gmra.mxu0 %v9308
      %v10299 = vpop.f32.mrf.mxu0
      %v10300 = vadd.f32 %v9971, %v10299
      %v10301 = vpop.f32.mrf.mxu0
      %v10302 = vadd.f32 %v9973, %v10301
      %10303 = vdwg.mxu0
      %10304 = vmatpush.bf16.msra.mxu0 %v9621
      %10305 = vmatpush.bf16.msra.mxu0 %v9620
      %10306 = vmatpush.bf16.msra.mxu0 %v9619
      %10307 = vmatpush.bf16.msra.mxu0 %v9618
      %10308 = vmatpush.bf16.msra.mxu0 %v9617
      %10309 = vmatpush.bf16.msra.mxu0 %v9616
      %10310 = vmatpush.bf16.msra.mxu0 %v9615
      %10311 = vmatpush.bf16.msra.mxu0 %v9614
      %10312 = vmatmul.bf16.gmra.mxu0 %v9120
      %v10313 = vpop.f32.mrf.mxu0
      %v10314 = vadd.f32 %v9985, %v10313
      %v10315 = vpop.f32.mrf.mxu0
      %v10316 = vadd.f32 %v9987, %v10315
      %10317 = vmatmul.bf16.gmra.mxu0 %v9123
      %v10318 = vpop.f32.mrf.mxu0
      %v10319 = vadd.f32 %v9990, %v10318
      %v10320 = vpop.f32.mrf.mxu0
      %v10321 = vadd.f32 %v9992, %v10320
      %10322 = vmatmul.bf16.gmra.mxu0 %v9126
      %v10323 = vpop.f32.mrf.mxu0
      %v10324 = vadd.f32 %v9995, %v10323
      %v10325 = vpop.f32.mrf.mxu0
      %v10326 = vadd.f32 %v9997, %v10325
      %10327 = vmatmul.bf16.gmra.mxu0 %v9129
      %v10328 = vpop.f32.mrf.mxu0
      %v10329 = vadd.f32 %v10000, %v10328
      %v10330 = vpop.f32.mrf.mxu0
      %v10331 = vadd.f32 %v10002, %v10330
      %10332 = vmatmul.bf16.gmra.mxu0 %v9132
      %v10333 = vpop.f32.mrf.mxu0
      %v10334 = vadd.f32 %v10005, %v10333
      %v10335 = vpop.f32.mrf.mxu0
      %v10336 = vadd.f32 %v10007, %v10335
      %10337 = vmatmul.bf16.gmra.mxu0 %v9135
      %v10338 = vpop.f32.mrf.mxu0
      %v10339 = vadd.f32 %v10010, %v10338
      %v10340 = vpop.f32.mrf.mxu0
      %v10341 = vadd.f32 %v10012, %v10340
      %10342 = vmatmul.bf16.gmra.mxu0 %v9138
      %v10343 = vpop.f32.mrf.mxu0
      %v10344 = vadd.f32 %v10015, %v10343
      %v10345 = vpop.f32.mrf.mxu0
      %v10346 = vadd.f32 %v10017, %v10345
      %10347 = vmatmul.bf16.gmra.mxu0 %v9141
      %v10348 = vpop.f32.mrf.mxu0
      %v10349 = vadd.f32 %v10020, %v10348
      %v10350 = vpop.f32.mrf.mxu0
      %v10351 = vadd.f32 %v10022, %v10350
      %10352 = vmatmul.bf16.gmra.mxu0 %v9144
      %v10353 = vpop.f32.mrf.mxu0
      %v10354 = vadd.f32 %v10025, %v10353
      %v10355 = vpop.f32.mrf.mxu0
      %v10356 = vadd.f32 %v10027, %v10355
      %10357 = vmatmul.bf16.gmra.mxu0 %v9147
      %v10358 = vpop.f32.mrf.mxu0
      %v10359 = vadd.f32 %v10030, %v10358
      %v10360 = vpop.f32.mrf.mxu0
      %v10361 = vadd.f32 %v10032, %v10360
      %10362 = vmatmul.bf16.gmra.mxu0 %v9150
      %v10363 = vpop.f32.mrf.mxu0
      %v10364 = vadd.f32 %v10035, %v10363
      %v10365 = vpop.f32.mrf.mxu0
      %v10366 = vadd.f32 %v10037, %v10365
      %10367 = vmatmul.bf16.gmra.mxu0 %v9153
      %v10368 = vpop.f32.mrf.mxu0
      %v10369 = vadd.f32 %v10040, %v10368
      %v10370 = vpop.f32.mrf.mxu0
      %v10371 = vadd.f32 %v10042, %v10370
      %10372 = vmatmul.bf16.gmra.mxu0 %v9156
      %v10373 = vpop.f32.mrf.mxu0
      %v10374 = vadd.f32 %v10045, %v10373
      %v10375 = vpop.f32.mrf.mxu0
      %v10376 = vadd.f32 %v10047, %v10375
      %10377 = vmatmul.bf16.gmra.mxu0 %v9159
      %v10378 = vpop.f32.mrf.mxu0
      %v10379 = vadd.f32 %v10050, %v10378
      %v10380 = vpop.f32.mrf.mxu0
      %v10381 = vadd.f32 %v10052, %v10380
      %10382 = vmatmul.bf16.gmra.mxu0 %v9162
      %v10383 = vpop.f32.mrf.mxu0
      %v10384 = vadd.f32 %v10055, %v10383
      %v10385 = vpop.f32.mrf.mxu0
      %v10386 = vadd.f32 %v10057, %v10385
      %10387 = vmatmul.bf16.gmra.mxu0 %v9165
      %v10388 = vpop.f32.mrf.mxu0
      %v10389 = vadd.f32 %v10060, %v10388
      %v10390 = vpop.f32.mrf.mxu0
      %v10391 = vadd.f32 %v10062, %v10390
      %10392 = vmatmul.bf16.gmra.mxu0 %v9168
      %v10393 = vpop.f32.mrf.mxu0
      %v10394 = vadd.f32 %v10065, %v10393
      %v10395 = vpop.f32.mrf.mxu0
      %v10396 = vadd.f32 %v10067, %v10395
      %10397 = vmatmul.bf16.gmra.mxu0 %v9171
      %v10398 = vpop.f32.mrf.mxu0
      %v10399 = vadd.f32 %v10070, %v10398
      %v10400 = vpop.f32.mrf.mxu0
      %v10401 = vadd.f32 %v10072, %v10400
      %10402 = vmatmul.bf16.gmra.mxu0 %v9174
      %v10403 = vpop.f32.mrf.mxu0
      %v10404 = vadd.f32 %v10075, %v10403
      %v10405 = vpop.f32.mrf.mxu0
      %v10406 = vadd.f32 %v10077, %v10405
      %10407 = vmatmul.bf16.gmra.mxu0 %v9177
      %v10408 = vpop.f32.mrf.mxu0
      %v10409 = vadd.f32 %v10080, %v10408
      %v10410 = vpop.f32.mrf.mxu0
      %v10411 = vadd.f32 %v10082, %v10410
      %10412 = vmatmul.bf16.gmra.mxu0 %v9180
      %v10413 = vpop.f32.mrf.mxu0
      %v10414 = vadd.f32 %v10085, %v10413
      %v10415 = vpop.f32.mrf.mxu0
      %v10416 = vadd.f32 %v10087, %v10415
      %10417 = vmatmul.bf16.gmra.mxu0 %v9183
      %v10418 = vpop.f32.mrf.mxu0
      %v10419 = vadd.f32 %v10090, %v10418
      %v10420 = vpop.f32.mrf.mxu0
      %v10421 = vadd.f32 %v10092, %v10420
      %10422 = vmatmul.bf16.gmra.mxu0 %v9186
      %v10423 = vpop.f32.mrf.mxu0
      %v10424 = vadd.f32 %v10095, %v10423
      %v10425 = vpop.f32.mrf.mxu0
      %v10426 = vadd.f32 %v10097, %v10425
      %10427 = vmatmul.bf16.gmra.mxu0 %v9189
      %v10428 = vpop.f32.mrf.mxu0
      %v10429 = vadd.f32 %v10100, %v10428
      %v10430 = vpop.f32.mrf.mxu0
      %v10431 = vadd.f32 %v10102, %v10430
      %10432 = vmatmul.bf16.gmra.mxu0 %v9192
      %v10433 = vpop.f32.mrf.mxu0
      %v10434 = vadd.f32 %v10105, %v10433
      %v10435 = vpop.f32.mrf.mxu0
      %v10436 = vadd.f32 %v10107, %v10435
      %10437 = vmatmul.bf16.gmra.mxu0 %v9195
      %v10438 = vpop.f32.mrf.mxu0
      %v10439 = vadd.f32 %v10110, %v10438
      %v10440 = vpop.f32.mrf.mxu0
      %v10441 = vadd.f32 %v10112, %v10440
      %10442 = vmatmul.bf16.gmra.mxu0 %v9198
      %v10443 = vpop.f32.mrf.mxu0
      %v10444 = vadd.f32 %v10115, %v10443
      %v10445 = vpop.f32.mrf.mxu0
      %v10446 = vadd.f32 %v10117, %v10445
      %10447 = vmatmul.bf16.gmra.mxu0 %v9201
      %v10448 = vpop.f32.mrf.mxu0
      %v10449 = vadd.f32 %v10120, %v10448
      %v10450 = vpop.f32.mrf.mxu0
      %v10451 = vadd.f32 %v10122, %v10450
      %10452 = vmatmul.bf16.gmra.mxu0 %v9204
      %v10453 = vpop.f32.mrf.mxu0
      %v10454 = vadd.f32 %v10125, %v10453
      %v10455 = vpop.f32.mrf.mxu0
      %v10456 = vadd.f32 %v10127, %v10455
      %10457 = vmatmul.bf16.gmra.mxu0 %v9207
      %v10458 = vpop.f32.mrf.mxu0
      %v10459 = vadd.f32 %v10130, %v10458
      %v10460 = vpop.f32.mrf.mxu0
      %v10461 = vadd.f32 %v10132, %v10460
      %10462 = vmatmul.bf16.gmra.mxu0 %v9210
      %v10463 = vpop.f32.mrf.mxu0
      %v10464 = vadd.f32 %v10135, %v10463
      %v10465 = vpop.f32.mrf.mxu0
      %v10466 = vadd.f32 %v10137, %v10465
      %10467 = vmatmul.bf16.gmra.mxu0 %v9213
      %v10468 = vpop.f32.mrf.mxu0
      %v10469 = vadd.f32 %v10140, %v10468
      %v10470 = vpop.f32.mrf.mxu0
      %v10471 = vadd.f32 %v10142, %v10470
      %10472 = vmatmul.bf16.gmra.mxu0 %v9216
      %v10473 = vpop.f32.mrf.mxu0
      %v10474 = vadd.f32 %v10145, %v10473
      %v10475 = vpop.f32.mrf.mxu0
      %v10476 = vadd.f32 %v10147, %v10475
      %10477 = vmatmul.bf16.gmra.mxu0 %v9219
      %v10478 = vpop.f32.mrf.mxu0
      %v10479 = vadd.f32 %v10150, %v10478
      %v10480 = vpop.f32.mrf.mxu0
      %v10481 = vadd.f32 %v10152, %v10480
      %10482 = vmatmul.bf16.gmra.mxu0 %v9222
      %v10483 = vpop.f32.mrf.mxu0
      %v10484 = vadd.f32 %v10155, %v10483
      %v10485 = vpop.f32.mrf.mxu0
      %v10486 = vadd.f32 %v10157, %v10485
      %10487 = vmatmul.bf16.gmra.mxu0 %v9225
      %v10488 = vpop.f32.mrf.mxu0
      %v10489 = vadd.f32 %v10160, %v10488
      %v10490 = vpop.f32.mrf.mxu0
      %v10491 = vadd.f32 %v10162, %v10490
      %10492 = vmatmul.bf16.gmra.mxu0 %v9228
      %v10493 = vpop.f32.mrf.mxu0
      %v10494 = vadd.f32 %v10165, %v10493
      %v10495 = vpop.f32.mrf.mxu0
      %v10496 = vadd.f32 %v10167, %v10495
      %10497 = vmatmul.bf16.gmra.mxu0 %v9231
      %v10498 = vpop.f32.mrf.mxu0
      %v10499 = vadd.f32 %v10170, %v10498
      %v10500 = vpop.f32.mrf.mxu0
      %v10501 = vadd.f32 %v10172, %v10500
      %10502 = vmatmul.bf16.gmra.mxu0 %v9234
      %v10503 = vpop.f32.mrf.mxu0
      %v10504 = vadd.f32 %v10175, %v10503
      %v10505 = vpop.f32.mrf.mxu0
      %v10506 = vadd.f32 %v10177, %v10505
      %10507 = vmatmul.bf16.gmra.mxu0 %v9237
      %v10508 = vpop.f32.mrf.mxu0
      %v10509 = vadd.f32 %v10180, %v10508
      %v10510 = vpop.f32.mrf.mxu0
      %v10511 = vadd.f32 %v10182, %v10510
      %10512 = vmatmul.bf16.gmra.mxu0 %v9240
      %v10513 = vpop.f32.mrf.mxu0
      %v10514 = vadd.f32 %v10185, %v10513
      %v10515 = vpop.f32.mrf.mxu0
      %v10516 = vadd.f32 %v10187, %v10515
      %10517 = vmatmul.bf16.gmra.mxu0 %v9243
      %v10518 = vpop.f32.mrf.mxu0
      %v10519 = vadd.f32 %v10190, %v10518
      %v10520 = vpop.f32.mrf.mxu0
      %v10521 = vadd.f32 %v10192, %v10520
      %10522 = vmatmul.bf16.gmra.mxu0 %v9246
      %v10523 = vpop.f32.mrf.mxu0
      %v10524 = vadd.f32 %v10195, %v10523
      %v10525 = vpop.f32.mrf.mxu0
      %v10526 = vadd.f32 %v10197, %v10525
      %10527 = vmatmul.bf16.gmra.mxu0 %v9249
      %v10528 = vpop.f32.mrf.mxu0
      %v10529 = vadd.f32 %v10200, %v10528
      %v10530 = vpop.f32.mrf.mxu0
      %v10531 = vadd.f32 %v10202, %v10530
      %10532 = vmatmul.bf16.gmra.mxu0 %v9252
      %v10533 = vpop.f32.mrf.mxu0
      %v10534 = vadd.f32 %v10205, %v10533
      %v10535 = vpop.f32.mrf.mxu0
      %v10536 = vadd.f32 %v10207, %v10535
      %10537 = vmatmul.bf16.gmra.mxu0 %v9255
      %v10538 = vpop.f32.mrf.mxu0
      %v10539 = vadd.f32 %v10210, %v10538
      %v10540 = vpop.f32.mrf.mxu0
      %v10541 = vadd.f32 %v10212, %v10540
      %10542 = vmatmul.bf16.gmra.mxu0 %v9258
      %v10543 = vpop.f32.mrf.mxu0
      %v10544 = vadd.f32 %v10215, %v10543
      %v10545 = vpop.f32.mrf.mxu0
      %v10546 = vadd.f32 %v10217, %v10545
      %10547 = vmatmul.bf16.gmra.mxu0 %v9261
      %v10548 = vpop.f32.mrf.mxu0
      %v10549 = vadd.f32 %v10220, %v10548
      %v10550 = vpop.f32.mrf.mxu0
      %v10551 = vadd.f32 %v10222, %v10550
      %10552 = vmatmul.bf16.gmra.mxu0 %v9264
      %v10553 = vpop.f32.mrf.mxu0
      %v10554 = vadd.f32 %v10225, %v10553
      %v10555 = vpop.f32.mrf.mxu0
      %v10556 = vadd.f32 %v10227, %v10555
      %10557 = vmatmul.bf16.gmra.mxu0 %v9267
      %v10558 = vpop.f32.mrf.mxu0
      %v10559 = vadd.f32 %v10230, %v10558
      %v10560 = vpop.f32.mrf.mxu0
      %v10561 = vadd.f32 %v10232, %v10560
      %10562 = vmatmul.bf16.gmra.mxu0 %v9270
      %v10563 = vpop.f32.mrf.mxu0
      %v10564 = vadd.f32 %v10235, %v10563
      %v10565 = vpop.f32.mrf.mxu0
      %v10566 = vadd.f32 %v10237, %v10565
      %10567 = vmatmul.bf16.gmra.mxu0 %v9273
      %v10568 = vpop.f32.mrf.mxu0
      %v10569 = vadd.f32 %v10240, %v10568
      %v10570 = vpop.f32.mrf.mxu0
      %v10571 = vadd.f32 %v10242, %v10570
      %10572 = vmatmul.bf16.gmra.mxu0 %v9276
      %v10573 = vpop.f32.mrf.mxu0
      %v10574 = vadd.f32 %v10245, %v10573
      %v10575 = vpop.f32.mrf.mxu0
      %v10576 = vadd.f32 %v10247, %v10575
      %10577 = vmatmul.bf16.gmra.mxu0 %v9279
      %v10578 = vpop.f32.mrf.mxu0
      %v10579 = vadd.f32 %v10250, %v10578
      %v10580 = vpop.f32.mrf.mxu0
      %v10581 = vadd.f32 %v10252, %v10580
      %10582 = vmatmul.bf16.gmra.mxu0 %v9282
      %v10583 = vpop.f32.mrf.mxu0
      %v10584 = vadd.f32 %v10255, %v10583
      %v10585 = vpop.f32.mrf.mxu0
      %v10586 = vadd.f32 %v10257, %v10585
      %10587 = vmatmul.bf16.gmra.mxu0 %v9285
      %v10588 = vpop.f32.mrf.mxu0
      %v10589 = vadd.f32 %v10260, %v10588
      %v10590 = vpop.f32.mrf.mxu0
      %v10591 = vadd.f32 %v10262, %v10590
      %10592 = vmatmul.bf16.gmra.mxu0 %v9288
      %v10593 = vpop.f32.mrf.mxu0
      %v10594 = vadd.f32 %v10265, %v10593
      %v10595 = vpop.f32.mrf.mxu0
      %v10596 = vadd.f32 %v10267, %v10595
      %10597 = vmatmul.bf16.gmra.mxu0 %v9291
      %v10598 = vpop.f32.mrf.mxu0
      %v10599 = vadd.f32 %v10270, %v10598
      %v10600 = vpop.f32.mrf.mxu0
      %v10601 = vadd.f32 %v10272, %v10600
      %10602 = vmatmul.bf16.gmra.mxu0 %v9294
      %v10603 = vpop.f32.mrf.mxu0
      %v10604 = vadd.f32 %v10275, %v10603
      %v10605 = vpop.f32.mrf.mxu0
      %v10606 = vadd.f32 %v10277, %v10605
      %10607 = vmatmul.bf16.gmra.mxu0 %v9297
      %v10608 = vpop.f32.mrf.mxu0
      %v10609 = vadd.f32 %v10280, %v10608
      %v10610 = vpop.f32.mrf.mxu0
      %v10611 = vadd.f32 %v10282, %v10610
      %10612 = vmatmul.bf16.gmra.mxu0 %v9300
      %v10613 = vpop.f32.mrf.mxu0
      %v10614 = vadd.f32 %v10285, %v10613
      %v10615 = vpop.f32.mrf.mxu0
      %v10616 = vadd.f32 %v10287, %v10615
      %10617 = vmatmul.bf16.gmra.mxu0 %v9303
      %v10618 = vpop.f32.mrf.mxu0
      %v10619 = vadd.f32 %v10290, %v10618
      %v10620 = vpop.f32.mrf.mxu0
      %v10621 = vadd.f32 %v10292, %v10620
      %10622 = vmatmul.bf16.gmra.mxu0 %v9306
      %v10623 = vpop.f32.mrf.mxu0
      %v10624 = vadd.f32 %v10295, %v10623
      %v10625 = vpop.f32.mrf.mxu0
      %v10626 = vadd.f32 %v10297, %v10625
      %10627 = vmatmul.bf16.gmra.mxu0 %v9309
      %v10628 = vpop.f32.mrf.mxu0
      %v10629 = vadd.f32 %v10300, %v10628
      %v10630 = vpop.f32.mrf.mxu0
      %v10631 = vadd.f32 %v10302, %v10630
      %10632 = vdwg.mxu0
      %v10633 = vadd.f32 %v7853, %v10314
      %v10634 = vadd.f32 %v7855, %v10316
      %v10635 = vadd.f32 %v7858, %v10319
      %v10636 = vadd.f32 %v7860, %v10321
      %v10637 = vadd.f32 %v7863, %v10324
      %v10638 = vadd.f32 %v7865, %v10326
      %v10639 = vadd.f32 %v7868, %v10329
      %v10640 = vadd.f32 %v7870, %v10331
      %v10641 = vadd.f32 %v7873, %v10334
      %v10642 = vadd.f32 %v7875, %v10336
      %v10643 = vadd.f32 %v7878, %v10339
      %v10644 = vadd.f32 %v7880, %v10341
      %v10645 = vadd.f32 %v7883, %v10344
      %v10646 = vadd.f32 %v7885, %v10346
      %v10647 = vadd.f32 %v7888, %v10349
      %v10648 = vadd.f32 %v7890, %v10351
      %v10649 = vadd.f32 %v7893, %v10354
      %v10650 = vadd.f32 %v7895, %v10356
      %v10651 = vadd.f32 %v7898, %v10359
      %v10652 = vadd.f32 %v7900, %v10361
      %v10653 = vadd.f32 %v7903, %v10364
      %v10654 = vadd.f32 %v7905, %v10366
      %v10655 = vadd.f32 %v7908, %v10369
      %v10656 = vadd.f32 %v7910, %v10371
      %v10657 = vadd.f32 %v7913, %v10374
      %v10658 = vadd.f32 %v7915, %v10376
      %v10659 = vadd.f32 %v7918, %v10379
      %v10660 = vadd.f32 %v7920, %v10381
      %v10661 = vadd.f32 %v7923, %v10384
      %v10662 = vadd.f32 %v7925, %v10386
      %v10663 = vadd.f32 %v7928, %v10389
      %v10664 = vadd.f32 %v7930, %v10391
      %v10665 = vadd.f32 %v7933, %v10394
      %v10666 = vadd.f32 %v7935, %v10396
      %v10667 = vadd.f32 %v7938, %v10399
      %v10668 = vadd.f32 %v7940, %v10401
      %v10669 = vadd.f32 %v7943, %v10404
      %v10670 = vadd.f32 %v7945, %v10406
      %v10671 = vadd.f32 %v7948, %v10409
      %v10672 = vadd.f32 %v7950, %v10411
      %v10673 = vadd.f32 %v7953, %v10414
      %v10674 = vadd.f32 %v7955, %v10416
      %v10675 = vadd.f32 %v7958, %v10419
      %v10676 = vadd.f32 %v7960, %v10421
      %v10677 = vadd.f32 %v7963, %v10424
      %v10678 = vadd.f32 %v7965, %v10426
      %v10679 = vadd.f32 %v7968, %v10429
      %v10680 = vadd.f32 %v7970, %v10431
      %v10681 = vadd.f32 %v7973, %v10434
      %v10682 = vadd.f32 %v7975, %v10436
      %v10683 = vadd.f32 %v7978, %v10439
      %v10684 = vadd.f32 %v7980, %v10441
      %v10685 = vadd.f32 %v7983, %v10444
      %v10686 = vadd.f32 %v7985, %v10446
      %v10687 = vadd.f32 %v7988, %v10449
      %v10688 = vadd.f32 %v7990, %v10451
      %v10689 = vadd.f32 %v7993, %v10454
      %v10690 = vadd.f32 %v7995, %v10456
      %v10691 = vadd.f32 %v7998, %v10459
      %v10692 = vadd.f32 %v8000, %v10461
      %v10693 = vadd.f32 %v8003, %v10464
      %v10694 = vadd.f32 %v8005, %v10466
      %v10695 = vadd.f32 %v8008, %v10469
      %v10696 = vadd.f32 %v8010, %v10471
      %v10697 = vadd.f32 %v8013, %v10474
      %v10698 = vadd.f32 %v8015, %v10476
      %v10699 = vadd.f32 %v8018, %v10479
      %v10700 = vadd.f32 %v8020, %v10481
      %v10701 = vadd.f32 %v8023, %v10484
      %v10702 = vadd.f32 %v8025, %v10486
      %v10703 = vadd.f32 %v8028, %v10489
      %v10704 = vadd.f32 %v8030, %v10491
      %v10705 = vadd.f32 %v8033, %v10494
      %v10706 = vadd.f32 %v8035, %v10496
      %v10707 = vadd.f32 %v8038, %v10499
      %v10708 = vadd.f32 %v8040, %v10501
      %v10709 = vadd.f32 %v8043, %v10504
      %v10710 = vadd.f32 %v8045, %v10506
      %v10711 = vadd.f32 %v8048, %v10509
      %v10712 = vadd.f32 %v8050, %v10511
      %v10713 = vadd.f32 %v8053, %v10514
      %v10714 = vadd.f32 %v8055, %v10516
      %v10715 = vadd.f32 %v8058, %v10519
      %v10716 = vadd.f32 %v8060, %v10521
      %v10717 = vadd.f32 %v8063, %v10524
      %v10718 = vadd.f32 %v8065, %v10526
      %v10719 = vadd.f32 %v8068, %v10529
      %v10720 = vadd.f32 %v8070, %v10531
      %v10721 = vadd.f32 %v8073, %v10534
      %v10722 = vadd.f32 %v8075, %v10536
      %v10723 = vadd.f32 %v8078, %v10539
      %v10724 = vadd.f32 %v8080, %v10541
      %v10725 = vadd.f32 %v8083, %v10544
      %v10726 = vadd.f32 %v8085, %v10546
      %v10727 = vadd.f32 %v8088, %v10549
      %v10728 = vadd.f32 %v8090, %v10551
      %v10729 = vadd.f32 %v8093, %v10554
      %v10730 = vadd.f32 %v8095, %v10556
      %v10731 = vadd.f32 %v8098, %v10559
      %v10732 = vadd.f32 %v8100, %v10561
      %v10733 = vadd.f32 %v8103, %v10564
      %v10734 = vadd.f32 %v8105, %v10566
      %v10735 = vadd.f32 %v8108, %v10569
      %v10736 = vadd.f32 %v8110, %v10571
      %v10737 = vadd.f32 %v8113, %v10574
      %v10738 = vadd.f32 %v8115, %v10576
      %v10739 = vadd.f32 %v8118, %v10579
      %v10740 = vadd.f32 %v8120, %v10581
      %v10741 = vadd.f32 %v8123, %v10584
      %v10742 = vadd.f32 %v8125, %v10586
      %v10743 = vadd.f32 %v8128, %v10589
      %v10744 = vadd.f32 %v8130, %v10591
      %v10745 = vadd.f32 %v8133, %v10594
      %v10746 = vadd.f32 %v8135, %v10596
      %v10747 = vadd.f32 %v8138, %v10599
      %v10748 = vadd.f32 %v8140, %v10601
      %v10749 = vadd.f32 %v8143, %v10604
      %v10750 = vadd.f32 %v8145, %v10606
      %v10751 = vadd.f32 %v8148, %v10609
      %v10752 = vadd.f32 %v8150, %v10611
      %v10753 = vadd.f32 %v8153, %v10614
      %v10754 = vadd.f32 %v8155, %v10616
      %v10755 = vadd.f32 %v8158, %v10619
      %v10756 = vadd.f32 %v8160, %v10621
      %v10757 = vadd.f32 %v8163, %v10624
      %v10758 = vadd.f32 %v8165, %v10626
      %v10759 = vadd.f32 %v8168, %v10629
      %v10760 = vadd.f32 %v8170, %v10631
      %v10761 = vld [vmem:[%s5] sm:$0x1]
      %v10763 = vperm.slane %v10761, 0
      %v10765 = vmul.f32 %v10633, %v10763
      %v10766 = vmul.f32 %v10634, %v10763
      %v10767 = vmul.f32 %v10635, %v10763
      %v10768 = vmul.f32 %v10636, %v10763
      %v10769 = vmul.f32 %v10637, %v10763
      %v10770 = vmul.f32 %v10638, %v10763
      %v10771 = vmul.f32 %v10639, %v10763
      %v10772 = vmul.f32 %v10640, %v10763
      %v10773 = vmul.f32 %v10641, %v10763
      %v10774 = vmul.f32 %v10642, %v10763
      %v10775 = vmul.f32 %v10643, %v10763
      %v10776 = vmul.f32 %v10644, %v10763
      %v10777 = vmul.f32 %v10645, %v10763
      %v10778 = vmul.f32 %v10646, %v10763
      %v10779 = vmul.f32 %v10647, %v10763
      %v10780 = vmul.f32 %v10648, %v10763
      %v10781 = vmul.f32 %v10649, %v10763
      %v10782 = vmul.f32 %v10650, %v10763
      %v10783 = vmul.f32 %v10651, %v10763
      %v10784 = vmul.f32 %v10652, %v10763
      %v10785 = vmul.f32 %v10653, %v10763
      %v10786 = vmul.f32 %v10654, %v10763
      %v10787 = vmul.f32 %v10655, %v10763
      %v10788 = vmul.f32 %v10656, %v10763
      %v10789 = vmul.f32 %v10657, %v10763
      %v10790 = vmul.f32 %v10658, %v10763
      %v10791 = vmul.f32 %v10659, %v10763
      %v10792 = vmul.f32 %v10660, %v10763
      %v10793 = vmul.f32 %v10661, %v10763
      %v10794 = vmul.f32 %v10662, %v10763
      %v10795 = vmul.f32 %v10663, %v10763
      %v10796 = vmul.f32 %v10664, %v10763
      %v10797 = vmul.f32 %v10665, %v10763
      %v10798 = vmul.f32 %v10666, %v10763
      %v10799 = vmul.f32 %v10667, %v10763
      %v10800 = vmul.f32 %v10668, %v10763
      %v10801 = vmul.f32 %v10669, %v10763
      %v10802 = vmul.f32 %v10670, %v10763
      %v10803 = vmul.f32 %v10671, %v10763
      %v10804 = vmul.f32 %v10672, %v10763
      %v10805 = vmul.f32 %v10673, %v10763
      %v10806 = vmul.f32 %v10674, %v10763
      %v10807 = vmul.f32 %v10675, %v10763
      %v10808 = vmul.f32 %v10676, %v10763
      %v10809 = vmul.f32 %v10677, %v10763
      %v10810 = vmul.f32 %v10678, %v10763
      %v10811 = vmul.f32 %v10679, %v10763
      %v10812 = vmul.f32 %v10680, %v10763
      %v10813 = vmul.f32 %v10681, %v10763
      %v10814 = vmul.f32 %v10682, %v10763
      %v10815 = vmul.f32 %v10683, %v10763
      %v10816 = vmul.f32 %v10684, %v10763
      %v10817 = vmul.f32 %v10685, %v10763
      %v10818 = vmul.f32 %v10686, %v10763
      %v10819 = vmul.f32 %v10687, %v10763
      %v10820 = vmul.f32 %v10688, %v10763
      %v10821 = vmul.f32 %v10689, %v10763
      %v10822 = vmul.f32 %v10690, %v10763
      %v10823 = vmul.f32 %v10691, %v10763
      %v10824 = vmul.f32 %v10692, %v10763
      %v10825 = vmul.f32 %v10693, %v10763
      %v10826 = vmul.f32 %v10694, %v10763
      %v10827 = vmul.f32 %v10695, %v10763
      %v10828 = vmul.f32 %v10696, %v10763
      %v10829 = vmul.f32 %v10697, %v10763
      %v10830 = vmul.f32 %v10698, %v10763
      %v10831 = vmul.f32 %v10699, %v10763
      %v10832 = vmul.f32 %v10700, %v10763
      %v10833 = vmul.f32 %v10701, %v10763
      %v10834 = vmul.f32 %v10702, %v10763
      %v10835 = vmul.f32 %v10703, %v10763
      %v10836 = vmul.f32 %v10704, %v10763
      %v10837 = vmul.f32 %v10705, %v10763
      %v10838 = vmul.f32 %v10706, %v10763
      %v10839 = vmul.f32 %v10707, %v10763
      %v10840 = vmul.f32 %v10708, %v10763
      %v10841 = vmul.f32 %v10709, %v10763
      %v10842 = vmul.f32 %v10710, %v10763
      %v10843 = vmul.f32 %v10711, %v10763
      %v10844 = vmul.f32 %v10712, %v10763
      %v10845 = vmul.f32 %v10713, %v10763
      %v10846 = vmul.f32 %v10714, %v10763
      %v10847 = vmul.f32 %v10715, %v10763
      %v10848 = vmul.f32 %v10716, %v10763
      %v10849 = vmul.f32 %v10717, %v10763
      %v10850 = vmul.f32 %v10718, %v10763
      %v10851 = vmul.f32 %v10719, %v10763
      %v10852 = vmul.f32 %v10720, %v10763
      %v10853 = vmul.f32 %v10721, %v10763
      %v10854 = vmul.f32 %v10722, %v10763
      %v10855 = vmul.f32 %v10723, %v10763
      %v10856 = vmul.f32 %v10724, %v10763
      %v10857 = vmul.f32 %v10725, %v10763
      %v10858 = vmul.f32 %v10726, %v10763
      %v10859 = vmul.f32 %v10727, %v10763
      %v10860 = vmul.f32 %v10728, %v10763
      %v10861 = vmul.f32 %v10729, %v10763
      %v10862 = vmul.f32 %v10730, %v10763
      %v10863 = vmul.f32 %v10731, %v10763
      %v10864 = vmul.f32 %v10732, %v10763
      %v10865 = vmul.f32 %v10733, %v10763
      %v10866 = vmul.f32 %v10734, %v10763
      %v10867 = vmul.f32 %v10735, %v10763
      %v10868 = vmul.f32 %v10736, %v10763
      %v10869 = vmul.f32 %v10737, %v10763
      %v10870 = vmul.f32 %v10738, %v10763
      %v10871 = vmul.f32 %v10739, %v10763
      %v10872 = vmul.f32 %v10740, %v10763
      %v10873 = vmul.f32 %v10741, %v10763
      %v10874 = vmul.f32 %v10742, %v10763
      %v10875 = vmul.f32 %v10743, %v10763
      %v10876 = vmul.f32 %v10744, %v10763
      %v10877 = vmul.f32 %v10745, %v10763
      %v10878 = vmul.f32 %v10746, %v10763
      %v10879 = vmul.f32 %v10747, %v10763
      %v10880 = vmul.f32 %v10748, %v10763
      %v10881 = vmul.f32 %v10749, %v10763
      %v10882 = vmul.f32 %v10750, %v10763
      %v10883 = vmul.f32 %v10751, %v10763
      %v10884 = vmul.f32 %v10752, %v10763
      %v10885 = vmul.f32 %v10753, %v10763
      %v10886 = vmul.f32 %v10754, %v10763
      %v10887 = vmul.f32 %v10755, %v10763
      %v10888 = vmul.f32 %v10756, %v10763
      %v10889 = vmul.f32 %v10757, %v10763
      %v10890 = vmul.f32 %v10758, %v10763
      %v10891 = vmul.f32 %v10759, %v10763
      %v10892 = vmul.f32 %v10760, %v10763
      %v10893 = vld [vmem:[%s6] sm:$0x1]
      %v10895 = vperm.slane %v10893, 0
      %v10897 = vadd.f32 %v10765, %v10895
      %v10898 = vadd.f32 %v10766, %v10895
      %v10899 = vadd.f32 %v10767, %v10895
      %v10900 = vadd.f32 %v10768, %v10895
      %v10901 = vadd.f32 %v10769, %v10895
      %v10902 = vadd.f32 %v10770, %v10895
      %v10903 = vadd.f32 %v10771, %v10895
      %v10904 = vadd.f32 %v10772, %v10895
      %v10905 = vadd.f32 %v10773, %v10895
      %v10906 = vadd.f32 %v10774, %v10895
      %v10907 = vadd.f32 %v10775, %v10895
      %v10908 = vadd.f32 %v10776, %v10895
      %v10909 = vadd.f32 %v10777, %v10895
      %v10910 = vadd.f32 %v10778, %v10895
      %v10911 = vadd.f32 %v10779, %v10895
      %v10912 = vadd.f32 %v10780, %v10895
      %v10913 = vadd.f32 %v10781, %v10895
      %v10914 = vadd.f32 %v10782, %v10895
      %v10915 = vadd.f32 %v10783, %v10895
      %v10916 = vadd.f32 %v10784, %v10895
      %v10917 = vadd.f32 %v10785, %v10895
      %v10918 = vadd.f32 %v10786, %v10895
      %v10919 = vadd.f32 %v10787, %v10895
      %v10920 = vadd.f32 %v10788, %v10895
      %v10921 = vadd.f32 %v10789, %v10895
      %v10922 = vadd.f32 %v10790, %v10895
      %v10923 = vadd.f32 %v10791, %v10895
      %v10924 = vadd.f32 %v10792, %v10895
      %v10925 = vadd.f32 %v10793, %v10895
      %v10926 = vadd.f32 %v10794, %v10895
      %v10927 = vadd.f32 %v10795, %v10895
      %v10928 = vadd.f32 %v10796, %v10895
      %v10929 = vadd.f32 %v10797, %v10895
      %v10930 = vadd.f32 %v10798, %v10895
      %v10931 = vadd.f32 %v10799, %v10895
      %v10932 = vadd.f32 %v10800, %v10895
      %v10933 = vadd.f32 %v10801, %v10895
      %v10934 = vadd.f32 %v10802, %v10895
      %v10935 = vadd.f32 %v10803, %v10895
      %v10936 = vadd.f32 %v10804, %v10895
      %v10937 = vadd.f32 %v10805, %v10895
      %v10938 = vadd.f32 %v10806, %v10895
      %v10939 = vadd.f32 %v10807, %v10895
      %v10940 = vadd.f32 %v10808, %v10895
      %v10941 = vadd.f32 %v10809, %v10895
      %v10942 = vadd.f32 %v10810, %v10895
      %v10943 = vadd.f32 %v10811, %v10895
      %v10944 = vadd.f32 %v10812, %v10895
      %v10945 = vadd.f32 %v10813, %v10895
      %v10946 = vadd.f32 %v10814, %v10895
      %v10947 = vadd.f32 %v10815, %v10895
      %v10948 = vadd.f32 %v10816, %v10895
      %v10949 = vadd.f32 %v10817, %v10895
      %v10950 = vadd.f32 %v10818, %v10895
      %v10951 = vadd.f32 %v10819, %v10895
      %v10952 = vadd.f32 %v10820, %v10895
      %v10953 = vadd.f32 %v10821, %v10895
      %v10954 = vadd.f32 %v10822, %v10895
      %v10955 = vadd.f32 %v10823, %v10895
      %v10956 = vadd.f32 %v10824, %v10895
      %v10957 = vadd.f32 %v10825, %v10895
      %v10958 = vadd.f32 %v10826, %v10895
      %v10959 = vadd.f32 %v10827, %v10895
      %v10960 = vadd.f32 %v10828, %v10895
      %v10961 = vadd.f32 %v10829, %v10895
      %v10962 = vadd.f32 %v10830, %v10895
      %v10963 = vadd.f32 %v10831, %v10895
      %v10964 = vadd.f32 %v10832, %v10895
      %v10965 = vadd.f32 %v10833, %v10895
      %v10966 = vadd.f32 %v10834, %v10895
      %v10967 = vadd.f32 %v10835, %v10895
      %v10968 = vadd.f32 %v10836, %v10895
      %v10969 = vadd.f32 %v10837, %v10895
      %v10970 = vadd.f32 %v10838, %v10895
      %v10971 = vadd.f32 %v10839, %v10895
      %v10972 = vadd.f32 %v10840, %v10895
      %v10973 = vadd.f32 %v10841, %v10895
      %v10974 = vadd.f32 %v10842, %v10895
      %v10975 = vadd.f32 %v10843, %v10895
      %v10976 = vadd.f32 %v10844, %v10895
      %v10977 = vadd.f32 %v10845, %v10895
      %v10978 = vadd.f32 %v10846, %v10895
      %v10979 = vadd.f32 %v10847, %v10895
      %v10980 = vadd.f32 %v10848, %v10895
      %v10981 = vadd.f32 %v10849, %v10895
      %v10982 = vadd.f32 %v10850, %v10895
      %v10983 = vadd.f32 %v10851, %v10895
      %v10984 = vadd.f32 %v10852, %v10895
      %v10985 = vadd.f32 %v10853, %v10895
      %v10986 = vadd.f32 %v10854, %v10895
      %v10987 = vadd.f32 %v10855, %v10895
      %v10988 = vadd.f32 %v10856, %v10895
      %v10989 = vadd.f32 %v10857, %v10895
      %v10990 = vadd.f32 %v10858, %v10895
      %v10991 = vadd.f32 %v10859, %v10895
      %v10992 = vadd.f32 %v10860, %v10895
      %v10993 = vadd.f32 %v10861, %v10895
      %v10994 = vadd.f32 %v10862, %v10895
      %v10995 = vadd.f32 %v10863, %v10895
      %v10996 = vadd.f32 %v10864, %v10895
      %v10997 = vadd.f32 %v10865, %v10895
      %v10998 = vadd.f32 %v10866, %v10895
      %v10999 = vadd.f32 %v10867, %v10895
      %v11000 = vadd.f32 %v10868, %v10895
      %v11001 = vadd.f32 %v10869, %v10895
      %v11002 = vadd.f32 %v10870, %v10895
      %v11003 = vadd.f32 %v10871, %v10895
      %v11004 = vadd.f32 %v10872, %v10895
      %v11005 = vadd.f32 %v10873, %v10895
      %v11006 = vadd.f32 %v10874, %v10895
      %v11007 = vadd.f32 %v10875, %v10895
      %v11008 = vadd.f32 %v10876, %v10895
      %v11009 = vadd.f32 %v10877, %v10895
      %v11010 = vadd.f32 %v10878, %v10895
      %v11011 = vadd.f32 %v10879, %v10895
      %v11012 = vadd.f32 %v10880, %v10895
      %v11013 = vadd.f32 %v10881, %v10895
      %v11014 = vadd.f32 %v10882, %v10895
      %v11015 = vadd.f32 %v10883, %v10895
      %v11016 = vadd.f32 %v10884, %v10895
      %v11017 = vadd.f32 %v10885, %v10895
      %v11018 = vadd.f32 %v10886, %v10895
      %v11019 = vadd.f32 %v10887, %v10895
      %v11020 = vadd.f32 %v10888, %v10895
      %v11021 = vadd.f32 %v10889, %v10895
      %v11022 = vadd.f32 %v10890, %v10895
      %v11023 = vadd.f32 %v10891, %v10895
      %v11024 = vadd.f32 %v10892, %v10895
      %v11025 = vmax.f32 %v10897, 0.0
      %v11026 = vmax.f32 %v10898, 0.0
      %v11027 = vmax.f32 %v10899, 0.0
      %v11028 = vmax.f32 %v10900, 0.0
      %v11029 = vmax.f32 %v10901, 0.0
      %v11030 = vmax.f32 %v10902, 0.0
      %v11031 = vmax.f32 %v10903, 0.0
      %v11032 = vmax.f32 %v10904, 0.0
      %v11033 = vmax.f32 %v10905, 0.0
      %v11034 = vmax.f32 %v10906, 0.0
      %v11035 = vmax.f32 %v10907, 0.0
      %v11036 = vmax.f32 %v10908, 0.0
      %v11037 = vmax.f32 %v10909, 0.0
      %v11038 = vmax.f32 %v10910, 0.0
      %v11039 = vmax.f32 %v10911, 0.0
      %v11040 = vmax.f32 %v10912, 0.0
      %v11041 = vmax.f32 %v10913, 0.0
      %v11042 = vmax.f32 %v10914, 0.0
      %v11043 = vmax.f32 %v10915, 0.0
      %v11044 = vmax.f32 %v10916, 0.0
      %v11045 = vmax.f32 %v10917, 0.0
      %v11046 = vmax.f32 %v10918, 0.0
      %v11047 = vmax.f32 %v10919, 0.0
      %v11048 = vmax.f32 %v10920, 0.0
      %v11049 = vmax.f32 %v10921, 0.0
      %v11050 = vmax.f32 %v10922, 0.0
      %v11051 = vmax.f32 %v10923, 0.0
      %v11052 = vmax.f32 %v10924, 0.0
      %v11053 = vmax.f32 %v10925, 0.0
      %v11054 = vmax.f32 %v10926, 0.0
      %v11055 = vmax.f32 %v10927, 0.0
      %v11056 = vmax.f32 %v10928, 0.0
      %v11057 = vmax.f32 %v10929, 0.0
      %v11058 = vmax.f32 %v10930, 0.0
      %v11059 = vmax.f32 %v10931, 0.0
      %v11060 = vmax.f32 %v10932, 0.0
      %v11061 = vmax.f32 %v10933, 0.0
      %v11062 = vmax.f32 %v10934, 0.0
      %v11063 = vmax.f32 %v10935, 0.0
      %v11064 = vmax.f32 %v10936, 0.0
      %v11065 = vmax.f32 %v10937, 0.0
      %v11066 = vmax.f32 %v10938, 0.0
      %v11067 = vmax.f32 %v10939, 0.0
      %v11068 = vmax.f32 %v10940, 0.0
      %v11069 = vmax.f32 %v10941, 0.0
      %v11070 = vmax.f32 %v10942, 0.0
      %v11071 = vmax.f32 %v10943, 0.0
      %v11072 = vmax.f32 %v10944, 0.0
      %v11073 = vmax.f32 %v10945, 0.0
      %v11074 = vmax.f32 %v10946, 0.0
      %v11075 = vmax.f32 %v10947, 0.0
      %v11076 = vmax.f32 %v10948, 0.0
      %v11077 = vmax.f32 %v10949, 0.0
      %v11078 = vmax.f32 %v10950, 0.0
      %v11079 = vmax.f32 %v10951, 0.0
      %v11080 = vmax.f32 %v10952, 0.0
      %v11081 = vmax.f32 %v10953, 0.0
      %v11082 = vmax.f32 %v10954, 0.0
      %v11083 = vmax.f32 %v10955, 0.0
      %v11084 = vmax.f32 %v10956, 0.0
      %v11085 = vmax.f32 %v10957, 0.0
      %v11086 = vmax.f32 %v10958, 0.0
      %v11087 = vmax.f32 %v10959, 0.0
      %v11088 = vmax.f32 %v10960, 0.0
      %v11089 = vmax.f32 %v10961, 0.0
      %v11090 = vmax.f32 %v10962, 0.0
      %v11091 = vmax.f32 %v10963, 0.0
      %v11092 = vmax.f32 %v10964, 0.0
      %v11093 = vmax.f32 %v10965, 0.0
      %v11094 = vmax.f32 %v10966, 0.0
      %v11095 = vmax.f32 %v10967, 0.0
      %v11096 = vmax.f32 %v10968, 0.0
      %v11097 = vmax.f32 %v10969, 0.0
      %v11098 = vmax.f32 %v10970, 0.0
      %v11099 = vmax.f32 %v10971, 0.0
      %v11100 = vmax.f32 %v10972, 0.0
      %v11101 = vmax.f32 %v10973, 0.0
      %v11102 = vmax.f32 %v10974, 0.0
      %v11103 = vmax.f32 %v10975, 0.0
      %v11104 = vmax.f32 %v10976, 0.0
      %v11105 = vmax.f32 %v10977, 0.0
      %v11106 = vmax.f32 %v10978, 0.0
      %v11107 = vmax.f32 %v10979, 0.0
      %v11108 = vmax.f32 %v10980, 0.0
      %v11109 = vmax.f32 %v10981, 0.0
      %v11110 = vmax.f32 %v10982, 0.0
      %v11111 = vmax.f32 %v10983, 0.0
      %v11112 = vmax.f32 %v10984, 0.0
      %v11113 = vmax.f32 %v10985, 0.0
      %v11114 = vmax.f32 %v10986, 0.0
      %v11115 = vmax.f32 %v10987, 0.0
      %v11116 = vmax.f32 %v10988, 0.0
      %v11117 = vmax.f32 %v10989, 0.0
      %v11118 = vmax.f32 %v10990, 0.0
      %v11119 = vmax.f32 %v10991, 0.0
      %v11120 = vmax.f32 %v10992, 0.0
      %v11121 = vmax.f32 %v10993, 0.0
      %v11122 = vmax.f32 %v10994, 0.0
      %v11123 = vmax.f32 %v10995, 0.0
      %v11124 = vmax.f32 %v10996, 0.0
      %v11125 = vmax.f32 %v10997, 0.0
      %v11126 = vmax.f32 %v10998, 0.0
      %v11127 = vmax.f32 %v10999, 0.0
      %v11128 = vmax.f32 %v11000, 0.0
      %v11129 = vmax.f32 %v11001, 0.0
      %v11130 = vmax.f32 %v11002, 0.0
      %v11131 = vmax.f32 %v11003, 0.0
      %v11132 = vmax.f32 %v11004, 0.0
      %v11133 = vmax.f32 %v11005, 0.0
      %v11134 = vmax.f32 %v11006, 0.0
      %v11135 = vmax.f32 %v11007, 0.0
      %v11136 = vmax.f32 %v11008, 0.0
      %v11137 = vmax.f32 %v11009, 0.0
      %v11138 = vmax.f32 %v11010, 0.0
      %v11139 = vmax.f32 %v11011, 0.0
      %v11140 = vmax.f32 %v11012, 0.0
      %v11141 = vmax.f32 %v11013, 0.0
      %v11142 = vmax.f32 %v11014, 0.0
      %v11143 = vmax.f32 %v11015, 0.0
      %v11144 = vmax.f32 %v11016, 0.0
      %v11145 = vmax.f32 %v11017, 0.0
      %v11146 = vmax.f32 %v11018, 0.0
      %v11147 = vmax.f32 %v11019, 0.0
      %v11148 = vmax.f32 %v11020, 0.0
      %v11149 = vmax.f32 %v11021, 0.0
      %v11150 = vmax.f32 %v11022, 0.0
      %v11151 = vmax.f32 %v11023, 0.0
      %v11152 = vmax.f32 %v11024, 0.0
      %v11153 = vpack.c.bf16 %v11026, %v11025
      %v11154 = vpack.c.bf16 %v11028, %v11027
      %v11155 = vpack.c.bf16 %v11030, %v11029
      %v11156 = vpack.c.bf16 %v11032, %v11031
      %v11157 = vpack.c.bf16 %v11034, %v11033
      %v11158 = vpack.c.bf16 %v11036, %v11035
      %v11159 = vpack.c.bf16 %v11038, %v11037
      %v11160 = vpack.c.bf16 %v11040, %v11039
      %v11161 = vpack.c.bf16 %v11042, %v11041
      %v11162 = vpack.c.bf16 %v11044, %v11043
      %v11163 = vpack.c.bf16 %v11046, %v11045
      %v11164 = vpack.c.bf16 %v11048, %v11047
      %v11165 = vpack.c.bf16 %v11050, %v11049
      %v11166 = vpack.c.bf16 %v11052, %v11051
      %v11167 = vpack.c.bf16 %v11054, %v11053
      %v11168 = vpack.c.bf16 %v11056, %v11055
      %v11169 = vpack.c.bf16 %v11058, %v11057
      %v11170 = vpack.c.bf16 %v11060, %v11059
      %v11171 = vpack.c.bf16 %v11062, %v11061
      %v11172 = vpack.c.bf16 %v11064, %v11063
      %v11173 = vpack.c.bf16 %v11066, %v11065
      %v11174 = vpack.c.bf16 %v11068, %v11067
      %v11175 = vpack.c.bf16 %v11070, %v11069
      %v11176 = vpack.c.bf16 %v11072, %v11071
      %v11177 = vpack.c.bf16 %v11074, %v11073
      %v11178 = vpack.c.bf16 %v11076, %v11075
      %v11179 = vpack.c.bf16 %v11078, %v11077
      %v11180 = vpack.c.bf16 %v11080, %v11079
      %v11181 = vpack.c.bf16 %v11082, %v11081
      %v11182 = vpack.c.bf16 %v11084, %v11083
      %v11183 = vpack.c.bf16 %v11086, %v11085
      %v11184 = vpack.c.bf16 %v11088, %v11087
      %v11185 = vpack.c.bf16 %v11090, %v11089
      %v11186 = vpack.c.bf16 %v11092, %v11091
      %v11187 = vpack.c.bf16 %v11094, %v11093
      %v11188 = vpack.c.bf16 %v11096, %v11095
      %v11189 = vpack.c.bf16 %v11098, %v11097
      %v11190 = vpack.c.bf16 %v11100, %v11099
      %v11191 = vpack.c.bf16 %v11102, %v11101
      %v11192 = vpack.c.bf16 %v11104, %v11103
      %v11193 = vpack.c.bf16 %v11106, %v11105
      %v11194 = vpack.c.bf16 %v11108, %v11107
      %v11195 = vpack.c.bf16 %v11110, %v11109
      %v11196 = vpack.c.bf16 %v11112, %v11111
      %v11197 = vpack.c.bf16 %v11114, %v11113
      %v11198 = vpack.c.bf16 %v11116, %v11115
      %v11199 = vpack.c.bf16 %v11118, %v11117
      %v11200 = vpack.c.bf16 %v11120, %v11119
      %v11201 = vpack.c.bf16 %v11122, %v11121
      %v11202 = vpack.c.bf16 %v11124, %v11123
      %v11203 = vpack.c.bf16 %v11126, %v11125
      %v11204 = vpack.c.bf16 %v11128, %v11127
      %v11205 = vpack.c.bf16 %v11130, %v11129
      %v11206 = vpack.c.bf16 %v11132, %v11131
      %v11207 = vpack.c.bf16 %v11134, %v11133
      %v11208 = vpack.c.bf16 %v11136, %v11135
      %v11209 = vpack.c.bf16 %v11138, %v11137
      %v11210 = vpack.c.bf16 %v11140, %v11139
      %v11211 = vpack.c.bf16 %v11142, %v11141
      %v11212 = vpack.c.bf16 %v11144, %v11143
      %v11213 = vpack.c.bf16 %v11146, %v11145
      %v11214 = vpack.c.bf16 %v11148, %v11147
      %v11215 = vpack.c.bf16 %v11150, %v11149
      %v11216 = vpack.c.bf16 %v11152, %v11151
      %v11217 = vld [vmem:[%s7] sm:$0xf]
      %v11218 = vld [vmem:[%s7 + $0x4] sm:$0xf]
      %v11219 = vld [vmem:[%s7 + $0x8] sm:$0xf]
      %v11220 = vld [vmem:[%s7 + $0xc] sm:$0xf]
      %v11221 = vld [vmem:[%s7 + $0x10] sm:$0xf]
      %v11222 = vld [vmem:[%s7 + $0x14] sm:$0xf]
      %v11223 = vld [vmem:[%s7 + $0x18] sm:$0xf]
      %v11224 = vld [vmem:[%s7 + $0x1c] sm:$0xf]
      %v11225 = vld [vmem:[%s7 + $0x20] sm:$0xf]
      %v11226 = vld [vmem:[%s7 + $0x24] sm:$0xf]
      %v11227 = vld [vmem:[%s7 + $0x28] sm:$0xf]
      %v11228 = vld [vmem:[%s7 + $0x2c] sm:$0xf]
      %v11229 = vld [vmem:[%s7 + $0x30] sm:$0xf]
      %v11230 = vld [vmem:[%s7 + $0x34] sm:$0xf]
      %v11231 = vld [vmem:[%s7 + $0x38] sm:$0xf]
      %v11232 = vld [vmem:[%s7 + $0x3c] sm:$0xf]
      %v11249 = vunpack.c.l.b16 %v11217
      %v11250 = vunpack.c.l.b16 %v11218
      %v11251 = vunpack.c.l.b16 %v11219
      %v11252 = vunpack.c.l.b16 %v11220
      %v11253 = vunpack.c.l.b16 %v11221
      %v11254 = vunpack.c.l.b16 %v11222
      %v11255 = vunpack.c.l.b16 %v11223
      %v11256 = vunpack.c.l.b16 %v11224
      %v11257 = vunpack.c.l.b16 %v11225
      %v11258 = vunpack.c.l.b16 %v11226
      %v11259 = vunpack.c.l.b16 %v11227
      %v11260 = vunpack.c.l.b16 %v11228
      %v11261 = vunpack.c.l.b16 %v11229
      %v11262 = vunpack.c.l.b16 %v11230
      %v11263 = vunpack.c.l.b16 %v11231
      %v11264 = vunpack.c.l.b16 %v11232
      %v11265 = vpack.c.b16 %v11250, %v11249
      %v11266 = vpack.c.b16 %v11252, %v11251
      %v11267 = vpack.c.b16 %v11254, %v11253
      %v11268 = vpack.c.b16 %v11256, %v11255
      %v11269 = vpack.c.b16 %v11258, %v11257
      %v11270 = vpack.c.b16 %v11260, %v11259
      %v11271 = vpack.c.b16 %v11262, %v11261
      %v11272 = vpack.c.b16 %v11264, %v11263
      %11281 = vmatpush.bf16.msra.mxu0 %v11272
      %11282 = vmatpush.bf16.msra.mxu0 %v11271
      %11283 = vmatpush.bf16.msra.mxu0 %v11270
      %11284 = vmatpush.bf16.msra.mxu0 %v11269
      %11285 = vmatpush.bf16.msra.mxu0 %v11268
      %11286 = vmatpush.bf16.msra.mxu0 %v11267
      %11287 = vmatpush.bf16.msra.mxu0 %v11266
      %11288 = vmatpush.bf16.msra.mxu0 %v11265
      %11289 = vmatmul.bf16.gmra.mxu0 %v11153
      %v11290 = vpop.f32.mrf.mxu0
      %v11291 = vadd.f32 0.0, %v11290
      %v11292 = vpop.f32.mrf.mxu0
      %v11293 = vadd.f32 0.0, %v11292
      %11294 = vmatmul.bf16.gmra.mxu0 %v11154
      %v11295 = vpop.f32.mrf.mxu0
      %v11296 = vadd.f32 0.0, %v11295
      %v11297 = vpop.f32.mrf.mxu0
      %v11298 = vadd.f32 0.0, %v11297
      %11299 = vmatmul.bf16.gmra.mxu0 %v11155
      %v11300 = vpop.f32.mrf.mxu0
      %v11301 = vadd.f32 0.0, %v11300
      %v11302 = vpop.f32.mrf.mxu0
      %v11303 = vadd.f32 0.0, %v11302
      %11304 = vmatmul.bf16.gmra.mxu0 %v11156
      %v11305 = vpop.f32.mrf.mxu0
      %v11306 = vadd.f32 0.0, %v11305
      %v11307 = vpop.f32.mrf.mxu0
      %v11308 = vadd.f32 0.0, %v11307
      %11309 = vmatmul.bf16.gmra.mxu0 %v11157
      %v11310 = vpop.f32.mrf.mxu0
      %v11311 = vadd.f32 0.0, %v11310
      %v11312 = vpop.f32.mrf.mxu0
      %v11313 = vadd.f32 0.0, %v11312
      %11314 = vmatmul.bf16.gmra.mxu0 %v11158
      %v11315 = vpop.f32.mrf.mxu0
      %v11316 = vadd.f32 0.0, %v11315
      %v11317 = vpop.f32.mrf.mxu0
      %v11318 = vadd.f32 0.0, %v11317
      %11319 = vmatmul.bf16.gmra.mxu0 %v11159
      %v11320 = vpop.f32.mrf.mxu0
      %v11321 = vadd.f32 0.0, %v11320
      %v11322 = vpop.f32.mrf.mxu0
      %v11323 = vadd.f32 0.0, %v11322
      %11324 = vmatmul.bf16.gmra.mxu0 %v11160
      %v11325 = vpop.f32.mrf.mxu0
      %v11326 = vadd.f32 0.0, %v11325
      %v11327 = vpop.f32.mrf.mxu0
      %v11328 = vadd.f32 0.0, %v11327
      %11329 = vmatmul.bf16.gmra.mxu0 %v11161
      %v11330 = vpop.f32.mrf.mxu0
      %v11331 = vadd.f32 0.0, %v11330
      %v11332 = vpop.f32.mrf.mxu0
      %v11333 = vadd.f32 0.0, %v11332
      %11334 = vmatmul.bf16.gmra.mxu0 %v11162
      %v11335 = vpop.f32.mrf.mxu0
      %v11336 = vadd.f32 0.0, %v11335
      %v11337 = vpop.f32.mrf.mxu0
      %v11338 = vadd.f32 0.0, %v11337
      %11339 = vmatmul.bf16.gmra.mxu0 %v11163
      %v11340 = vpop.f32.mrf.mxu0
      %v11341 = vadd.f32 0.0, %v11340
      %v11342 = vpop.f32.mrf.mxu0
      %v11343 = vadd.f32 0.0, %v11342
      %11344 = vmatmul.bf16.gmra.mxu0 %v11164
      %v11345 = vpop.f32.mrf.mxu0
      %v11346 = vadd.f32 0.0, %v11345
      %v11347 = vpop.f32.mrf.mxu0
      %v11348 = vadd.f32 0.0, %v11347
      %11349 = vmatmul.bf16.gmra.mxu0 %v11165
      %v11350 = vpop.f32.mrf.mxu0
      %v11351 = vadd.f32 0.0, %v11350
      %v11352 = vpop.f32.mrf.mxu0
      %v11353 = vadd.f32 0.0, %v11352
      %11354 = vmatmul.bf16.gmra.mxu0 %v11166
      %v11355 = vpop.f32.mrf.mxu0
      %v11356 = vadd.f32 0.0, %v11355
      %v11357 = vpop.f32.mrf.mxu0
      %v11358 = vadd.f32 0.0, %v11357
      %11359 = vmatmul.bf16.gmra.mxu0 %v11167
      %v11360 = vpop.f32.mrf.mxu0
      %v11361 = vadd.f32 0.0, %v11360
      %v11362 = vpop.f32.mrf.mxu0
      %v11363 = vadd.f32 0.0, %v11362
      %11364 = vmatmul.bf16.gmra.mxu0 %v11168
      %v11365 = vpop.f32.mrf.mxu0
      %v11366 = vadd.f32 0.0, %v11365
      %v11367 = vpop.f32.mrf.mxu0
      %v11368 = vadd.f32 0.0, %v11367
      %11369 = vmatmul.bf16.gmra.mxu0 %v11169
      %v11370 = vpop.f32.mrf.mxu0
      %v11371 = vadd.f32 0.0, %v11370
      %v11372 = vpop.f32.mrf.mxu0
      %v11373 = vadd.f32 0.0, %v11372
      %11374 = vmatmul.bf16.gmra.mxu0 %v11170
      %v11375 = vpop.f32.mrf.mxu0
      %v11376 = vadd.f32 0.0, %v11375
      %v11377 = vpop.f32.mrf.mxu0
      %v11378 = vadd.f32 0.0, %v11377
      %11379 = vmatmul.bf16.gmra.mxu0 %v11171
      %v11380 = vpop.f32.mrf.mxu0
      %v11381 = vadd.f32 0.0, %v11380
      %v11382 = vpop.f32.mrf.mxu0
      %v11383 = vadd.f32 0.0, %v11382
      %11384 = vmatmul.bf16.gmra.mxu0 %v11172
      %v11385 = vpop.f32.mrf.mxu0
      %v11386 = vadd.f32 0.0, %v11385
      %v11387 = vpop.f32.mrf.mxu0
      %v11388 = vadd.f32 0.0, %v11387
      %11389 = vmatmul.bf16.gmra.mxu0 %v11173
      %v11390 = vpop.f32.mrf.mxu0
      %v11391 = vadd.f32 0.0, %v11390
      %v11392 = vpop.f32.mrf.mxu0
      %v11393 = vadd.f32 0.0, %v11392
      %11394 = vmatmul.bf16.gmra.mxu0 %v11174
      %v11395 = vpop.f32.mrf.mxu0
      %v11396 = vadd.f32 0.0, %v11395
      %v11397 = vpop.f32.mrf.mxu0
      %v11398 = vadd.f32 0.0, %v11397
      %11399 = vmatmul.bf16.gmra.mxu0 %v11175
      %v11400 = vpop.f32.mrf.mxu0
      %v11401 = vadd.f32 0.0, %v11400
      %v11402 = vpop.f32.mrf.mxu0
      %v11403 = vadd.f32 0.0, %v11402
      %11404 = vmatmul.bf16.gmra.mxu0 %v11176
      %v11405 = vpop.f32.mrf.mxu0
      %v11406 = vadd.f32 0.0, %v11405
      %v11407 = vpop.f32.mrf.mxu0
      %v11408 = vadd.f32 0.0, %v11407
      %11409 = vmatmul.bf16.gmra.mxu0 %v11177
      %v11410 = vpop.f32.mrf.mxu0
      %v11411 = vadd.f32 0.0, %v11410
      %v11412 = vpop.f32.mrf.mxu0
      %v11413 = vadd.f32 0.0, %v11412
      %11414 = vmatmul.bf16.gmra.mxu0 %v11178
      %v11415 = vpop.f32.mrf.mxu0
      %v11416 = vadd.f32 0.0, %v11415
      %v11417 = vpop.f32.mrf.mxu0
      %v11418 = vadd.f32 0.0, %v11417
      %11419 = vmatmul.bf16.gmra.mxu0 %v11179
      %v11420 = vpop.f32.mrf.mxu0
      %v11421 = vadd.f32 0.0, %v11420
      %v11422 = vpop.f32.mrf.mxu0
      %v11423 = vadd.f32 0.0, %v11422
      %11424 = vmatmul.bf16.gmra.mxu0 %v11180
      %v11425 = vpop.f32.mrf.mxu0
      %v11426 = vadd.f32 0.0, %v11425
      %v11427 = vpop.f32.mrf.mxu0
      %v11428 = vadd.f32 0.0, %v11427
      %11429 = vmatmul.bf16.gmra.mxu0 %v11181
      %v11430 = vpop.f32.mrf.mxu0
      %v11431 = vadd.f32 0.0, %v11430
      %v11432 = vpop.f32.mrf.mxu0
      %v11433 = vadd.f32 0.0, %v11432
      %11434 = vmatmul.bf16.gmra.mxu0 %v11182
      %v11435 = vpop.f32.mrf.mxu0
      %v11436 = vadd.f32 0.0, %v11435
      %v11437 = vpop.f32.mrf.mxu0
      %v11438 = vadd.f32 0.0, %v11437
      %11439 = vmatmul.bf16.gmra.mxu0 %v11183
      %v11440 = vpop.f32.mrf.mxu0
      %v11441 = vadd.f32 0.0, %v11440
      %v11442 = vpop.f32.mrf.mxu0
      %v11443 = vadd.f32 0.0, %v11442
      %11444 = vmatmul.bf16.gmra.mxu0 %v11184
      %v11445 = vpop.f32.mrf.mxu0
      %v11446 = vadd.f32 0.0, %v11445
      %v11447 = vpop.f32.mrf.mxu0
      %v11448 = vadd.f32 0.0, %v11447
      %11449 = vmatmul.bf16.gmra.mxu0 %v11185
      %v11450 = vpop.f32.mrf.mxu0
      %v11451 = vadd.f32 0.0, %v11450
      %v11452 = vpop.f32.mrf.mxu0
      %v11453 = vadd.f32 0.0, %v11452
      %11454 = vmatmul.bf16.gmra.mxu0 %v11186
      %v11455 = vpop.f32.mrf.mxu0
      %v11456 = vadd.f32 0.0, %v11455
      %v11457 = vpop.f32.mrf.mxu0
      %v11458 = vadd.f32 0.0, %v11457
      %11459 = vmatmul.bf16.gmra.mxu0 %v11187
      %v11460 = vpop.f32.mrf.mxu0
      %v11461 = vadd.f32 0.0, %v11460
      %v11462 = vpop.f32.mrf.mxu0
      %v11463 = vadd.f32 0.0, %v11462
      %11464 = vmatmul.bf16.gmra.mxu0 %v11188
      %v11465 = vpop.f32.mrf.mxu0
      %v11466 = vadd.f32 0.0, %v11465
      %v11467 = vpop.f32.mrf.mxu0
      %v11468 = vadd.f32 0.0, %v11467
      %11469 = vmatmul.bf16.gmra.mxu0 %v11189
      %v11470 = vpop.f32.mrf.mxu0
      %v11471 = vadd.f32 0.0, %v11470
      %v11472 = vpop.f32.mrf.mxu0
      %v11473 = vadd.f32 0.0, %v11472
      %11474 = vmatmul.bf16.gmra.mxu0 %v11190
      %v11475 = vpop.f32.mrf.mxu0
      %v11476 = vadd.f32 0.0, %v11475
      %v11477 = vpop.f32.mrf.mxu0
      %v11478 = vadd.f32 0.0, %v11477
      %11479 = vmatmul.bf16.gmra.mxu0 %v11191
      %v11480 = vpop.f32.mrf.mxu0
      %v11481 = vadd.f32 0.0, %v11480
      %v11482 = vpop.f32.mrf.mxu0
      %v11483 = vadd.f32 0.0, %v11482
      %11484 = vmatmul.bf16.gmra.mxu0 %v11192
      %v11485 = vpop.f32.mrf.mxu0
      %v11486 = vadd.f32 0.0, %v11485
      %v11487 = vpop.f32.mrf.mxu0
      %v11488 = vadd.f32 0.0, %v11487
      %11489 = vmatmul.bf16.gmra.mxu0 %v11193
      %v11490 = vpop.f32.mrf.mxu0
      %v11491 = vadd.f32 0.0, %v11490
      %v11492 = vpop.f32.mrf.mxu0
      %v11493 = vadd.f32 0.0, %v11492
      %11494 = vmatmul.bf16.gmra.mxu0 %v11194
      %v11495 = vpop.f32.mrf.mxu0
      %v11496 = vadd.f32 0.0, %v11495
      %v11497 = vpop.f32.mrf.mxu0
      %v11498 = vadd.f32 0.0, %v11497
      %11499 = vmatmul.bf16.gmra.mxu0 %v11195
      %v11500 = vpop.f32.mrf.mxu0
      %v11501 = vadd.f32 0.0, %v11500
      %v11502 = vpop.f32.mrf.mxu0
      %v11503 = vadd.f32 0.0, %v11502
      %11504 = vmatmul.bf16.gmra.mxu0 %v11196
      %v11505 = vpop.f32.mrf.mxu0
      %v11506 = vadd.f32 0.0, %v11505
      %v11507 = vpop.f32.mrf.mxu0
      %v11508 = vadd.f32 0.0, %v11507
      %11509 = vmatmul.bf16.gmra.mxu0 %v11197
      %v11510 = vpop.f32.mrf.mxu0
      %v11511 = vadd.f32 0.0, %v11510
      %v11512 = vpop.f32.mrf.mxu0
      %v11513 = vadd.f32 0.0, %v11512
      %11514 = vmatmul.bf16.gmra.mxu0 %v11198
      %v11515 = vpop.f32.mrf.mxu0
      %v11516 = vadd.f32 0.0, %v11515
      %v11517 = vpop.f32.mrf.mxu0
      %v11518 = vadd.f32 0.0, %v11517
      %11519 = vmatmul.bf16.gmra.mxu0 %v11199
      %v11520 = vpop.f32.mrf.mxu0
      %v11521 = vadd.f32 0.0, %v11520
      %v11522 = vpop.f32.mrf.mxu0
      %v11523 = vadd.f32 0.0, %v11522
      %11524 = vmatmul.bf16.gmra.mxu0 %v11200
      %v11525 = vpop.f32.mrf.mxu0
      %v11526 = vadd.f32 0.0, %v11525
      %v11527 = vpop.f32.mrf.mxu0
      %v11528 = vadd.f32 0.0, %v11527
      %11529 = vmatmul.bf16.gmra.mxu0 %v11201
      %v11530 = vpop.f32.mrf.mxu0
      %v11531 = vadd.f32 0.0, %v11530
      %v11532 = vpop.f32.mrf.mxu0
      %v11533 = vadd.f32 0.0, %v11532
      %11534 = vmatmul.bf16.gmra.mxu0 %v11202
      %v11535 = vpop.f32.mrf.mxu0
      %v11536 = vadd.f32 0.0, %v11535
      %v11537 = vpop.f32.mrf.mxu0
      %v11538 = vadd.f32 0.0, %v11537
      %11539 = vmatmul.bf16.gmra.mxu0 %v11203
      %v11540 = vpop.f32.mrf.mxu0
      %v11541 = vadd.f32 0.0, %v11540
      %v11542 = vpop.f32.mrf.mxu0
      %v11543 = vadd.f32 0.0, %v11542
      %11544 = vmatmul.bf16.gmra.mxu0 %v11204
      %v11545 = vpop.f32.mrf.mxu0
      %v11546 = vadd.f32 0.0, %v11545
      %v11547 = vpop.f32.mrf.mxu0
      %v11548 = vadd.f32 0.0, %v11547
      %11549 = vmatmul.bf16.gmra.mxu0 %v11205
      %v11550 = vpop.f32.mrf.mxu0
      %v11551 = vadd.f32 0.0, %v11550
      %v11552 = vpop.f32.mrf.mxu0
      %v11553 = vadd.f32 0.0, %v11552
      %11554 = vmatmul.bf16.gmra.mxu0 %v11206
      %v11555 = vpop.f32.mrf.mxu0
      %v11556 = vadd.f32 0.0, %v11555
      %v11557 = vpop.f32.mrf.mxu0
      %v11558 = vadd.f32 0.0, %v11557
      %11559 = vmatmul.bf16.gmra.mxu0 %v11207
      %v11560 = vpop.f32.mrf.mxu0
      %v11561 = vadd.f32 0.0, %v11560
      %v11562 = vpop.f32.mrf.mxu0
      %v11563 = vadd.f32 0.0, %v11562
      %11564 = vmatmul.bf16.gmra.mxu0 %v11208
      %v11565 = vpop.f32.mrf.mxu0
      %v11566 = vadd.f32 0.0, %v11565
      %v11567 = vpop.f32.mrf.mxu0
      %v11568 = vadd.f32 0.0, %v11567
      %11569 = vmatmul.bf16.gmra.mxu0 %v11209
      %v11570 = vpop.f32.mrf.mxu0
      %v11571 = vadd.f32 0.0, %v11570
      %v11572 = vpop.f32.mrf.mxu0
      %v11573 = vadd.f32 0.0, %v11572
      %11574 = vmatmul.bf16.gmra.mxu0 %v11210
      %v11575 = vpop.f32.mrf.mxu0
      %v11576 = vadd.f32 0.0, %v11575
      %v11577 = vpop.f32.mrf.mxu0
      %v11578 = vadd.f32 0.0, %v11577
      %11579 = vmatmul.bf16.gmra.mxu0 %v11211
      %v11580 = vpop.f32.mrf.mxu0
      %v11581 = vadd.f32 0.0, %v11580
      %v11582 = vpop.f32.mrf.mxu0
      %v11583 = vadd.f32 0.0, %v11582
      %11584 = vmatmul.bf16.gmra.mxu0 %v11212
      %v11585 = vpop.f32.mrf.mxu0
      %v11586 = vadd.f32 0.0, %v11585
      %v11587 = vpop.f32.mrf.mxu0
      %v11588 = vadd.f32 0.0, %v11587
      %11589 = vmatmul.bf16.gmra.mxu0 %v11213
      %v11590 = vpop.f32.mrf.mxu0
      %v11591 = vadd.f32 0.0, %v11590
      %v11592 = vpop.f32.mrf.mxu0
      %v11593 = vadd.f32 0.0, %v11592
      %11594 = vmatmul.bf16.gmra.mxu0 %v11214
      %v11595 = vpop.f32.mrf.mxu0
      %v11596 = vadd.f32 0.0, %v11595
      %v11597 = vpop.f32.mrf.mxu0
      %v11598 = vadd.f32 0.0, %v11597
      %11599 = vmatmul.bf16.gmra.mxu0 %v11215
      %v11600 = vpop.f32.mrf.mxu0
      %v11601 = vadd.f32 0.0, %v11600
      %v11602 = vpop.f32.mrf.mxu0
      %v11603 = vadd.f32 0.0, %v11602
      %11604 = vmatmul.bf16.gmra.mxu0 %v11216
      %v11605 = vpop.f32.mrf.mxu0
      %v11606 = vadd.f32 0.0, %v11605
      %v11607 = vpop.f32.mrf.mxu0
      %v11608 = vadd.f32 0.0, %v11607
      %11609 = vdwg.mxu0
      %v11610 = vld [vmem:[%s8] sm:$0x1]
      %v11612 = vperm.slane %v11610, 0
      %v11614 = vmul.f32 %v11291, %v11612
      %v11615 = vmul.f32 %v11293, %v11612
      %v11616 = vmul.f32 %v11296, %v11612
      %v11617 = vmul.f32 %v11298, %v11612
      %v11618 = vmul.f32 %v11301, %v11612
      %v11619 = vmul.f32 %v11303, %v11612
      %v11620 = vmul.f32 %v11306, %v11612
      %v11621 = vmul.f32 %v11308, %v11612
      %v11622 = vmul.f32 %v11311, %v11612
      %v11623 = vmul.f32 %v11313, %v11612
      %v11624 = vmul.f32 %v11316, %v11612
      %v11625 = vmul.f32 %v11318, %v11612
      %v11626 = vmul.f32 %v11321, %v11612
      %v11627 = vmul.f32 %v11323, %v11612
      %v11628 = vmul.f32 %v11326, %v11612
      %v11629 = vmul.f32 %v11328, %v11612
      %v11630 = vmul.f32 %v11331, %v11612
      %v11631 = vmul.f32 %v11333, %v11612
      %v11632 = vmul.f32 %v11336, %v11612
      %v11633 = vmul.f32 %v11338, %v11612
      %v11634 = vmul.f32 %v11341, %v11612
      %v11635 = vmul.f32 %v11343, %v11612
      %v11636 = vmul.f32 %v11346, %v11612
      %v11637 = vmul.f32 %v11348, %v11612
      %v11638 = vmul.f32 %v11351, %v11612
      %v11639 = vmul.f32 %v11353, %v11612
      %v11640 = vmul.f32 %v11356, %v11612
      %v11641 = vmul.f32 %v11358, %v11612
      %v11642 = vmul.f32 %v11361, %v11612
      %v11643 = vmul.f32 %v11363, %v11612
      %v11644 = vmul.f32 %v11366, %v11612
      %v11645 = vmul.f32 %v11368, %v11612
      %v11646 = vmul.f32 %v11371, %v11612
      %v11647 = vmul.f32 %v11373, %v11612
      %v11648 = vmul.f32 %v11376, %v11612
      %v11649 = vmul.f32 %v11378, %v11612
      %v11650 = vmul.f32 %v11381, %v11612
      %v11651 = vmul.f32 %v11383, %v11612
      %v11652 = vmul.f32 %v11386, %v11612
      %v11653 = vmul.f32 %v11388, %v11612
      %v11654 = vmul.f32 %v11391, %v11612
      %v11655 = vmul.f32 %v11393, %v11612
      %v11656 = vmul.f32 %v11396, %v11612
      %v11657 = vmul.f32 %v11398, %v11612
      %v11658 = vmul.f32 %v11401, %v11612
      %v11659 = vmul.f32 %v11403, %v11612
      %v11660 = vmul.f32 %v11406, %v11612
      %v11661 = vmul.f32 %v11408, %v11612
      %v11662 = vmul.f32 %v11411, %v11612
      %v11663 = vmul.f32 %v11413, %v11612
      %v11664 = vmul.f32 %v11416, %v11612
      %v11665 = vmul.f32 %v11418, %v11612
      %v11666 = vmul.f32 %v11421, %v11612
      %v11667 = vmul.f32 %v11423, %v11612
      %v11668 = vmul.f32 %v11426, %v11612
      %v11669 = vmul.f32 %v11428, %v11612
      %v11670 = vmul.f32 %v11431, %v11612
      %v11671 = vmul.f32 %v11433, %v11612
      %v11672 = vmul.f32 %v11436, %v11612
      %v11673 = vmul.f32 %v11438, %v11612
      %v11674 = vmul.f32 %v11441, %v11612
      %v11675 = vmul.f32 %v11443, %v11612
      %v11676 = vmul.f32 %v11446, %v11612
      %v11677 = vmul.f32 %v11448, %v11612
      %v11678 = vmul.f32 %v11451, %v11612
      %v11679 = vmul.f32 %v11453, %v11612
      %v11680 = vmul.f32 %v11456, %v11612
      %v11681 = vmul.f32 %v11458, %v11612
      %v11682 = vmul.f32 %v11461, %v11612
      %v11683 = vmul.f32 %v11463, %v11612
      %v11684 = vmul.f32 %v11466, %v11612
      %v11685 = vmul.f32 %v11468, %v11612
      %v11686 = vmul.f32 %v11471, %v11612
      %v11687 = vmul.f32 %v11473, %v11612
      %v11688 = vmul.f32 %v11476, %v11612
      %v11689 = vmul.f32 %v11478, %v11612
      %v11690 = vmul.f32 %v11481, %v11612
      %v11691 = vmul.f32 %v11483, %v11612
      %v11692 = vmul.f32 %v11486, %v11612
      %v11693 = vmul.f32 %v11488, %v11612
      %v11694 = vmul.f32 %v11491, %v11612
      %v11695 = vmul.f32 %v11493, %v11612
      %v11696 = vmul.f32 %v11496, %v11612
      %v11697 = vmul.f32 %v11498, %v11612
      %v11698 = vmul.f32 %v11501, %v11612
      %v11699 = vmul.f32 %v11503, %v11612
      %v11700 = vmul.f32 %v11506, %v11612
      %v11701 = vmul.f32 %v11508, %v11612
      %v11702 = vmul.f32 %v11511, %v11612
      %v11703 = vmul.f32 %v11513, %v11612
      %v11704 = vmul.f32 %v11516, %v11612
      %v11705 = vmul.f32 %v11518, %v11612
      %v11706 = vmul.f32 %v11521, %v11612
      %v11707 = vmul.f32 %v11523, %v11612
      %v11708 = vmul.f32 %v11526, %v11612
      %v11709 = vmul.f32 %v11528, %v11612
      %v11710 = vmul.f32 %v11531, %v11612
      %v11711 = vmul.f32 %v11533, %v11612
      %v11712 = vmul.f32 %v11536, %v11612
      %v11713 = vmul.f32 %v11538, %v11612
      %v11714 = vmul.f32 %v11541, %v11612
      %v11715 = vmul.f32 %v11543, %v11612
      %v11716 = vmul.f32 %v11546, %v11612
      %v11717 = vmul.f32 %v11548, %v11612
      %v11718 = vmul.f32 %v11551, %v11612
      %v11719 = vmul.f32 %v11553, %v11612
      %v11720 = vmul.f32 %v11556, %v11612
      %v11721 = vmul.f32 %v11558, %v11612
      %v11722 = vmul.f32 %v11561, %v11612
      %v11723 = vmul.f32 %v11563, %v11612
      %v11724 = vmul.f32 %v11566, %v11612
      %v11725 = vmul.f32 %v11568, %v11612
      %v11726 = vmul.f32 %v11571, %v11612
      %v11727 = vmul.f32 %v11573, %v11612
      %v11728 = vmul.f32 %v11576, %v11612
      %v11729 = vmul.f32 %v11578, %v11612
      %v11730 = vmul.f32 %v11581, %v11612
      %v11731 = vmul.f32 %v11583, %v11612
      %v11732 = vmul.f32 %v11586, %v11612
      %v11733 = vmul.f32 %v11588, %v11612
      %v11734 = vmul.f32 %v11591, %v11612
      %v11735 = vmul.f32 %v11593, %v11612
      %v11736 = vmul.f32 %v11596, %v11612
      %v11737 = vmul.f32 %v11598, %v11612
      %v11738 = vmul.f32 %v11601, %v11612
      %v11739 = vmul.f32 %v11603, %v11612
      %v11740 = vmul.f32 %v11606, %v11612
      %v11741 = vmul.f32 %v11608, %v11612
      %v11742 = vld [vmem:[%s9] sm:$0x1]
      %v11744 = vperm.slane %v11742, 0
      %v11746 = vadd.f32 %v11614, %v11744
      %v11747 = vadd.f32 %v11615, %v11744
      %v11748 = vadd.f32 %v11616, %v11744
      %v11749 = vadd.f32 %v11617, %v11744
      %v11750 = vadd.f32 %v11618, %v11744
      %v11751 = vadd.f32 %v11619, %v11744
      %v11752 = vadd.f32 %v11620, %v11744
      %v11753 = vadd.f32 %v11621, %v11744
      %v11754 = vadd.f32 %v11622, %v11744
      %v11755 = vadd.f32 %v11623, %v11744
      %v11756 = vadd.f32 %v11624, %v11744
      %v11757 = vadd.f32 %v11625, %v11744
      %v11758 = vadd.f32 %v11626, %v11744
      %v11759 = vadd.f32 %v11627, %v11744
      %v11760 = vadd.f32 %v11628, %v11744
      %v11761 = vadd.f32 %v11629, %v11744
      %v11762 = vadd.f32 %v11630, %v11744
      %v11763 = vadd.f32 %v11631, %v11744
      %v11764 = vadd.f32 %v11632, %v11744
      %v11765 = vadd.f32 %v11633, %v11744
      %v11766 = vadd.f32 %v11634, %v11744
      %v11767 = vadd.f32 %v11635, %v11744
      %v11768 = vadd.f32 %v11636, %v11744
      %v11769 = vadd.f32 %v11637, %v11744
      %v11770 = vadd.f32 %v11638, %v11744
      %v11771 = vadd.f32 %v11639, %v11744
      %v11772 = vadd.f32 %v11640, %v11744
      %v11773 = vadd.f32 %v11641, %v11744
      %v11774 = vadd.f32 %v11642, %v11744
      %v11775 = vadd.f32 %v11643, %v11744
      %v11776 = vadd.f32 %v11644, %v11744
      %v11777 = vadd.f32 %v11645, %v11744
      %v11778 = vadd.f32 %v11646, %v11744
      %v11779 = vadd.f32 %v11647, %v11744
      %v11780 = vadd.f32 %v11648, %v11744
      %v11781 = vadd.f32 %v11649, %v11744
      %v11782 = vadd.f32 %v11650, %v11744
      %v11783 = vadd.f32 %v11651, %v11744
      %v11784 = vadd.f32 %v11652, %v11744
      %v11785 = vadd.f32 %v11653, %v11744
      %v11786 = vadd.f32 %v11654, %v11744
      %v11787 = vadd.f32 %v11655, %v11744
      %v11788 = vadd.f32 %v11656, %v11744
      %v11789 = vadd.f32 %v11657, %v11744
      %v11790 = vadd.f32 %v11658, %v11744
      %v11791 = vadd.f32 %v11659, %v11744
      %v11792 = vadd.f32 %v11660, %v11744
      %v11793 = vadd.f32 %v11661, %v11744
      %v11794 = vadd.f32 %v11662, %v11744
      %v11795 = vadd.f32 %v11663, %v11744
      %v11796 = vadd.f32 %v11664, %v11744
      %v11797 = vadd.f32 %v11665, %v11744
      %v11798 = vadd.f32 %v11666, %v11744
      %v11799 = vadd.f32 %v11667, %v11744
      %v11800 = vadd.f32 %v11668, %v11744
      %v11801 = vadd.f32 %v11669, %v11744
      %v11802 = vadd.f32 %v11670, %v11744
      %v11803 = vadd.f32 %v11671, %v11744
      %v11804 = vadd.f32 %v11672, %v11744
      %v11805 = vadd.f32 %v11673, %v11744
      %v11806 = vadd.f32 %v11674, %v11744
      %v11807 = vadd.f32 %v11675, %v11744
      %v11808 = vadd.f32 %v11676, %v11744
      %v11809 = vadd.f32 %v11677, %v11744
      %v11810 = vadd.f32 %v11678, %v11744
      %v11811 = vadd.f32 %v11679, %v11744
      %v11812 = vadd.f32 %v11680, %v11744
      %v11813 = vadd.f32 %v11681, %v11744
      %v11814 = vadd.f32 %v11682, %v11744
      %v11815 = vadd.f32 %v11683, %v11744
      %v11816 = vadd.f32 %v11684, %v11744
      %v11817 = vadd.f32 %v11685, %v11744
      %v11818 = vadd.f32 %v11686, %v11744
      %v11819 = vadd.f32 %v11687, %v11744
      %v11820 = vadd.f32 %v11688, %v11744
      %v11821 = vadd.f32 %v11689, %v11744
      %v11822 = vadd.f32 %v11690, %v11744
      %v11823 = vadd.f32 %v11691, %v11744
      %v11824 = vadd.f32 %v11692, %v11744
      %v11825 = vadd.f32 %v11693, %v11744
      %v11826 = vadd.f32 %v11694, %v11744
      %v11827 = vadd.f32 %v11695, %v11744
      %v11828 = vadd.f32 %v11696, %v11744
      %v11829 = vadd.f32 %v11697, %v11744
      %v11830 = vadd.f32 %v11698, %v11744
      %v11831 = vadd.f32 %v11699, %v11744
      %v11832 = vadd.f32 %v11700, %v11744
      %v11833 = vadd.f32 %v11701, %v11744
      %v11834 = vadd.f32 %v11702, %v11744
      %v11835 = vadd.f32 %v11703, %v11744
      %v11836 = vadd.f32 %v11704, %v11744
      %v11837 = vadd.f32 %v11705, %v11744
      %v11838 = vadd.f32 %v11706, %v11744
      %v11839 = vadd.f32 %v11707, %v11744
      %v11840 = vadd.f32 %v11708, %v11744
      %v11841 = vadd.f32 %v11709, %v11744
      %v11842 = vadd.f32 %v11710, %v11744
      %v11843 = vadd.f32 %v11711, %v11744
      %v11844 = vadd.f32 %v11712, %v11744
      %v11845 = vadd.f32 %v11713, %v11744
      %v11846 = vadd.f32 %v11714, %v11744
      %v11847 = vadd.f32 %v11715, %v11744
      %v11848 = vadd.f32 %v11716, %v11744
      %v11849 = vadd.f32 %v11717, %v11744
      %v11850 = vadd.f32 %v11718, %v11744
      %v11851 = vadd.f32 %v11719, %v11744
      %v11852 = vadd.f32 %v11720, %v11744
      %v11853 = vadd.f32 %v11721, %v11744
      %v11854 = vadd.f32 %v11722, %v11744
      %v11855 = vadd.f32 %v11723, %v11744
      %v11856 = vadd.f32 %v11724, %v11744
      %v11857 = vadd.f32 %v11725, %v11744
      %v11858 = vadd.f32 %v11726, %v11744
      %v11859 = vadd.f32 %v11727, %v11744
      %v11860 = vadd.f32 %v11728, %v11744
      %v11861 = vadd.f32 %v11729, %v11744
      %v11862 = vadd.f32 %v11730, %v11744
      %v11863 = vadd.f32 %v11731, %v11744
      %v11864 = vadd.f32 %v11732, %v11744
      %v11865 = vadd.f32 %v11733, %v11744
      %v11866 = vadd.f32 %v11734, %v11744
      %v11867 = vadd.f32 %v11735, %v11744
      %v11868 = vadd.f32 %v11736, %v11744
      %v11869 = vadd.f32 %v11737, %v11744
      %v11870 = vadd.f32 %v11738, %v11744
      %v11871 = vadd.f32 %v11739, %v11744
      %v11872 = vadd.f32 %v11740, %v11744
      %v11873 = vadd.f32 %v11741, %v11744
      %v11874 = vld [vmem:[%s359] sm:$0xf]
      %v11875 = vld [vmem:[%s359 + $0x4] sm:$0xf]
      %v11876 = vld [vmem:[%s359 + $0x8] sm:$0xf]
      %v11877 = vld [vmem:[%s359 + $0xc] sm:$0xf]
      %v11878 = vld [vmem:[%s359 + $0x10] sm:$0xf]
      %v11879 = vld [vmem:[%s359 + $0x14] sm:$0xf]
      %v11880 = vld [vmem:[%s359 + $0x18] sm:$0xf]
      %v11881 = vld [vmem:[%s359 + $0x1c] sm:$0xf]
      %v11882 = vld [vmem:[%s359 + $0x20] sm:$0xf]
      %v11883 = vld [vmem:[%s359 + $0x24] sm:$0xf]
      %v11884 = vld [vmem:[%s359 + $0x28] sm:$0xf]
      %v11885 = vld [vmem:[%s359 + $0x2c] sm:$0xf]
      %v11886 = vld [vmem:[%s359 + $0x30] sm:$0xf]
      %v11887 = vld [vmem:[%s359 + $0x34] sm:$0xf]
      %v11888 = vld [vmem:[%s359 + $0x38] sm:$0xf]
      %v11889 = vld [vmem:[%s359 + $0x3c] sm:$0xf]
      %v11890 = vld [vmem:[%s359 + $0x40] sm:$0xf]
      %v11891 = vld [vmem:[%s359 + $0x44] sm:$0xf]
      %v11892 = vld [vmem:[%s359 + $0x48] sm:$0xf]
      %v11893 = vld [vmem:[%s359 + $0x4c] sm:$0xf]
      %v11894 = vld [vmem:[%s359 + $0x50] sm:$0xf]
      %v11895 = vld [vmem:[%s359 + $0x54] sm:$0xf]
      %v11896 = vld [vmem:[%s359 + $0x58] sm:$0xf]
      %v11897 = vld [vmem:[%s359 + $0x5c] sm:$0xf]
      %v11898 = vld [vmem:[%s359 + $0x60] sm:$0xf]
      %v11899 = vld [vmem:[%s359 + $0x64] sm:$0xf]
      %v11900 = vld [vmem:[%s359 + $0x68] sm:$0xf]
      %v11901 = vld [vmem:[%s359 + $0x6c] sm:$0xf]
      %v11902 = vld [vmem:[%s359 + $0x70] sm:$0xf]
      %v11903 = vld [vmem:[%s359 + $0x74] sm:$0xf]
      %v11904 = vld [vmem:[%s359 + $0x78] sm:$0xf]
      %v11905 = vld [vmem:[%s359 + $0x7c] sm:$0xf]
      %v11906 = vld [vmem:[%s359 + $0x80] sm:$0xf]
      %v11907 = vld [vmem:[%s359 + $0x84] sm:$0xf]
      %v11908 = vld [vmem:[%s359 + $0x88] sm:$0xf]
      %v11909 = vld [vmem:[%s359 + $0x8c] sm:$0xf]
      %v11910 = vld [vmem:[%s359 + $0x90] sm:$0xf]
      %v11911 = vld [vmem:[%s359 + $0x94] sm:$0xf]
      %v11912 = vld [vmem:[%s359 + $0x98] sm:$0xf]
      %v11913 = vld [vmem:[%s359 + $0x9c] sm:$0xf]
      %v11914 = vld [vmem:[%s359 + $0xa0] sm:$0xf]
      %v11915 = vld [vmem:[%s359 + $0xa4] sm:$0xf]
      %v11916 = vld [vmem:[%s359 + $0xa8] sm:$0xf]
      %v11917 = vld [vmem:[%s359 + $0xac] sm:$0xf]
      %v11918 = vld [vmem:[%s359 + $0xb0] sm:$0xf]
      %v11919 = vld [vmem:[%s359 + $0xb4] sm:$0xf]
      %v11920 = vld [vmem:[%s359 + $0xb8] sm:$0xf]
      %v11921 = vld [vmem:[%s359 + $0xbc] sm:$0xf]
      %v11922 = vld [vmem:[%s359 + $0xc0] sm:$0xf]
      %v11923 = vld [vmem:[%s359 + $0xc4] sm:$0xf]
      %v11924 = vld [vmem:[%s359 + $0xc8] sm:$0xf]
      %v11925 = vld [vmem:[%s359 + $0xcc] sm:$0xf]
      %v11926 = vld [vmem:[%s359 + $0xd0] sm:$0xf]
      %v11927 = vld [vmem:[%s359 + $0xd4] sm:$0xf]
      %v11928 = vld [vmem:[%s359 + $0xd8] sm:$0xf]
      %v11929 = vld [vmem:[%s359 + $0xdc] sm:$0xf]
      %v11930 = vld [vmem:[%s359 + $0xe0] sm:$0xf]
      %v11931 = vld [vmem:[%s359 + $0xe4] sm:$0xf]
      %v11932 = vld [vmem:[%s359 + $0xe8] sm:$0xf]
      %v11933 = vld [vmem:[%s359 + $0xec] sm:$0xf]
      %v11934 = vld [vmem:[%s359 + $0xf0] sm:$0xf]
      %v11935 = vld [vmem:[%s359 + $0xf4] sm:$0xf]
      %v11936 = vld [vmem:[%s359 + $0xf8] sm:$0xf]
      %v11937 = vld [vmem:[%s359 + $0xfc] sm:$0xf]
      %v11938 = vld [vmem:[%s359 + $0x100] sm:$0xf]
      %v11939 = vld [vmem:[%s359 + $0x104] sm:$0xf]
      %v11940 = vld [vmem:[%s359 + $0x108] sm:$0xf]
      %v11941 = vld [vmem:[%s359 + $0x10c] sm:$0xf]
      %v11942 = vld [vmem:[%s359 + $0x110] sm:$0xf]
      %v11943 = vld [vmem:[%s359 + $0x114] sm:$0xf]
      %v11944 = vld [vmem:[%s359 + $0x118] sm:$0xf]
      %v11945 = vld [vmem:[%s359 + $0x11c] sm:$0xf]
      %v11946 = vld [vmem:[%s359 + $0x120] sm:$0xf]
      %v11947 = vld [vmem:[%s359 + $0x124] sm:$0xf]
      %v11948 = vld [vmem:[%s359 + $0x128] sm:$0xf]
      %v11949 = vld [vmem:[%s359 + $0x12c] sm:$0xf]
      %v11950 = vld [vmem:[%s359 + $0x130] sm:$0xf]
      %v11951 = vld [vmem:[%s359 + $0x134] sm:$0xf]
      %v11952 = vld [vmem:[%s359 + $0x138] sm:$0xf]
      %v11953 = vld [vmem:[%s359 + $0x13c] sm:$0xf]
      %v11954 = vld [vmem:[%s359 + $0x140] sm:$0xf]
      %v11955 = vld [vmem:[%s359 + $0x144] sm:$0xf]
      %v11956 = vld [vmem:[%s359 + $0x148] sm:$0xf]
      %v11957 = vld [vmem:[%s359 + $0x14c] sm:$0xf]
      %v11958 = vld [vmem:[%s359 + $0x150] sm:$0xf]
      %v11959 = vld [vmem:[%s359 + $0x154] sm:$0xf]
      %v11960 = vld [vmem:[%s359 + $0x158] sm:$0xf]
      %v11961 = vld [vmem:[%s359 + $0x15c] sm:$0xf]
      %v11962 = vld [vmem:[%s359 + $0x160] sm:$0xf]
      %v11963 = vld [vmem:[%s359 + $0x164] sm:$0xf]
      %v11964 = vld [vmem:[%s359 + $0x168] sm:$0xf]
      %v11965 = vld [vmem:[%s359 + $0x16c] sm:$0xf]
      %v11966 = vld [vmem:[%s359 + $0x170] sm:$0xf]
      %v11967 = vld [vmem:[%s359 + $0x174] sm:$0xf]
      %v11968 = vld [vmem:[%s359 + $0x178] sm:$0xf]
      %v11969 = vld [vmem:[%s359 + $0x17c] sm:$0xf]
      %v11970 = vld [vmem:[%s359 + $0x180] sm:$0xf]
      %v11971 = vld [vmem:[%s359 + $0x184] sm:$0xf]
      %v11972 = vld [vmem:[%s359 + $0x188] sm:$0xf]
      %v11973 = vld [vmem:[%s359 + $0x18c] sm:$0xf]
      %v11974 = vld [vmem:[%s359 + $0x190] sm:$0xf]
      %v11975 = vld [vmem:[%s359 + $0x194] sm:$0xf]
      %v11976 = vld [vmem:[%s359 + $0x198] sm:$0xf]
      %v11977 = vld [vmem:[%s359 + $0x19c] sm:$0xf]
      %v11978 = vld [vmem:[%s359 + $0x1a0] sm:$0xf]
      %v11979 = vld [vmem:[%s359 + $0x1a4] sm:$0xf]
      %v11980 = vld [vmem:[%s359 + $0x1a8] sm:$0xf]
      %v11981 = vld [vmem:[%s359 + $0x1ac] sm:$0xf]
      %v11982 = vld [vmem:[%s359 + $0x1b0] sm:$0xf]
      %v11983 = vld [vmem:[%s359 + $0x1b4] sm:$0xf]
      %v11984 = vld [vmem:[%s359 + $0x1b8] sm:$0xf]
      %v11985 = vld [vmem:[%s359 + $0x1bc] sm:$0xf]
      %v11986 = vld [vmem:[%s359 + $0x1c0] sm:$0xf]
      %v11987 = vld [vmem:[%s359 + $0x1c4] sm:$0xf]
      %v11988 = vld [vmem:[%s359 + $0x1c8] sm:$0xf]
      %v11989 = vld [vmem:[%s359 + $0x1cc] sm:$0xf]
      %v11990 = vld [vmem:[%s359 + $0x1d0] sm:$0xf]
      %v11991 = vld [vmem:[%s359 + $0x1d4] sm:$0xf]
      %v11992 = vld [vmem:[%s359 + $0x1d8] sm:$0xf]
      %v11993 = vld [vmem:[%s359 + $0x1dc] sm:$0xf]
      %v11994 = vld [vmem:[%s359 + $0x1e0] sm:$0xf]
      %v11995 = vld [vmem:[%s359 + $0x1e4] sm:$0xf]
      %v11996 = vld [vmem:[%s359 + $0x1e8] sm:$0xf]
      %v11997 = vld [vmem:[%s359 + $0x1ec] sm:$0xf]
      %v11998 = vld [vmem:[%s359 + $0x1f0] sm:$0xf]
      %v11999 = vld [vmem:[%s359 + $0x1f4] sm:$0xf]
      %v12000 = vld [vmem:[%s359 + $0x1f8] sm:$0xf]
      %v12001 = vld [vmem:[%s359 + $0x1fc] sm:$0xf]
      %v12002 = vunpack.c.l.bf16 %v11874
      %v12003 = vunpack.c.l.bf16 %v11875
      %v12004 = vunpack.c.l.bf16 %v11876
      %v12005 = vunpack.c.l.bf16 %v11877
      %v12006 = vunpack.c.l.bf16 %v11878
      %v12007 = vunpack.c.l.bf16 %v11879
      %v12008 = vunpack.c.l.bf16 %v11880
      %v12009 = vunpack.c.l.bf16 %v11881
      %v12010 = vunpack.c.l.bf16 %v11882
      %v12011 = vunpack.c.l.bf16 %v11883
      %v12012 = vunpack.c.l.bf16 %v11884
      %v12013 = vunpack.c.l.bf16 %v11885
      %v12014 = vunpack.c.l.bf16 %v11886
      %v12015 = vunpack.c.l.bf16 %v11887
      %v12016 = vunpack.c.l.bf16 %v11888
      %v12017 = vunpack.c.l.bf16 %v11889
      %v12018 = vunpack.c.l.bf16 %v11890
      %v12019 = vunpack.c.l.bf16 %v11891
      %v12020 = vunpack.c.l.bf16 %v11892
      %v12021 = vunpack.c.l.bf16 %v11893
      %v12022 = vunpack.c.l.bf16 %v11894
      %v12023 = vunpack.c.l.bf16 %v11895
      %v12024 = vunpack.c.l.bf16 %v11896
      %v12025 = vunpack.c.l.bf16 %v11897
      %v12026 = vunpack.c.l.bf16 %v11898
      %v12027 = vunpack.c.l.bf16 %v11899
      %v12028 = vunpack.c.l.bf16 %v11900
      %v12029 = vunpack.c.l.bf16 %v11901
      %v12030 = vunpack.c.l.bf16 %v11902
      %v12031 = vunpack.c.l.bf16 %v11903
      %v12032 = vunpack.c.l.bf16 %v11904
      %v12033 = vunpack.c.l.bf16 %v11905
      %v12034 = vunpack.c.l.bf16 %v11906
      %v12035 = vunpack.c.l.bf16 %v11907
      %v12036 = vunpack.c.l.bf16 %v11908
      %v12037 = vunpack.c.l.bf16 %v11909
      %v12038 = vunpack.c.l.bf16 %v11910
      %v12039 = vunpack.c.l.bf16 %v11911
      %v12040 = vunpack.c.l.bf16 %v11912
      %v12041 = vunpack.c.l.bf16 %v11913
      %v12042 = vunpack.c.l.bf16 %v11914
      %v12043 = vunpack.c.l.bf16 %v11915
      %v12044 = vunpack.c.l.bf16 %v11916
      %v12045 = vunpack.c.l.bf16 %v11917
      %v12046 = vunpack.c.l.bf16 %v11918
      %v12047 = vunpack.c.l.bf16 %v11919
      %v12048 = vunpack.c.l.bf16 %v11920
      %v12049 = vunpack.c.l.bf16 %v11921
      %v12050 = vunpack.c.l.bf16 %v11922
      %v12051 = vunpack.c.l.bf16 %v11923
      %v12052 = vunpack.c.l.bf16 %v11924
      %v12053 = vunpack.c.l.bf16 %v11925
      %v12054 = vunpack.c.l.bf16 %v11926
      %v12055 = vunpack.c.l.bf16 %v11927
      %v12056 = vunpack.c.l.bf16 %v11928
      %v12057 = vunpack.c.l.bf16 %v11929
      %v12058 = vunpack.c.l.bf16 %v11930
      %v12059 = vunpack.c.l.bf16 %v11931
      %v12060 = vunpack.c.l.bf16 %v11932
      %v12061 = vunpack.c.l.bf16 %v11933
      %v12062 = vunpack.c.l.bf16 %v11934
      %v12063 = vunpack.c.l.bf16 %v11935
      %v12064 = vunpack.c.l.bf16 %v11936
      %v12065 = vunpack.c.l.bf16 %v11937
      %v12066 = vunpack.c.l.bf16 %v11938
      %v12067 = vunpack.c.l.bf16 %v11939
      %v12068 = vunpack.c.l.bf16 %v11940
      %v12069 = vunpack.c.l.bf16 %v11941
      %v12070 = vunpack.c.l.bf16 %v11942
      %v12071 = vunpack.c.l.bf16 %v11943
      %v12072 = vunpack.c.l.bf16 %v11944
      %v12073 = vunpack.c.l.bf16 %v11945
      %v12074 = vunpack.c.l.bf16 %v11946
      %v12075 = vunpack.c.l.bf16 %v11947
      %v12076 = vunpack.c.l.bf16 %v11948
      %v12077 = vunpack.c.l.bf16 %v11949
      %v12078 = vunpack.c.l.bf16 %v11950
      %v12079 = vunpack.c.l.bf16 %v11951
      %v12080 = vunpack.c.l.bf16 %v11952
      %v12081 = vunpack.c.l.bf16 %v11953
      %v12082 = vunpack.c.l.bf16 %v11954
      %v12083 = vunpack.c.l.bf16 %v11955
      %v12084 = vunpack.c.l.bf16 %v11956
      %v12085 = vunpack.c.l.bf16 %v11957
      %v12086 = vunpack.c.l.bf16 %v11958
      %v12087 = vunpack.c.l.bf16 %v11959
      %v12088 = vunpack.c.l.bf16 %v11960
      %v12089 = vunpack.c.l.bf16 %v11961
      %v12090 = vunpack.c.l.bf16 %v11962
      %v12091 = vunpack.c.l.bf16 %v11963
      %v12092 = vunpack.c.l.bf16 %v11964
      %v12093 = vunpack.c.l.bf16 %v11965
      %v12094 = vunpack.c.l.bf16 %v11966
      %v12095 = vunpack.c.l.bf16 %v11967
      %v12096 = vunpack.c.l.bf16 %v11968
      %v12097 = vunpack.c.l.bf16 %v11969
      %v12098 = vunpack.c.l.bf16 %v11970
      %v12099 = vunpack.c.l.bf16 %v11971
      %v12100 = vunpack.c.l.bf16 %v11972
      %v12101 = vunpack.c.l.bf16 %v11973
      %v12102 = vunpack.c.l.bf16 %v11974
      %v12103 = vunpack.c.l.bf16 %v11975
      %v12104 = vunpack.c.l.bf16 %v11976
      %v12105 = vunpack.c.l.bf16 %v11977
      %v12106 = vunpack.c.l.bf16 %v11978
      %v12107 = vunpack.c.l.bf16 %v11979
      %v12108 = vunpack.c.l.bf16 %v11980
      %v12109 = vunpack.c.l.bf16 %v11981
      %v12110 = vunpack.c.l.bf16 %v11982
      %v12111 = vunpack.c.l.bf16 %v11983
      %v12112 = vunpack.c.l.bf16 %v11984
      %v12113 = vunpack.c.l.bf16 %v11985
      %v12114 = vunpack.c.l.bf16 %v11986
      %v12115 = vunpack.c.l.bf16 %v11987
      %v12116 = vunpack.c.l.bf16 %v11988
      %v12117 = vunpack.c.l.bf16 %v11989
      %v12118 = vunpack.c.l.bf16 %v11990
      %v12119 = vunpack.c.l.bf16 %v11991
      %v12120 = vunpack.c.l.bf16 %v11992
      %v12121 = vunpack.c.l.bf16 %v11993
      %v12122 = vunpack.c.l.bf16 %v11994
      %v12123 = vunpack.c.l.bf16 %v11995
      %v12124 = vunpack.c.l.bf16 %v11996
      %v12125 = vunpack.c.l.bf16 %v11997
      %v12126 = vunpack.c.l.bf16 %v11998
      %v12127 = vunpack.c.l.bf16 %v11999
      %v12128 = vunpack.c.l.bf16 %v12000
      %v12129 = vunpack.c.l.bf16 %v12001
      %v12130 = vadd.f32 %v11746, %v12002
      %v12131 = vadd.f32 %v11747, %v12003
      %v12132 = vadd.f32 %v11748, %v12004
      %v12133 = vadd.f32 %v11749, %v12005
      %v12134 = vadd.f32 %v11750, %v12006
      %v12135 = vadd.f32 %v11751, %v12007
      %v12136 = vadd.f32 %v11752, %v12008
      %v12137 = vadd.f32 %v11753, %v12009
      %v12138 = vadd.f32 %v11754, %v12010
      %v12139 = vadd.f32 %v11755, %v12011
      %v12140 = vadd.f32 %v11756, %v12012
      %v12141 = vadd.f32 %v11757, %v12013
      %v12142 = vadd.f32 %v11758, %v12014
      %v12143 = vadd.f32 %v11759, %v12015
      %v12144 = vadd.f32 %v11760, %v12016
      %v12145 = vadd.f32 %v11761, %v12017
      %v12146 = vadd.f32 %v11762, %v12018
      %v12147 = vadd.f32 %v11763, %v12019
      %v12148 = vadd.f32 %v11764, %v12020
      %v12149 = vadd.f32 %v11765, %v12021
      %v12150 = vadd.f32 %v11766, %v12022
      %v12151 = vadd.f32 %v11767, %v12023
      %v12152 = vadd.f32 %v11768, %v12024
      %v12153 = vadd.f32 %v11769, %v12025
      %v12154 = vadd.f32 %v11770, %v12026
      %v12155 = vadd.f32 %v11771, %v12027
      %v12156 = vadd.f32 %v11772, %v12028
      %v12157 = vadd.f32 %v11773, %v12029
      %v12158 = vadd.f32 %v11774, %v12030
      %v12159 = vadd.f32 %v11775, %v12031
      %v12160 = vadd.f32 %v11776, %v12032
      %v12161 = vadd.f32 %v11777, %v12033
      %v12162 = vadd.f32 %v11778, %v12034
      %v12163 = vadd.f32 %v11779, %v12035
      %v12164 = vadd.f32 %v11780, %v12036
      %v12165 = vadd.f32 %v11781, %v12037
      %v12166 = vadd.f32 %v11782, %v12038
      %v12167 = vadd.f32 %v11783, %v12039
      %v12168 = vadd.f32 %v11784, %v12040
      %v12169 = vadd.f32 %v11785, %v12041
      %v12170 = vadd.f32 %v11786, %v12042
      %v12171 = vadd.f32 %v11787, %v12043
      %v12172 = vadd.f32 %v11788, %v12044
      %v12173 = vadd.f32 %v11789, %v12045
      %v12174 = vadd.f32 %v11790, %v12046
      %v12175 = vadd.f32 %v11791, %v12047
      %v12176 = vadd.f32 %v11792, %v12048
      %v12177 = vadd.f32 %v11793, %v12049
      %v12178 = vadd.f32 %v11794, %v12050
      %v12179 = vadd.f32 %v11795, %v12051
      %v12180 = vadd.f32 %v11796, %v12052
      %v12181 = vadd.f32 %v11797, %v12053
      %v12182 = vadd.f32 %v11798, %v12054
      %v12183 = vadd.f32 %v11799, %v12055
      %v12184 = vadd.f32 %v11800, %v12056
      %v12185 = vadd.f32 %v11801, %v12057
      %v12186 = vadd.f32 %v11802, %v12058
      %v12187 = vadd.f32 %v11803, %v12059
      %v12188 = vadd.f32 %v11804, %v12060
      %v12189 = vadd.f32 %v11805, %v12061
      %v12190 = vadd.f32 %v11806, %v12062
      %v12191 = vadd.f32 %v11807, %v12063
      %v12192 = vadd.f32 %v11808, %v12064
      %v12193 = vadd.f32 %v11809, %v12065
      %v12194 = vadd.f32 %v11810, %v12066
      %v12195 = vadd.f32 %v11811, %v12067
      %v12196 = vadd.f32 %v11812, %v12068
      %v12197 = vadd.f32 %v11813, %v12069
      %v12198 = vadd.f32 %v11814, %v12070
      %v12199 = vadd.f32 %v11815, %v12071
      %v12200 = vadd.f32 %v11816, %v12072
      %v12201 = vadd.f32 %v11817, %v12073
      %v12202 = vadd.f32 %v11818, %v12074
      %v12203 = vadd.f32 %v11819, %v12075
      %v12204 = vadd.f32 %v11820, %v12076
      %v12205 = vadd.f32 %v11821, %v12077
      %v12206 = vadd.f32 %v11822, %v12078
      %v12207 = vadd.f32 %v11823, %v12079
      %v12208 = vadd.f32 %v11824, %v12080
      %v12209 = vadd.f32 %v11825, %v12081
      %v12210 = vadd.f32 %v11826, %v12082
      %v12211 = vadd.f32 %v11827, %v12083
      %v12212 = vadd.f32 %v11828, %v12084
      %v12213 = vadd.f32 %v11829, %v12085
      %v12214 = vadd.f32 %v11830, %v12086
      %v12215 = vadd.f32 %v11831, %v12087
      %v12216 = vadd.f32 %v11832, %v12088
      %v12217 = vadd.f32 %v11833, %v12089
      %v12218 = vadd.f32 %v11834, %v12090
      %v12219 = vadd.f32 %v11835, %v12091
      %v12220 = vadd.f32 %v11836, %v12092
      %v12221 = vadd.f32 %v11837, %v12093
      %v12222 = vadd.f32 %v11838, %v12094
      %v12223 = vadd.f32 %v11839, %v12095
      %v12224 = vadd.f32 %v11840, %v12096
      %v12225 = vadd.f32 %v11841, %v12097
      %v12226 = vadd.f32 %v11842, %v12098
      %v12227 = vadd.f32 %v11843, %v12099
      %v12228 = vadd.f32 %v11844, %v12100
      %v12229 = vadd.f32 %v11845, %v12101
      %v12230 = vadd.f32 %v11846, %v12102
      %v12231 = vadd.f32 %v11847, %v12103
      %v12232 = vadd.f32 %v11848, %v12104
      %v12233 = vadd.f32 %v11849, %v12105
      %v12234 = vadd.f32 %v11850, %v12106
      %v12235 = vadd.f32 %v11851, %v12107
      %v12236 = vadd.f32 %v11852, %v12108
      %v12237 = vadd.f32 %v11853, %v12109
      %v12238 = vadd.f32 %v11854, %v12110
      %v12239 = vadd.f32 %v11855, %v12111
      %v12240 = vadd.f32 %v11856, %v12112
      %v12241 = vadd.f32 %v11857, %v12113
      %v12242 = vadd.f32 %v11858, %v12114
      %v12243 = vadd.f32 %v11859, %v12115
      %v12244 = vadd.f32 %v11860, %v12116
      %v12245 = vadd.f32 %v11861, %v12117
      %v12246 = vadd.f32 %v11862, %v12118
      %v12247 = vadd.f32 %v11863, %v12119
      %v12248 = vadd.f32 %v11864, %v12120
      %v12249 = vadd.f32 %v11865, %v12121
      %v12250 = vadd.f32 %v11866, %v12122
      %v12251 = vadd.f32 %v11867, %v12123
      %v12252 = vadd.f32 %v11868, %v12124
      %v12253 = vadd.f32 %v11869, %v12125
      %v12254 = vadd.f32 %v11870, %v12126
      %v12255 = vadd.f32 %v11871, %v12127
      %v12256 = vadd.f32 %v11872, %v12128
      %v12257 = vadd.f32 %v11873, %v12129
      %v12258 = vmax.f32 %v12130, 0.0
      %v12259 = vmax.f32 %v12131, 0.0
      %v12260 = vmax.f32 %v12132, 0.0
      %v12261 = vmax.f32 %v12133, 0.0
      %v12262 = vmax.f32 %v12134, 0.0
      %v12263 = vmax.f32 %v12135, 0.0
      %v12264 = vmax.f32 %v12136, 0.0
      %v12265 = vmax.f32 %v12137, 0.0
      %v12266 = vmax.f32 %v12138, 0.0
      %v12267 = vmax.f32 %v12139, 0.0
      %v12268 = vmax.f32 %v12140, 0.0
      %v12269 = vmax.f32 %v12141, 0.0
      %v12270 = vmax.f32 %v12142, 0.0
      %v12271 = vmax.f32 %v12143, 0.0
      %v12272 = vmax.f32 %v12144, 0.0
      %v12273 = vmax.f32 %v12145, 0.0
      %v12274 = vmax.f32 %v12146, 0.0
      %v12275 = vmax.f32 %v12147, 0.0
      %v12276 = vmax.f32 %v12148, 0.0
      %v12277 = vmax.f32 %v12149, 0.0
      %v12278 = vmax.f32 %v12150, 0.0
      %v12279 = vmax.f32 %v12151, 0.0
      %v12280 = vmax.f32 %v12152, 0.0
      %v12281 = vmax.f32 %v12153, 0.0
      %v12282 = vmax.f32 %v12154, 0.0
      %v12283 = vmax.f32 %v12155, 0.0
      %v12284 = vmax.f32 %v12156, 0.0
      %v12285 = vmax.f32 %v12157, 0.0
      %v12286 = vmax.f32 %v12158, 0.0
      %v12287 = vmax.f32 %v12159, 0.0
      %v12288 = vmax.f32 %v12160, 0.0
      %v12289 = vmax.f32 %v12161, 0.0
      %v12290 = vmax.f32 %v12162, 0.0
      %v12291 = vmax.f32 %v12163, 0.0
      %v12292 = vmax.f32 %v12164, 0.0
      %v12293 = vmax.f32 %v12165, 0.0
      %v12294 = vmax.f32 %v12166, 0.0
      %v12295 = vmax.f32 %v12167, 0.0
      %v12296 = vmax.f32 %v12168, 0.0
      %v12297 = vmax.f32 %v12169, 0.0
      %v12298 = vmax.f32 %v12170, 0.0
      %v12299 = vmax.f32 %v12171, 0.0
      %v12300 = vmax.f32 %v12172, 0.0
      %v12301 = vmax.f32 %v12173, 0.0
      %v12302 = vmax.f32 %v12174, 0.0
      %v12303 = vmax.f32 %v12175, 0.0
      %v12304 = vmax.f32 %v12176, 0.0
      %v12305 = vmax.f32 %v12177, 0.0
      %v12306 = vmax.f32 %v12178, 0.0
      %v12307 = vmax.f32 %v12179, 0.0
      %v12308 = vmax.f32 %v12180, 0.0
      %v12309 = vmax.f32 %v12181, 0.0
      %v12310 = vmax.f32 %v12182, 0.0
      %v12311 = vmax.f32 %v12183, 0.0
      %v12312 = vmax.f32 %v12184, 0.0
      %v12313 = vmax.f32 %v12185, 0.0
      %v12314 = vmax.f32 %v12186, 0.0
      %v12315 = vmax.f32 %v12187, 0.0
      %v12316 = vmax.f32 %v12188, 0.0
      %v12317 = vmax.f32 %v12189, 0.0
      %v12318 = vmax.f32 %v12190, 0.0
      %v12319 = vmax.f32 %v12191, 0.0
      %v12320 = vmax.f32 %v12192, 0.0
      %v12321 = vmax.f32 %v12193, 0.0
      %v12322 = vmax.f32 %v12194, 0.0
      %v12323 = vmax.f32 %v12195, 0.0
      %v12324 = vmax.f32 %v12196, 0.0
      %v12325 = vmax.f32 %v12197, 0.0
      %v12326 = vmax.f32 %v12198, 0.0
      %v12327 = vmax.f32 %v12199, 0.0
      %v12328 = vmax.f32 %v12200, 0.0
      %v12329 = vmax.f32 %v12201, 0.0
      %v12330 = vmax.f32 %v12202, 0.0
      %v12331 = vmax.f32 %v12203, 0.0
      %v12332 = vmax.f32 %v12204, 0.0
      %v12333 = vmax.f32 %v12205, 0.0
      %v12334 = vmax.f32 %v12206, 0.0
      %v12335 = vmax.f32 %v12207, 0.0
      %v12336 = vmax.f32 %v12208, 0.0
      %v12337 = vmax.f32 %v12209, 0.0
      %v12338 = vmax.f32 %v12210, 0.0
      %v12339 = vmax.f32 %v12211, 0.0
      %v12340 = vmax.f32 %v12212, 0.0
      %v12341 = vmax.f32 %v12213, 0.0
      %v12342 = vmax.f32 %v12214, 0.0
      %v12343 = vmax.f32 %v12215, 0.0
      %v12344 = vmax.f32 %v12216, 0.0
      %v12345 = vmax.f32 %v12217, 0.0
      %v12346 = vmax.f32 %v12218, 0.0
      %v12347 = vmax.f32 %v12219, 0.0
      %v12348 = vmax.f32 %v12220, 0.0
      %v12349 = vmax.f32 %v12221, 0.0
      %v12350 = vmax.f32 %v12222, 0.0
      %v12351 = vmax.f32 %v12223, 0.0
      %v12352 = vmax.f32 %v12224, 0.0
      %v12353 = vmax.f32 %v12225, 0.0
      %v12354 = vmax.f32 %v12226, 0.0
      %v12355 = vmax.f32 %v12227, 0.0
      %v12356 = vmax.f32 %v12228, 0.0
      %v12357 = vmax.f32 %v12229, 0.0
      %v12358 = vmax.f32 %v12230, 0.0
      %v12359 = vmax.f32 %v12231, 0.0
      %v12360 = vmax.f32 %v12232, 0.0
      %v12361 = vmax.f32 %v12233, 0.0
      %v12362 = vmax.f32 %v12234, 0.0
      %v12363 = vmax.f32 %v12235, 0.0
      %v12364 = vmax.f32 %v12236, 0.0
      %v12365 = vmax.f32 %v12237, 0.0
      %v12366 = vmax.f32 %v12238, 0.0
      %v12367 = vmax.f32 %v12239, 0.0
      %v12368 = vmax.f32 %v12240, 0.0
      %v12369 = vmax.f32 %v12241, 0.0
      %v12370 = vmax.f32 %v12242, 0.0
      %v12371 = vmax.f32 %v12243, 0.0
      %v12372 = vmax.f32 %v12244, 0.0
      %v12373 = vmax.f32 %v12245, 0.0
      %v12374 = vmax.f32 %v12246, 0.0
      %v12375 = vmax.f32 %v12247, 0.0
      %v12376 = vmax.f32 %v12248, 0.0
      %v12377 = vmax.f32 %v12249, 0.0
      %v12378 = vmax.f32 %v12250, 0.0
      %v12379 = vmax.f32 %v12251, 0.0
      %v12380 = vmax.f32 %v12252, 0.0
      %v12381 = vmax.f32 %v12253, 0.0
      %v12382 = vmax.f32 %v12254, 0.0
      %v12383 = vmax.f32 %v12255, 0.0
      %v12384 = vmax.f32 %v12256, 0.0
      %v12385 = vmax.f32 %v12257, 0.0
      %v12386 = vpack.c.bf16 %v12258, %v12258
      %v12387 = vpack.c.bf16 %v12259, %v12259
      %v12388 = vpack.c.bf16 %v12260, %v12260
      %v12389 = vpack.c.bf16 %v12261, %v12261
      %v12390 = vpack.c.bf16 %v12262, %v12262
      %v12391 = vpack.c.bf16 %v12263, %v12263
      %v12392 = vpack.c.bf16 %v12264, %v12264
      %v12393 = vpack.c.bf16 %v12265, %v12265
      %v12394 = vpack.c.bf16 %v12266, %v12266
      %v12395 = vpack.c.bf16 %v12267, %v12267
      %v12396 = vpack.c.bf16 %v12268, %v12268
      %v12397 = vpack.c.bf16 %v12269, %v12269
      %v12398 = vpack.c.bf16 %v12270, %v12270
      %v12399 = vpack.c.bf16 %v12271, %v12271
      %v12400 = vpack.c.bf16 %v12272, %v12272
      %v12401 = vpack.c.bf16 %v12273, %v12273
      %v12402 = vpack.c.bf16 %v12274, %v12274
      %v12403 = vpack.c.bf16 %v12275, %v12275
      %v12404 = vpack.c.bf16 %v12276, %v12276
      %v12405 = vpack.c.bf16 %v12277, %v12277
      %v12406 = vpack.c.bf16 %v12278, %v12278
      %v12407 = vpack.c.bf16 %v12279, %v12279
      %v12408 = vpack.c.bf16 %v12280, %v12280
      %v12409 = vpack.c.bf16 %v12281, %v12281
      %v12410 = vpack.c.bf16 %v12282, %v12282
      %v12411 = vpack.c.bf16 %v12283, %v12283
      %v12412 = vpack.c.bf16 %v12284, %v12284
      %v12413 = vpack.c.bf16 %v12285, %v12285
      %v12414 = vpack.c.bf16 %v12286, %v12286
      %v12415 = vpack.c.bf16 %v12287, %v12287
      %v12416 = vpack.c.bf16 %v12288, %v12288
      %v12417 = vpack.c.bf16 %v12289, %v12289
      %v12418 = vpack.c.bf16 %v12290, %v12290
      %v12419 = vpack.c.bf16 %v12291, %v12291
      %v12420 = vpack.c.bf16 %v12292, %v12292
      %v12421 = vpack.c.bf16 %v12293, %v12293
      %v12422 = vpack.c.bf16 %v12294, %v12294
      %v12423 = vpack.c.bf16 %v12295, %v12295
      %v12424 = vpack.c.bf16 %v12296, %v12296
      %v12425 = vpack.c.bf16 %v12297, %v12297
      %v12426 = vpack.c.bf16 %v12298, %v12298
      %v12427 = vpack.c.bf16 %v12299, %v12299
      %v12428 = vpack.c.bf16 %v12300, %v12300
      %v12429 = vpack.c.bf16 %v12301, %v12301
      %v12430 = vpack.c.bf16 %v12302, %v12302
      %v12431 = vpack.c.bf16 %v12303, %v12303
      %v12432 = vpack.c.bf16 %v12304, %v12304
      %v12433 = vpack.c.bf16 %v12305, %v12305
      %v12434 = vpack.c.bf16 %v12306, %v12306
      %v12435 = vpack.c.bf16 %v12307, %v12307
      %v12436 = vpack.c.bf16 %v12308, %v12308
      %v12437 = vpack.c.bf16 %v12309, %v12309
      %v12438 = vpack.c.bf16 %v12310, %v12310
      %v12439 = vpack.c.bf16 %v12311, %v12311
      %v12440 = vpack.c.bf16 %v12312, %v12312
      %v12441 = vpack.c.bf16 %v12313, %v12313
      %v12442 = vpack.c.bf16 %v12314, %v12314
      %v12443 = vpack.c.bf16 %v12315, %v12315
      %v12444 = vpack.c.bf16 %v12316, %v12316
      %v12445 = vpack.c.bf16 %v12317, %v12317
      %v12446 = vpack.c.bf16 %v12318, %v12318
      %v12447 = vpack.c.bf16 %v12319, %v12319
      %v12448 = vpack.c.bf16 %v12320, %v12320
      %v12449 = vpack.c.bf16 %v12321, %v12321
      %v12450 = vpack.c.bf16 %v12322, %v12322
      %v12451 = vpack.c.bf16 %v12323, %v12323
      %v12452 = vpack.c.bf16 %v12324, %v12324
      %v12453 = vpack.c.bf16 %v12325, %v12325
      %v12454 = vpack.c.bf16 %v12326, %v12326
      %v12455 = vpack.c.bf16 %v12327, %v12327
      %v12456 = vpack.c.bf16 %v12328, %v12328
      %v12457 = vpack.c.bf16 %v12329, %v12329
      %v12458 = vpack.c.bf16 %v12330, %v12330
      %v12459 = vpack.c.bf16 %v12331, %v12331
      %v12460 = vpack.c.bf16 %v12332, %v12332
      %v12461 = vpack.c.bf16 %v12333, %v12333
      %v12462 = vpack.c.bf16 %v12334, %v12334
      %v12463 = vpack.c.bf16 %v12335, %v12335
      %v12464 = vpack.c.bf16 %v12336, %v12336
      %v12465 = vpack.c.bf16 %v12337, %v12337
      %v12466 = vpack.c.bf16 %v12338, %v12338
      %v12467 = vpack.c.bf16 %v12339, %v12339
      %v12468 = vpack.c.bf16 %v12340, %v12340
      %v12469 = vpack.c.bf16 %v12341, %v12341
      %v12470 = vpack.c.bf16 %v12342, %v12342
      %v12471 = vpack.c.bf16 %v12343, %v12343
      %v12472 = vpack.c.bf16 %v12344, %v12344
      %v12473 = vpack.c.bf16 %v12345, %v12345
      %v12474 = vpack.c.bf16 %v12346, %v12346
      %v12475 = vpack.c.bf16 %v12347, %v12347
      %v12476 = vpack.c.bf16 %v12348, %v12348
      %v12477 = vpack.c.bf16 %v12349, %v12349
      %v12478 = vpack.c.bf16 %v12350, %v12350
      %v12479 = vpack.c.bf16 %v12351, %v12351
      %v12480 = vpack.c.bf16 %v12352, %v12352
      %v12481 = vpack.c.bf16 %v12353, %v12353
      %v12482 = vpack.c.bf16 %v12354, %v12354
      %v12483 = vpack.c.bf16 %v12355, %v12355
      %v12484 = vpack.c.bf16 %v12356, %v12356
      %v12485 = vpack.c.bf16 %v12357, %v12357
      %v12486 = vpack.c.bf16 %v12358, %v12358
      %v12487 = vpack.c.bf16 %v12359, %v12359
      %v12488 = vpack.c.bf16 %v12360, %v12360
      %v12489 = vpack.c.bf16 %v12361, %v12361
      %v12490 = vpack.c.bf16 %v12362, %v12362
      %v12491 = vpack.c.bf16 %v12363, %v12363
      %v12492 = vpack.c.bf16 %v12364, %v12364
      %v12493 = vpack.c.bf16 %v12365, %v12365
      %v12494 = vpack.c.bf16 %v12366, %v12366
      %v12495 = vpack.c.bf16 %v12367, %v12367
      %v12496 = vpack.c.bf16 %v12368, %v12368
      %v12497 = vpack.c.bf16 %v12369, %v12369
      %v12498 = vpack.c.bf16 %v12370, %v12370
      %v12499 = vpack.c.bf16 %v12371, %v12371
      %v12500 = vpack.c.bf16 %v12372, %v12372
      %v12501 = vpack.c.bf16 %v12373, %v12373
      %v12502 = vpack.c.bf16 %v12374, %v12374
      %v12503 = vpack.c.bf16 %v12375, %v12375
      %v12504 = vpack.c.bf16 %v12376, %v12376
      %v12505 = vpack.c.bf16 %v12377, %v12377
      %v12506 = vpack.c.bf16 %v12378, %v12378
      %v12507 = vpack.c.bf16 %v12379, %v12379
      %v12508 = vpack.c.bf16 %v12380, %v12380
      %v12509 = vpack.c.bf16 %v12381, %v12381
      %v12510 = vpack.c.bf16 %v12382, %v12382
      %v12511 = vpack.c.bf16 %v12383, %v12383
      %v12512 = vpack.c.bf16 %v12384, %v12384
      %v12513 = vpack.c.bf16 %v12385, %v12385
      %12514 = vst [vmem:[%s366] sm:$0xf] %v12386
      %12515 = vst [vmem:[%s366 + $0x4] sm:$0xf] %v12387
      %12516 = vst [vmem:[%s366 + $0x8] sm:$0xf] %v12388
      %12517 = vst [vmem:[%s366 + $0xc] sm:$0xf] %v12389
      %12518 = vst [vmem:[%s366 + $0x10] sm:$0xf] %v12390
      %12519 = vst [vmem:[%s366 + $0x14] sm:$0xf] %v12391
      %12520 = vst [vmem:[%s366 + $0x18] sm:$0xf] %v12392
      %12521 = vst [vmem:[%s366 + $0x1c] sm:$0xf] %v12393
      %12522 = vst [vmem:[%s366 + $0x20] sm:$0xf] %v12394
      %12523 = vst [vmem:[%s366 + $0x24] sm:$0xf] %v12395
      %12524 = vst [vmem:[%s366 + $0x28] sm:$0xf] %v12396
      %12525 = vst [vmem:[%s366 + $0x2c] sm:$0xf] %v12397
      %12526 = vst [vmem:[%s366 + $0x30] sm:$0xf] %v12398
      %12527 = vst [vmem:[%s366 + $0x34] sm:$0xf] %v12399
      %12528 = vst [vmem:[%s366 + $0x38] sm:$0xf] %v12400
      %12529 = vst [vmem:[%s366 + $0x3c] sm:$0xf] %v12401
      %12530 = vst [vmem:[%s366 + $0x40] sm:$0xf] %v12402
      %12531 = vst [vmem:[%s366 + $0x44] sm:$0xf] %v12403
      %12532 = vst [vmem:[%s366 + $0x48] sm:$0xf] %v12404
      %12533 = vst [vmem:[%s366 + $0x4c] sm:$0xf] %v12405
      %12534 = vst [vmem:[%s366 + $0x50] sm:$0xf] %v12406
      %12535 = vst [vmem:[%s366 + $0x54] sm:$0xf] %v12407
      %12536 = vst [vmem:[%s366 + $0x58] sm:$0xf] %v12408
      %12537 = vst [vmem:[%s366 + $0x5c] sm:$0xf] %v12409
      %12538 = vst [vmem:[%s366 + $0x60] sm:$0xf] %v12410
      %12539 = vst [vmem:[%s366 + $0x64] sm:$0xf] %v12411
      %12540 = vst [vmem:[%s366 + $0x68] sm:$0xf] %v12412
      %12541 = vst [vmem:[%s366 + $0x6c] sm:$0xf] %v12413
      %12542 = vst [vmem:[%s366 + $0x70] sm:$0xf] %v12414
      %12543 = vst [vmem:[%s366 + $0x74] sm:$0xf] %v12415
      %12544 = vst [vmem:[%s366 + $0x78] sm:$0xf] %v12416
      %12545 = vst [vmem:[%s366 + $0x7c] sm:$0xf] %v12417
      %12546 = vst [vmem:[%s366 + $0x80] sm:$0xf] %v12418
      %12547 = vst [vmem:[%s366 + $0x84] sm:$0xf] %v12419
      %12548 = vst [vmem:[%s366 + $0x88] sm:$0xf] %v12420
      %12549 = vst [vmem:[%s366 + $0x8c] sm:$0xf] %v12421
      %12550 = vst [vmem:[%s366 + $0x90] sm:$0xf] %v12422
      %12551 = vst [vmem:[%s366 + $0x94] sm:$0xf] %v12423
      %12552 = vst [vmem:[%s366 + $0x98] sm:$0xf] %v12424
      %12553 = vst [vmem:[%s366 + $0x9c] sm:$0xf] %v12425
      %12554 = vst [vmem:[%s366 + $0xa0] sm:$0xf] %v12426
      %12555 = vst [vmem:[%s366 + $0xa4] sm:$0xf] %v12427
      %12556 = vst [vmem:[%s366 + $0xa8] sm:$0xf] %v12428
      %12557 = vst [vmem:[%s366 + $0xac] sm:$0xf] %v12429
      %12558 = vst [vmem:[%s366 + $0xb0] sm:$0xf] %v12430
      %12559 = vst [vmem:[%s366 + $0xb4] sm:$0xf] %v12431
      %12560 = vst [vmem:[%s366 + $0xb8] sm:$0xf] %v12432
      %12561 = vst [vmem:[%s366 + $0xbc] sm:$0xf] %v12433
      %12562 = vst [vmem:[%s366 + $0xc0] sm:$0xf] %v12434
      %12563 = vst [vmem:[%s366 + $0xc4] sm:$0xf] %v12435
      %12564 = vst [vmem:[%s366 + $0xc8] sm:$0xf] %v12436
      %12565 = vst [vmem:[%s366 + $0xcc] sm:$0xf] %v12437
      %12566 = vst [vmem:[%s366 + $0xd0] sm:$0xf] %v12438
      %12567 = vst [vmem:[%s366 + $0xd4] sm:$0xf] %v12439
      %12568 = vst [vmem:[%s366 + $0xd8] sm:$0xf] %v12440
      %12569 = vst [vmem:[%s366 + $0xdc] sm:$0xf] %v12441
      %12570 = vst [vmem:[%s366 + $0xe0] sm:$0xf] %v12442
      %12571 = vst [vmem:[%s366 + $0xe4] sm:$0xf] %v12443
      %12572 = vst [vmem:[%s366 + $0xe8] sm:$0xf] %v12444
      %12573 = vst [vmem:[%s366 + $0xec] sm:$0xf] %v12445
      %12574 = vst [vmem:[%s366 + $0xf0] sm:$0xf] %v12446
      %12575 = vst [vmem:[%s366 + $0xf4] sm:$0xf] %v12447
      %12576 = vst [vmem:[%s366 + $0xf8] sm:$0xf] %v12448
      %12577 = vst [vmem:[%s366 + $0xfc] sm:$0xf] %v12449
      %12578 = vst [vmem:[%s366 + $0x100] sm:$0xf] %v12450
      %12579 = vst [vmem:[%s366 + $0x104] sm:$0xf] %v12451
      %12580 = vst [vmem:[%s366 + $0x108] sm:$0xf] %v12452
      %12581 = vst [vmem:[%s366 + $0x10c] sm:$0xf] %v12453
      %12582 = vst [vmem:[%s366 + $0x110] sm:$0xf] %v12454
      %12583 = vst [vmem:[%s366 + $0x114] sm:$0xf] %v12455
      %12584 = vst [vmem:[%s366 + $0x118] sm:$0xf] %v12456
      %12585 = vst [vmem:[%s366 + $0x11c] sm:$0xf] %v12457
      %12586 = vst [vmem:[%s366 + $0x120] sm:$0xf] %v12458
      %12587 = vst [vmem:[%s366 + $0x124] sm:$0xf] %v12459
      %12588 = vst [vmem:[%s366 + $0x128] sm:$0xf] %v12460
      %12589 = vst [vmem:[%s366 + $0x12c] sm:$0xf] %v12461
      %12590 = vst [vmem:[%s366 + $0x130] sm:$0xf] %v12462
      %12591 = vst [vmem:[%s366 + $0x134] sm:$0xf] %v12463
      %12592 = vst [vmem:[%s366 + $0x138] sm:$0xf] %v12464
      %12593 = vst [vmem:[%s366 + $0x13c] sm:$0xf] %v12465
      %12594 = vst [vmem:[%s366 + $0x140] sm:$0xf] %v12466
      %12595 = vst [vmem:[%s366 + $0x144] sm:$0xf] %v12467
      %12596 = vst [vmem:[%s366 + $0x148] sm:$0xf] %v12468
      %12597 = vst [vmem:[%s366 + $0x14c] sm:$0xf] %v12469
      %12598 = vst [vmem:[%s366 + $0x150] sm:$0xf] %v12470
      %12599 = vst [vmem:[%s366 + $0x154] sm:$0xf] %v12471
      %12600 = vst [vmem:[%s366 + $0x158] sm:$0xf] %v12472
      %12601 = vst [vmem:[%s366 + $0x15c] sm:$0xf] %v12473
      %12602 = vst [vmem:[%s366 + $0x160] sm:$0xf] %v12474
      %12603 = vst [vmem:[%s366 + $0x164] sm:$0xf] %v12475
      %12604 = vst [vmem:[%s366 + $0x168] sm:$0xf] %v12476
      %12605 = vst [vmem:[%s366 + $0x16c] sm:$0xf] %v12477
      %12606 = vst [vmem:[%s366 + $0x170] sm:$0xf] %v12478
      %12607 = vst [vmem:[%s366 + $0x174] sm:$0xf] %v12479
      %12608 = vst [vmem:[%s366 + $0x178] sm:$0xf] %v12480
      %12609 = vst [vmem:[%s366 + $0x17c] sm:$0xf] %v12481
      %12610 = vst [vmem:[%s366 + $0x180] sm:$0xf] %v12482
      %12611 = vst [vmem:[%s366 + $0x184] sm:$0xf] %v12483
      %12612 = vst [vmem:[%s366 + $0x188] sm:$0xf] %v12484
      %12613 = vst [vmem:[%s366 + $0x18c] sm:$0xf] %v12485
      %12614 = vst [vmem:[%s366 + $0x190] sm:$0xf] %v12486
      %12615 = vst [vmem:[%s366 + $0x194] sm:$0xf] %v12487
      %12616 = vst [vmem:[%s366 + $0x198] sm:$0xf] %v12488
      %12617 = vst [vmem:[%s366 + $0x19c] sm:$0xf] %v12489
      %12618 = vst [vmem:[%s366 + $0x1a0] sm:$0xf] %v12490
      %12619 = vst [vmem:[%s366 + $0x1a4] sm:$0xf] %v12491
      %12620 = vst [vmem:[%s366 + $0x1a8] sm:$0xf] %v12492
      %12621 = vst [vmem:[%s366 + $0x1ac] sm:$0xf] %v12493
      %12622 = vst [vmem:[%s366 + $0x1b0] sm:$0xf] %v12494
      %12623 = vst [vmem:[%s366 + $0x1b4] sm:$0xf] %v12495
      %12624 = vst [vmem:[%s366 + $0x1b8] sm:$0xf] %v12496
      %12625 = vst [vmem:[%s366 + $0x1bc] sm:$0xf] %v12497
      %12626 = vst [vmem:[%s366 + $0x1c0] sm:$0xf] %v12498
      %12627 = vst [vmem:[%s366 + $0x1c4] sm:$0xf] %v12499
      %12628 = vst [vmem:[%s366 + $0x1c8] sm:$0xf] %v12500
      %12629 = vst [vmem:[%s366 + $0x1cc] sm:$0xf] %v12501
      %12630 = vst [vmem:[%s366 + $0x1d0] sm:$0xf] %v12502
      %12631 = vst [vmem:[%s366 + $0x1d4] sm:$0xf] %v12503
      %12632 = vst [vmem:[%s366 + $0x1d8] sm:$0xf] %v12504
      %12633 = vst [vmem:[%s366 + $0x1dc] sm:$0xf] %v12505
      %12634 = vst [vmem:[%s366 + $0x1e0] sm:$0xf] %v12506
      %12635 = vst [vmem:[%s366 + $0x1e4] sm:$0xf] %v12507
      %12636 = vst [vmem:[%s366 + $0x1e8] sm:$0xf] %v12508
      %12637 = vst [vmem:[%s366 + $0x1ec] sm:$0xf] %v12509
      %12638 = vst [vmem:[%s366 + $0x1f0] sm:$0xf] %v12510
      %12639 = vst [vmem:[%s366 + $0x1f4] sm:$0xf] %v12511
      %12640 = vst [vmem:[%s366 + $0x1f8] sm:$0xf] %v12512
      %12641 = vst [vmem:[%s366 + $0x1fc] sm:$0xf] %v12513
      %s12642 = smul.u32 4, %s21
      %p12643 = scmp.lt.s32.totalorder %s12642, 7
      %s12644 = scalar_select %p12643, %s12642, 7
      %s12645 = smul.addr %s12644, 32
      %s12646 = smul.addr %s12645, 4
      %s12647 = scalar_lea.vmem %s10, %s12646
      // Predicated region
      $region61: #{bottleneck_forward.1} parent=59 // pred_check
        %p12648 = pneg %p254
      $region62: #{bottleneck_forward.1} parent=59 // pred_check_branch
        %12650 = sbr.rel (%p12648) target = $region64
      $region63: #{bottleneck_forward.1} parent=59 // pred_region
        %s12651 = smul.u32 4, %s21
      $region64: #{bottleneck_forward.1} parent=59 // pred_fallthru
        _
    $region60: #{bottleneck_forward.1} parent=5 // pred_fallthru
      _
    %p12652 = scmp.le.s32.totalorder 2, %s16
    // Predicated region
    $region65: #{bottleneck_forward.1} parent=5 // pred_check
      %p12653 = pneg %p12652
    $region66: #{bottleneck_forward.1} parent=5 // pred_check_branch
      %12655 = sbr.rel (%p12653) target = $region68
    $region67: #{bottleneck_forward.1} parent=5 // pred_region
      %s12656 = ssub.s32 %s16, 2
      // Predicated region
      $region69: #{bottleneck_forward.1} parent=67 // pred_check
        %p12657 = pneg %p260
      $region70: #{bottleneck_forward.1} parent=67 // pred_check_branch
        %12659 = sbr.rel (%p12657) target = $region72
      $region71: #{bottleneck_forward.1} parent=67 // pred_region
        %s12660 = smul.u32 4, %s22
        %p12661 = scmp.lt.s32.totalorder %s12660, 7
        %s12662 = scalar_select %p12661, %s12660, 7
        %s12663 = smul.addr %s12662, 32
        %s12664 = smul.addr %s12663, 4
        %s12665 = scalar_lea.vmem %s10, %s12664
      $region72: #{bottleneck_forward.1} parent=67 // pred_fallthru
        _
    $region68: #{bottleneck_forward.1} parent=5 // pred_fallthru
      _
  $region6: #{bottleneck_forward.1} parent=0 // loop_footer
    %s20 = sadd.s32 1, %s16
  $region7: #{bottleneck_forward.1} parent=0 // loop_footer_branch
    %15 = sbr.rel target = $region3
  $region8: #{bottleneck_forward.1} parent=0 // loop_exit
    _

</llo_original>
